<compile_context>
chip_gen: v5e
topology: v5e:2x2
jax: 0.10.0
libtpu: 0.0.40
codegen_flags: <defaults>
</compile_context>

<pallas_src>
import jax
import jax.numpy as jnp
from jax import lax
from jax.experimental import pallas as pl
from jax.experimental.pallas import tpu as pltpu

ELU_ALPHA = 1.0
IN_EPS = 1e-5        # torch.nn.InstanceNorm2d default eps
NORM_EPS = 1e-7      # eps in normalize_img
ACT_DTYPE = jnp.bfloat16   # HBM activations / conv weights
SUBLANE_PACK = 16          # bf16 sublane packing (tile-aligned scratch rows)


def _round_up(x, m):
    return (x + m - 1) // m * m


# ----------------------------------------------------------------------------
# Pallas kernels
# ----------------------------------------------------------------------------
def _make_conv3x3_kernel(mode, taps, cin_p, Wp, W, valid_len, count, has_skip):
    """Fused 3x3 conv (single big matmul) + bias (+ InstanceNorm + ELU).

    Per grid step (one batch sample):
      x_ref:  (Cin_p, Pp)       zero-padded image, flattened on the lane axis (bf16)
      s_ref:  (Cin_p, Pp)       optional fused skip-add input (same layout)
      w_ref:  (Cout, 9*Cin_p)   fused weight, column t*Cin_p + ci == torch w[:, ci, dy, dx]
      b_ref:  (Cout, 1)         bias (f32)
      o_ref:  (1, Cout, Q)      lane-dense, 128-aligned output (bf16)
      xs_ref: (9*Cin_p, Q)      VMEM staging scratch for the 9 tap slabs (bf16)
    """
    inv_count = 1.0 / float(count)

    def kernel(*refs):
        if has_skip:
            x_ref, s_ref, w_ref, b_ref, o_ref, xs_ref = refs
        else:
            x_ref, w_ref, b_ref, o_ref, xs_ref = refs
            s_ref = None
        Q = xs_ref.shape[1]

        # Stage the 9 lane-shifted tap slabs into ONE scratch (skip-add fused,
        # single VPU pass); f32 for the lane-offset slicing, bf16 in the scratch.
        xv = x_ref[...].astype(jnp.float32)
        if s_ref is not None:
            xv = xv + s_ref[...].astype(jnp.float32)
        for t, off in enumerate(taps):
            xs_ref[t * cin_p:(t + 1) * cin_p, :] = xv[:, off:off + Q].astype(xs_ref.dtype)

        # ONE MXU matmul: (Cout, 9*Cin_p) @ (9*Cin_p, Q), f32 accumulation.
        y = jnp.dot(w_ref[...], xs_ref[...], preferred_element_type=jnp.float32)
        y = y + b_ref[...]

        if mode == "in_elu":
            # Validity mask generated in-kernel (no HBM mask input): position q
            # is a real pixel iff q < H*(W+2) and (q mod (W+2)) < W.
            q_idx = lax.broadcasted_iota(jnp.int32, (1, Q), 1)
            m = jnp.logical_and(q_idx % Wp < W, q_idx < valid_len).astype(jnp.float32)
            # One-pass InstanceNorm statistics (biased var), f32.
            mean = jnp.sum(y * m, axis=1, keepdims=True) * inv_count
            ex2 = jnp.sum((y * y) * m, axis=1, keepdims=True) * inv_count
            var = jnp.maximum(ex2 - mean * mean, 0.0)
            y = (y - mean) * lax.rsqrt(var + IN_EPS)
            # ELU(alpha=1); exp only on the clamped negative part.
            y = jnp.where(y > 0, y, ELU_ALPHA * (jnp.exp(jnp.minimum(y, 0.0)) - 1.0))
        # mode == "none": plain conv + bias
        o_ref[0] = y.astype(o_ref.dtype)

    return kernel


def _make_tail_kernel(n_batch, c4, is_residual, tail):
    """Fused 1x1 conv (VPU FMAs) + tanh (+ residual) + tail (norm/clip/sigmoid).

    Refs (single grid step, whole batch — it is tiny: (N, 3, HW)):
      y0_ref:  (N, C4, HW) bf16   decoder output features
      raw_ref: (N, 3, HW)  f32    input image (residual)
      w_ref:   (3, C4)     f32    1x1 conv weight (SMEM, read as scalars)
      b_ref:   (3,)        f32    bias (SMEM)
      o_ref:   (N, 3, HW)  f32
    """
    def kernel(y0_ref, raw_ref, w_ref, b_ref, o_ref):
        # Pass 1: 1x1 conv via VPU scalar-FMAs (M=3, K=C4 is far too small for
        # the MXU) + tanh + residual; write each sample straight to o_ref so
        # only one (3, HW) slab is ever live; carry running global max/min.
        gmax = None
        gmin = None
        for n in range(n_batch):
            y0 = y0_ref[n].astype(jnp.float32)                    # (C4, HW)
            rows = []
            for co in range(3):
                acc = y0[0:1, :] * w_ref[co, 0]
                for k in range(1, c4):
                    acc = acc + y0[k:k + 1, :] * w_ref[co, k]
                rows.append(acc + b_ref[co])
            t = jnp.tanh(jnp.concatenate(rows, axis=0))           # (3, HW)
            if is_residual:
                t = t + raw_ref[n]
            o_ref[n] = t
            if tail == 'norm':
                tmax = jnp.max(t)
                tmin = jnp.min(t)
                gmax = tmax if gmax is None else jnp.maximum(gmax, tmax)
                gmin = tmin if gmin is None else jnp.minimum(gmin, tmin)

        # Pass 2: tail, reading back from the VMEM-resident output block.
        if tail == 'norm':
            # torch normalize_img gates on the BATCH-GLOBAL max/min, then
            # rescales per (sample, channel) over H*W.
            cond = jnp.logical_or(gmax > 1.0, gmin < 0.0)
            for n in range(n_batch):
                t = o_ref[n]
                mx = jnp.max(t, axis=1, keepdims=True)
                mn = jnp.min(t, axis=1, keepdims=True)
                tn = (t - mn) / (mx - mn + NORM_EPS)
                o_ref[n] = jnp.where(cond, tn, t)
        elif tail == 'clip':
            for n in range(n_batch):
                o_ref[n] = jnp.clip(o_ref[n], 0.0, 1.0)
            _ = None
        elif tail == 'sigmoid':
            for n in range(n_batch):
                o_ref[n] = jax.nn.sigmoid(o_ref[n])
        # tail == 'none': nothing else to do.
        # TODO(synk): 'IN+clip' / 'IN+sigmoid' tails (extra InstanceNorm2d(3)) not wired.
    return kernel


# ----------------------------------------------------------------------------
# Wrappers around pallas_call
# ----------------------------------------------------------------------------
def conv3x3(x, w9, b, mode, skip=None):
    """3x3 conv, stride 1, zero-pad 1, optional fused skip-add on the INPUT.

    x, skip: (N, Cin, H, W); w9: (9, Cout, Cin) with tap t = dy*3 + dx; b: (Cout,).
    """
    N, Cin, H, W = x.shape
    Cout = w9.shape[1]
    Wp = W + 2
    HWp = H * Wp
    Qp = _round_up(HWp, 128)               # lane-dense, 128-aligned output length
    Cin_p = _round_up(Cin, SUBLANE_PACK)   # tile-aligned scratch row blocks
    Pp = _round_up(Qp + 2 * Wp + 2, 128)   # padded flat input length (all taps in-bounds)

    def prep(t):
        tp = jnp.pad(t, ((0, 0), (0, Cin_p - Cin), (1, 1), (1, 1)))
        tf = tp.reshape(N, Cin_p, (H + 2) * Wp)
        tf = jnp.pad(tf, ((0, 0), (0, 0), (0, Pp - (H + 2) * Wp)))
        return tf.astype(ACT_DTYPE)

    inputs = [prep(x)]
    in_specs = [pl.BlockSpec((None, Cin_p, Pp), lambda n: (n, 0, 0))]
    if skip is not None:
        inputs.append(prep(skip))
        in_specs.append(pl.BlockSpec((None, Cin_p, Pp), lambda n: (n, 0, 0)))

    # Fused weight: (Cout, 9*Cin_p); column t*Cin_p + ci == torch w[:, ci, dy, dx].
    wf = jnp.pad(w9, ((0, 0), (0, 0), (0, Cin_p - Cin)))           # (9, Cout, Cin_p)
    wf = jnp.transpose(wf, (1, 0, 2)).reshape(Cout, 9 * Cin_p).astype(ACT_DTYPE)
    inputs.append(wf)
    in_specs.append(pl.BlockSpec((Cout, 9 * Cin_p), lambda n: (0, 0)))
    inputs.append(b.reshape(Cout, 1).astype(jnp.float32))
    in_specs.append(pl.BlockSpec((Cout, 1), lambda n: (0, 0)))

    taps = [dy * Wp + dx for dy in range(3) for dx in range(3)]
    kernel = _make_conv3x3_kernel(mode, taps, Cin_p, Wp, W, HWp, H * W,
                                  has_skip=skip is not None)

    isz = jnp.dtype(ACT_DTYPE).itemsize
    n_in = 2 if skip is not None else 1
    vmem_est = (2 * n_in * Cin_p * Pp * isz          # pipelined input tiles
                + 2 * Cout * 9 * Cin_p * isz + 2 * Cout * 4
                + 2 * Cout * Qp * isz                # pipelined output tiles
                + 9 * Cin_p * Qp * isz               # staging scratch
                + Cin_p * Pp * 4)                    # f32 upcast of the input slab
    flops = 2 * N * Cout * 9 * Cin_p * Qp
    transcendentals = 2 * N * Cout * Qp if mode == "in_elu" else 0
    bytes_accessed = isz * (N * n_in * Cin_p * Pp + Cout * 9 * Cin_p + N * Cout * Qp) + 4 * Cout

    yq = pl.pallas_call(
        kernel,
        out_shape=jax.ShapeDtypeStruct((N, Cout, Qp), ACT_DTYPE),
        grid=(N,),
        in_specs=in_specs,
        out_specs=pl.BlockSpec((1, Cout, Qp), lambda n: (n, 0, 0)),
        scratch_shapes=[pltpu.VMEM((9 * Cin_p, Qp), ACT_DTYPE)],
        compiler_params=pltpu.CompilerParams(
            dimension_semantics=("parallel",),
            vmem_limit_bytes=int(min(max(2 * vmem_est, 32 << 20), 110 << 20))),
        cost_estimate=pl.CostEstimate(flops=flops,
                                      transcendentals=transcendentals,
                                      bytes_accessed=bytes_accessed),
    )(*inputs)

    # Strip wrap columns: (N, Cout, Qp) -> (N, Cout, H, W).
    # TODO(synk): keep the padded (H, W+2) lane layout between layers to avoid
    # this slice + the next layer's re-pad HBM round trip.
    return yq[:, :, :HWp].reshape(N, Cout, H, Wp)[:, :, :, :W]


def output_tail(y0, w1, b1, raw_img, is_residual, tail):
    """Fused 1x1 conv + tanh + residual + normalize/clip/sigmoid in ONE pallas_call."""
    N, C4, H, W = y0.shape
    HW = H * W
    y0f = y0.reshape(N, C4, HW)
    rawf = raw_img.reshape(N, 3, HW).astype(jnp.float32)
    isz_a = jnp.dtype(y0f.dtype).itemsize
    vmem_est = 2 * N * HW * (C4 * isz_a + 3 * 4 * 2)

    # TODO(synk): the batch-global normalize_img gate forces a single block; a
    # per-sample (megacore) grid is only possible for the clip/sigmoid/none tails.
    out = pl.pallas_call(
        _make_tail_kernel(N, C4, is_residual, tail),
        out_shape=jax.ShapeDtypeStruct((N, 3, HW), jnp.float32),
        grid=(1,),
        in_specs=[
            pl.BlockSpec((N, C4, HW), lambda i: (0, 0, 0)),
            pl.BlockSpec((N, 3, HW), lambda i: (0, 0, 0)),
            pl.BlockSpec(memory_space=pltpu.MemorySpace.SMEM),   # 1x1 weight (3, C4)
            pl.BlockSpec(memory_space=pltpu.MemorySpace.SMEM),   # bias (3,)
        ],
        out_specs=pl.BlockSpec((N, 3, HW), lambda i: (0, 0, 0)),
        compiler_params=pltpu.CompilerParams(
            vmem_limit_bytes=int(min(max(2 * vmem_est, 32 << 20), 110 << 20))),
        cost_estimate=pl.CostEstimate(
            flops=2 * N * 3 * C4 * HW + 8 * N * 3 * HW,
            transcendentals=N * 3 * HW,
            bytes_accessed=N * HW * (C4 * isz_a + 3 * 4 * 2)),
    )(y0f, rawf, w1.astype(jnp.float32), b1.astype(jnp.float32))
    return out.reshape(N, 3, H, W)


# ----------------------------------------------------------------------------
# JAX glue (layout plumbing only)
# ----------------------------------------------------------------------------
def maxpool2(x):
    N, C, H, W = x.shape
    return jnp.max(x.reshape(N, C, H // 2, 2, W // 2, 2), axis=(3, 5))


def _interp_matrix(n_in, n_out):
    if n_in == 1:
        return jnp.ones((n_out, 1), jnp.float32)
    src = jnp.arange(n_out, dtype=jnp.float32) * (n_in - 1) / (n_out - 1)
    lo = jnp.clip(jnp.floor(src).astype(jnp.int32), 0, n_in - 2)
    frac = src - lo.astype(jnp.float32)
    M = jnp.zeros((n_out, n_in), jnp.float32)
    M = M.at[jnp.arange(n_out), lo].add(1.0 - frac)
    M = M.at[jnp.arange(n_out), lo + 1].add(frac)
    return M


def upsample_bilinear_2x(x):
    """nn.UpsamplingBilinear2d(scale_factor=2) == bilinear, align_corners=True."""
    N, C, H, W = x.shape
    xf = x.astype(jnp.float32)
    Mh = _interp_matrix(H, 2 * H)
    Mw = _interp_matrix(W, 2 * W)
    y = jnp.einsum('oh,nchw->ncow', Mh, xf)
    y = jnp.einsum('pw,ncow->ncop', Mw, y)
    return y


# ----------------------------------------------------------------------------
# Parameters (deterministic synthetic init) and forward pass
# ----------------------------------------------------------------------------
def init_params(key, basic_channel=8):
    C = basic_channel

    def conv3_init(k, cin, cout):
        k1, k2 = jax.random.split(k)
        w = jax.random.normal(k1, (9, cout, cin), jnp.float32) / jnp.sqrt(9 * cin)
        b = jax.random.normal(k2, (cout,), jnp.float32) * 0.01
        return w, b

    def conv1_init(k, cin, cout):
        k1, k2 = jax.random.split(k)
        w = jax.random.normal(k1, (cout, cin), jnp.float32) / jnp.sqrt(cin)
        b = jax.random.normal(k2, (cout,), jnp.float32) * 0.01
        return w, b

    keys = jax.random.split(key, 10)
    return {
        'e1_conv': conv3_init(keys[0], 3, C),
        'e1_bb':   conv3_init(keys[1], C, C),
        'e2_bb':   conv3_init(keys[2], C, 2 * C),
        'e3_bb':   conv3_init(keys[3], 2 * C, 4 * C),
        'e4_bb':   conv3_init(keys[4], 4 * C, 8 * C),
        'd4':      conv3_init(keys[5], 8 * C, 4 * C),
        'd3':      conv3_init(keys[6], 4 * C, 2 * C),
        'd2':      conv3_init(keys[7], 2 * C, C),
        'd1':      conv3_init(keys[8], C, C // 4),
        'out':     conv1_init(keys[9], C // 4, 3),
    }


def nu2net_forward(raw_img, params, is_residual=True, tail='norm'):
    # raw_img: (N, 3, H, W) — same NCHW layout as the PyTorch reference.
    # ---- Encoder ----
    x1 = conv3x3(raw_img, *params['e1_conv'], mode='none')
    x1 = conv3x3(x1, *params['e1_bb'], mode='in_elu')
    x2 = conv3x3(maxpool2(x1), *params['e2_bb'], mode='in_elu')
    x3 = conv3x3(maxpool2(x2), *params['e3_bb'], mode='in_elu')
    x4 = conv3x3(maxpool2(x3), *params['e4_bb'], mode='in_elu')
    # ---- Decoder (skip-adds fused into the conv kernels) ----
    y3 = upsample_bilinear_2x(conv3x3(x4, *params['d4'], mode='in_elu'))
    y2 = upsample_bilinear_2x(conv3x3(y3, *params['d3'], mode='in_elu', skip=x3))
    y1 = upsample_bilinear_2x(conv3x3(y2, *params['d2'], mode='in_elu', skip=x2))
    y0 = conv3x3(y1, *params['d1'], mode='in_elu', skip=x1)
    # ---- Fused tail: 1x1 conv + tanh + residual + normalize/clip/sigmoid ----
    return output_tail(y0, *params['out'], raw_img, is_residual, tail)


if __name__ == "__main__":
    key = jax.random.PRNGKey(0)
    k_img, k_par = jax.random.split(key)

    # batch=2, 3-channel 16x16 image (NCHW like the torch module), basic_channel=8
    # (spatial must be divisible by 8 for the three 2x pools; C divisible by 4).
    raw_img = jax.random.uniform(k_img, (2, 3, 16, 16), jnp.float32)
    params = init_params(k_par, basic_channel=8)

    fwd = jax.jit(lambda x: nu2net_forward(x, params, is_residual=True, tail='norm'))
    out = fwd(raw_img)
    jax.block_until_ready(out)
    assert out.shape == (2, 3, 16, 16), out.shape
    print("KERNEL_OK")
</pallas_src>

<mosaic_0001>
module attributes {stable_mosaic.version = 11 : i64} {
  func.func @kernel(%arg0: i32, %arg1: memref<1x16x512xbf16, #tpu.memory_space<vmem>>, %arg2: memref<8x144xbf16, #tpu.memory_space<vmem>>, %arg3: memref<8x1xf32, #tpu.memory_space<vmem>>, %arg4: memref<1x8x384xbf16, #tpu.memory_space<vmem>>, %arg5: memref<144x384xbf16, #tpu.memory_space<vmem>>) attributes {dimension_semantics = [#tpu.dimension_semantics<parallel>], iteration_bounds = array<i64: 2>, scalar_prefetch = 0 : i64, scratch_operands = 1 : i64, tpu.core_type = #tpu.core_type<tc>, window_params = [{transform_indices = @transform_0, window_bounds = array<i64: 1, 16, 512>}, {pipeline_mode = #tpu.pipeline_mode<synchronous>, transform_indices = @transform_1, window_bounds = array<i64: 8, 144>}, {pipeline_mode = #tpu.pipeline_mode<synchronous>, transform_indices = @transform_2, window_bounds = array<i64: 8, 1>}, {transform_indices = @transform_3, window_bounds = array<i64: 1, 8, 384>}]} {
    %c0 = arith.constant 0 : index
    %c0_0 = arith.constant 0 : index
    %c0_1 = arith.constant 0 : index
    %0 = vector.load %arg1[%c0, %c0_0, %c0_1] : memref<1x16x512xbf16, #tpu.memory_space<vmem>>, vector<1x16x512xbf16>
    %1 = vector.shape_cast %0 : vector<1x16x512xbf16> to vector<16x512xbf16>
    %2 = arith.extf %1 : vector<16x512xbf16> to vector<16x512xf32>
    %3 = vector.extract_strided_slice %2 {offsets = [0, 0], sizes = [16, 384], strides = [1, 1]} : vector<16x512xf32> to vector<16x384xf32>
    %4 = arith.truncf %3 : vector<16x384xf32> to vector<16x384xbf16>
    %c0_2 = arith.constant 0 : index
    %c0_3 = arith.constant 0 : index
    %5 = vector.load %arg5[%c0_2, %c0_3] : memref<144x384xbf16, #tpu.memory_space<vmem>>, vector<16x384xbf16>
    tpu.vector_store %arg5[%c0_2, %c0_3], %4 {strides = array<i32>} : memref<144x384xbf16, #tpu.memory_space<vmem>>, vector<16x384xbf16>,
    %6 = vector.extract_strided_slice %2 {offsets = [0, 1], sizes = [16, 384], strides = [1, 1]} : vector<16x512xf32> to vector<16x384xf32>
    %7 = arith.truncf %6 : vector<16x384xf32> to vector<16x384xbf16>
    %c16 = arith.constant 16 : index
    %c0_4 = arith.constant 0 : index
    %8 = vector.load %arg5[%c16, %c0_4] : memref<144x384xbf16, #tpu.memory_space<vmem>>, vector<16x384xbf16>
    tpu.vector_store %arg5[%c16, %c0_4], %7 {strides = array<i32>} : memref<144x384xbf16, #tpu.memory_space<vmem>>, vector<16x384xbf16>,
    %9 = vector.extract_strided_slice %2 {offsets = [0, 2], sizes = [16, 384], strides = [1, 1]} : vector<16x512xf32> to vector<16x384xf32>
    %10 = arith.truncf %9 : vector<16x384xf32> to vector<16x384xbf16>
    %c32 = arith.constant 32 : index
    %c0_5 = arith.constant 0 : index
    %11 = vector.load %arg5[%c32, %c0_5] : memref<144x384xbf16, #tpu.memory_space<vmem>>, vector<16x384xbf16>
    tpu.vector_store %arg5[%c32, %c0_5], %10 {strides = array<i32>} : memref<144x384xbf16, #tpu.memory_space<vmem>>, vector<16x384xbf16>,
    %12 = vector.extract_strided_slice %2 {offsets = [0, 18], sizes = [16, 384], strides = [1, 1]} : vector<16x512xf32> to vector<16x384xf32>
    %13 = arith.truncf %12 : vector<16x384xf32> to vector<16x384xbf16>
    %c48 = arith.constant 48 : index
    %c0_6 = arith.constant 0 : index
    %14 = vector.load %arg5[%c48, %c0_6] : memref<144x384xbf16, #tpu.memory_space<vmem>>, vector<16x384xbf16>
    tpu.vector_store %arg5[%c48, %c0_6], %13 {strides = array<i32>} : memref<144x384xbf16, #tpu.memory_space<vmem>>, vector<16x384xbf16>,
    %15 = vector.extract_strided_slice %2 {offsets = [0, 19], sizes = [16, 384], strides = [1, 1]} : vector<16x512xf32> to vector<16x384xf32>
    %16 = arith.truncf %15 : vector<16x384xf32> to vector<16x384xbf16>
    %c64 = arith.constant 64 : index
    %c0_7 = arith.constant 0 : index
    %17 = vector.load %arg5[%c64, %c0_7] : memref<144x384xbf16, #tpu.memory_space<vmem>>, vector<16x384xbf16>
    tpu.vector_store %arg5[%c64, %c0_7], %16 {strides = array<i32>} : memref<144x384xbf16, #tpu.memory_space<vmem>>, vector<16x384xbf16>,
    %18 = vector.extract_strided_slice %2 {offsets = [0, 20], sizes = [16, 384], strides = [1, 1]} : vector<16x512xf32> to vector<16x384xf32>
    %19 = arith.truncf %18 : vector<16x384xf32> to vector<16x384xbf16>
    %c80 = arith.constant 80 : index
    %c0_8 = arith.constant 0 : index
    %20 = vector.load %arg5[%c80, %c0_8] : memref<144x384xbf16, #tpu.memory_space<vmem>>, vector<16x384xbf16>
    tpu.vector_store %arg5[%c80, %c0_8], %19 {strides = array<i32>} : memref<144x384xbf16, #tpu.memory_space<vmem>>, vector<16x384xbf16>,
    %21 = vector.extract_strided_slice %2 {offsets = [0, 36], sizes = [16, 384], strides = [1, 1]} : vector<16x512xf32> to vector<16x384xf32>
    %22 = arith.truncf %21 : vector<16x384xf32> to vector<16x384xbf16>
    %c96 = arith.constant 96 : index
    %c0_9 = arith.constant 0 : index
    %23 = vector.load %arg5[%c96, %c0_9] : memref<144x384xbf16, #tpu.memory_space<vmem>>, vector<16x384xbf16>
    tpu.vector_store %arg5[%c96, %c0_9], %22 {strides = array<i32>} : memref<144x384xbf16, #tpu.memory_space<vmem>>, vector<16x384xbf16>,
    %24 = vector.extract_strided_slice %2 {offsets = [0, 37], sizes = [16, 384], strides = [1, 1]} : vector<16x512xf32> to vector<16x384xf32>
    %25 = arith.truncf %24 : vector<16x384xf32> to vector<16x384xbf16>
    %c112 = arith.constant 112 : index
    %c0_10 = arith.constant 0 : index
    %26 = vector.load %arg5[%c112, %c0_10] : memref<144x384xbf16, #tpu.memory_space<vmem>>, vector<16x384xbf16>
    tpu.vector_store %arg5[%c112, %c0_10], %25 {strides = array<i32>} : memref<144x384xbf16, #tpu.memory_space<vmem>>, vector<16x384xbf16>,
    %27 = vector.extract_strided_slice %2 {offsets = [0, 38], sizes = [16, 384], strides = [1, 1]} : vector<16x512xf32> to vector<16x384xf32>
    %28 = arith.truncf %27 : vector<16x384xf32> to vector<16x384xbf16>
    %c128 = arith.constant 128 : index
    %c0_11 = arith.constant 0 : index
    %29 = vector.load %arg5[%c128, %c0_11] : memref<144x384xbf16, #tpu.memory_space<vmem>>, vector<16x384xbf16>
    tpu.vector_store %arg5[%c128, %c0_11], %28 {strides = array<i32>} : memref<144x384xbf16, #tpu.memory_space<vmem>>, vector<16x384xbf16>,
    %c0_12 = arith.constant 0 : index
    %c0_13 = arith.constant 0 : index
    %30 = vector.load %arg2[%c0_12, %c0_13] : memref<8x144xbf16, #tpu.memory_space<vmem>>, vector<8x144xbf16>
    %c0_14 = arith.constant 0 : index
    %c0_15 = arith.constant 0 : index
    %31 = vector.load %arg5[%c0_14, %c0_15] : memref<144x384xbf16, #tpu.memory_space<vmem>>, vector<144x384xbf16>
    %cst = arith.constant dense<0.000000e+00> : vector<8x384xf32>
    %32 = tpu.matmul %30, %31, %cst {dimension_numbers = #tpu.dot_dimension_numbers<[1], [0], [0], [1], [0, 0, 1, 1], [], []>} : vector<8x144xbf16>, vector<144x384xbf16>, vector<8x384xf32> -> vector<8x384xf32>
    %c0_16 = arith.constant 0 : index
    %c0_17 = arith.constant 0 : index
    %33 = vector.load %arg3[%c0_16, %c0_17] : memref<8x1xf32, #tpu.memory_space<vmem>>, vector<8x1xf32>
    %34 = vector.broadcast %33 : vector<8x1xf32> to vector<8x384xf32>
    %35 = arith.addf %32, %34 : vector<8x384xf32>
    %36 = arith.truncf %35 : vector<8x384xf32> to vector<8x384xbf16>
    %c0_18 = arith.constant 0 : index
    %c0_19 = arith.constant 0 : index
    %c0_20 = arith.constant 0 : index
    %37 = vector.load %arg4[%c0_18, %c0_19, %c0_20] : memref<1x8x384xbf16, #tpu.memory_space<vmem>>, vector<1x8x384xbf16>
    %38 = vector.shape_cast %37 : vector<1x8x384xbf16> to vector<8x384xbf16>
    %39 = vector.shape_cast %36 : vector<8x384xbf16> to vector<1x8x384xbf16>
    tpu.vector_store %arg4[%c0_18, %c0_19, %c0_20], %39 {strides = array<i32>} : memref<1x8x384xbf16, #tpu.memory_space<vmem>>, vector<1x8x384xbf16>,
    return
  }
  func.func @transform_0(%arg0: i32) -> (i32, i32, i32) {
    %c0_i32 = arith.constant 0 : i32
    %c0_i32_0 = arith.constant 0 : i32
    %c0_i32_1 = arith.constant 0 : i32
    return %arg0, %c0_i32, %c0_i32_0 : i32, i32, i32
  }
  func.func @transform_1(%arg0: i32) -> (i32, i32) {
    %c0_i32 = arith.constant 0 : i32
    %c0_i32_0 = arith.constant 0 : i32
    %c0_i32_1 = arith.constant 0 : i32
    return %c0_i32, %c0_i32_0 : i32, i32
  }
  func.func @transform_2(%arg0: i32) -> (i32, i32) {
    %c0_i32 = arith.constant 0 : i32
    %c0_i32_0 = arith.constant 0 : i32
    %c0_i32_1 = arith.constant 0 : i32
    return %c0_i32, %c0_i32_0 : i32, i32
  }
  func.func @transform_3(%arg0: i32) -> (i32, i32, i32) {
    %c0_i32 = arith.constant 0 : i32
    %c0_i32_0 = arith.constant 0 : i32
    %c0_i32_1 = arith.constant 0 : i32
    return %arg0, %c0_i32, %c0_i32_0 : i32, i32, i32
  }
}

module attributes {stable_mosaic.version = 11 : i64} {
  func.func @kernel(%arg0: i32, %arg1: memref<1x16x512xbf16, #tpu.memory_space<vmem>>, %arg2: memref<8x144xbf16, #tpu.memory_space<vmem>>, %arg3: memref<8x1xf32, #tpu.memory_space<vmem>>, %arg4: memref<1x8x384xbf16, #tpu.memory_space<vmem>>, %arg5: memref<144x384xbf16, #tpu.memory_space<vmem>>) attributes {dimension_semantics = [#tpu.dimension_semantics<parallel>], iteration_bounds = array<i64: 2>, scalar_prefetch = 0 : i64, scratch_operands = 1 : i64, tpu.core_type = #tpu.core_type<tc>, window_params = [{transform_indices = @transform_0, window_bounds = array<i64: 1, 16, 512>}, {pipeline_mode = #tpu.pipeline_mode<synchronous>, transform_indices = @transform_1, window_bounds = array<i64: 8, 144>}, {pipeline_mode = #tpu.pipeline_mode<synchronous>, transform_indices = @transform_2, window_bounds = array<i64: 8, 1>}, {transform_indices = @transform_3, window_bounds = array<i64: 1, 8, 384>}]} {
    %c0 = arith.constant 0 : index
    %c0_0 = arith.constant 0 : index
    %c0_1 = arith.constant 0 : index
    %0 = vector.load %arg1[%c0, %c0_0, %c0_1] : memref<1x16x512xbf16, #tpu.memory_space<vmem>>, vector<1x16x512xbf16>
    %1 = vector.shape_cast %0 : vector<1x16x512xbf16> to vector<16x512xbf16>
    %2 = arith.extf %1 : vector<16x512xbf16> to vector<16x512xf32>
    %3 = vector.extract_strided_slice %2 {offsets = [0, 0], sizes = [16, 384], strides = [1, 1]} : vector<16x512xf32> to vector<16x384xf32>
    %4 = arith.truncf %3 : vector<16x384xf32> to vector<16x384xbf16>
    %c0_2 = arith.constant 0 : index
    %c0_3 = arith.constant 0 : index
    %5 = vector.load %arg5[%c0_2, %c0_3] : memref<144x384xbf16, #tpu.memory_space<vmem>>, vector<16x384xbf16>
    tpu.vector_store %arg5[%c0_2, %c0_3], %4 {strides = array<i32>} : memref<144x384xbf16, #tpu.memory_space<vmem>>, vector<16x384xbf16>,
    %6 = vector.extract_strided_slice %2 {offsets = [0, 1], sizes = [16, 384], strides = [1, 1]} : vector<16x512xf32> to vector<16x384xf32>
    %7 = arith.truncf %6 : vector<16x384xf32> to vector<16x384xbf16>
    %c16 = arith.constant 16 : index
    %c0_4 = arith.constant 0 : index
    %8 = vector.load %arg5[%c16, %c0_4] : memref<144x384xbf16, #tpu.memory_space<vmem>>, vector<16x384xbf16>
    tpu.vector_store %arg5[%c16, %c0_4], %7 {strides = array<i32>} : memref<144x384xbf16, #tpu.memory_space<vmem>>, vector<16x384xbf16>,
    %9 = vector.extract_strided_slice %2 {offsets = [0, 2], sizes = [16, 384], strides = [1, 1]} : vector<16x512xf32> to vector<16x384xf32>
    %10 = arith.truncf %9 : vector<16x384xf32> to vector<16x384xbf16>
    %c32 = arith.constant 32 : index
    %c0_5 = arith.constant 0 : index
    %11 = vector.load %arg5[%c32, %c0_5] : memref<144x384xbf16, #tpu.memory_space<vmem>>, vector<16x384xbf16>
    tpu.vector_store %arg5[%c32, %c0_5], %10 {strides = array<i32>} : memref<144x384xbf16, #tpu.memory_space<vmem>>, vector<16x384xbf16>,
    %12 = vector.extract_strided_slice %2 {offsets = [0, 18], sizes = [16, 384], strides = [1, 1]} : vector<16x512xf32> to vector<16x384xf32>
    %13 = arith.truncf %12 : vector<16x384xf32> to vector<16x384xbf16>
    %c48 = arith.constant 48 : index
    %c0_6 = arith.constant 0 : index
    %14 = vector.load %arg5[%c48, %c0_6] : memref<144x384xbf16, #tpu.memory_space<vmem>>, vector<16x384xbf16>
    tpu.vector_store %arg5[%c48, %c0_6], %13 {strides = array<i32>} : memref<144x384xbf16, #tpu.memory_space<vmem>>, vector<16x384xbf16>,
    %15 = vector.extract_strided_slice %2 {offsets = [0, 19], sizes = [16, 384], strides = [1, 1]} : vector<16x512xf32> to vector<16x384xf32>
    %16 = arith.truncf %15 : vector<16x384xf32> to vector<16x384xbf16>
    %c64 = arith.constant 64 : index
    %c0_7 = arith.constant 0 : index
    %17 = vector.load %arg5[%c64, %c0_7] : memref<144x384xbf16, #tpu.memory_space<vmem>>, vector<16x384xbf16>
    tpu.vector_store %arg5[%c64, %c0_7], %16 {strides = array<i32>} : memref<144x384xbf16, #tpu.memory_space<vmem>>, vector<16x384xbf16>,
    %18 = vector.extract_strided_slice %2 {offsets = [0, 20], sizes = [16, 384], strides = [1, 1]} : vector<16x512xf32> to vector<16x384xf32>
    %19 = arith.truncf %18 : vector<16x384xf32> to vector<16x384xbf16>
    %c80 = arith.constant 80 : index
    %c0_8 = arith.constant 0 : index
    %20 = vector.load %arg5[%c80, %c0_8] : memref<144x384xbf16, #tpu.memory_space<vmem>>, vector<16x384xbf16>
    tpu.vector_store %arg5[%c80, %c0_8], %19 {strides = array<i32>} : memref<144x384xbf16, #tpu.memory_space<vmem>>, vector<16x384xbf16>,
    %21 = vector.extract_strided_slice %2 {offsets = [0, 36], sizes = [16, 384], strides = [1, 1]} : vector<16x512xf32> to vector<16x384xf32>
    %22 = arith.truncf %21 : vector<16x384xf32> to vector<16x384xbf16>
    %c96 = arith.constant 96 : index
    %c0_9 = arith.constant 0 : index
    %23 = vector.load %arg5[%c96, %c0_9] : memref<144x384xbf16, #tpu.memory_space<vmem>>, vector<16x384xbf16>
    tpu.vector_store %arg5[%c96, %c0_9], %22 {strides = array<i32>} : memref<144x384xbf16, #tpu.memory_space<vmem>>, vector<16x384xbf16>,
    %24 = vector.extract_strided_slice %2 {offsets = [0, 37], sizes = [16, 384], strides = [1, 1]} : vector<16x512xf32> to vector<16x384xf32>
    %25 = arith.truncf %24 : vector<16x384xf32> to vector<16x384xbf16>
    %c112 = arith.constant 112 : index
    %c0_10 = arith.constant 0 : index
    %26 = vector.load %arg5[%c112, %c0_10] : memref<144x384xbf16, #tpu.memory_space<vmem>>, vector<16x384xbf16>
    tpu.vector_store %arg5[%c112, %c0_10], %25 {strides = array<i32>} : memref<144x384xbf16, #tpu.memory_space<vmem>>, vector<16x384xbf16>,
    %27 = vector.extract_strided_slice %2 {offsets = [0, 38], sizes = [16, 384], strides = [1, 1]} : vector<16x512xf32> to vector<16x384xf32>
    %28 = arith.truncf %27 : vector<16x384xf32> to vector<16x384xbf16>
    %c128 = arith.constant 128 : index
    %c0_11 = arith.constant 0 : index
    %29 = vector.load %arg5[%c128, %c0_11] : memref<144x384xbf16, #tpu.memory_space<vmem>>, vector<16x384xbf16>
    tpu.vector_store %arg5[%c128, %c0_11], %28 {strides = array<i32>} : memref<144x384xbf16, #tpu.memory_space<vmem>>, vector<16x384xbf16>,
    %c0_12 = arith.constant 0 : index
    %c0_13 = arith.constant 0 : index
    %30 = vector.load %arg2[%c0_12, %c0_13] : memref<8x144xbf16, #tpu.memory_space<vmem>>, vector<8x144xbf16>
    %c0_14 = arith.constant 0 : index
    %c0_15 = arith.constant 0 : index
    %31 = vector.load %arg5[%c0_14, %c0_15] : memref<144x384xbf16, #tpu.memory_space<vmem>>, vector<144x384xbf16>
    %cst = arith.constant dense<0.000000e+00> : vector<8x384xf32>
    %32 = tpu.matmul %30, %31, %cst {dimension_numbers = #tpu.dot_dimension_numbers<[1], [0], [0], [1], [0, 0, 1, 1], [], []>} : vector<8x144xbf16>, vector<144x384xbf16>, vector<8x384xf32> -> vector<8x384xf32>
    %c0_16 = arith.constant 0 : index
    %c0_17 = arith.constant 0 : index
    %33 = vector.load %arg3[%c0_16, %c0_17] : memref<8x1xf32, #tpu.memory_space<vmem>>, vector<8x1xf32>
    %34 = vector.broadcast %33 : vector<8x1xf32> to vector<8x384xf32>
    %35 = arith.addf %32, %34 : vector<8x384xf32>
    %36 = tpu.iota {dimensions = array<i32: 1>} : vector<1x384xi32>
    %c18_i32 = arith.constant 18 : i32
    %c0_i32 = arith.constant 0 : i32
    %37 = arith.cmpi eq, %c18_i32, %c0_i32 : i32
    %c1_i32 = arith.constant 1 : i32
    %38 = arith.select %37, %c1_i32, %c18_i32 : i32
    %39 = vector.broadcast %38 : i32 to vector<1x384xi32>
    %40 = arith.remsi %36, %39 : vector<1x384xi32>
    %c0_i32_18 = arith.constant 0 : i32
    %41 = vector.broadcast %c0_i32_18 : i32 to vector<1x384xi32>
    %42 = arith.cmpi ne, %40, %41 : vector<1x384xi32>
    %c0_i32_19 = arith.constant 0 : i32
    %43 = vector.broadcast %c0_i32_19 : i32 to vector<1x384xi32>
    %44 = arith.cmpi slt, %40, %43 : vector<1x384xi32>
    %c0_i32_20 = arith.constant 0 : i32
    %45 = arith.cmpi slt, %38, %c0_i32_20 : i32
    %46 = vector.broadcast %45 : i1 to vector<1x384xi1>
    %47 = vector.broadcast %46 : vector<1x384xi1> to vector<1x384xi1>
    %48 = arith.xori %44, %47 : vector<1x384xi1>
    %49 = arith.andi %48, %42 : vector<1x384xi1>
    %50 = vector.broadcast %38 : i32 to vector<1x384xi32>
    %51 = arith.addi %40, %50 : vector<1x384xi32>
    %52 = arith.select %49, %51, %40 : vector<1x384xi1>, vector<1x384xi32>
    %c16_i32 = arith.constant 16 : i32
    %53 = vector.broadcast %c16_i32 : i32 to vector<1x384xi32>
    %54 = arith.cmpi slt, %52, %53 : vector<1x384xi32>
    %c288_i32 = arith.constant 288 : i32
    %55 = vector.broadcast %c288_i32 : i32 to vector<1x384xi32>
    %56 = arith.cmpi slt, %36, %55 : vector<1x384xi32>
    %57 = arith.andi %54, %56 : vector<1x384xi1>
    %58 = arith.extui %57 : vector<1x384xi1> to vector<1x384xi32>
    %59 = arith.sitofp %58 : vector<1x384xi32> to vector<1x384xf32>
    %60 = vector.broadcast %59 : vector<1x384xf32> to vector<8x384xf32>
    %61 = arith.mulf %35, %60 : vector<8x384xf32>
    %cst_21 = arith.constant dense<0.000000e+00> : vector<8xf32>
    %62 = vector.multi_reduction <add>, %61, %cst_21 [1] : vector<8x384xf32> to vector<8xf32>
    %63 = vector.shape_cast %62 : vector<8xf32> to vector<8x1xf32>
    %cst_22 = arith.constant 3.906250e-03 : f32
    %64 = vector.broadcast %cst_22 : f32 to vector<8x1xf32>
    %65 = arith.mulf %63, %64 : vector<8x1xf32>
    %66 = arith.mulf %35, %35 : vector<8x384xf32>
    %67 = vector.broadcast %59 : vector<1x384xf32> to vector<8x384xf32>
    %68 = arith.mulf %66, %67 : vector<8x384xf32>
    %cst_23 = arith.constant dense<0.000000e+00> : vector<8xf32>
    %69 = vector.multi_reduction <add>, %68, %cst_23 [1] : vector<8x384xf32> to vector<8xf32>
    %70 = vector.shape_cast %69 : vector<8xf32> to vector<8x1xf32>
    %cst_24 = arith.constant 3.906250e-03 : f32
    %71 = vector.broadcast %cst_24 : f32 to vector<8x1xf32>
    %72 = arith.mulf %70, %71 : vector<8x1xf32>
    %73 = arith.mulf %65, %65 : vector<8x1xf32>
    %74 = arith.subf %72, %73 : vector<8x1xf32>
    %cst_25 = arith.constant 0.000000e+00 : f32
    %75 = vector.broadcast %cst_25 : f32 to vector<8x1xf32>
    %76 = arith.maximumf %74, %75 : vector<8x1xf32>
    %77 = vector.broadcast %65 : vector<8x1xf32> to vector<8x384xf32>
    %78 = arith.subf %35, %77 : vector<8x384xf32>
    %cst_26 = arith.constant 9.99999974E-6 : f32
    %79 = vector.broadcast %cst_26 : f32 to vector<8x1xf32>
    %80 = arith.addf %76, %79 : vector<8x1xf32>
    %81 = math.rsqrt %80 : vector<8x1xf32>
    %82 = vector.broadcast %81 : vector<8x1xf32> to vector<8x384xf32>
    %83 = arith.mulf %78, %82 : vector<8x384xf32>
    %cst_27 = arith.constant 0.000000e+00 : f32
    %84 = vector.broadcast %cst_27 : f32 to vector<8x384xf32>
    %85 = arith.cmpf ogt, %83, %84 : vector<8x384xf32>
    %cst_28 = arith.constant 0.000000e+00 : f32
    %86 = vector.broadcast %cst_28 : f32 to vector<8x384xf32>
    %87 = arith.minimumf %83, %86 : vector<8x384xf32>
    %88 = math.exp %87 : vector<8x384xf32>
    %cst_29 = arith.constant 1.000000e+00 : f32
    %89 = vector.broadcast %cst_29 : f32 to vector<8x384xf32>
    %90 = arith.subf %88, %89 : vector<8x384xf32>
    %cst_30 = arith.constant 1.000000e+00 : f32
    %91 = vector.broadcast %cst_30 : f32 to vector<8x384xf32>
    %92 = arith.mulf %91, %90 : vector<8x384xf32>
    %93 = arith.select %85, %83, %92 : vector<8x384xi1>, vector<8x384xf32>
    %94 = arith.truncf %93 : vector<8x384xf32> to vector<8x384xbf16>
    %c0_31 = arith.constant 0 : index
    %c0_32 = arith.constant 0 : index
    %c0_33 = arith.constant 0 : index
    %95 = vector.load %arg4[%c0_31, %c0_32, %c0_33] : memref<1x8x384xbf16, #tpu.memory_space<vmem>>, vector<1x8x384xbf16>
    %96 = vector.shape_cast %95 : vector<1x8x384xbf16> to vector<8x384xbf16>
    %97 = vector.shape_cast %94 : vector<8x384xbf16> to vector<1x8x384xbf16>
    tpu.vector_store %arg4[%c0_31, %c0_32, %c0_33], %97 {strides = array<i32>} : memref<1x8x384xbf16, #tpu.memory_space<vmem>>, vector<1x8x384xbf16>,
    return
  }
  func.func @transform_0(%arg0: i32) -> (i32, i32, i32) {
    %c0_i32 = arith.constant 0 : i32
    %c0_i32_0 = arith.constant 0 : i32
    %c0_i32_1 = arith.constant 0 : i32
    return %arg0, %c0_i32, %c0_i32_0 : i32, i32, i32
  }
  func.func @transform_1(%arg0: i32) -> (i32, i32) {
    %c0_i32 = arith.constant 0 : i32
    %c0_i32_0 = arith.constant 0 : i32
    %c0_i32_1 = arith.constant 0 : i32
    return %c0_i32, %c0_i32_0 : i32, i32
  }
  func.func @transform_2(%arg0: i32) -> (i32, i32) {
    %c0_i32 = arith.constant 0 : i32
    %c0_i32_0 = arith.constant 0 : i32
    %c0_i32_1 = arith.constant 0 : i32
    return %c0_i32, %c0_i32_0 : i32, i32
  }
  func.func @transform_3(%arg0: i32) -> (i32, i32, i32) {
    %c0_i32 = arith.constant 0 : i32
    %c0_i32_0 = arith.constant 0 : i32
    %c0_i32_1 = arith.constant 0 : i32
    return %arg0, %c0_i32, %c0_i32_0 : i32, i32, i32
  }
}

module attributes {stable_mosaic.version = 11 : i64} {
  func.func @kernel(%arg0: i32, %arg1: memref<1x16x256xbf16, #tpu.memory_space<vmem>>, %arg2: memref<16x144xbf16, #tpu.memory_space<vmem>>, %arg3: memref<16x1xf32, #tpu.memory_space<vmem>>, %arg4: memref<1x16x128xbf16, #tpu.memory_space<vmem>>, %arg5: memref<144x128xbf16, #tpu.memory_space<vmem>>) attributes {dimension_semantics = [#tpu.dimension_semantics<parallel>], iteration_bounds = array<i64: 2>, scalar_prefetch = 0 : i64, scratch_operands = 1 : i64, tpu.core_type = #tpu.core_type<tc>, window_params = [{transform_indices = @transform_0, window_bounds = array<i64: 1, 16, 256>}, {pipeline_mode = #tpu.pipeline_mode<synchronous>, transform_indices = @transform_1, window_bounds = array<i64: 16, 144>}, {pipeline_mode = #tpu.pipeline_mode<synchronous>, transform_indices = @transform_2, window_bounds = array<i64: 16, 1>}, {transform_indices = @transform_3, window_bounds = array<i64: 1, 16, 128>}]} {
    %c0 = arith.constant 0 : index
    %c0_0 = arith.constant 0 : index
    %c0_1 = arith.constant 0 : index
    %0 = vector.load %arg1[%c0, %c0_0, %c0_1] : memref<1x16x256xbf16, #tpu.memory_space<vmem>>, vector<1x16x256xbf16>
    %1 = vector.shape_cast %0 : vector<1x16x256xbf16> to vector<16x256xbf16>
    %2 = arith.extf %1 : vector<16x256xbf16> to vector<16x256xf32>
    %3 = vector.extract_strided_slice %2 {offsets = [0, 0], sizes = [16, 128], strides = [1, 1]} : vector<16x256xf32> to vector<16x128xf32>
    %4 = arith.truncf %3 : vector<16x128xf32> to vector<16x128xbf16>
    %c0_2 = arith.constant 0 : index
    %c0_3 = arith.constant 0 : index
    %5 = vector.load %arg5[%c0_2, %c0_3] : memref<144x128xbf16, #tpu.memory_space<vmem>>, vector<16x128xbf16>
    tpu.vector_store %arg5[%c0_2, %c0_3], %4 {strides = array<i32>} : memref<144x128xbf16, #tpu.memory_space<vmem>>, vector<16x128xbf16>,
    %6 = vector.extract_strided_slice %2 {offsets = [0, 1], sizes = [16, 128], strides = [1, 1]} : vector<16x256xf32> to vector<16x128xf32>
    %7 = arith.truncf %6 : vector<16x128xf32> to vector<16x128xbf16>
    %c16 = arith.constant 16 : index
    %c0_4 = arith.constant 0 : index
    %8 = vector.load %arg5[%c16, %c0_4] : memref<144x128xbf16, #tpu.memory_space<vmem>>, vector<16x128xbf16>
    tpu.vector_store %arg5[%c16, %c0_4], %7 {strides = array<i32>} : memref<144x128xbf16, #tpu.memory_space<vmem>>, vector<16x128xbf16>,
    %9 = vector.extract_strided_slice %2 {offsets = [0, 2], sizes = [16, 128], strides = [1, 1]} : vector<16x256xf32> to vector<16x128xf32>
    %10 = arith.truncf %9 : vector<16x128xf32> to vector<16x128xbf16>
    %c32 = arith.constant 32 : index
    %c0_5 = arith.constant 0 : index
    %11 = vector.load %arg5[%c32, %c0_5] : memref<144x128xbf16, #tpu.memory_space<vmem>>, vector<16x128xbf16>
    tpu.vector_store %arg5[%c32, %c0_5], %10 {strides = array<i32>} : memref<144x128xbf16, #tpu.memory_space<vmem>>, vector<16x128xbf16>,
    %12 = vector.extract_strided_slice %2 {offsets = [0, 10], sizes = [16, 128], strides = [1, 1]} : vector<16x256xf32> to vector<16x128xf32>
    %13 = arith.truncf %12 : vector<16x128xf32> to vector<16x128xbf16>
    %c48 = arith.constant 48 : index
    %c0_6 = arith.constant 0 : index
    %14 = vector.load %arg5[%c48, %c0_6] : memref<144x128xbf16, #tpu.memory_space<vmem>>, vector<16x128xbf16>
    tpu.vector_store %arg5[%c48, %c0_6], %13 {strides = array<i32>} : memref<144x128xbf16, #tpu.memory_space<vmem>>, vector<16x128xbf16>,
    %15 = vector.extract_strided_slice %2 {offsets = [0, 11], sizes = [16, 128], strides = [1, 1]} : vector<16x256xf32> to vector<16x128xf32>
    %16 = arith.truncf %15 : vector<16x128xf32> to vector<16x128xbf16>
    %c64 = arith.constant 64 : index
    %c0_7 = arith.constant 0 : index
    %17 = vector.load %arg5[%c64, %c0_7] : memref<144x128xbf16, #tpu.memory_space<vmem>>, vector<16x128xbf16>
    tpu.vector_store %arg5[%c64, %c0_7], %16 {strides = array<i32>} : memref<144x128xbf16, #tpu.memory_space<vmem>>, vector<16x128xbf16>,
    %18 = vector.extract_strided_slice %2 {offsets = [0, 12], sizes = [16, 128], strides = [1, 1]} : vector<16x256xf32> to vector<16x128xf32>
    %19 = arith.truncf %18 : vector<16x128xf32> to vector<16x128xbf16>
    %c80 = arith.constant 80 : index
    %c0_8 = arith.constant 0 : index
    %20 = vector.load %arg5[%c80, %c0_8] : memref<144x128xbf16, #tpu.memory_space<vmem>>, vector<16x128xbf16>
    tpu.vector_store %arg5[%c80, %c0_8], %19 {strides = array<i32>} : memref<144x128xbf16, #tpu.memory_space<vmem>>, vector<16x128xbf16>,
    %21 = vector.extract_strided_slice %2 {offsets = [0, 20], sizes = [16, 128], strides = [1, 1]} : vector<16x256xf32> to vector<16x128xf32>
    %22 = arith.truncf %21 : vector<16x128xf32> to vector<16x128xbf16>
    %c96 = arith.constant 96 : index
    %c0_9 = arith.constant 0 : index
    %23 = vector.load %arg5[%c96, %c0_9] : memref<144x128xbf16, #tpu.memory_space<vmem>>, vector<16x128xbf16>
    tpu.vector_store %arg5[%c96, %c0_9], %22 {strides = array<i32>} : memref<144x128xbf16, #tpu.memory_space<vmem>>, vector<16x128xbf16>,
    %24 = vector.extract_strided_slice %2 {offsets = [0, 21], sizes = [16, 128], strides = [1, 1]} : vector<16x256xf32> to vector<16x128xf32>
    %25 = arith.truncf %24 : vector<16x128xf32> to vector<16x128xbf16>
    %c112 = arith.constant 112 : index
    %c0_10 = arith.constant 0 : index
    %26 = vector.load %arg5[%c112, %c0_10] : memref<144x128xbf16, #tpu.memory_space<vmem>>, vector<16x128xbf16>
    tpu.vector_store %arg5[%c112, %c0_10], %25 {strides = array<i32>} : memref<144x128xbf16, #tpu.memory_space<vmem>>, vector<16x128xbf16>,
    %27 = vector.extract_strided_slice %2 {offsets = [0, 22], sizes = [16, 128], strides = [1, 1]} : vector<16x256xf32> to vector<16x128xf32>
    %28 = arith.truncf %27 : vector<16x128xf32> to vector<16x128xbf16>
    %c128 = arith.constant 128 : index
    %c0_11 = arith.constant 0 : index
    %29 = vector.load %arg5[%c128, %c0_11] : memref<144x128xbf16, #tpu.memory_space<vmem>>, vector<16x128xbf16>
    tpu.vector_store %arg5[%c128, %c0_11], %28 {strides = array<i32>} : memref<144x128xbf16, #tpu.memory_space<vmem>>, vector<16x128xbf16>,
    %c0_12 = arith.constant 0 : index
    %c0_13 = arith.constant 0 : index
    %30 = vector.load %arg2[%c0_12, %c0_13] : memref<16x144xbf16, #tpu.memory_space<vmem>>, vector<16x144xbf16>
    %c0_14 = arith.constant 0 : index
    %c0_15 = arith.constant 0 : index
    %31 = vector.load %arg5[%c0_14, %c0_15] : memref<144x128xbf16, #tpu.memory_space<vmem>>, vector<144x128xbf16>
    %cst = arith.constant dense<0.000000e+00> : vector<16x128xf32>
    %32 = tpu.matmul %30, %31, %cst {dimension_numbers = #tpu.dot_dimension_numbers<[1], [0], [0], [1], [0, 0, 1, 1], [], []>} : vector<16x144xbf16>, vector<144x128xbf16>, vector<16x128xf32> -> vector<16x128xf32>
    %c0_16 = arith.constant 0 : index
    %c0_17 = arith.constant 0 : index
    %33 = vector.load %arg3[%c0_16, %c0_17] : memref<16x1xf32, #tpu.memory_space<vmem>>, vector<16x1xf32>
    %34 = vector.broadcast %33 : vector<16x1xf32> to vector<16x128xf32>
    %35 = arith.addf %32, %34 : vector<16x128xf32>
    %36 = tpu.iota {dimensions = array<i32: 1>} : vector<1x128xi32>
    %c10_i32 = arith.constant 10 : i32
    %c0_i32 = arith.constant 0 : i32
    %37 = arith.cmpi eq, %c10_i32, %c0_i32 : i32
    %c1_i32 = arith.constant 1 : i32
    %38 = arith.select %37, %c1_i32, %c10_i32 : i32
    %39 = vector.broadcast %38 : i32 to vector<1x128xi32>
    %40 = arith.remsi %36, %39 : vector<1x128xi32>
    %c0_i32_18 = arith.constant 0 : i32
    %41 = vector.broadcast %c0_i32_18 : i32 to vector<1x128xi32>
    %42 = arith.cmpi ne, %40, %41 : vector<1x128xi32>
    %c0_i32_19 = arith.constant 0 : i32
    %43 = vector.broadcast %c0_i32_19 : i32 to vector<1x128xi32>
    %44 = arith.cmpi slt, %40, %43 : vector<1x128xi32>
    %c0_i32_20 = arith.constant 0 : i32
    %45 = arith.cmpi slt, %38, %c0_i32_20 : i32
    %46 = vector.broadcast %45 : i1 to vector<1x128xi1>
    %47 = vector.broadcast %46 : vector<1x128xi1> to vector<1x128xi1>
    %48 = arith.xori %44, %47 : vector<1x128xi1>
    %49 = arith.andi %48, %42 : vector<1x128xi1>
    %50 = vector.broadcast %38 : i32 to vector<1x128xi32>
    %51 = arith.addi %40, %50 : vector<1x128xi32>
    %52 = arith.select %49, %51, %40 : vector<1x128xi1>, vector<1x128xi32>
    %c8_i32 = arith.constant 8 : i32
    %53 = vector.broadcast %c8_i32 : i32 to vector<1x128xi32>
    %54 = arith.cmpi slt, %52, %53 : vector<1x128xi32>
    %c80_i32 = arith.constant 80 : i32
    %55 = vector.broadcast %c80_i32 : i32 to vector<1x128xi32>
    %56 = arith.cmpi slt, %36, %55 : vector<1x128xi32>
    %57 = arith.andi %54, %56 : vector<1x128xi1>
    %58 = arith.extui %57 : vector<1x128xi1> to vector<1x128xi32>
    %59 = arith.sitofp %58 : vector<1x128xi32> to vector<1x128xf32>
    %60 = vector.broadcast %59 : vector<1x128xf32> to vector<16x128xf32>
    %61 = arith.mulf %35, %60 : vector<16x128xf32>
    %cst_21 = arith.constant dense<0.000000e+00> : vector<16xf32>
    %62 = vector.multi_reduction <add>, %61, %cst_21 [1] : vector<16x128xf32> to vector<16xf32>
    %63 = vector.shape_cast %62 : vector<16xf32> to vector<16x1xf32>
    %cst_22 = arith.constant 1.562500e-02 : f32
    %64 = vector.broadcast %cst_22 : f32 to vector<16x1xf32>
    %65 = arith.mulf %63, %64 : vector<16x1xf32>
    %66 = arith.mulf %35, %35 : vector<16x128xf32>
    %67 = vector.broadcast %59 : vector<1x128xf32> to vector<16x128xf32>
    %68 = arith.mulf %66, %67 : vector<16x128xf32>
    %cst_23 = arith.constant dense<0.000000e+00> : vector<16xf32>
    %69 = vector.multi_reduction <add>, %68, %cst_23 [1] : vector<16x128xf32> to vector<16xf32>
    %70 = vector.shape_cast %69 : vector<16xf32> to vector<16x1xf32>
    %cst_24 = arith.constant 1.562500e-02 : f32
    %71 = vector.broadcast %cst_24 : f32 to vector<16x1xf32>
    %72 = arith.mulf %70, %71 : vector<16x1xf32>
    %73 = arith.mulf %65, %65 : vector<16x1xf32>
    %74 = arith.subf %72, %73 : vector<16x1xf32>
    %cst_25 = arith.constant 0.000000e+00 : f32
    %75 = vector.broadcast %cst_25 : f32 to vector<16x1xf32>
    %76 = arith.maximumf %74, %75 : vector<16x1xf32>
    %77 = vector.broadcast %65 : vector<16x1xf32> to vector<16x128xf32>
    %78 = arith.subf %35, %77 : vector<16x128xf32>
    %cst_26 = arith.constant 9.99999974E-6 : f32
    %79 = vector.broadcast %cst_26 : f32 to vector<16x1xf32>
    %80 = arith.addf %76, %79 : vector<16x1xf32>
    %81 = math.rsqrt %80 : vector<16x1xf32>
    %82 = vector.broadcast %81 : vector<16x1xf32> to vector<16x128xf32>
    %83 = arith.mulf %78, %82 : vector<16x128xf32>
    %cst_27 = arith.constant 0.000000e+00 : f32
    %84 = vector.broadcast %cst_27 : f32 to vector<16x128xf32>
    %85 = arith.cmpf ogt, %83, %84 : vector<16x128xf32>
    %cst_28 = arith.constant 0.000000e+00 : f32
    %86 = vector.broadcast %cst_28 : f32 to vector<16x128xf32>
    %87 = arith.minimumf %83, %86 : vector<16x128xf32>
    %88 = math.exp %87 : vector<16x128xf32>
    %cst_29 = arith.constant 1.000000e+00 : f32
    %89 = vector.broadcast %cst_29 : f32 to vector<16x128xf32>
    %90 = arith.subf %88, %89 : vector<16x128xf32>
    %cst_30 = arith.constant 1.000000e+00 : f32
    %91 = vector.broadcast %cst_30 : f32 to vector<16x128xf32>
    %92 = arith.mulf %91, %90 : vector<16x128xf32>
    %93 = arith.select %85, %83, %92 : vector<16x128xi1>, vector<16x128xf32>
    %94 = arith.truncf %93 : vector<16x128xf32> to vector<16x128xbf16>
    %c0_31 = arith.constant 0 : index
    %c0_32 = arith.constant 0 : index
    %c0_33 = arith.constant 0 : index
    %95 = vector.load %arg4[%c0_31, %c0_32, %c0_33] : memref<1x16x128xbf16, #tpu.memory_space<vmem>>, vector<1x16x128xbf16>
    %96 = vector.shape_cast %95 : vector<1x16x128xbf16> to vector<16x128xbf16>
    %97 = vector.shape_cast %94 : vector<16x128xbf16> to vector<1x16x128xbf16>
    tpu.vector_store %arg4[%c0_31, %c0_32, %c0_33], %97 {strides = array<i32>} : memref<1x16x128xbf16, #tpu.memory_space<vmem>>, vector<1x16x128xbf16>,
    return
  }
  func.func @transform_0(%arg0: i32) -> (i32, i32, i32) {
    %c0_i32 = arith.constant 0 : i32
    %c0_i32_0 = arith.constant 0 : i32
    %c0_i32_1 = arith.constant 0 : i32
    return %arg0, %c0_i32, %c0_i32_0 : i32, i32, i32
  }
  func.func @transform_1(%arg0: i32) -> (i32, i32) {
    %c0_i32 = arith.constant 0 : i32
    %c0_i32_0 = arith.constant 0 : i32
    %c0_i32_1 = arith.constant 0 : i32
    return %c0_i32, %c0_i32_0 : i32, i32
  }
  func.func @transform_2(%arg0: i32) -> (i32, i32) {
    %c0_i32 = arith.constant 0 : i32
    %c0_i32_0 = arith.constant 0 : i32
    %c0_i32_1 = arith.constant 0 : i32
    return %c0_i32, %c0_i32_0 : i32, i32
  }
  func.func @transform_3(%arg0: i32) -> (i32, i32, i32) {
    %c0_i32 = arith.constant 0 : i32
    %c0_i32_0 = arith.constant 0 : i32
    %c0_i32_1 = arith.constant 0 : i32
    return %arg0, %c0_i32, %c0_i32_0 : i32, i32, i32
  }
}

module attributes {stable_mosaic.version = 11 : i64} {
  func.func @kernel(%arg0: i32, %arg1: memref<1x16x256xbf16, #tpu.memory_space<vmem>>, %arg2: memref<32x144xbf16, #tpu.memory_space<vmem>>, %arg3: memref<32x1xf32, #tpu.memory_space<vmem>>, %arg4: memref<1x32x128xbf16, #tpu.memory_space<vmem>>, %arg5: memref<144x128xbf16, #tpu.memory_space<vmem>>) attributes {dimension_semantics = [#tpu.dimension_semantics<parallel>], iteration_bounds = array<i64: 2>, scalar_prefetch = 0 : i64, scratch_operands = 1 : i64, tpu.core_type = #tpu.core_type<tc>, window_params = [{transform_indices = @transform_0, window_bounds = array<i64: 1, 16, 256>}, {pipeline_mode = #tpu.pipeline_mode<synchronous>, transform_indices = @transform_1, window_bounds = array<i64: 32, 144>}, {pipeline_mode = #tpu.pipeline_mode<synchronous>, transform_indices = @transform_2, window_bounds = array<i64: 32, 1>}, {transform_indices = @transform_3, window_bounds = array<i64: 1, 32, 128>}]} {
    %c0 = arith.constant 0 : index
    %c0_0 = arith.constant 0 : index
    %c0_1 = arith.constant 0 : index
    %0 = vector.load %arg1[%c0, %c0_0, %c0_1] : memref<1x16x256xbf16, #tpu.memory_space<vmem>>, vector<1x16x256xbf16>
    %1 = vector.shape_cast %0 : vector<1x16x256xbf16> to vector<16x256xbf16>
    %2 = arith.extf %1 : vector<16x256xbf16> to vector<16x256xf32>
    %3 = vector.extract_strided_slice %2 {offsets = [0, 0], sizes = [16, 128], strides = [1, 1]} : vector<16x256xf32> to vector<16x128xf32>
    %4 = arith.truncf %3 : vector<16x128xf32> to vector<16x128xbf16>
    %c0_2 = arith.constant 0 : index
    %c0_3 = arith.constant 0 : index
    %5 = vector.load %arg5[%c0_2, %c0_3] : memref<144x128xbf16, #tpu.memory_space<vmem>>, vector<16x128xbf16>
    tpu.vector_store %arg5[%c0_2, %c0_3], %4 {strides = array<i32>} : memref<144x128xbf16, #tpu.memory_space<vmem>>, vector<16x128xbf16>,
    %6 = vector.extract_strided_slice %2 {offsets = [0, 1], sizes = [16, 128], strides = [1, 1]} : vector<16x256xf32> to vector<16x128xf32>
    %7 = arith.truncf %6 : vector<16x128xf32> to vector<16x128xbf16>
    %c16 = arith.constant 16 : index
    %c0_4 = arith.constant 0 : index
    %8 = vector.load %arg5[%c16, %c0_4] : memref<144x128xbf16, #tpu.memory_space<vmem>>, vector<16x128xbf16>
    tpu.vector_store %arg5[%c16, %c0_4], %7 {strides = array<i32>} : memref<144x128xbf16, #tpu.memory_space<vmem>>, vector<16x128xbf16>,
    %9 = vector.extract_strided_slice %2 {offsets = [0, 2], sizes = [16, 128], strides = [1, 1]} : vector<16x256xf32> to vector<16x128xf32>
    %10 = arith.truncf %9 : vector<16x128xf32> to vector<16x128xbf16>
    %c32 = arith.constant 32 : index
    %c0_5 = arith.constant 0 : index
    %11 = vector.load %arg5[%c32, %c0_5] : memref<144x128xbf16, #tpu.memory_space<vmem>>, vector<16x128xbf16>
    tpu.vector_store %arg5[%c32, %c0_5], %10 {strides = array<i32>} : memref<144x128xbf16, #tpu.memory_space<vmem>>, vector<16x128xbf16>,
    %12 = vector.extract_strided_slice %2 {offsets = [0, 6], sizes = [16, 128], strides = [1, 1]} : vector<16x256xf32> to vector<16x128xf32>
    %13 = arith.truncf %12 : vector<16x128xf32> to vector<16x128xbf16>
    %c48 = arith.constant 48 : index
    %c0_6 = arith.constant 0 : index
    %14 = vector.load %arg5[%c48, %c0_6] : memref<144x128xbf16, #tpu.memory_space<vmem>>, vector<16x128xbf16>
    tpu.vector_store %arg5[%c48, %c0_6], %13 {strides = array<i32>} : memref<144x128xbf16, #tpu.memory_space<vmem>>, vector<16x128xbf16>,
    %15 = vector.extract_strided_slice %2 {offsets = [0, 7], sizes = [16, 128], strides = [1, 1]} : vector<16x256xf32> to vector<16x128xf32>
    %16 = arith.truncf %15 : vector<16x128xf32> to vector<16x128xbf16>
    %c64 = arith.constant 64 : index
    %c0_7 = arith.constant 0 : index
    %17 = vector.load %arg5[%c64, %c0_7] : memref<144x128xbf16, #tpu.memory_space<vmem>>, vector<16x128xbf16>
    tpu.vector_store %arg5[%c64, %c0_7], %16 {strides = array<i32>} : memref<144x128xbf16, #tpu.memory_space<vmem>>, vector<16x128xbf16>,
    %18 = vector.extract_strided_slice %2 {offsets = [0, 8], sizes = [16, 128], strides = [1, 1]} : vector<16x256xf32> to vector<16x128xf32>
    %19 = arith.truncf %18 : vector<16x128xf32> to vector<16x128xbf16>
    %c80 = arith.constant 80 : index
    %c0_8 = arith.constant 0 : index
    %20 = vector.load %arg5[%c80, %c0_8] : memref<144x128xbf16, #tpu.memory_space<vmem>>, vector<16x128xbf16>
    tpu.vector_store %arg5[%c80, %c0_8], %19 {strides = array<i32>} : memref<144x128xbf16, #tpu.memory_space<vmem>>, vector<16x128xbf16>,
    %21 = vector.extract_strided_slice %2 {offsets = [0, 12], sizes = [16, 128], strides = [1, 1]} : vector<16x256xf32> to vector<16x128xf32>
    %22 = arith.truncf %21 : vector<16x128xf32> to vector<16x128xbf16>
    %c96 = arith.constant 96 : index
    %c0_9 = arith.constant 0 : index
    %23 = vector.load %arg5[%c96, %c0_9] : memref<144x128xbf16, #tpu.memory_space<vmem>>, vector<16x128xbf16>
    tpu.vector_store %arg5[%c96, %c0_9], %22 {strides = array<i32>} : memref<144x128xbf16, #tpu.memory_space<vmem>>, vector<16x128xbf16>,
    %24 = vector.extract_strided_slice %2 {offsets = [0, 13], sizes = [16, 128], strides = [1, 1]} : vector<16x256xf32> to vector<16x128xf32>
    %25 = arith.truncf %24 : vector<16x128xf32> to vector<16x128xbf16>
    %c112 = arith.constant 112 : index
    %c0_10 = arith.constant 0 : index
    %26 = vector.load %arg5[%c112, %c0_10] : memref<144x128xbf16, #tpu.memory_space<vmem>>, vector<16x128xbf16>
    tpu.vector_store %arg5[%c112, %c0_10], %25 {strides = array<i32>} : memref<144x128xbf16, #tpu.memory_space<vmem>>, vector<16x128xbf16>,
    %27 = vector.extract_strided_slice %2 {offsets = [0, 14], sizes = [16, 128], strides = [1, 1]} : vector<16x256xf32> to vector<16x128xf32>
    %28 = arith.truncf %27 : vector<16x128xf32> to vector<16x128xbf16>
    %c128 = arith.constant 128 : index
    %c0_11 = arith.constant 0 : index
    %29 = vector.load %arg5[%c128, %c0_11] : memref<144x128xbf16, #tpu.memory_space<vmem>>, vector<16x128xbf16>
    tpu.vector_store %arg5[%c128, %c0_11], %28 {strides = array<i32>} : memref<144x128xbf16, #tpu.memory_space<vmem>>, vector<16x128xbf16>,
    %c0_12 = arith.constant 0 : index
    %c0_13 = arith.constant 0 : index
    %30 = vector.load %arg2[%c0_12, %c0_13] : memref<32x144xbf16, #tpu.memory_space<vmem>>, vector<32x144xbf16>
    %c0_14 = arith.constant 0 : index
    %c0_15 = arith.constant 0 : index
    %31 = vector.load %arg5[%c0_14, %c0_15] : memref<144x128xbf16, #tpu.memory_space<vmem>>, vector<144x128xbf16>
    %cst = arith.constant dense<0.000000e+00> : vector<32x128xf32>
    %32 = tpu.matmul %30, %31, %cst {dimension_numbers = #tpu.dot_dimension_numbers<[1], [0], [0], [1], [0, 0, 1, 1], [], []>} : vector<32x144xbf16>, vector<144x128xbf16>, vector<32x128xf32> -> vector<32x128xf32>
    %c0_16 = arith.constant 0 : index
    %c0_17 = arith.constant 0 : index
    %33 = vector.load %arg3[%c0_16, %c0_17] : memref<32x1xf32, #tpu.memory_space<vmem>>, vector<32x1xf32>
    %34 = vector.broadcast %33 : vector<32x1xf32> to vector<32x128xf32>
    %35 = arith.addf %32, %34 : vector<32x128xf32>
    %36 = tpu.iota {dimensions = array<i32: 1>} : vector<1x128xi32>
    %c6_i32 = arith.constant 6 : i32
    %c0_i32 = arith.constant 0 : i32
    %37 = arith.cmpi eq, %c6_i32, %c0_i32 : i32
    %c1_i32 = arith.constant 1 : i32
    %38 = arith.select %37, %c1_i32, %c6_i32 : i32
    %39 = vector.broadcast %38 : i32 to vector<1x128xi32>
    %40 = arith.remsi %36, %39 : vector<1x128xi32>
    %c0_i32_18 = arith.constant 0 : i32
    %41 = vector.broadcast %c0_i32_18 : i32 to vector<1x128xi32>
    %42 = arith.cmpi ne, %40, %41 : vector<1x128xi32>
    %c0_i32_19 = arith.constant 0 : i32
    %43 = vector.broadcast %c0_i32_19 : i32 to vector<1x128xi32>
    %44 = arith.cmpi slt, %40, %43 : vector<1x128xi32>
    %c0_i32_20 = arith.constant 0 : i32
    %45 = arith.cmpi slt, %38, %c0_i32_20 : i32
    %46 = vector.broadcast %45 : i1 to vector<1x128xi1>
    %47 = vector.broadcast %46 : vector<1x128xi1> to vector<1x128xi1>
    %48 = arith.xori %44, %47 : vector<1x128xi1>
    %49 = arith.andi %48, %42 : vector<1x128xi1>
    %50 = vector.broadcast %38 : i32 to vector<1x128xi32>
    %51 = arith.addi %40, %50 : vector<1x128xi32>
    %52 = arith.select %49, %51, %40 : vector<1x128xi1>, vector<1x128xi32>
    %c4_i32 = arith.constant 4 : i32
    %53 = vector.broadcast %c4_i32 : i32 to vector<1x128xi32>
    %54 = arith.cmpi slt, %52, %53 : vector<1x128xi32>
    %c24_i32 = arith.constant 24 : i32
    %55 = vector.broadcast %c24_i32 : i32 to vector<1x128xi32>
    %56 = arith.cmpi slt, %36, %55 : vector<1x128xi32>
    %57 = arith.andi %54, %56 : vector<1x128xi1>
    %58 = arith.extui %57 : vector<1x128xi1> to vector<1x128xi32>
    %59 = arith.sitofp %58 : vector<1x128xi32> to vector<1x128xf32>
    %60 = vector.broadcast %59 : vector<1x128xf32> to vector<32x128xf32>
    %61 = arith.mulf %35, %60 : vector<32x128xf32>
    %cst_21 = arith.constant dense<0.000000e+00> : vector<32xf32>
    %62 = vector.multi_reduction <add>, %61, %cst_21 [1] : vector<32x128xf32> to vector<32xf32>
    %63 = vector.shape_cast %62 : vector<32xf32> to vector<32x1xf32>
    %cst_22 = arith.constant 6.250000e-02 : f32
    %64 = vector.broadcast %cst_22 : f32 to vector<32x1xf32>
    %65 = arith.mulf %63, %64 : vector<32x1xf32>
    %66 = arith.mulf %35, %35 : vector<32x128xf32>
    %67 = vector.broadcast %59 : vector<1x128xf32> to vector<32x128xf32>
    %68 = arith.mulf %66, %67 : vector<32x128xf32>
    %cst_23 = arith.constant dense<0.000000e+00> : vector<32xf32>
    %69 = vector.multi_reduction <add>, %68, %cst_23 [1] : vector<32x128xf32> to vector<32xf32>
    %70 = vector.shape_cast %69 : vector<32xf32> to vector<32x1xf32>
    %cst_24 = arith.constant 6.250000e-02 : f32
    %71 = vector.broadcast %cst_24 : f32 to vector<32x1xf32>
    %72 = arith.mulf %70, %71 : vector<32x1xf32>
    %73 = arith.mulf %65, %65 : vector<32x1xf32>
    %74 = arith.subf %72, %73 : vector<32x1xf32>
    %cst_25 = arith.constant 0.000000e+00 : f32
    %75 = vector.broadcast %cst_25 : f32 to vector<32x1xf32>
    %76 = arith.maximumf %74, %75 : vector<32x1xf32>
    %77 = vector.broadcast %65 : vector<32x1xf32> to vector<32x128xf32>
    %78 = arith.subf %35, %77 : vector<32x128xf32>
    %cst_26 = arith.constant 9.99999974E-6 : f32
    %79 = vector.broadcast %cst_26 : f32 to vector<32x1xf32>
    %80 = arith.addf %76, %79 : vector<32x1xf32>
    %81 = math.rsqrt %80 : vector<32x1xf32>
    %82 = vector.broadcast %81 : vector<32x1xf32> to vector<32x128xf32>
    %83 = arith.mulf %78, %82 : vector<32x128xf32>
    %cst_27 = arith.constant 0.000000e+00 : f32
    %84 = vector.broadcast %cst_27 : f32 to vector<32x128xf32>
    %85 = arith.cmpf ogt, %83, %84 : vector<32x128xf32>
    %cst_28 = arith.constant 0.000000e+00 : f32
    %86 = vector.broadcast %cst_28 : f32 to vector<32x128xf32>
    %87 = arith.minimumf %83, %86 : vector<32x128xf32>
    %88 = math.exp %87 : vector<32x128xf32>
    %cst_29 = arith.constant 1.000000e+00 : f32
    %89 = vector.broadcast %cst_29 : f32 to vector<32x128xf32>
    %90 = arith.subf %88, %89 : vector<32x128xf32>
    %cst_30 = arith.constant 1.000000e+00 : f32
    %91 = vector.broadcast %cst_30 : f32 to vector<32x128xf32>
    %92 = arith.mulf %91, %90 : vector<32x128xf32>
    %93 = arith.select %85, %83, %92 : vector<32x128xi1>, vector<32x128xf32>
    %94 = arith.truncf %93 : vector<32x128xf32> to vector<32x128xbf16>
    %c0_31 = arith.constant 0 : index
    %c0_32 = arith.constant 0 : index
    %c0_33 = arith.constant 0 : index
    %95 = vector.load %arg4[%c0_31, %c0_32, %c0_33] : memref<1x32x128xbf16, #tpu.memory_space<vmem>>, vector<1x32x128xbf16>
    %96 = vector.shape_cast %95 : vector<1x32x128xbf16> to vector<32x128xbf16>
    %97 = vector.shape_cast %94 : vector<32x128xbf16> to vector<1x32x128xbf16>
    tpu.vector_store %arg4[%c0_31, %c0_32, %c0_33], %97 {strides = array<i32>} : memref<1x32x128xbf16, #tpu.memory_space<vmem>>, vector<1x32x128xbf16>,
    return
  }
  func.func @transform_0(%arg0: i32) -> (i32, i32, i32) {
    %c0_i32 = arith.constant 0 : i32
    %c0_i32_0 = arith.constant 0 : i32
    %c0_i32_1 = arith.constant 0 : i32
    return %arg0, %c0_i32, %c0_i32_0 : i32, i32, i32
  }
  func.func @transform_1(%arg0: i32) -> (i32, i32) {
    %c0_i32 = arith.constant 0 : i32
    %c0_i32_0 = arith.constant 0 : i32
    %c0_i32_1 = arith.constant 0 : i32
    return %c0_i32, %c0_i32_0 : i32, i32
  }
  func.func @transform_2(%arg0: i32) -> (i32, i32) {
    %c0_i32 = arith.constant 0 : i32
    %c0_i32_0 = arith.constant 0 : i32
    %c0_i32_1 = arith.constant 0 : i32
    return %c0_i32, %c0_i32_0 : i32, i32
  }
  func.func @transform_3(%arg0: i32) -> (i32, i32, i32) {
    %c0_i32 = arith.constant 0 : i32
    %c0_i32_0 = arith.constant 0 : i32
    %c0_i32_1 = arith.constant 0 : i32
    return %arg0, %c0_i32, %c0_i32_0 : i32, i32, i32
  }
}

module attributes {stable_mosaic.version = 11 : i64} {
  func.func @kernel(%arg0: i32, %arg1: memref<1x32x256xbf16, #tpu.memory_space<vmem>>, %arg2: memref<64x288xbf16, #tpu.memory_space<vmem>>, %arg3: memref<64x1xf32, #tpu.memory_space<vmem>>, %arg4: memref<1x64x128xbf16, #tpu.memory_space<vmem>>, %arg5: memref<288x128xbf16, #tpu.memory_space<vmem>>) attributes {dimension_semantics = [#tpu.dimension_semantics<parallel>], iteration_bounds = array<i64: 2>, scalar_prefetch = 0 : i64, scratch_operands = 1 : i64, tpu.core_type = #tpu.core_type<tc>, window_params = [{transform_indices = @transform_0, window_bounds = array<i64: 1, 32, 256>}, {pipeline_mode = #tpu.pipeline_mode<synchronous>, transform_indices = @transform_1, window_bounds = array<i64: 64, 288>}, {pipeline_mode = #tpu.pipeline_mode<synchronous>, transform_indices = @transform_2, window_bounds = array<i64: 64, 1>}, {transform_indices = @transform_3, window_bounds = array<i64: 1, 64, 128>}]} {
    %c0 = arith.constant 0 : index
    %c0_0 = arith.constant 0 : index
    %c0_1 = arith.constant 0 : index
    %0 = vector.load %arg1[%c0, %c0_0, %c0_1] : memref<1x32x256xbf16, #tpu.memory_space<vmem>>, vector<1x32x256xbf16>
    %1 = vector.shape_cast %0 : vector<1x32x256xbf16> to vector<32x256xbf16>
    %2 = arith.extf %1 : vector<32x256xbf16> to vector<32x256xf32>
    %3 = vector.extract_strided_slice %2 {offsets = [0, 0], sizes = [32, 128], strides = [1, 1]} : vector<32x256xf32> to vector<32x128xf32>
    %4 = arith.truncf %3 : vector<32x128xf32> to vector<32x128xbf16>
    %c0_2 = arith.constant 0 : index
    %c0_3 = arith.constant 0 : index
    %5 = vector.load %arg5[%c0_2, %c0_3] : memref<288x128xbf16, #tpu.memory_space<vmem>>, vector<32x128xbf16>
    tpu.vector_store %arg5[%c0_2, %c0_3], %4 {strides = array<i32>} : memref<288x128xbf16, #tpu.memory_space<vmem>>, vector<32x128xbf16>,
    %6 = vector.extract_strided_slice %2 {offsets = [0, 1], sizes = [32, 128], strides = [1, 1]} : vector<32x256xf32> to vector<32x128xf32>
    %7 = arith.truncf %6 : vector<32x128xf32> to vector<32x128xbf16>
    %c32 = arith.constant 32 : index
    %c0_4 = arith.constant 0 : index
    %8 = vector.load %arg5[%c32, %c0_4] : memref<288x128xbf16, #tpu.memory_space<vmem>>, vector<32x128xbf16>
    tpu.vector_store %arg5[%c32, %c0_4], %7 {strides = array<i32>} : memref<288x128xbf16, #tpu.memory_space<vmem>>, vector<32x128xbf16>,
    %9 = vector.extract_strided_slice %2 {offsets = [0, 2], sizes = [32, 128], strides = [1, 1]} : vector<32x256xf32> to vector<32x128xf32>
    %10 = arith.truncf %9 : vector<32x128xf32> to vector<32x128xbf16>
    %c64 = arith.constant 64 : index
    %c0_5 = arith.constant 0 : index
    %11 = vector.load %arg5[%c64, %c0_5] : memref<288x128xbf16, #tpu.memory_space<vmem>>, vector<32x128xbf16>
    tpu.vector_store %arg5[%c64, %c0_5], %10 {strides = array<i32>} : memref<288x128xbf16, #tpu.memory_space<vmem>>, vector<32x128xbf16>,
    %12 = vector.extract_strided_slice %2 {offsets = [0, 4], sizes = [32, 128], strides = [1, 1]} : vector<32x256xf32> to vector<32x128xf32>
    %13 = arith.truncf %12 : vector<32x128xf32> to vector<32x128xbf16>
    %c96 = arith.constant 96 : index
    %c0_6 = arith.constant 0 : index
    %14 = vector.load %arg5[%c96, %c0_6] : memref<288x128xbf16, #tpu.memory_space<vmem>>, vector<32x128xbf16>
    tpu.vector_store %arg5[%c96, %c0_6], %13 {strides = array<i32>} : memref<288x128xbf16, #tpu.memory_space<vmem>>, vector<32x128xbf16>,
    %15 = vector.extract_strided_slice %2 {offsets = [0, 5], sizes = [32, 128], strides = [1, 1]} : vector<32x256xf32> to vector<32x128xf32>
    %16 = arith.truncf %15 : vector<32x128xf32> to vector<32x128xbf16>
    %c128 = arith.constant 128 : index
    %c0_7 = arith.constant 0 : index
    %17 = vector.load %arg5[%c128, %c0_7] : memref<288x128xbf16, #tpu.memory_space<vmem>>, vector<32x128xbf16>
    tpu.vector_store %arg5[%c128, %c0_7], %16 {strides = array<i32>} : memref<288x128xbf16, #tpu.memory_space<vmem>>, vector<32x128xbf16>,
    %18 = vector.extract_strided_slice %2 {offsets = [0, 6], sizes = [32, 128], strides = [1, 1]} : vector<32x256xf32> to vector<32x128xf32>
    %19 = arith.truncf %18 : vector<32x128xf32> to vector<32x128xbf16>
    %c160 = arith.constant 160 : index
    %c0_8 = arith.constant 0 : index
    %20 = vector.load %arg5[%c160, %c0_8] : memref<288x128xbf16, #tpu.memory_space<vmem>>, vector<32x128xbf16>
    tpu.vector_store %arg5[%c160, %c0_8], %19 {strides = array<i32>} : memref<288x128xbf16, #tpu.memory_space<vmem>>, vector<32x128xbf16>,
    %21 = vector.extract_strided_slice %2 {offsets = [0, 8], sizes = [32, 128], strides = [1, 1]} : vector<32x256xf32> to vector<32x128xf32>
    %22 = arith.truncf %21 : vector<32x128xf32> to vector<32x128xbf16>
    %c192 = arith.constant 192 : index
    %c0_9 = arith.constant 0 : index
    %23 = vector.load %arg5[%c192, %c0_9] : memref<288x128xbf16, #tpu.memory_space<vmem>>, vector<32x128xbf16>
    tpu.vector_store %arg5[%c192, %c0_9], %22 {strides = array<i32>} : memref<288x128xbf16, #tpu.memory_space<vmem>>, vector<32x128xbf16>,
    %24 = vector.extract_strided_slice %2 {offsets = [0, 9], sizes = [32, 128], strides = [1, 1]} : vector<32x256xf32> to vector<32x128xf32>
    %25 = arith.truncf %24 : vector<32x128xf32> to vector<32x128xbf16>
    %c224 = arith.constant 224 : index
    %c0_10 = arith.constant 0 : index
    %26 = vector.load %arg5[%c224, %c0_10] : memref<288x128xbf16, #tpu.memory_space<vmem>>, vector<32x128xbf16>
    tpu.vector_store %arg5[%c224, %c0_10], %25 {strides = array<i32>} : memref<288x128xbf16, #tpu.memory_space<vmem>>, vector<32x128xbf16>,
    %27 = vector.extract_strided_slice %2 {offsets = [0, 10], sizes = [32, 128], strides = [1, 1]} : vector<32x256xf32> to vector<32x128xf32>
    %28 = arith.truncf %27 : vector<32x128xf32> to vector<32x128xbf16>
    %c256 = arith.constant 256 : index
    %c0_11 = arith.constant 0 : index
    %29 = vector.load %arg5[%c256, %c0_11] : memref<288x128xbf16, #tpu.memory_space<vmem>>, vector<32x128xbf16>
    tpu.vector_store %arg5[%c256, %c0_11], %28 {strides = array<i32>} : memref<288x128xbf16, #tpu.memory_space<vmem>>, vector<32x128xbf16>,
    %c0_12 = arith.constant 0 : index
    %c0_13 = arith.constant 0 : index
    %30 = vector.load %arg2[%c0_12, %c0_13] : memref<64x288xbf16, #tpu.memory_space<vmem>>, vector<64x288xbf16>
    %c0_14 = arith.constant 0 : index
    %c0_15 = arith.constant 0 : index
    %31 = vector.load %arg5[%c0_14, %c0_15] : memref<288x128xbf16, #tpu.memory_space<vmem>>, vector<288x128xbf16>
    %cst = arith.constant dense<0.000000e+00> : vector<64x128xf32>
    %32 = tpu.matmul %30, %31, %cst {dimension_numbers = #tpu.dot_dimension_numbers<[1], [0], [0], [1], [0, 0, 1, 1], [], []>} : vector<64x288xbf16>, vector<288x128xbf16>, vector<64x128xf32> -> vector<64x128xf32>
    %c0_16 = arith.constant 0 : index
    %c0_17 = arith.constant 0 : index
    %33 = vector.load %arg3[%c0_16, %c0_17] : memref<64x1xf32, #tpu.memory_space<vmem>>, vector<64x1xf32>
    %34 = vector.broadcast %33 : vector<64x1xf32> to vector<64x128xf32>
    %35 = arith.addf %32, %34 : vector<64x128xf32>
    %36 = tpu.iota {dimensions = array<i32: 1>} : vector<1x128xi32>
    %c4_i32 = arith.constant 4 : i32
    %c0_i32 = arith.constant 0 : i32
    %37 = arith.cmpi eq, %c4_i32, %c0_i32 : i32
    %c1_i32 = arith.constant 1 : i32
    %38 = arith.select %37, %c1_i32, %c4_i32 : i32
    %39 = vector.broadcast %38 : i32 to vector<1x128xi32>
    %40 = arith.remsi %36, %39 : vector<1x128xi32>
    %c0_i32_18 = arith.constant 0 : i32
    %41 = vector.broadcast %c0_i32_18 : i32 to vector<1x128xi32>
    %42 = arith.cmpi ne, %40, %41 : vector<1x128xi32>
    %c0_i32_19 = arith.constant 0 : i32
    %43 = vector.broadcast %c0_i32_19 : i32 to vector<1x128xi32>
    %44 = arith.cmpi slt, %40, %43 : vector<1x128xi32>
    %c0_i32_20 = arith.constant 0 : i32
    %45 = arith.cmpi slt, %38, %c0_i32_20 : i32
    %46 = vector.broadcast %45 : i1 to vector<1x128xi1>
    %47 = vector.broadcast %46 : vector<1x128xi1> to vector<1x128xi1>
    %48 = arith.xori %44, %47 : vector<1x128xi1>
    %49 = arith.andi %48, %42 : vector<1x128xi1>
    %50 = vector.broadcast %38 : i32 to vector<1x128xi32>
    %51 = arith.addi %40, %50 : vector<1x128xi32>
    %52 = arith.select %49, %51, %40 : vector<1x128xi1>, vector<1x128xi32>
    %c2_i32 = arith.constant 2 : i32
    %53 = vector.broadcast %c2_i32 : i32 to vector<1x128xi32>
    %54 = arith.cmpi slt, %52, %53 : vector<1x128xi32>
    %c8_i32 = arith.constant 8 : i32
    %55 = vector.broadcast %c8_i32 : i32 to vector<1x128xi32>
    %56 = arith.cmpi slt, %36, %55 : vector<1x128xi32>
    %57 = arith.andi %54, %56 : vector<1x128xi1>
    %58 = arith.extui %57 : vector<1x128xi1> to vector<1x128xi32>
    %59 = arith.sitofp %58 : vector<1x128xi32> to vector<1x128xf32>
    %60 = vector.broadcast %59 : vector<1x128xf32> to vector<64x128xf32>
    %61 = arith.mulf %35, %60 : vector<64x128xf32>
    %cst_21 = arith.constant dense<0.000000e+00> : vector<64xf32>
    %62 = vector.multi_reduction <add>, %61, %cst_21 [1] : vector<64x128xf32> to vector<64xf32>
    %63 = vector.shape_cast %62 : vector<64xf32> to vector<64x1xf32>
    %cst_22 = arith.constant 2.500000e-01 : f32
    %64 = vector.broadcast %cst_22 : f32 to vector<64x1xf32>
    %65 = arith.mulf %63, %64 : vector<64x1xf32>
    %66 = arith.mulf %35, %35 : vector<64x128xf32>
    %67 = vector.broadcast %59 : vector<1x128xf32> to vector<64x128xf32>
    %68 = arith.mulf %66, %67 : vector<64x128xf32>
    %cst_23 = arith.constant dense<0.000000e+00> : vector<64xf32>
    %69 = vector.multi_reduction <add>, %68, %cst_23 [1] : vector<64x128xf32> to vector<64xf32>
    %70 = vector.shape_cast %69 : vector<64xf32> to vector<64x1xf32>
    %cst_24 = arith.constant 2.500000e-01 : f32
    %71 = vector.broadcast %cst_24 : f32 to vector<64x1xf32>
    %72 = arith.mulf %70, %71 : vector<64x1xf32>
    %73 = arith.mulf %65, %65 : vector<64x1xf32>
    %74 = arith.subf %72, %73 : vector<64x1xf32>
    %cst_25 = arith.constant 0.000000e+00 : f32
    %75 = vector.broadcast %cst_25 : f32 to vector<64x1xf32>
    %76 = arith.maximumf %74, %75 : vector<64x1xf32>
    %77 = vector.broadcast %65 : vector<64x1xf32> to vector<64x128xf32>
    %78 = arith.subf %35, %77 : vector<64x128xf32>
    %cst_26 = arith.constant 9.99999974E-6 : f32
    %79 = vector.broadcast %cst_26 : f32 to vector<64x1xf32>
    %80 = arith.addf %76, %79 : vector<64x1xf32>
    %81 = math.rsqrt %80 : vector<64x1xf32>
    %82 = vector.broadcast %81 : vector<64x1xf32> to vector<64x128xf32>
    %83 = arith.mulf %78, %82 : vector<64x128xf32>
    %cst_27 = arith.constant 0.000000e+00 : f32
    %84 = vector.broadcast %cst_27 : f32 to vector<64x128xf32>
    %85 = arith.cmpf ogt, %83, %84 : vector<64x128xf32>
    %cst_28 = arith.constant 0.000000e+00 : f32
    %86 = vector.broadcast %cst_28 : f32 to vector<64x128xf32>
    %87 = arith.minimumf %83, %86 : vector<64x128xf32>
    %88 = math.exp %87 : vector<64x128xf32>
    %cst_29 = arith.constant 1.000000e+00 : f32
    %89 = vector.broadcast %cst_29 : f32 to vector<64x128xf32>
    %90 = arith.subf %88, %89 : vector<64x128xf32>
    %cst_30 = arith.constant 1.000000e+00 : f32
    %91 = vector.broadcast %cst_30 : f32 to vector<64x128xf32>
    %92 = arith.mulf %91, %90 : vector<64x128xf32>
    %93 = arith.select %85, %83, %92 : vector<64x128xi1>, vector<64x128xf32>
    %94 = arith.truncf %93 : vector<64x128xf32> to vector<64x128xbf16>
    %c0_31 = arith.constant 0 : index
    %c0_32 = arith.constant 0 : index
    %c0_33 = arith.constant 0 : index
    %95 = vector.load %arg4[%c0_31, %c0_32, %c0_33] : memref<1x64x128xbf16, #tpu.memory_space<vmem>>, vector<1x64x128xbf16>
    %96 = vector.shape_cast %95 : vector<1x64x128xbf16> to vector<64x128xbf16>
    %97 = vector.shape_cast %94 : vector<64x128xbf16> to vector<1x64x128xbf16>
    tpu.vector_store %arg4[%c0_31, %c0_32, %c0_33], %97 {strides = array<i32>} : memref<1x64x128xbf16, #tpu.memory_space<vmem>>, vector<1x64x128xbf16>,
    return
  }
  func.func @transform_0(%arg0: i32) -> (i32, i32, i32) {
    %c0_i32 = arith.constant 0 : i32
    %c0_i32_0 = arith.constant 0 : i32
    %c0_i32_1 = arith.constant 0 : i32
    return %arg0, %c0_i32, %c0_i32_0 : i32, i32, i32
  }
  func.func @transform_1(%arg0: i32) -> (i32, i32) {
    %c0_i32 = arith.constant 0 : i32
    %c0_i32_0 = arith.constant 0 : i32
    %c0_i32_1 = arith.constant 0 : i32
    return %c0_i32, %c0_i32_0 : i32, i32
  }
  func.func @transform_2(%arg0: i32) -> (i32, i32) {
    %c0_i32 = arith.constant 0 : i32
    %c0_i32_0 = arith.constant 0 : i32
    %c0_i32_1 = arith.constant 0 : i32
    return %c0_i32, %c0_i32_0 : i32, i32
  }
  func.func @transform_3(%arg0: i32) -> (i32, i32, i32) {
    %c0_i32 = arith.constant 0 : i32
    %c0_i32_0 = arith.constant 0 : i32
    %c0_i32_1 = arith.constant 0 : i32
    return %arg0, %c0_i32, %c0_i32_0 : i32, i32, i32
  }
}

module attributes {stable_mosaic.version = 11 : i64} {
  func.func @kernel(%arg0: i32, %arg1: memref<1x64x256xbf16, #tpu.memory_space<vmem>>, %arg2: memref<32x576xbf16, #tpu.memory_space<vmem>>, %arg3: memref<32x1xf32, #tpu.memory_space<vmem>>, %arg4: memref<1x32x128xbf16, #tpu.memory_space<vmem>>, %arg5: memref<576x128xbf16, #tpu.memory_space<vmem>>) attributes {dimension_semantics = [#tpu.dimension_semantics<parallel>], iteration_bounds = array<i64: 2>, scalar_prefetch = 0 : i64, scratch_operands = 1 : i64, tpu.core_type = #tpu.core_type<tc>, window_params = [{transform_indices = @transform_0, window_bounds = array<i64: 1, 64, 256>}, {pipeline_mode = #tpu.pipeline_mode<synchronous>, transform_indices = @transform_1, window_bounds = array<i64: 32, 576>}, {pipeline_mode = #tpu.pipeline_mode<synchronous>, transform_indices = @transform_2, window_bounds = array<i64: 32, 1>}, {transform_indices = @transform_3, window_bounds = array<i64: 1, 32, 128>}]} {
    %c0 = arith.constant 0 : index
    %c0_0 = arith.constant 0 : index
    %c0_1 = arith.constant 0 : index
    %0 = vector.load %arg1[%c0, %c0_0, %c0_1] : memref<1x64x256xbf16, #tpu.memory_space<vmem>>, vector<1x64x256xbf16>
    %1 = vector.shape_cast %0 : vector<1x64x256xbf16> to vector<64x256xbf16>
    %2 = arith.extf %1 : vector<64x256xbf16> to vector<64x256xf32>
    %3 = vector.extract_strided_slice %2 {offsets = [0, 0], sizes = [64, 128], strides = [1, 1]} : vector<64x256xf32> to vector<64x128xf32>
    %4 = arith.truncf %3 : vector<64x128xf32> to vector<64x128xbf16>
    %c0_2 = arith.constant 0 : index
    %c0_3 = arith.constant 0 : index
    %5 = vector.load %arg5[%c0_2, %c0_3] : memref<576x128xbf16, #tpu.memory_space<vmem>>, vector<64x128xbf16>
    tpu.vector_store %arg5[%c0_2, %c0_3], %4 {strides = array<i32>} : memref<576x128xbf16, #tpu.memory_space<vmem>>, vector<64x128xbf16>,
    %6 = vector.extract_strided_slice %2 {offsets = [0, 1], sizes = [64, 128], strides = [1, 1]} : vector<64x256xf32> to vector<64x128xf32>
    %7 = arith.truncf %6 : vector<64x128xf32> to vector<64x128xbf16>
    %c64 = arith.constant 64 : index
    %c0_4 = arith.constant 0 : index
    %8 = vector.load %arg5[%c64, %c0_4] : memref<576x128xbf16, #tpu.memory_space<vmem>>, vector<64x128xbf16>
    tpu.vector_store %arg5[%c64, %c0_4], %7 {strides = array<i32>} : memref<576x128xbf16, #tpu.memory_space<vmem>>, vector<64x128xbf16>,
    %9 = vector.extract_strided_slice %2 {offsets = [0, 2], sizes = [64, 128], strides = [1, 1]} : vector<64x256xf32> to vector<64x128xf32>
    %10 = arith.truncf %9 : vector<64x128xf32> to vector<64x128xbf16>
    %c128 = arith.constant 128 : index
    %c0_5 = arith.constant 0 : index
    %11 = vector.load %arg5[%c128, %c0_5] : memref<576x128xbf16, #tpu.memory_space<vmem>>, vector<64x128xbf16>
    tpu.vector_store %arg5[%c128, %c0_5], %10 {strides = array<i32>} : memref<576x128xbf16, #tpu.memory_space<vmem>>, vector<64x128xbf16>,
    %12 = vector.extract_strided_slice %2 {offsets = [0, 4], sizes = [64, 128], strides = [1, 1]} : vector<64x256xf32> to vector<64x128xf32>
    %13 = arith.truncf %12 : vector<64x128xf32> to vector<64x128xbf16>
    %c192 = arith.constant 192 : index
    %c0_6 = arith.constant 0 : index
    %14 = vector.load %arg5[%c192, %c0_6] : memref<576x128xbf16, #tpu.memory_space<vmem>>, vector<64x128xbf16>
    tpu.vector_store %arg5[%c192, %c0_6], %13 {strides = array<i32>} : memref<576x128xbf16, #tpu.memory_space<vmem>>, vector<64x128xbf16>,
    %15 = vector.extract_strided_slice %2 {offsets = [0, 5], sizes = [64, 128], strides = [1, 1]} : vector<64x256xf32> to vector<64x128xf32>
    %16 = arith.truncf %15 : vector<64x128xf32> to vector<64x128xbf16>
    %c256 = arith.constant 256 : index
    %c0_7 = arith.constant 0 : index
    %17 = vector.load %arg5[%c256, %c0_7] : memref<576x128xbf16, #tpu.memory_space<vmem>>, vector<64x128xbf16>
    tpu.vector_store %arg5[%c256, %c0_7], %16 {strides = array<i32>} : memref<576x128xbf16, #tpu.memory_space<vmem>>, vector<64x128xbf16>,
    %18 = vector.extract_strided_slice %2 {offsets = [0, 6], sizes = [64, 128], strides = [1, 1]} : vector<64x256xf32> to vector<64x128xf32>
    %19 = arith.truncf %18 : vector<64x128xf32> to vector<64x128xbf16>
    %c320 = arith.constant 320 : index
    %c0_8 = arith.constant 0 : index
    %20 = vector.load %arg5[%c320, %c0_8] : memref<576x128xbf16, #tpu.memory_space<vmem>>, vector<64x128xbf16>
    tpu.vector_store %arg5[%c320, %c0_8], %19 {strides = array<i32>} : memref<576x128xbf16, #tpu.memory_space<vmem>>, vector<64x128xbf16>,
    %21 = vector.extract_strided_slice %2 {offsets = [0, 8], sizes = [64, 128], strides = [1, 1]} : vector<64x256xf32> to vector<64x128xf32>
    %22 = arith.truncf %21 : vector<64x128xf32> to vector<64x128xbf16>
    %c384 = arith.constant 384 : index
    %c0_9 = arith.constant 0 : index
    %23 = vector.load %arg5[%c384, %c0_9] : memref<576x128xbf16, #tpu.memory_space<vmem>>, vector<64x128xbf16>
    tpu.vector_store %arg5[%c384, %c0_9], %22 {strides = array<i32>} : memref<576x128xbf16, #tpu.memory_space<vmem>>, vector<64x128xbf16>,
    %24 = vector.extract_strided_slice %2 {offsets = [0, 9], sizes = [64, 128], strides = [1, 1]} : vector<64x256xf32> to vector<64x128xf32>
    %25 = arith.truncf %24 : vector<64x128xf32> to vector<64x128xbf16>
    %c448 = arith.constant 448 : index
    %c0_10 = arith.constant 0 : index
    %26 = vector.load %arg5[%c448, %c0_10] : memref<576x128xbf16, #tpu.memory_space<vmem>>, vector<64x128xbf16>
    tpu.vector_store %arg5[%c448, %c0_10], %25 {strides = array<i32>} : memref<576x128xbf16, #tpu.memory_space<vmem>>, vector<64x128xbf16>,
    %27 = vector.extract_strided_slice %2 {offsets = [0, 10], sizes = [64, 128], strides = [1, 1]} : vector<64x256xf32> to vector<64x128xf32>
    %28 = arith.truncf %27 : vector<64x128xf32> to vector<64x128xbf16>
    %c512 = arith.constant 512 : index
    %c0_11 = arith.constant 0 : index
    %29 = vector.load %arg5[%c512, %c0_11] : memref<576x128xbf16, #tpu.memory_space<vmem>>, vector<64x128xbf16>
    tpu.vector_store %arg5[%c512, %c0_11], %28 {strides = array<i32>} : memref<576x128xbf16, #tpu.memory_space<vmem>>, vector<64x128xbf16>,
    %c0_12 = arith.constant 0 : index
    %c0_13 = arith.constant 0 : index
    %30 = vector.load %arg2[%c0_12, %c0_13] : memref<32x576xbf16, #tpu.memory_space<vmem>>, vector<32x576xbf16>
    %c0_14 = arith.constant 0 : index
    %c0_15 = arith.constant 0 : index
    %31 = vector.load %arg5[%c0_14, %c0_15] : memref<576x128xbf16, #tpu.memory_space<vmem>>, vector<576x128xbf16>
    %cst = arith.constant dense<0.000000e+00> : vector<32x128xf32>
    %32 = tpu.matmul %30, %31, %cst {dimension_numbers = #tpu.dot_dimension_numbers<[1], [0], [0], [1], [0, 0, 1, 1], [], []>} : vector<32x576xbf16>, vector<576x128xbf16>, vector<32x128xf32> -> vector<32x128xf32>
    %c0_16 = arith.constant 0 : index
    %c0_17 = arith.constant 0 : index
    %33 = vector.load %arg3[%c0_16, %c0_17] : memref<32x1xf32, #tpu.memory_space<vmem>>, vector<32x1xf32>
    %34 = vector.broadcast %33 : vector<32x1xf32> to vector<32x128xf32>
    %35 = arith.addf %32, %34 : vector<32x128xf32>
    %36 = tpu.iota {dimensions = array<i32: 1>} : vector<1x128xi32>
    %c4_i32 = arith.constant 4 : i32
    %c0_i32 = arith.constant 0 : i32
    %37 = arith.cmpi eq, %c4_i32, %c0_i32 : i32
    %c1_i32 = arith.constant 1 : i32
    %38 = arith.select %37, %c1_i32, %c4_i32 : i32
    %39 = vector.broadcast %38 : i32 to vector<1x128xi32>
    %40 = arith.remsi %36, %39 : vector<1x128xi32>
    %c0_i32_18 = arith.constant 0 : i32
    %41 = vector.broadcast %c0_i32_18 : i32 to vector<1x128xi32>
    %42 = arith.cmpi ne, %40, %41 : vector<1x128xi32>
    %c0_i32_19 = arith.constant 0 : i32
    %43 = vector.broadcast %c0_i32_19 : i32 to vector<1x128xi32>
    %44 = arith.cmpi slt, %40, %43 : vector<1x128xi32>
    %c0_i32_20 = arith.constant 0 : i32
    %45 = arith.cmpi slt, %38, %c0_i32_20 : i32
    %46 = vector.broadcast %45 : i1 to vector<1x128xi1>
    %47 = vector.broadcast %46 : vector<1x128xi1> to vector<1x128xi1>
    %48 = arith.xori %44, %47 : vector<1x128xi1>
    %49 = arith.andi %48, %42 : vector<1x128xi1>
    %50 = vector.broadcast %38 : i32 to vector<1x128xi32>
    %51 = arith.addi %40, %50 : vector<1x128xi32>
    %52 = arith.select %49, %51, %40 : vector<1x128xi1>, vector<1x128xi32>
    %c2_i32 = arith.constant 2 : i32
    %53 = vector.broadcast %c2_i32 : i32 to vector<1x128xi32>
    %54 = arith.cmpi slt, %52, %53 : vector<1x128xi32>
    %c8_i32 = arith.constant 8 : i32
    %55 = vector.broadcast %c8_i32 : i32 to vector<1x128xi32>
    %56 = arith.cmpi slt, %36, %55 : vector<1x128xi32>
    %57 = arith.andi %54, %56 : vector<1x128xi1>
    %58 = arith.extui %57 : vector<1x128xi1> to vector<1x128xi32>
    %59 = arith.sitofp %58 : vector<1x128xi32> to vector<1x128xf32>
    %60 = vector.broadcast %59 : vector<1x128xf32> to vector<32x128xf32>
    %61 = arith.mulf %35, %60 : vector<32x128xf32>
    %cst_21 = arith.constant dense<0.000000e+00> : vector<32xf32>
    %62 = vector.multi_reduction <add>, %61, %cst_21 [1] : vector<32x128xf32> to vector<32xf32>
    %63 = vector.shape_cast %62 : vector<32xf32> to vector<32x1xf32>
    %cst_22 = arith.constant 2.500000e-01 : f32
    %64 = vector.broadcast %cst_22 : f32 to vector<32x1xf32>
    %65 = arith.mulf %63, %64 : vector<32x1xf32>
    %66 = arith.mulf %35, %35 : vector<32x128xf32>
    %67 = vector.broadcast %59 : vector<1x128xf32> to vector<32x128xf32>
    %68 = arith.mulf %66, %67 : vector<32x128xf32>
    %cst_23 = arith.constant dense<0.000000e+00> : vector<32xf32>
    %69 = vector.multi_reduction <add>, %68, %cst_23 [1] : vector<32x128xf32> to vector<32xf32>
    %70 = vector.shape_cast %69 : vector<32xf32> to vector<32x1xf32>
    %cst_24 = arith.constant 2.500000e-01 : f32
    %71 = vector.broadcast %cst_24 : f32 to vector<32x1xf32>
    %72 = arith.mulf %70, %71 : vector<32x1xf32>
    %73 = arith.mulf %65, %65 : vector<32x1xf32>
    %74 = arith.subf %72, %73 : vector<32x1xf32>
    %cst_25 = arith.constant 0.000000e+00 : f32
    %75 = vector.broadcast %cst_25 : f32 to vector<32x1xf32>
    %76 = arith.maximumf %74, %75 : vector<32x1xf32>
    %77 = vector.broadcast %65 : vector<32x1xf32> to vector<32x128xf32>
    %78 = arith.subf %35, %77 : vector<32x128xf32>
    %cst_26 = arith.constant 9.99999974E-6 : f32
    %79 = vector.broadcast %cst_26 : f32 to vector<32x1xf32>
    %80 = arith.addf %76, %79 : vector<32x1xf32>
    %81 = math.rsqrt %80 : vector<32x1xf32>
    %82 = vector.broadcast %81 : vector<32x1xf32> to vector<32x128xf32>
    %83 = arith.mulf %78, %82 : vector<32x128xf32>
    %cst_27 = arith.constant 0.000000e+00 : f32
    %84 = vector.broadcast %cst_27 : f32 to vector<32x128xf32>
    %85 = arith.cmpf ogt, %83, %84 : vector<32x128xf32>
    %cst_28 = arith.constant 0.000000e+00 : f32
    %86 = vector.broadcast %cst_28 : f32 to vector<32x128xf32>
    %87 = arith.minimumf %83, %86 : vector<32x128xf32>
    %88 = math.exp %87 : vector<32x128xf32>
    %cst_29 = arith.constant 1.000000e+00 : f32
    %89 = vector.broadcast %cst_29 : f32 to vector<32x128xf32>
    %90 = arith.subf %88, %89 : vector<32x128xf32>
    %cst_30 = arith.constant 1.000000e+00 : f32
    %91 = vector.broadcast %cst_30 : f32 to vector<32x128xf32>
    %92 = arith.mulf %91, %90 : vector<32x128xf32>
    %93 = arith.select %85, %83, %92 : vector<32x128xi1>, vector<32x128xf32>
    %94 = arith.truncf %93 : vector<32x128xf32> to vector<32x128xbf16>
    %c0_31 = arith.constant 0 : index
    %c0_32 = arith.constant 0 : index
    %c0_33 = arith.constant 0 : index
    %95 = vector.load %arg4[%c0_31, %c0_32, %c0_33] : memref<1x32x128xbf16, #tpu.memory_space<vmem>>, vector<1x32x128xbf16>
    %96 = vector.shape_cast %95 : vector<1x32x128xbf16> to vector<32x128xbf16>
    %97 = vector.shape_cast %94 : vector<32x128xbf16> to vector<1x32x128xbf16>
    tpu.vector_store %arg4[%c0_31, %c0_32, %c0_33], %97 {strides = array<i32>} : memref<1x32x128xbf16, #tpu.memory_space<vmem>>, vector<1x32x128xbf16>,
    return
  }
  func.func @transform_0(%arg0: i32) -> (i32, i32, i32) {
    %c0_i32 = arith.constant 0 : i32
    %c0_i32_0 = arith.constant 0 : i32
    %c0_i32_1 = arith.constant 0 : i32
    return %arg0, %c0_i32, %c0_i32_0 : i32, i32, i32
  }
  func.func @transform_1(%arg0: i32) -> (i32, i32) {
    %c0_i32 = arith.constant 0 : i32
    %c0_i32_0 = arith.constant 0 : i32
    %c0_i32_1 = arith.constant 0 : i32
    return %c0_i32, %c0_i32_0 : i32, i32
  }
  func.func @transform_2(%arg0: i32) -> (i32, i32) {
    %c0_i32 = arith.constant 0 : i32
    %c0_i32_0 = arith.constant 0 : i32
    %c0_i32_1 = arith.constant 0 : i32
    return %c0_i32, %c0_i32_0 : i32, i32
  }
  func.func @transform_3(%arg0: i32) -> (i32, i32, i32) {
    %c0_i32 = arith.constant 0 : i32
    %c0_i32_0 = arith.constant 0 : i32
    %c0_i32_1 = arith.constant 0 : i32
    return %arg0, %c0_i32, %c0_i32_0 : i32, i32, i32
  }
}

module attributes {stable_mosaic.version = 11 : i64} {
  func.func @kernel(%arg0: i32, %arg1: memref<1x32x256xbf16, #tpu.memory_space<vmem>>, %arg2: memref<1x32x256xbf16, #tpu.memory_space<vmem>>, %arg3: memref<16x288xbf16, #tpu.memory_space<vmem>>, %arg4: memref<16x1xf32, #tpu.memory_space<vmem>>, %arg5: memref<1x16x128xbf16, #tpu.memory_space<vmem>>, %arg6: memref<288x128xbf16, #tpu.memory_space<vmem>>) attributes {dimension_semantics = [#tpu.dimension_semantics<parallel>], iteration_bounds = array<i64: 2>, scalar_prefetch = 0 : i64, scratch_operands = 1 : i64, tpu.core_type = #tpu.core_type<tc>, window_params = [{transform_indices = @transform_0, window_bounds = array<i64: 1, 32, 256>}, {transform_indices = @transform_1, window_bounds = array<i64: 1, 32, 256>}, {pipeline_mode = #tpu.pipeline_mode<synchronous>, transform_indices = @transform_2, window_bounds = array<i64: 16, 288>}, {pipeline_mode = #tpu.pipeline_mode<synchronous>, transform_indices = @transform_3, window_bounds = array<i64: 16, 1>}, {transform_indices = @transform_4, window_bounds = array<i64: 1, 16, 128>}]} {
    %c0 = arith.constant 0 : index
    %c0_0 = arith.constant 0 : index
    %c0_1 = arith.constant 0 : index
    %0 = vector.load %arg1[%c0, %c0_0, %c0_1] : memref<1x32x256xbf16, #tpu.memory_space<vmem>>, vector<1x32x256xbf16>
    %1 = vector.shape_cast %0 : vector<1x32x256xbf16> to vector<32x256xbf16>
    %2 = arith.extf %1 : vector<32x256xbf16> to vector<32x256xf32>
    %c0_2 = arith.constant 0 : index
    %c0_3 = arith.constant 0 : index
    %c0_4 = arith.constant 0 : index
    %3 = vector.load %arg2[%c0_2, %c0_3, %c0_4] : memref<1x32x256xbf16, #tpu.memory_space<vmem>>, vector<1x32x256xbf16>
    %4 = vector.shape_cast %3 : vector<1x32x256xbf16> to vector<32x256xbf16>
    %5 = arith.extf %4 : vector<32x256xbf16> to vector<32x256xf32>
    %6 = arith.addf %2, %5 : vector<32x256xf32>
    %7 = vector.extract_strided_slice %6 {offsets = [0, 0], sizes = [32, 128], strides = [1, 1]} : vector<32x256xf32> to vector<32x128xf32>
    %8 = arith.truncf %7 : vector<32x128xf32> to vector<32x128xbf16>
    %c0_5 = arith.constant 0 : index
    %c0_6 = arith.constant 0 : index
    %9 = vector.load %arg6[%c0_5, %c0_6] : memref<288x128xbf16, #tpu.memory_space<vmem>>, vector<32x128xbf16>
    tpu.vector_store %arg6[%c0_5, %c0_6], %8 {strides = array<i32>} : memref<288x128xbf16, #tpu.memory_space<vmem>>, vector<32x128xbf16>,
    %10 = vector.extract_strided_slice %6 {offsets = [0, 1], sizes = [32, 128], strides = [1, 1]} : vector<32x256xf32> to vector<32x128xf32>
    %11 = arith.truncf %10 : vector<32x128xf32> to vector<32x128xbf16>
    %c32 = arith.constant 32 : index
    %c0_7 = arith.constant 0 : index
    %12 = vector.load %arg6[%c32, %c0_7] : memref<288x128xbf16, #tpu.memory_space<vmem>>, vector<32x128xbf16>
    tpu.vector_store %arg6[%c32, %c0_7], %11 {strides = array<i32>} : memref<288x128xbf16, #tpu.memory_space<vmem>>, vector<32x128xbf16>,
    %13 = vector.extract_strided_slice %6 {offsets = [0, 2], sizes = [32, 128], strides = [1, 1]} : vector<32x256xf32> to vector<32x128xf32>
    %14 = arith.truncf %13 : vector<32x128xf32> to vector<32x128xbf16>
    %c64 = arith.constant 64 : index
    %c0_8 = arith.constant 0 : index
    %15 = vector.load %arg6[%c64, %c0_8] : memref<288x128xbf16, #tpu.memory_space<vmem>>, vector<32x128xbf16>
    tpu.vector_store %arg6[%c64, %c0_8], %14 {strides = array<i32>} : memref<288x128xbf16, #tpu.memory_space<vmem>>, vector<32x128xbf16>,
    %16 = vector.extract_strided_slice %6 {offsets = [0, 6], sizes = [32, 128], strides = [1, 1]} : vector<32x256xf32> to vector<32x128xf32>
    %17 = arith.truncf %16 : vector<32x128xf32> to vector<32x128xbf16>
    %c96 = arith.constant 96 : index
    %c0_9 = arith.constant 0 : index
    %18 = vector.load %arg6[%c96, %c0_9] : memref<288x128xbf16, #tpu.memory_space<vmem>>, vector<32x128xbf16>
    tpu.vector_store %arg6[%c96, %c0_9], %17 {strides = array<i32>} : memref<288x128xbf16, #tpu.memory_space<vmem>>, vector<32x128xbf16>,
    %19 = vector.extract_strided_slice %6 {offsets = [0, 7], sizes = [32, 128], strides = [1, 1]} : vector<32x256xf32> to vector<32x128xf32>
    %20 = arith.truncf %19 : vector<32x128xf32> to vector<32x128xbf16>
    %c128 = arith.constant 128 : index
    %c0_10 = arith.constant 0 : index
    %21 = vector.load %arg6[%c128, %c0_10] : memref<288x128xbf16, #tpu.memory_space<vmem>>, vector<32x128xbf16>
    tpu.vector_store %arg6[%c128, %c0_10], %20 {strides = array<i32>} : memref<288x128xbf16, #tpu.memory_space<vmem>>, vector<32x128xbf16>,
    %22 = vector.extract_strided_slice %6 {offsets = [0, 8], sizes = [32, 128], strides = [1, 1]} : vector<32x256xf32> to vector<32x128xf32>
    %23 = arith.truncf %22 : vector<32x128xf32> to vector<32x128xbf16>
    %c160 = arith.constant 160 : index
    %c0_11 = arith.constant 0 : index
    %24 = vector.load %arg6[%c160, %c0_11] : memref<288x128xbf16, #tpu.memory_space<vmem>>, vector<32x128xbf16>
    tpu.vector_store %arg6[%c160, %c0_11], %23 {strides = array<i32>} : memref<288x128xbf16, #tpu.memory_space<vmem>>, vector<32x128xbf16>,
    %25 = vector.extract_strided_slice %6 {offsets = [0, 12], sizes = [32, 128], strides = [1, 1]} : vector<32x256xf32> to vector<32x128xf32>
    %26 = arith.truncf %25 : vector<32x128xf32> to vector<32x128xbf16>
    %c192 = arith.constant 192 : index
    %c0_12 = arith.constant 0 : index
    %27 = vector.load %arg6[%c192, %c0_12] : memref<288x128xbf16, #tpu.memory_space<vmem>>, vector<32x128xbf16>
    tpu.vector_store %arg6[%c192, %c0_12], %26 {strides = array<i32>} : memref<288x128xbf16, #tpu.memory_space<vmem>>, vector<32x128xbf16>,
    %28 = vector.extract_strided_slice %6 {offsets = [0, 13], sizes = [32, 128], strides = [1, 1]} : vector<32x256xf32> to vector<32x128xf32>
    %29 = arith.truncf %28 : vector<32x128xf32> to vector<32x128xbf16>
    %c224 = arith.constant 224 : index
    %c0_13 = arith.constant 0 : index
    %30 = vector.load %arg6[%c224, %c0_13] : memref<288x128xbf16, #tpu.memory_space<vmem>>, vector<32x128xbf16>
    tpu.vector_store %arg6[%c224, %c0_13], %29 {strides = array<i32>} : memref<288x128xbf16, #tpu.memory_space<vmem>>, vector<32x128xbf16>,
    %31 = vector.extract_strided_slice %6 {offsets = [0, 14], sizes = [32, 128], strides = [1, 1]} : vector<32x256xf32> to vector<32x128xf32>
    %32 = arith.truncf %31 : vector<32x128xf32> to vector<32x128xbf16>
    %c256 = arith.constant 256 : index
    %c0_14 = arith.constant 0 : index
    %33 = vector.load %arg6[%c256, %c0_14] : memref<288x128xbf16, #tpu.memory_space<vmem>>, vector<32x128xbf16>
    tpu.vector_store %arg6[%c256, %c0_14], %32 {strides = array<i32>} : memref<288x128xbf16, #tpu.memory_space<vmem>>, vector<32x128xbf16>,
    %c0_15 = arith.constant 0 : index
    %c0_16 = arith.constant 0 : index
    %34 = vector.load %arg3[%c0_15, %c0_16] : memref<16x288xbf16, #tpu.memory_space<vmem>>, vector<16x288xbf16>
    %c0_17 = arith.constant 0 : index
    %c0_18 = arith.constant 0 : index
    %35 = vector.load %arg6[%c0_17, %c0_18] : memref<288x128xbf16, #tpu.memory_space<vmem>>, vector<288x128xbf16>
    %cst = arith.constant dense<0.000000e+00> : vector<16x128xf32>
    %36 = tpu.matmul %34, %35, %cst {dimension_numbers = #tpu.dot_dimension_numbers<[1], [0], [0], [1], [0, 0, 1, 1], [], []>} : vector<16x288xbf16>, vector<288x128xbf16>, vector<16x128xf32> -> vector<16x128xf32>
    %c0_19 = arith.constant 0 : index
    %c0_20 = arith.constant 0 : index
    %37 = vector.load %arg4[%c0_19, %c0_20] : memref<16x1xf32, #tpu.memory_space<vmem>>, vector<16x1xf32>
    %38 = vector.broadcast %37 : vector<16x1xf32> to vector<16x128xf32>
    %39 = arith.addf %36, %38 : vector<16x128xf32>
    %40 = tpu.iota {dimensions = array<i32: 1>} : vector<1x128xi32>
    %c6_i32 = arith.constant 6 : i32
    %c0_i32 = arith.constant 0 : i32
    %41 = arith.cmpi eq, %c6_i32, %c0_i32 : i32
    %c1_i32 = arith.constant 1 : i32
    %42 = arith.select %41, %c1_i32, %c6_i32 : i32
    %43 = vector.broadcast %42 : i32 to vector<1x128xi32>
    %44 = arith.remsi %40, %43 : vector<1x128xi32>
    %c0_i32_21 = arith.constant 0 : i32
    %45 = vector.broadcast %c0_i32_21 : i32 to vector<1x128xi32>
    %46 = arith.cmpi ne, %44, %45 : vector<1x128xi32>
    %c0_i32_22 = arith.constant 0 : i32
    %47 = vector.broadcast %c0_i32_22 : i32 to vector<1x128xi32>
    %48 = arith.cmpi slt, %44, %47 : vector<1x128xi32>
    %c0_i32_23 = arith.constant 0 : i32
    %49 = arith.cmpi slt, %42, %c0_i32_23 : i32
    %50 = vector.broadcast %49 : i1 to vector<1x128xi1>
    %51 = vector.broadcast %50 : vector<1x128xi1> to vector<1x128xi1>
    %52 = arith.xori %48, %51 : vector<1x128xi1>
    %53 = arith.andi %52, %46 : vector<1x128xi1>
    %54 = vector.broadcast %42 : i32 to vector<1x128xi32>
    %55 = arith.addi %44, %54 : vector<1x128xi32>
    %56 = arith.select %53, %55, %44 : vector<1x128xi1>, vector<1x128xi32>
    %c4_i32 = arith.constant 4 : i32
    %57 = vector.broadcast %c4_i32 : i32 to vector<1x128xi32>
    %58 = arith.cmpi slt, %56, %57 : vector<1x128xi32>
    %c24_i32 = arith.constant 24 : i32
    %59 = vector.broadcast %c24_i32 : i32 to vector<1x128xi32>
    %60 = arith.cmpi slt, %40, %59 : vector<1x128xi32>
    %61 = arith.andi %58, %60 : vector<1x128xi1>
    %62 = arith.extui %61 : vector<1x128xi1> to vector<1x128xi32>
    %63 = arith.sitofp %62 : vector<1x128xi32> to vector<1x128xf32>
    %64 = vector.broadcast %63 : vector<1x128xf32> to vector<16x128xf32>
    %65 = arith.mulf %39, %64 : vector<16x128xf32>
    %cst_24 = arith.constant dense<0.000000e+00> : vector<16xf32>
    %66 = vector.multi_reduction <add>, %65, %cst_24 [1] : vector<16x128xf32> to vector<16xf32>
    %67 = vector.shape_cast %66 : vector<16xf32> to vector<16x1xf32>
    %cst_25 = arith.constant 6.250000e-02 : f32
    %68 = vector.broadcast %cst_25 : f32 to vector<16x1xf32>
    %69 = arith.mulf %67, %68 : vector<16x1xf32>
    %70 = arith.mulf %39, %39 : vector<16x128xf32>
    %71 = vector.broadcast %63 : vector<1x128xf32> to vector<16x128xf32>
    %72 = arith.mulf %70, %71 : vector<16x128xf32>
    %cst_26 = arith.constant dense<0.000000e+00> : vector<16xf32>
    %73 = vector.multi_reduction <add>, %72, %cst_26 [1] : vector<16x128xf32> to vector<16xf32>
    %74 = vector.shape_cast %73 : vector<16xf32> to vector<16x1xf32>
    %cst_27 = arith.constant 6.250000e-02 : f32
    %75 = vector.broadcast %cst_27 : f32 to vector<16x1xf32>
    %76 = arith.mulf %74, %75 : vector<16x1xf32>
    %77 = arith.mulf %69, %69 : vector<16x1xf32>
    %78 = arith.subf %76, %77 : vector<16x1xf32>
    %cst_28 = arith.constant 0.000000e+00 : f32
    %79 = vector.broadcast %cst_28 : f32 to vector<16x1xf32>
    %80 = arith.maximumf %78, %79 : vector<16x1xf32>
    %81 = vector.broadcast %69 : vector<16x1xf32> to vector<16x128xf32>
    %82 = arith.subf %39, %81 : vector<16x128xf32>
    %cst_29 = arith.constant 9.99999974E-6 : f32
    %83 = vector.broadcast %cst_29 : f32 to vector<16x1xf32>
    %84 = arith.addf %80, %83 : vector<16x1xf32>
    %85 = math.rsqrt %84 : vector<16x1xf32>
    %86 = vector.broadcast %85 : vector<16x1xf32> to vector<16x128xf32>
    %87 = arith.mulf %82, %86 : vector<16x128xf32>
    %cst_30 = arith.constant 0.000000e+00 : f32
    %88 = vector.broadcast %cst_30 : f32 to vector<16x128xf32>
    %89 = arith.cmpf ogt, %87, %88 : vector<16x128xf32>
    %cst_31 = arith.constant 0.000000e+00 : f32
    %90 = vector.broadcast %cst_31 : f32 to vector<16x128xf32>
    %91 = arith.minimumf %87, %90 : vector<16x128xf32>
    %92 = math.exp %91 : vector<16x128xf32>
    %cst_32 = arith.constant 1.000000e+00 : f32
    %93 = vector.broadcast %cst_32 : f32 to vector<16x128xf32>
    %94 = arith.subf %92, %93 : vector<16x128xf32>
    %cst_33 = arith.constant 1.000000e+00 : f32
    %95 = vector.broadcast %cst_33 : f32 to vector<16x128xf32>
    %96 = arith.mulf %95, %94 : vector<16x128xf32>
    %97 = arith.select %89, %87, %96 : vector<16x128xi1>, vector<16x128xf32>
    %98 = arith.truncf %97 : vector<16x128xf32> to vector<16x128xbf16>
    %c0_34 = arith.constant 0 : index
    %c0_35 = arith.constant 0 : index
    %c0_36 = arith.constant 0 : index
    %99 = vector.load %arg5[%c0_34, %c0_35, %c0_36] : memref<1x16x128xbf16, #tpu.memory_space<vmem>>, vector<1x16x128xbf16>
    %100 = vector.shape_cast %99 : vector<1x16x128xbf16> to vector<16x128xbf16>
    %101 = vector.shape_cast %98 : vector<16x128xbf16> to vector<1x16x128xbf16>
    tpu.vector_store %arg5[%c0_34, %c0_35, %c0_36], %101 {strides = array<i32>} : memref<1x16x128xbf16, #tpu.memory_space<vmem>>, vector<1x16x128xbf16>,
    return
  }
  func.func @transform_0(%arg0: i32) -> (i32, i32, i32) {
    %c0_i32 = arith.constant 0 : i32
    %c0_i32_0 = arith.constant 0 : i32
    %c0_i32_1 = arith.constant 0 : i32
    return %arg0, %c0_i32, %c0_i32_0 : i32, i32, i32
  }
  func.func @transform_1(%arg0: i32) -> (i32, i32, i32) {
    %c0_i32 = arith.constant 0 : i32
    %c0_i32_0 = arith.constant 0 : i32
    %c0_i32_1 = arith.constant 0 : i32
    return %arg0, %c0_i32, %c0_i32_0 : i32, i32, i32
  }
  func.func @transform_2(%arg0: i32) -> (i32, i32) {
    %c0_i32 = arith.constant 0 : i32
    %c0_i32_0 = arith.constant 0 : i32
    %c0_i32_1 = arith.constant 0 : i32
    return %c0_i32, %c0_i32_0 : i32, i32
  }
  func.func @transform_3(%arg0: i32) -> (i32, i32) {
    %c0_i32 = arith.constant 0 : i32
    %c0_i32_0 = arith.constant 0 : i32
    %c0_i32_1 = arith.constant 0 : i32
    return %c0_i32, %c0_i32_0 : i32, i32
  }
  func.func @transform_4(%arg0: i32) -> (i32, i32, i32) {
    %c0_i32 = arith.constant 0 : i32
    %c0_i32_0 = arith.constant 0 : i32
    %c0_i32_1 = arith.constant 0 : i32
    return %arg0, %c0_i32, %c0_i32_0 : i32, i32, i32
  }
}

module attributes {stable_mosaic.version = 11 : i64} {
  func.func @kernel(%arg0: i32, %arg1: memref<1x16x256xbf16, #tpu.memory_space<vmem>>, %arg2: memref<1x16x256xbf16, #tpu.memory_space<vmem>>, %arg3: memref<8x144xbf16, #tpu.memory_space<vmem>>, %arg4: memref<8x1xf32, #tpu.memory_space<vmem>>, %arg5: memref<1x8x128xbf16, #tpu.memory_space<vmem>>, %arg6: memref<144x128xbf16, #tpu.memory_space<vmem>>) attributes {dimension_semantics = [#tpu.dimension_semantics<parallel>], iteration_bounds = array<i64: 2>, scalar_prefetch = 0 : i64, scratch_operands = 1 : i64, tpu.core_type = #tpu.core_type<tc>, window_params = [{transform_indices = @transform_0, window_bounds = array<i64: 1, 16, 256>}, {transform_indices = @transform_1, window_bounds = array<i64: 1, 16, 256>}, {pipeline_mode = #tpu.pipeline_mode<synchronous>, transform_indices = @transform_2, window_bounds = array<i64: 8, 144>}, {pipeline_mode = #tpu.pipeline_mode<synchronous>, transform_indices = @transform_3, window_bounds = array<i64: 8, 1>}, {transform_indices = @transform_4, window_bounds = array<i64: 1, 8, 128>}]} {
    %c0 = arith.constant 0 : index
    %c0_0 = arith.constant 0 : index
    %c0_1 = arith.constant 0 : index
    %0 = vector.load %arg1[%c0, %c0_0, %c0_1] : memref<1x16x256xbf16, #tpu.memory_space<vmem>>, vector<1x16x256xbf16>
    %1 = vector.shape_cast %0 : vector<1x16x256xbf16> to vector<16x256xbf16>
    %2 = arith.extf %1 : vector<16x256xbf16> to vector<16x256xf32>
    %c0_2 = arith.constant 0 : index
    %c0_3 = arith.constant 0 : index
    %c0_4 = arith.constant 0 : index
    %3 = vector.load %arg2[%c0_2, %c0_3, %c0_4] : memref<1x16x256xbf16, #tpu.memory_space<vmem>>, vector<1x16x256xbf16>
    %4 = vector.shape_cast %3 : vector<1x16x256xbf16> to vector<16x256xbf16>
    %5 = arith.extf %4 : vector<16x256xbf16> to vector<16x256xf32>
    %6 = arith.addf %2, %5 : vector<16x256xf32>
    %7 = vector.extract_strided_slice %6 {offsets = [0, 0], sizes = [16, 128], strides = [1, 1]} : vector<16x256xf32> to vector<16x128xf32>
    %8 = arith.truncf %7 : vector<16x128xf32> to vector<16x128xbf16>
    %c0_5 = arith.constant 0 : index
    %c0_6 = arith.constant 0 : index
    %9 = vector.load %arg6[%c0_5, %c0_6] : memref<144x128xbf16, #tpu.memory_space<vmem>>, vector<16x128xbf16>
    tpu.vector_store %arg6[%c0_5, %c0_6], %8 {strides = array<i32>} : memref<144x128xbf16, #tpu.memory_space<vmem>>, vector<16x128xbf16>,
    %10 = vector.extract_strided_slice %6 {offsets = [0, 1], sizes = [16, 128], strides = [1, 1]} : vector<16x256xf32> to vector<16x128xf32>
    %11 = arith.truncf %10 : vector<16x128xf32> to vector<16x128xbf16>
    %c16 = arith.constant 16 : index
    %c0_7 = arith.constant 0 : index
    %12 = vector.load %arg6[%c16, %c0_7] : memref<144x128xbf16, #tpu.memory_space<vmem>>, vector<16x128xbf16>
    tpu.vector_store %arg6[%c16, %c0_7], %11 {strides = array<i32>} : memref<144x128xbf16, #tpu.memory_space<vmem>>, vector<16x128xbf16>,
    %13 = vector.extract_strided_slice %6 {offsets = [0, 2], sizes = [16, 128], strides = [1, 1]} : vector<16x256xf32> to vector<16x128xf32>
    %14 = arith.truncf %13 : vector<16x128xf32> to vector<16x128xbf16>
    %c32 = arith.constant 32 : index
    %c0_8 = arith.constant 0 : index
    %15 = vector.load %arg6[%c32, %c0_8] : memref<144x128xbf16, #tpu.memory_space<vmem>>, vector<16x128xbf16>
    tpu.vector_store %arg6[%c32, %c0_8], %14 {strides = array<i32>} : memref<144x128xbf16, #tpu.memory_space<vmem>>, vector<16x128xbf16>,
    %16 = vector.extract_strided_slice %6 {offsets = [0, 10], sizes = [16, 128], strides = [1, 1]} : vector<16x256xf32> to vector<16x128xf32>
    %17 = arith.truncf %16 : vector<16x128xf32> to vector<16x128xbf16>
    %c48 = arith.constant 48 : index
    %c0_9 = arith.constant 0 : index
    %18 = vector.load %arg6[%c48, %c0_9] : memref<144x128xbf16, #tpu.memory_space<vmem>>, vector<16x128xbf16>
    tpu.vector_store %arg6[%c48, %c0_9], %17 {strides = array<i32>} : memref<144x128xbf16, #tpu.memory_space<vmem>>, vector<16x128xbf16>,
    %19 = vector.extract_strided_slice %6 {offsets = [0, 11], sizes = [16, 128], strides = [1, 1]} : vector<16x256xf32> to vector<16x128xf32>
    %20 = arith.truncf %19 : vector<16x128xf32> to vector<16x128xbf16>
    %c64 = arith.constant 64 : index
    %c0_10 = arith.constant 0 : index
    %21 = vector.load %arg6[%c64, %c0_10] : memref<144x128xbf16, #tpu.memory_space<vmem>>, vector<16x128xbf16>
    tpu.vector_store %arg6[%c64, %c0_10], %20 {strides = array<i32>} : memref<144x128xbf16, #tpu.memory_space<vmem>>, vector<16x128xbf16>,
    %22 = vector.extract_strided_slice %6 {offsets = [0, 12], sizes = [16, 128], strides = [1, 1]} : vector<16x256xf32> to vector<16x128xf32>
    %23 = arith.truncf %22 : vector<16x128xf32> to vector<16x128xbf16>
    %c80 = arith.constant 80 : index
    %c0_11 = arith.constant 0 : index
    %24 = vector.load %arg6[%c80, %c0_11] : memref<144x128xbf16, #tpu.memory_space<vmem>>, vector<16x128xbf16>
    tpu.vector_store %arg6[%c80, %c0_11], %23 {strides = array<i32>} : memref<144x128xbf16, #tpu.memory_space<vmem>>, vector<16x128xbf16>,
    %25 = vector.extract_strided_slice %6 {offsets = [0, 20], sizes = [16, 128], strides = [1, 1]} : vector<16x256xf32> to vector<16x128xf32>
    %26 = arith.truncf %25 : vector<16x128xf32> to vector<16x128xbf16>
    %c96 = arith.constant 96 : index
    %c0_12 = arith.constant 0 : index
    %27 = vector.load %arg6[%c96, %c0_12] : memref<144x128xbf16, #tpu.memory_space<vmem>>, vector<16x128xbf16>
    tpu.vector_store %arg6[%c96, %c0_12], %26 {strides = array<i32>} : memref<144x128xbf16, #tpu.memory_space<vmem>>, vector<16x128xbf16>,
    %28 = vector.extract_strided_slice %6 {offsets = [0, 21], sizes = [16, 128], strides = [1, 1]} : vector<16x256xf32> to vector<16x128xf32>
    %29 = arith.truncf %28 : vector<16x128xf32> to vector<16x128xbf16>
    %c112 = arith.constant 112 : index
    %c0_13 = arith.constant 0 : index
    %30 = vector.load %arg6[%c112, %c0_13] : memref<144x128xbf16, #tpu.memory_space<vmem>>, vector<16x128xbf16>
    tpu.vector_store %arg6[%c112, %c0_13], %29 {strides = array<i32>} : memref<144x128xbf16, #tpu.memory_space<vmem>>, vector<16x128xbf16>,
    %31 = vector.extract_strided_slice %6 {offsets = [0, 22], sizes = [16, 128], strides = [1, 1]} : vector<16x256xf32> to vector<16x128xf32>
    %32 = arith.truncf %31 : vector<16x128xf32> to vector<16x128xbf16>
    %c128 = arith.constant 128 : index
    %c0_14 = arith.constant 0 : index
    %33 = vector.load %arg6[%c128, %c0_14] : memref<144x128xbf16, #tpu.memory_space<vmem>>, vector<16x128xbf16>
    tpu.vector_store %arg6[%c128, %c0_14], %32 {strides = array<i32>} : memref<144x128xbf16, #tpu.memory_space<vmem>>, vector<16x128xbf16>,
    %c0_15 = arith.constant 0 : index
    %c0_16 = arith.constant 0 : index
    %34 = vector.load %arg3[%c0_15, %c0_16] : memref<8x144xbf16, #tpu.memory_space<vmem>>, vector<8x144xbf16>
    %c0_17 = arith.constant 0 : index
    %c0_18 = arith.constant 0 : index
    %35 = vector.load %arg6[%c0_17, %c0_18] : memref<144x128xbf16, #tpu.memory_space<vmem>>, vector<144x128xbf16>
    %cst = arith.constant dense<0.000000e+00> : vector<8x128xf32>
    %36 = tpu.matmul %34, %35, %cst {dimension_numbers = #tpu.dot_dimension_numbers<[1], [0], [0], [1], [0, 0, 1, 1], [], []>} : vector<8x144xbf16>, vector<144x128xbf16>, vector<8x128xf32> -> vector<8x128xf32>
    %c0_19 = arith.constant 0 : index
    %c0_20 = arith.constant 0 : index
    %37 = vector.load %arg4[%c0_19, %c0_20] : memref<8x1xf32, #tpu.memory_space<vmem>>, vector<8x1xf32>
    %38 = vector.broadcast %37 : vector<8x1xf32> to vector<8x128xf32>
    %39 = arith.addf %36, %38 : vector<8x128xf32>
    %40 = tpu.iota {dimensions = array<i32: 1>} : vector<1x128xi32>
    %c10_i32 = arith.constant 10 : i32
    %c0_i32 = arith.constant 0 : i32
    %41 = arith.cmpi eq, %c10_i32, %c0_i32 : i32
    %c1_i32 = arith.constant 1 : i32
    %42 = arith.select %41, %c1_i32, %c10_i32 : i32
    %43 = vector.broadcast %42 : i32 to vector<1x128xi32>
    %44 = arith.remsi %40, %43 : vector<1x128xi32>
    %c0_i32_21 = arith.constant 0 : i32
    %45 = vector.broadcast %c0_i32_21 : i32 to vector<1x128xi32>
    %46 = arith.cmpi ne, %44, %45 : vector<1x128xi32>
    %c0_i32_22 = arith.constant 0 : i32
    %47 = vector.broadcast %c0_i32_22 : i32 to vector<1x128xi32>
    %48 = arith.cmpi slt, %44, %47 : vector<1x128xi32>
    %c0_i32_23 = arith.constant 0 : i32
    %49 = arith.cmpi slt, %42, %c0_i32_23 : i32
    %50 = vector.broadcast %49 : i1 to vector<1x128xi1>
    %51 = vector.broadcast %50 : vector<1x128xi1> to vector<1x128xi1>
    %52 = arith.xori %48, %51 : vector<1x128xi1>
    %53 = arith.andi %52, %46 : vector<1x128xi1>
    %54 = vector.broadcast %42 : i32 to vector<1x128xi32>
    %55 = arith.addi %44, %54 : vector<1x128xi32>
    %56 = arith.select %53, %55, %44 : vector<1x128xi1>, vector<1x128xi32>
    %c8_i32 = arith.constant 8 : i32
    %57 = vector.broadcast %c8_i32 : i32 to vector<1x128xi32>
    %58 = arith.cmpi slt, %56, %57 : vector<1x128xi32>
    %c80_i32 = arith.constant 80 : i32
    %59 = vector.broadcast %c80_i32 : i32 to vector<1x128xi32>
    %60 = arith.cmpi slt, %40, %59 : vector<1x128xi32>
    %61 = arith.andi %58, %60 : vector<1x128xi1>
    %62 = arith.extui %61 : vector<1x128xi1> to vector<1x128xi32>
    %63 = arith.sitofp %62 : vector<1x128xi32> to vector<1x128xf32>
    %64 = vector.broadcast %63 : vector<1x128xf32> to vector<8x128xf32>
    %65 = arith.mulf %39, %64 : vector<8x128xf32>
    %cst_24 = arith.constant dense<0.000000e+00> : vector<8xf32>
    %66 = vector.multi_reduction <add>, %65, %cst_24 [1] : vector<8x128xf32> to vector<8xf32>
    %67 = vector.shape_cast %66 : vector<8xf32> to vector<8x1xf32>
    %cst_25 = arith.constant 1.562500e-02 : f32
    %68 = vector.broadcast %cst_25 : f32 to vector<8x1xf32>
    %69 = arith.mulf %67, %68 : vector<8x1xf32>
    %70 = arith.mulf %39, %39 : vector<8x128xf32>
    %71 = vector.broadcast %63 : vector<1x128xf32> to vector<8x128xf32>
    %72 = arith.mulf %70, %71 : vector<8x128xf32>
    %cst_26 = arith.constant dense<0.000000e+00> : vector<8xf32>
    %73 = vector.multi_reduction <add>, %72, %cst_26 [1] : vector<8x128xf32> to vector<8xf32>
    %74 = vector.shape_cast %73 : vector<8xf32> to vector<8x1xf32>
    %cst_27 = arith.constant 1.562500e-02 : f32
    %75 = vector.broadcast %cst_27 : f32 to vector<8x1xf32>
    %76 = arith.mulf %74, %75 : vector<8x1xf32>
    %77 = arith.mulf %69, %69 : vector<8x1xf32>
    %78 = arith.subf %76, %77 : vector<8x1xf32>
    %cst_28 = arith.constant 0.000000e+00 : f32
    %79 = vector.broadcast %cst_28 : f32 to vector<8x1xf32>
    %80 = arith.maximumf %78, %79 : vector<8x1xf32>
    %81 = vector.broadcast %69 : vector<8x1xf32> to vector<8x128xf32>
    %82 = arith.subf %39, %81 : vector<8x128xf32>
    %cst_29 = arith.constant 9.99999974E-6 : f32
    %83 = vector.broadcast %cst_29 : f32 to vector<8x1xf32>
    %84 = arith.addf %80, %83 : vector<8x1xf32>
    %85 = math.rsqrt %84 : vector<8x1xf32>
    %86 = vector.broadcast %85 : vector<8x1xf32> to vector<8x128xf32>
    %87 = arith.mulf %82, %86 : vector<8x128xf32>
    %cst_30 = arith.constant 0.000000e+00 : f32
    %88 = vector.broadcast %cst_30 : f32 to vector<8x128xf32>
    %89 = arith.cmpf ogt, %87, %88 : vector<8x128xf32>
    %cst_31 = arith.constant 0.000000e+00 : f32
    %90 = vector.broadcast %cst_31 : f32 to vector<8x128xf32>
    %91 = arith.minimumf %87, %90 : vector<8x128xf32>
    %92 = math.exp %91 : vector<8x128xf32>
    %cst_32 = arith.constant 1.000000e+00 : f32
    %93 = vector.broadcast %cst_32 : f32 to vector<8x128xf32>
    %94 = arith.subf %92, %93 : vector<8x128xf32>
    %cst_33 = arith.constant 1.000000e+00 : f32
    %95 = vector.broadcast %cst_33 : f32 to vector<8x128xf32>
    %96 = arith.mulf %95, %94 : vector<8x128xf32>
    %97 = arith.select %89, %87, %96 : vector<8x128xi1>, vector<8x128xf32>
    %98 = arith.truncf %97 : vector<8x128xf32> to vector<8x128xbf16>
    %c0_34 = arith.constant 0 : index
    %c0_35 = arith.constant 0 : index
    %c0_36 = arith.constant 0 : index
    %99 = vector.load %arg5[%c0_34, %c0_35, %c0_36] : memref<1x8x128xbf16, #tpu.memory_space<vmem>>, vector<1x8x128xbf16>
    %100 = vector.shape_cast %99 : vector<1x8x128xbf16> to vector<8x128xbf16>
    %101 = vector.shape_cast %98 : vector<8x128xbf16> to vector<1x8x128xbf16>
    tpu.vector_store %arg5[%c0_34, %c0_35, %c0_36], %101 {strides = array<i32>} : memref<1x8x128xbf16, #tpu.memory_space<vmem>>, vector<1x8x128xbf16>,
    return
  }
  func.func @transform_0(%arg0: i32) -> (i32, i32, i32) {
    %c0_i32 = arith.constant 0 : i32
    %c0_i32_0 = arith.constant 0 : i32
    %c0_i32_1 = arith.constant 0 : i32
    return %arg0, %c0_i32, %c0_i32_0 : i32, i32, i32
  }
  func.func @transform_1(%arg0: i32) -> (i32, i32, i32) {
    %c0_i32 = arith.constant 0 : i32
    %c0_i32_0 = arith.constant 0 : i32
    %c0_i32_1 = arith.constant 0 : i32
    return %arg0, %c0_i32, %c0_i32_0 : i32, i32, i32
  }
  func.func @transform_2(%arg0: i32) -> (i32, i32) {
    %c0_i32 = arith.constant 0 : i32
    %c0_i32_0 = arith.constant 0 : i32
    %c0_i32_1 = arith.constant 0 : i32
    return %c0_i32, %c0_i32_0 : i32, i32
  }
  func.func @transform_3(%arg0: i32) -> (i32, i32) {
    %c0_i32 = arith.constant 0 : i32
    %c0_i32_0 = arith.constant 0 : i32
    %c0_i32_1 = arith.constant 0 : i32
    return %c0_i32, %c0_i32_0 : i32, i32
  }
  func.func @transform_4(%arg0: i32) -> (i32, i32, i32) {
    %c0_i32 = arith.constant 0 : i32
    %c0_i32_0 = arith.constant 0 : i32
    %c0_i32_1 = arith.constant 0 : i32
    return %arg0, %c0_i32, %c0_i32_0 : i32, i32, i32
  }
}

module attributes {stable_mosaic.version = 11 : i64} {
  func.func @kernel(%arg0: i32, %arg1: memref<1x16x512xbf16, #tpu.memory_space<vmem>>, %arg2: memref<1x16x512xbf16, #tpu.memory_space<vmem>>, %arg3: memref<2x144xbf16, #tpu.memory_space<vmem>>, %arg4: memref<2x1xf32, #tpu.memory_space<vmem>>, %arg5: memref<1x2x384xbf16, #tpu.memory_space<vmem>>, %arg6: memref<144x384xbf16, #tpu.memory_space<vmem>>) attributes {dimension_semantics = [#tpu.dimension_semantics<parallel>], iteration_bounds = array<i64: 2>, scalar_prefetch = 0 : i64, scratch_operands = 1 : i64, tpu.core_type = #tpu.core_type<tc>, window_params = [{transform_indices = @transform_0, window_bounds = array<i64: 1, 16, 512>}, {transform_indices = @transform_1, window_bounds = array<i64: 1, 16, 512>}, {pipeline_mode = #tpu.pipeline_mode<synchronous>, transform_indices = @transform_2, window_bounds = array<i64: 2, 144>}, {pipeline_mode = #tpu.pipeline_mode<synchronous>, transform_indices = @transform_3, window_bounds = array<i64: 2, 1>}, {transform_indices = @transform_4, window_bounds = array<i64: 1, 2, 384>}]} {
    %c0 = arith.constant 0 : index
    %c0_0 = arith.constant 0 : index
    %c0_1 = arith.constant 0 : index
    %0 = vector.load %arg1[%c0, %c0_0, %c0_1] : memref<1x16x512xbf16, #tpu.memory_space<vmem>>, vector<1x16x512xbf16>
    %1 = vector.shape_cast %0 : vector<1x16x512xbf16> to vector<16x512xbf16>
    %2 = arith.extf %1 : vector<16x512xbf16> to vector<16x512xf32>
    %c0_2 = arith.constant 0 : index
    %c0_3 = arith.constant 0 : index
    %c0_4 = arith.constant 0 : index
    %3 = vector.load %arg2[%c0_2, %c0_3, %c0_4] : memref<1x16x512xbf16, #tpu.memory_space<vmem>>, vector<1x16x512xbf16>
    %4 = vector.shape_cast %3 : vector<1x16x512xbf16> to vector<16x512xbf16>
    %5 = arith.extf %4 : vector<16x512xbf16> to vector<16x512xf32>
    %6 = arith.addf %2, %5 : vector<16x512xf32>
    %7 = vector.extract_strided_slice %6 {offsets = [0, 0], sizes = [16, 384], strides = [1, 1]} : vector<16x512xf32> to vector<16x384xf32>
    %8 = arith.truncf %7 : vector<16x384xf32> to vector<16x384xbf16>
    %c0_5 = arith.constant 0 : index
    %c0_6 = arith.constant 0 : index
    %9 = vector.load %arg6[%c0_5, %c0_6] : memref<144x384xbf16, #tpu.memory_space<vmem>>, vector<16x384xbf16>
    tpu.vector_store %arg6[%c0_5, %c0_6], %8 {strides = array<i32>} : memref<144x384xbf16, #tpu.memory_space<vmem>>, vector<16x384xbf16>,
    %10 = vector.extract_strided_slice %6 {offsets = [0, 1], sizes = [16, 384], strides = [1, 1]} : vector<16x512xf32> to vector<16x384xf32>
    %11 = arith.truncf %10 : vector<16x384xf32> to vector<16x384xbf16>
    %c16 = arith.constant 16 : index
    %c0_7 = arith.constant 0 : index
    %12 = vector.load %arg6[%c16, %c0_7] : memref<144x384xbf16, #tpu.memory_space<vmem>>, vector<16x384xbf16>
    tpu.vector_store %arg6[%c16, %c0_7], %11 {strides = array<i32>} : memref<144x384xbf16, #tpu.memory_space<vmem>>, vector<16x384xbf16>,
    %13 = vector.extract_strided_slice %6 {offsets = [0, 2], sizes = [16, 384], strides = [1, 1]} : vector<16x512xf32> to vector<16x384xf32>
    %14 = arith.truncf %13 : vector<16x384xf32> to vector<16x384xbf16>
    %c32 = arith.constant 32 : index
    %c0_8 = arith.constant 0 : index
    %15 = vector.load %arg6[%c32, %c0_8] : memref<144x384xbf16, #tpu.memory_space<vmem>>, vector<16x384xbf16>
    tpu.vector_store %arg6[%c32, %c0_8], %14 {strides = array<i32>} : memref<144x384xbf16, #tpu.memory_space<vmem>>, vector<16x384xbf16>,
    %16 = vector.extract_strided_slice %6 {offsets = [0, 18], sizes = [16, 384], strides = [1, 1]} : vector<16x512xf32> to vector<16x384xf32>
    %17 = arith.truncf %16 : vector<16x384xf32> to vector<16x384xbf16>
    %c48 = arith.constant 48 : index
    %c0_9 = arith.constant 0 : index
    %18 = vector.load %arg6[%c48, %c0_9] : memref<144x384xbf16, #tpu.memory_space<vmem>>, vector<16x384xbf16>
    tpu.vector_store %arg6[%c48, %c0_9], %17 {strides = array<i32>} : memref<144x384xbf16, #tpu.memory_space<vmem>>, vector<16x384xbf16>,
    %19 = vector.extract_strided_slice %6 {offsets = [0, 19], sizes = [16, 384], strides = [1, 1]} : vector<16x512xf32> to vector<16x384xf32>
    %20 = arith.truncf %19 : vector<16x384xf32> to vector<16x384xbf16>
    %c64 = arith.constant 64 : index
    %c0_10 = arith.constant 0 : index
    %21 = vector.load %arg6[%c64, %c0_10] : memref<144x384xbf16, #tpu.memory_space<vmem>>, vector<16x384xbf16>
    tpu.vector_store %arg6[%c64, %c0_10], %20 {strides = array<i32>} : memref<144x384xbf16, #tpu.memory_space<vmem>>, vector<16x384xbf16>,
    %22 = vector.extract_strided_slice %6 {offsets = [0, 20], sizes = [16, 384], strides = [1, 1]} : vector<16x512xf32> to vector<16x384xf32>
    %23 = arith.truncf %22 : vector<16x384xf32> to vector<16x384xbf16>
    %c80 = arith.constant 80 : index
    %c0_11 = arith.constant 0 : index
    %24 = vector.load %arg6[%c80, %c0_11] : memref<144x384xbf16, #tpu.memory_space<vmem>>, vector<16x384xbf16>
    tpu.vector_store %arg6[%c80, %c0_11], %23 {strides = array<i32>} : memref<144x384xbf16, #tpu.memory_space<vmem>>, vector<16x384xbf16>,
    %25 = vector.extract_strided_slice %6 {offsets = [0, 36], sizes = [16, 384], strides = [1, 1]} : vector<16x512xf32> to vector<16x384xf32>
    %26 = arith.truncf %25 : vector<16x384xf32> to vector<16x384xbf16>
    %c96 = arith.constant 96 : index
    %c0_12 = arith.constant 0 : index
    %27 = vector.load %arg6[%c96, %c0_12] : memref<144x384xbf16, #tpu.memory_space<vmem>>, vector<16x384xbf16>
    tpu.vector_store %arg6[%c96, %c0_12], %26 {strides = array<i32>} : memref<144x384xbf16, #tpu.memory_space<vmem>>, vector<16x384xbf16>,
    %28 = vector.extract_strided_slice %6 {offsets = [0, 37], sizes = [16, 384], strides = [1, 1]} : vector<16x512xf32> to vector<16x384xf32>
    %29 = arith.truncf %28 : vector<16x384xf32> to vector<16x384xbf16>
    %c112 = arith.constant 112 : index
    %c0_13 = arith.constant 0 : index
    %30 = vector.load %arg6[%c112, %c0_13] : memref<144x384xbf16, #tpu.memory_space<vmem>>, vector<16x384xbf16>
    tpu.vector_store %arg6[%c112, %c0_13], %29 {strides = array<i32>} : memref<144x384xbf16, #tpu.memory_space<vmem>>, vector<16x384xbf16>,
    %31 = vector.extract_strided_slice %6 {offsets = [0, 38], sizes = [16, 384], strides = [1, 1]} : vector<16x512xf32> to vector<16x384xf32>
    %32 = arith.truncf %31 : vector<16x384xf32> to vector<16x384xbf16>
    %c128 = arith.constant 128 : index
    %c0_14 = arith.constant 0 : index
    %33 = vector.load %arg6[%c128, %c0_14] : memref<144x384xbf16, #tpu.memory_space<vmem>>, vector<16x384xbf16>
    tpu.vector_store %arg6[%c128, %c0_14], %32 {strides = array<i32>} : memref<144x384xbf16, #tpu.memory_space<vmem>>, vector<16x384xbf16>,
    %c0_15 = arith.constant 0 : index
    %c0_16 = arith.constant 0 : index
    %34 = vector.load %arg3[%c0_15, %c0_16] : memref<2x144xbf16, #tpu.memory_space<vmem>>, vector<2x144xbf16>
    %c0_17 = arith.constant 0 : index
    %c0_18 = arith.constant 0 : index
    %35 = vector.load %arg6[%c0_17, %c0_18] : memref<144x384xbf16, #tpu.memory_space<vmem>>, vector<144x384xbf16>
    %cst = arith.constant dense<0.000000e+00> : vector<2x384xf32>
    %36 = tpu.matmul %34, %35, %cst {dimension_numbers = #tpu.dot_dimension_numbers<[1], [0], [0], [1], [0, 0, 1, 1], [], []>} : vector<2x144xbf16>, vector<144x384xbf16>, vector<2x384xf32> -> vector<2x384xf32>
    %c0_19 = arith.constant 0 : index
    %c0_20 = arith.constant 0 : index
    %37 = vector.load %arg4[%c0_19, %c0_20] : memref<2x1xf32, #tpu.memory_space<vmem>>, vector<2x1xf32>
    %38 = vector.broadcast %37 : vector<2x1xf32> to vector<2x384xf32>
    %39 = arith.addf %36, %38 : vector<2x384xf32>
    %40 = tpu.iota {dimensions = array<i32: 1>} : vector<1x384xi32>
    %c18_i32 = arith.constant 18 : i32
    %c0_i32 = arith.constant 0 : i32
    %41 = arith.cmpi eq, %c18_i32, %c0_i32 : i32
    %c1_i32 = arith.constant 1 : i32
    %42 = arith.select %41, %c1_i32, %c18_i32 : i32
    %43 = vector.broadcast %42 : i32 to vector<1x384xi32>
    %44 = arith.remsi %40, %43 : vector<1x384xi32>
    %c0_i32_21 = arith.constant 0 : i32
    %45 = vector.broadcast %c0_i32_21 : i32 to vector<1x384xi32>
    %46 = arith.cmpi ne, %44, %45 : vector<1x384xi32>
    %c0_i32_22 = arith.constant 0 : i32
    %47 = vector.broadcast %c0_i32_22 : i32 to vector<1x384xi32>
    %48 = arith.cmpi slt, %44, %47 : vector<1x384xi32>
    %c0_i32_23 = arith.constant 0 : i32
    %49 = arith.cmpi slt, %42, %c0_i32_23 : i32
    %50 = vector.broadcast %49 : i1 to vector<1x384xi1>
    %51 = vector.broadcast %50 : vector<1x384xi1> to vector<1x384xi1>
    %52 = arith.xori %48, %51 : vector<1x384xi1>
    %53 = arith.andi %52, %46 : vector<1x384xi1>
    %54 = vector.broadcast %42 : i32 to vector<1x384xi32>
    %55 = arith.addi %44, %54 : vector<1x384xi32>
    %56 = arith.select %53, %55, %44 : vector<1x384xi1>, vector<1x384xi32>
    %c16_i32 = arith.constant 16 : i32
    %57 = vector.broadcast %c16_i32 : i32 to vector<1x384xi32>
    %58 = arith.cmpi slt, %56, %57 : vector<1x384xi32>
    %c288_i32 = arith.constant 288 : i32
    %59 = vector.broadcast %c288_i32 : i32 to vector<1x384xi32>
    %60 = arith.cmpi slt, %40, %59 : vector<1x384xi32>
    %61 = arith.andi %58, %60 : vector<1x384xi1>
    %62 = arith.extui %61 : vector<1x384xi1> to vector<1x384xi32>
    %63 = arith.sitofp %62 : vector<1x384xi32> to vector<1x384xf32>
    %64 = vector.broadcast %63 : vector<1x384xf32> to vector<2x384xf32>
    %65 = arith.mulf %39, %64 : vector<2x384xf32>
    %cst_24 = arith.constant dense<0.000000e+00> : vector<2xf32>
    %66 = vector.multi_reduction <add>, %65, %cst_24 [1] : vector<2x384xf32> to vector<2xf32>
    %67 = vector.shape_cast %66 : vector<2xf32> to vector<2x1xf32>
    %cst_25 = arith.constant 3.906250e-03 : f32
    %68 = vector.broadcast %cst_25 : f32 to vector<2x1xf32>
    %69 = arith.mulf %67, %68 : vector<2x1xf32>
    %70 = arith.mulf %39, %39 : vector<2x384xf32>
    %71 = vector.broadcast %63 : vector<1x384xf32> to vector<2x384xf32>
    %72 = arith.mulf %70, %71 : vector<2x384xf32>
    %cst_26 = arith.constant dense<0.000000e+00> : vector<2xf32>
    %73 = vector.multi_reduction <add>, %72, %cst_26 [1] : vector<2x384xf32> to vector<2xf32>
    %74 = vector.shape_cast %73 : vector<2xf32> to vector<2x1xf32>
    %cst_27 = arith.constant 3.906250e-03 : f32
    %75 = vector.broadcast %cst_27 : f32 to vector<2x1xf32>
    %76 = arith.mulf %74, %75 : vector<2x1xf32>
    %77 = arith.mulf %69, %69 : vector<2x1xf32>
    %78 = arith.subf %76, %77 : vector<2x1xf32>
    %cst_28 = arith.constant 0.000000e+00 : f32
    %79 = vector.broadcast %cst_28 : f32 to vector<2x1xf32>
    %80 = arith.maximumf %78, %79 : vector<2x1xf32>
    %81 = vector.broadcast %69 : vector<2x1xf32> to vector<2x384xf32>
    %82 = arith.subf %39, %81 : vector<2x384xf32>
    %cst_29 = arith.constant 9.99999974E-6 : f32
    %83 = vector.broadcast %cst_29 : f32 to vector<2x1xf32>
    %84 = arith.addf %80, %83 : vector<2x1xf32>
    %85 = math.rsqrt %84 : vector<2x1xf32>
    %86 = vector.broadcast %85 : vector<2x1xf32> to vector<2x384xf32>
    %87 = arith.mulf %82, %86 : vector<2x384xf32>
    %cst_30 = arith.constant 0.000000e+00 : f32
    %88 = vector.broadcast %cst_30 : f32 to vector<2x384xf32>
    %89 = arith.cmpf ogt, %87, %88 : vector<2x384xf32>
    %cst_31 = arith.constant 0.000000e+00 : f32
    %90 = vector.broadcast %cst_31 : f32 to vector<2x384xf32>
    %91 = arith.minimumf %87, %90 : vector<2x384xf32>
    %92 = math.exp %91 : vector<2x384xf32>
    %cst_32 = arith.constant 1.000000e+00 : f32
    %93 = vector.broadcast %cst_32 : f32 to vector<2x384xf32>
    %94 = arith.subf %92, %93 : vector<2x384xf32>
    %cst_33 = arith.constant 1.000000e+00 : f32
    %95 = vector.broadcast %cst_33 : f32 to vector<2x384xf32>
    %96 = arith.mulf %95, %94 : vector<2x384xf32>
    %97 = arith.select %89, %87, %96 : vector<2x384xi1>, vector<2x384xf32>
    %98 = arith.truncf %97 : vector<2x384xf32> to vector<2x384xbf16>
    %c0_34 = arith.constant 0 : index
    %c0_35 = arith.constant 0 : index
    %c0_36 = arith.constant 0 : index
    %99 = vector.load %arg5[%c0_34, %c0_35, %c0_36] : memref<1x2x384xbf16, #tpu.memory_space<vmem>>, vector<1x2x384xbf16>
    %100 = vector.shape_cast %99 : vector<1x2x384xbf16> to vector<2x384xbf16>
    %101 = vector.shape_cast %98 : vector<2x384xbf16> to vector<1x2x384xbf16>
    tpu.vector_store %arg5[%c0_34, %c0_35, %c0_36], %101 {strides = array<i32>} : memref<1x2x384xbf16, #tpu.memory_space<vmem>>, vector<1x2x384xbf16>,
    return
  }
  func.func @transform_0(%arg0: i32) -> (i32, i32, i32) {
    %c0_i32 = arith.constant 0 : i32
    %c0_i32_0 = arith.constant 0 : i32
    %c0_i32_1 = arith.constant 0 : i32
    return %arg0, %c0_i32, %c0_i32_0 : i32, i32, i32
  }
  func.func @transform_1(%arg0: i32) -> (i32, i32, i32) {
    %c0_i32 = arith.constant 0 : i32
    %c0_i32_0 = arith.constant 0 : i32
    %c0_i32_1 = arith.constant 0 : i32
    return %arg0, %c0_i32, %c0_i32_0 : i32, i32, i32
  }
  func.func @transform_2(%arg0: i32) -> (i32, i32) {
    %c0_i32 = arith.constant 0 : i32
    %c0_i32_0 = arith.constant 0 : i32
    %c0_i32_1 = arith.constant 0 : i32
    return %c0_i32, %c0_i32_0 : i32, i32
  }
  func.func @transform_3(%arg0: i32) -> (i32, i32) {
    %c0_i32 = arith.constant 0 : i32
    %c0_i32_0 = arith.constant 0 : i32
    %c0_i32_1 = arith.constant 0 : i32
    return %c0_i32, %c0_i32_0 : i32, i32
  }
  func.func @transform_4(%arg0: i32) -> (i32, i32, i32) {
    %c0_i32 = arith.constant 0 : i32
    %c0_i32_0 = arith.constant 0 : i32
    %c0_i32_1 = arith.constant 0 : i32
    return %arg0, %c0_i32, %c0_i32_0 : i32, i32, i32
  }
}

module attributes {stable_mosaic.version = 11 : i64} {
  func.func @kernel(%arg0: i32, %arg1: memref<2x2x256xbf16, #tpu.memory_space<vmem>>, %arg2: memref<2x3x256xf32, #tpu.memory_space<vmem>>, %arg3: memref<3x2xf32, #tpu.memory_space<smem>>, %arg4: memref<3xf32, #tpu.memory_space<smem>>, %arg5: memref<2x3x256xf32, #tpu.memory_space<vmem>>) attributes {dimension_semantics = [#tpu.dimension_semantics<arbitrary>], iteration_bounds = array<i64: 1>, scalar_prefetch = 0 : i64, scratch_operands = 0 : i64, tpu.core_type = #tpu.core_type<tc>, window_params = [{pipeline_mode = #tpu.pipeline_mode<synchronous>, transform_indices = @transform_0, window_bounds = array<i64: 2, 2, 256>}, {pipeline_mode = #tpu.pipeline_mode<synchronous>, transform_indices = @transform_1, window_bounds = array<i64: 2, 3, 256>}, {transform_indices = @transform_2, window_bounds = array<i64: 3, 2>}, {transform_indices = @transform_3, window_bounds = array<i64: 3>}, {pipeline_mode = #tpu.pipeline_mode<synchronous>, transform_indices = @transform_4, window_bounds = array<i64: 2, 3, 256>}]} {
    %c0 = arith.constant 0 : index
    %c0_0 = arith.constant 0 : index
    %c0_1 = arith.constant 0 : index
    %0 = vector.load %arg1[%c0, %c0_0, %c0_1] : memref<2x2x256xbf16, #tpu.memory_space<vmem>>, vector<1x2x256xbf16>
    %1 = vector.shape_cast %0 : vector<1x2x256xbf16> to vector<2x256xbf16>
    %2 = arith.extf %1 : vector<2x256xbf16> to vector<2x256xf32>
    %3 = vector.extract_strided_slice %2 {offsets = [0, 0], sizes = [1, 256], strides = [1, 1]} : vector<2x256xf32> to vector<1x256xf32>
    %c0_2 = arith.constant 0 : index
    %c0_3 = arith.constant 0 : index
    %4 = memref.load %arg3[%c0_2, %c0_3] : memref<3x2xf32, #tpu.memory_space<smem>>
    %5 = vector.broadcast %4 : f32 to vector<1x256xf32>
    %6 = arith.mulf %3, %5 : vector<1x256xf32>
    %7 = vector.extract_strided_slice %2 {offsets = [1, 0], sizes = [1, 256], strides = [1, 1]} : vector<2x256xf32> to vector<1x256xf32>
    %c0_4 = arith.constant 0 : index
    %c1 = arith.constant 1 : index
    %8 = memref.load %arg3[%c0_4, %c1] : memref<3x2xf32, #tpu.memory_space<smem>>
    %9 = vector.broadcast %8 : f32 to vector<1x256xf32>
    %10 = arith.mulf %7, %9 : vector<1x256xf32>
    %11 = arith.addf %6, %10 : vector<1x256xf32>
    %c0_5 = arith.constant 0 : index
    %12 = memref.load %arg4[%c0_5] : memref<3xf32, #tpu.memory_space<smem>>
    %13 = vector.broadcast %12 : f32 to vector<1x256xf32>
    %14 = arith.addf %11, %13 : vector<1x256xf32>
    %15 = vector.extract_strided_slice %2 {offsets = [0, 0], sizes = [1, 256], strides = [1, 1]} : vector<2x256xf32> to vector<1x256xf32>
    %c1_6 = arith.constant 1 : index
    %c0_7 = arith.constant 0 : index
    %16 = memref.load %arg3[%c1_6, %c0_7] : memref<3x2xf32, #tpu.memory_space<smem>>
    %17 = vector.broadcast %16 : f32 to vector<1x256xf32>
    %18 = arith.mulf %15, %17 : vector<1x256xf32>
    %19 = vector.extract_strided_slice %2 {offsets = [1, 0], sizes = [1, 256], strides = [1, 1]} : vector<2x256xf32> to vector<1x256xf32>
    %c1_8 = arith.constant 1 : index
    %c1_9 = arith.constant 1 : index
    %20 = memref.load %arg3[%c1_8, %c1_9] : memref<3x2xf32, #tpu.memory_space<smem>>
    %21 = vector.broadcast %20 : f32 to vector<1x256xf32>
    %22 = arith.mulf %19, %21 : vector<1x256xf32>
    %23 = arith.addf %18, %22 : vector<1x256xf32>
    %c1_10 = arith.constant 1 : index
    %24 = memref.load %arg4[%c1_10] : memref<3xf32, #tpu.memory_space<smem>>
    %25 = vector.broadcast %24 : f32 to vector<1x256xf32>
    %26 = arith.addf %23, %25 : vector<1x256xf32>
    %27 = vector.extract_strided_slice %2 {offsets = [0, 0], sizes = [1, 256], strides = [1, 1]} : vector<2x256xf32> to vector<1x256xf32>
    %c2 = arith.constant 2 : index
    %c0_11 = arith.constant 0 : index
    %28 = memref.load %arg3[%c2, %c0_11] : memref<3x2xf32, #tpu.memory_space<smem>>
    %29 = vector.broadcast %28 : f32 to vector<1x256xf32>
    %30 = arith.mulf %27, %29 : vector<1x256xf32>
    %31 = vector.extract_strided_slice %2 {offsets = [1, 0], sizes = [1, 256], strides = [1, 1]} : vector<2x256xf32> to vector<1x256xf32>
    %c2_12 = arith.constant 2 : index
    %c1_13 = arith.constant 1 : index
    %32 = memref.load %arg3[%c2_12, %c1_13] : memref<3x2xf32, #tpu.memory_space<smem>>
    %33 = vector.broadcast %32 : f32 to vector<1x256xf32>
    %34 = arith.mulf %31, %33 : vector<1x256xf32>
    %35 = arith.addf %30, %34 : vector<1x256xf32>
    %c2_14 = arith.constant 2 : index
    %36 = memref.load %arg4[%c2_14] : memref<3xf32, #tpu.memory_space<smem>>
    %37 = vector.broadcast %36 : f32 to vector<1x256xf32>
    %38 = arith.addf %35, %37 : vector<1x256xf32>
    %39 = tpu.concatenate %14, %26, %38 in 0 : vector<1x256xf32>, vector<1x256xf32>, vector<1x256xf32> -> vector<3x256xf32>
    %40 = math.tanh %39 : vector<3x256xf32>
    %c0_15 = arith.constant 0 : index
    %c0_16 = arith.constant 0 : index
    %c0_17 = arith.constant 0 : index
    %41 = vector.load %arg2[%c0_15, %c0_16, %c0_17] : memref<2x3x256xf32, #tpu.memory_space<vmem>>, vector<1x3x256xf32>
    %42 = vector.shape_cast %41 : vector<1x3x256xf32> to vector<3x256xf32>
    %43 = arith.addf %40, %42 : vector<3x256xf32>
    %c0_18 = arith.constant 0 : index
    %c0_19 = arith.constant 0 : index
    %c0_20 = arith.constant 0 : index
    %44 = vector.load %arg5[%c0_18, %c0_19, %c0_20] : memref<2x3x256xf32, #tpu.memory_space<vmem>>, vector<1x3x256xf32>
    %45 = vector.shape_cast %44 : vector<1x3x256xf32> to vector<3x256xf32>
    %46 = vector.shape_cast %43 : vector<3x256xf32> to vector<1x3x256xf32>
    tpu.vector_store %arg5[%c0_18, %c0_19, %c0_20], %46 {strides = array<i32>} : memref<2x3x256xf32, #tpu.memory_space<vmem>>, vector<1x3x256xf32>,
    %47 = vector.shape_cast %43 : vector<3x256xf32> to vector<1x3x256xf32>
    %cst = arith.constant dense<0xFF800000> : vector<1xf32>
    %48 = vector.multi_reduction <maximumf>, %47, %cst [1, 2] : vector<1x3x256xf32> to vector<1xf32>
    %49 = vector.shape_cast %48 : vector<1xf32> to vector<1x1x1xf32>
    %50 = vector.extract %49[0, 0, 0] : f32 from vector<1x1x1xf32>
    %51 = vector.shape_cast %43 : vector<3x256xf32> to vector<1x3x256xf32>
    %cst_21 = arith.constant dense<0x7F800000> : vector<1xf32>
    %52 = vector.multi_reduction <minimumf>, %51, %cst_21 [1, 2] : vector<1x3x256xf32> to vector<1xf32>
    %53 = vector.shape_cast %52 : vector<1xf32> to vector<1x1x1xf32>
    %54 = vector.extract %53[0, 0, 0] : f32 from vector<1x1x1xf32>
    %c1_22 = arith.constant 1 : index
    %c0_23 = arith.constant 0 : index
    %c0_24 = arith.constant 0 : index
    %55 = vector.load %arg1[%c1_22, %c0_23, %c0_24] : memref<2x2x256xbf16, #tpu.memory_space<vmem>>, vector<1x2x256xbf16>
    %56 = vector.shape_cast %55 : vector<1x2x256xbf16> to vector<2x256xbf16>
    %57 = arith.extf %56 : vector<2x256xbf16> to vector<2x256xf32>
    %58 = vector.extract_strided_slice %57 {offsets = [0, 0], sizes = [1, 256], strides = [1, 1]} : vector<2x256xf32> to vector<1x256xf32>
    %c0_25 = arith.constant 0 : index
    %c0_26 = arith.constant 0 : index
    %59 = memref.load %arg3[%c0_25, %c0_26] : memref<3x2xf32, #tpu.memory_space<smem>>
    %60 = vector.broadcast %59 : f32 to vector<1x256xf32>
    %61 = arith.mulf %58, %60 : vector<1x256xf32>
    %62 = vector.extract_strided_slice %57 {offsets = [1, 0], sizes = [1, 256], strides = [1, 1]} : vector<2x256xf32> to vector<1x256xf32>
    %c0_27 = arith.constant 0 : index
    %c1_28 = arith.constant 1 : index
    %63 = memref.load %arg3[%c0_27, %c1_28] : memref<3x2xf32, #tpu.memory_space<smem>>
    %64 = vector.broadcast %63 : f32 to vector<1x256xf32>
    %65 = arith.mulf %62, %64 : vector<1x256xf32>
    %66 = arith.addf %61, %65 : vector<1x256xf32>
    %c0_29 = arith.constant 0 : index
    %67 = memref.load %arg4[%c0_29] : memref<3xf32, #tpu.memory_space<smem>>
    %68 = vector.broadcast %67 : f32 to vector<1x256xf32>
    %69 = arith.addf %66, %68 : vector<1x256xf32>
    %70 = vector.extract_strided_slice %57 {offsets = [0, 0], sizes = [1, 256], strides = [1, 1]} : vector<2x256xf32> to vector<1x256xf32>
    %c1_30 = arith.constant 1 : index
    %c0_31 = arith.constant 0 : index
    %71 = memref.load %arg3[%c1_30, %c0_31] : memref<3x2xf32, #tpu.memory_space<smem>>
    %72 = vector.broadcast %71 : f32 to vector<1x256xf32>
    %73 = arith.mulf %70, %72 : vector<1x256xf32>
    %74 = vector.extract_strided_slice %57 {offsets = [1, 0], sizes = [1, 256], strides = [1, 1]} : vector<2x256xf32> to vector<1x256xf32>
    %c1_32 = arith.constant 1 : index
    %c1_33 = arith.constant 1 : index
    %75 = memref.load %arg3[%c1_32, %c1_33] : memref<3x2xf32, #tpu.memory_space<smem>>
    %76 = vector.broadcast %75 : f32 to vector<1x256xf32>
    %77 = arith.mulf %74, %76 : vector<1x256xf32>
    %78 = arith.addf %73, %77 : vector<1x256xf32>
    %c1_34 = arith.constant 1 : index
    %79 = memref.load %arg4[%c1_34] : memref<3xf32, #tpu.memory_space<smem>>
    %80 = vector.broadcast %79 : f32 to vector<1x256xf32>
    %81 = arith.addf %78, %80 : vector<1x256xf32>
    %82 = vector.extract_strided_slice %57 {offsets = [0, 0], sizes = [1, 256], strides = [1, 1]} : vector<2x256xf32> to vector<1x256xf32>
    %c2_35 = arith.constant 2 : index
    %c0_36 = arith.constant 0 : index
    %83 = memref.load %arg3[%c2_35, %c0_36] : memref<3x2xf32, #tpu.memory_space<smem>>
    %84 = vector.broadcast %83 : f32 to vector<1x256xf32>
    %85 = arith.mulf %82, %84 : vector<1x256xf32>
    %86 = vector.extract_strided_slice %57 {offsets = [1, 0], sizes = [1, 256], strides = [1, 1]} : vector<2x256xf32> to vector<1x256xf32>
    %c2_37 = arith.constant 2 : index
    %c1_38 = arith.constant 1 : index
    %87 = memref.load %arg3[%c2_37, %c1_38] : memref<3x2xf32, #tpu.memory_space<smem>>
    %88 = vector.broadcast %87 : f32 to vector<1x256xf32>
    %89 = arith.mulf %86, %88 : vector<1x256xf32>
    %90 = arith.addf %85, %89 : vector<1x256xf32>
    %c2_39 = arith.constant 2 : index
    %91 = memref.load %arg4[%c2_39] : memref<3xf32, #tpu.memory_space<smem>>
    %92 = vector.broadcast %91 : f32 to vector<1x256xf32>
    %93 = arith.addf %90, %92 : vector<1x256xf32>
    %94 = tpu.concatenate %69, %81, %93 in 0 : vector<1x256xf32>, vector<1x256xf32>, vector<1x256xf32> -> vector<3x256xf32>
    %95 = math.tanh %94 : vector<3x256xf32>
    %c1_40 = arith.constant 1 : index
    %c0_41 = arith.constant 0 : index
    %c0_42 = arith.constant 0 : index
    %96 = vector.load %arg2[%c1_40, %c0_41, %c0_42] : memref<2x3x256xf32, #tpu.memory_space<vmem>>, vector<1x3x256xf32>
    %97 = vector.shape_cast %96 : vector<1x3x256xf32> to vector<3x256xf32>
    %98 = arith.addf %95, %97 : vector<3x256xf32>
    %c1_43 = arith.constant 1 : index
    %c0_44 = arith.constant 0 : index
    %c0_45 = arith.constant 0 : index
    %99 = vector.load %arg5[%c1_43, %c0_44, %c0_45] : memref<2x3x256xf32, #tpu.memory_space<vmem>>, vector<1x3x256xf32>
    %100 = vector.shape_cast %99 : vector<1x3x256xf32> to vector<3x256xf32>
    %101 = vector.shape_cast %98 : vector<3x256xf32> to vector<1x3x256xf32>
    tpu.vector_store %arg5[%c1_43, %c0_44, %c0_45], %101 {strides = array<i32>} : memref<2x3x256xf32, #tpu.memory_space<vmem>>, vector<1x3x256xf32>,
    %102 = vector.shape_cast %98 : vector<3x256xf32> to vector<1x3x256xf32>
    %cst_46 = arith.constant dense<0xFF800000> : vector<1xf32>
    %103 = vector.multi_reduction <maximumf>, %102, %cst_46 [1, 2] : vector<1x3x256xf32> to vector<1xf32>
    %104 = vector.shape_cast %103 : vector<1xf32> to vector<1x1x1xf32>
    %105 = vector.extract %104[0, 0, 0] : f32 from vector<1x1x1xf32>
    %106 = vector.shape_cast %98 : vector<3x256xf32> to vector<1x3x256xf32>
    %cst_47 = arith.constant dense<0x7F800000> : vector<1xf32>
    %107 = vector.multi_reduction <minimumf>, %106, %cst_47 [1, 2] : vector<1x3x256xf32> to vector<1xf32>
    %108 = vector.shape_cast %107 : vector<1xf32> to vector<1x1x1xf32>
    %109 = vector.extract %108[0, 0, 0] : f32 from vector<1x1x1xf32>
    %110 = arith.maximumf %50, %105 : f32
    %111 = arith.minimumf %54, %109 : f32
    %cst_48 = arith.constant 1.000000e+00 : f32
    %112 = arith.cmpf ogt, %110, %cst_48 : f32
    %cst_49 = arith.constant 0.000000e+00 : f32
    %113 = arith.cmpf olt, %111, %cst_49 : f32
    %114 = arith.ori %112, %113 : i1
    %c0_50 = arith.constant 0 : index
    %c0_51 = arith.constant 0 : index
    %c0_52 = arith.constant 0 : index
    %115 = vector.load %arg5[%c0_50, %c0_51, %c0_52] : memref<2x3x256xf32, #tpu.memory_space<vmem>>, vector<1x3x256xf32>
    %116 = vector.shape_cast %115 : vector<1x3x256xf32> to vector<3x256xf32>
    %cst_53 = arith.constant dense<0xFF800000> : vector<3xf32>
    %117 = vector.multi_reduction <maximumf>, %116, %cst_53 [1] : vector<3x256xf32> to vector<3xf32>
    %118 = vector.shape_cast %117 : vector<3xf32> to vector<3x1xf32>
    %cst_54 = arith.constant dense<0x7F800000> : vector<3xf32>
    %119 = vector.multi_reduction <minimumf>, %116, %cst_54 [1] : vector<3x256xf32> to vector<3xf32>
    %120 = vector.shape_cast %119 : vector<3xf32> to vector<3x1xf32>
    %121 = vector.broadcast %120 : vector<3x1xf32> to vector<3x256xf32>
    %122 = arith.subf %116, %121 : vector<3x256xf32>
    %123 = arith.subf %118, %120 : vector<3x1xf32>
    %cst_55 = arith.constant 1.000000e-07 : f32
    %124 = vector.broadcast %cst_55 : f32 to vector<3x1xf32>
    %125 = arith.addf %123, %124 : vector<3x1xf32>
    %126 = vector.broadcast %125 : vector<3x1xf32> to vector<3x256xf32>
    %127 = arith.divf %122, %126 : vector<3x256xf32>
    %128 = arith.select %114, %127, %116 : vector<3x256xf32>
    %c0_56 = arith.constant 0 : index
    %c0_57 = arith.constant 0 : index
    %c0_58 = arith.constant 0 : index
    %129 = vector.load %arg5[%c0_56, %c0_57, %c0_58] : memref<2x3x256xf32, #tpu.memory_space<vmem>>, vector<1x3x256xf32>
    %130 = vector.shape_cast %129 : vector<1x3x256xf32> to vector<3x256xf32>
    %131 = vector.shape_cast %128 : vector<3x256xf32> to vector<1x3x256xf32>
    tpu.vector_store %arg5[%c0_56, %c0_57, %c0_58], %131 {strides = array<i32>} : memref<2x3x256xf32, #tpu.memory_space<vmem>>, vector<1x3x256xf32>,
    %c1_59 = arith.constant 1 : index
    %c0_60 = arith.constant 0 : index
    %c0_61 = arith.constant 0 : index
    %132 = vector.load %arg5[%c1_59, %c0_60, %c0_61] : memref<2x3x256xf32, #tpu.memory_space<vmem>>, vector<1x3x256xf32>
    %133 = vector.shape_cast %132 : vector<1x3x256xf32> to vector<3x256xf32>
    %cst_62 = arith.constant dense<0xFF800000> : vector<3xf32>
    %134 = vector.multi_reduction <maximumf>, %133, %cst_62 [1] : vector<3x256xf32> to vector<3xf32>
    %135 = vector.shape_cast %134 : vector<3xf32> to vector<3x1xf32>
    %cst_63 = arith.constant dense<0x7F800000> : vector<3xf32>
    %136 = vector.multi_reduction <minimumf>, %133, %cst_63 [1] : vector<3x256xf32> to vector<3xf32>
    %137 = vector.shape_cast %136 : vector<3xf32> to vector<3x1xf32>
    %138 = vector.broadcast %137 : vector<3x1xf32> to vector<3x256xf32>
    %139 = arith.subf %133, %138 : vector<3x256xf32>
    %140 = arith.subf %135, %137 : vector<3x1xf32>
    %cst_64 = arith.constant 1.000000e-07 : f32
    %141 = vector.broadcast %cst_64 : f32 to vector<3x1xf32>
    %142 = arith.addf %140, %141 : vector<3x1xf32>
    %143 = vector.broadcast %142 : vector<3x1xf32> to vector<3x256xf32>
    %144 = arith.divf %139, %143 : vector<3x256xf32>
    %145 = arith.select %114, %144, %133 : vector<3x256xf32>
    %c1_65 = arith.constant 1 : index
    %c0_66 = arith.constant 0 : index
    %c0_67 = arith.constant 0 : index
    %146 = vector.load %arg5[%c1_65, %c0_66, %c0_67] : memref<2x3x256xf32, #tpu.memory_space<vmem>>, vector<1x3x256xf32>
    %147 = vector.shape_cast %146 : vector<1x3x256xf32> to vector<3x256xf32>
    %148 = vector.shape_cast %145 : vector<3x256xf32> to vector<1x3x256xf32>
    tpu.vector_store %arg5[%c1_65, %c0_66, %c0_67], %148 {strides = array<i32>} : memref<2x3x256xf32, #tpu.memory_space<vmem>>, vector<1x3x256xf32>,
    return
  }
  func.func @transform_0(%arg0: i32) -> (i32, i32, i32) {
    %c0_i32 = arith.constant 0 : i32
    %c0_i32_0 = arith.constant 0 : i32
    %c0_i32_1 = arith.constant 0 : i32
    %c0_i32_2 = arith.constant 0 : i32
    return %c0_i32, %c0_i32_0, %c0_i32_1 : i32, i32, i32
  }
  func.func @transform_1(%arg0: i32) -> (i32, i32, i32) {
    %c0_i32 = arith.constant 0 : i32
    %c0_i32_0 = arith.constant 0 : i32
    %c0_i32_1 = arith.constant 0 : i32
    %c0_i32_2 = arith.constant 0 : i32
    return %c0_i32, %c0_i32_0, %c0_i32_1 : i32, i32, i32
  }
  func.func @transform_2(%arg0: i32) -> (i32, i32) {
    %c0_i32 = arith.constant 0 : i32
    %c0_i32_0 = arith.constant 0 : i32
    %c0_i32_1 = arith.constant 0 : i32
    return %c0_i32, %c0_i32_0 : i32, i32
  }
  func.func @transform_3(%arg0: i32) -> i32 {
    %c0_i32 = arith.constant 0 : i32
    %c0_i32_0 = arith.constant 0 : i32
    return %c0_i32 : i32
  }
  func.func @transform_4(%arg0: i32) -> (i32, i32, i32) {
    %c0_i32 = arith.constant 0 : i32
    %c0_i32_0 = arith.constant 0 : i32
    %c0_i32_1 = arith.constant 0 : i32
    %c0_i32_2 = arith.constant 0 : i32
    return %c0_i32, %c0_i32_0, %c0_i32_1 : i32, i32, i32
  }
}

</mosaic_0001>

<llo_original>
// kernel: _lambda_.10
$region0: #{_lambda_.10}
  #allocation0 [shape = 'u32[]', space=smem, size = 0x4, offset = 0x4, fixed_abs, tag = 'smem constant byte address 0x4 - core index']
  #allocation1 [shape = 'u32[72,128]{1,0:T(1,128)}', space=vmem, size = 0x9000, scoped, tag = 'internal scratch']
  #allocation2 [shape = 'bf16[144,384]{1,0:T(8,128)(2,1)}', space=vmem, size = 0x1b000, scoped, tag = 'scratch operand']
  %s0 = inlined_call_operand.vmem [shape: bf16[2,16,512], index: 0, kind: input, shape index: {}]
  %s1 = inlined_call_operand.vmem [shape: bf16[8,144], index: 1, kind: input, shape index: {}]
  %s2 = inlined_call_operand.vmem [shape: f32[8,1], index: 2, kind: input, shape index: {}]
  %s3 = inlined_call_operand.vmem [shape: bf16[2,8,384], index: 3, kind: output, shape index: {}]
  %s4 = sld [smem:[#allocation0]]
  $region45: #{_lambda_.10} parent=0
    _
  %s6 = ssub.s32 1, %s4
  %s7 = scalar_select 0, %s6, %s4
  loop: start=0, step=1, limit=4
  $region2: #{_lambda_.10} parent=0 // loop_pre_header
    _
  $region3: #{_lambda_.10} parent=0 // loop_header
    %s9 = sphi 0, %s13
    %p10 = scmp.ge.s32.totalorder %s9, 4
    %s19 = sphi 0, %s21
    %s22 = sphi 0, %s19
    %s23 = sphi 0, %s22
    %s39 = sphi 0, %s23
    %s43 = sphi 0, %s43
    %s45 = sphi 0, %s43
    %s46 = sphi 0, %s45
    %s60 = sphi 0, %s46
    %s64 = sphi 0, %s64
    %s66 = sphi 0, %s64
    %s67 = sphi 0, %s66
    %s81 = sphi 0, %s67
    %s87 = sphi 0, %s89
    %s90 = sphi 0, %s87
    %s91 = sphi 0, %s90
    %s107 = sphi 0, %s91
  $region4: #{_lambda_.10} parent=0 // loop_header_branch
    %12 = sbr.rel (%p10) target = $region8
  $region5: #{_lambda_.10} parent=0 // loop_body
    %s14 = ssub.s32 %s9, 1
    %s15 = ssub.s32 %s9, 2
    %s16 = sadd.s32 %s9, 1
    %s17 = ssub.s32 %s9, %s16
    %p18 = scmp.eq.s32.totalorder %s17, 0
    %s20 = sadd.s32 %s19, 1
    %s21 = scalar_select %p18, %s19, %s20
    %p24 = pneg %p18
    %p25 = scmp.eq.s32.totalorder %s9, 1
    %p26 = por %p24, %p25
    %p27 = scmp.ne.s32.totalorder %s19, %s22
    %p28 = scmp.eq.s32.totalorder %s9, 0
    %p29 = por %p27, %p28
    %p30 = scmp.ne.s32.totalorder %s19, %s22
    %p31 = scmp.eq.s32.totalorder %s14, 1
    %p32 = por %p30, %p31
    %p33 = scmp.ne.s32.totalorder %s22, %s23
    %p34 = scmp.eq.s32.totalorder %s14, 0
    %p35 = por %p33, %p34
    %p36 = scmp.ne.s32.totalorder %s22, %s23
    %p37 = scmp.eq.s32.totalorder %s15, 1
    %p38 = por %p36, %p37
    %p40 = scmp.ne.s32.totalorder %s23, %s39
    %p41 = scmp.eq.s32.totalorder %s15, 0
    %p42 = por %p40, %p41
    %s44 = sadd.s32 %s43, 1
    %p47 = scmp.eq.s32.totalorder %s9, 1
    %p48 = scmp.ne.s32.totalorder %s43, %s45
    %p49 = scmp.eq.s32.totalorder %s9, 0
    %p50 = por %p48, %p49
    %p51 = scmp.ne.s32.totalorder %s43, %s45
    %p52 = scmp.eq.s32.totalorder %s14, 1
    %p53 = por %p51, %p52
    %p54 = scmp.ne.s32.totalorder %s45, %s46
    %p55 = scmp.eq.s32.totalorder %s14, 0
    %p56 = por %p54, %p55
    %p57 = scmp.ne.s32.totalorder %s45, %s46
    %p58 = scmp.eq.s32.totalorder %s15, 1
    %p59 = por %p57, %p58
    %p61 = scmp.ne.s32.totalorder %s46, %s60
    %p62 = scmp.eq.s32.totalorder %s15, 0
    %p63 = por %p61, %p62
    %s65 = sadd.s32 %s64, 1
    %p68 = scmp.eq.s32.totalorder %s9, 1
    %p69 = scmp.ne.s32.totalorder %s64, %s66
    %p70 = scmp.eq.s32.totalorder %s9, 0
    %p71 = por %p69, %p70
    %p72 = scmp.ne.s32.totalorder %s64, %s66
    %p73 = scmp.eq.s32.totalorder %s14, 1
    %p74 = por %p72, %p73
    %p75 = scmp.ne.s32.totalorder %s66, %s67
    %p76 = scmp.eq.s32.totalorder %s14, 0
    %p77 = por %p75, %p76
    %p78 = scmp.ne.s32.totalorder %s66, %s67
    %p79 = scmp.eq.s32.totalorder %s15, 1
    %p80 = por %p78, %p79
    %p82 = scmp.ne.s32.totalorder %s67, %s81
    %p83 = scmp.eq.s32.totalorder %s15, 0
    %p84 = por %p82, %p83
    %s85 = ssub.s32 %s9, %s16
    %p86 = scmp.eq.s32.totalorder %s85, 0
    %s88 = sadd.s32 %s87, 1
    %s89 = scalar_select %p86, %s87, %s88
    %p92 = pneg %p86
    %p93 = scmp.eq.s32.totalorder %s9, 1
    %p94 = por %p92, %p93
    %p95 = scmp.ne.s32.totalorder %s87, %s90
    %p96 = scmp.eq.s32.totalorder %s9, 0
    %p97 = por %p95, %p96
    %p98 = scmp.ne.s32.totalorder %s87, %s90
    %p99 = scmp.eq.s32.totalorder %s14, 1
    %p100 = por %p98, %p99
    %p101 = scmp.ne.s32.totalorder %s90, %s91
    %p102 = scmp.eq.s32.totalorder %s14, 0
    %p103 = por %p101, %p102
    %p104 = scmp.ne.s32.totalorder %s90, %s91
    %p105 = scmp.eq.s32.totalorder %s15, 1
    %p106 = por %p104, %p105
    %p108 = scmp.ne.s32.totalorder %s91, %s107
    %p109 = scmp.eq.s32.totalorder %s15, 0
    %p110 = por %p108, %p109
    %p111 = scmp.le.s32.totalorder 1, %s9
    %p112 = scmp.lt.s32.totalorder %s9, 3
    %p113 = pnand %p111, %p112
    %p114 = pneg %p113
    // Predicated region
    $region9: #{_lambda_.10} parent=5 // pred_check
      _
    $region10: #{_lambda_.10} parent=5 // pred_check_branch
      %116 = sbr.rel (%p113) target = $region12
    $region11: #{_lambda_.10} parent=5 // pred_region
      %s117 = ssub.s32 %s9, 1
      // Predicated region
      $region13: #{_lambda_.10} parent=11 // pred_check
        %p118 = pneg %p56
      $region14: #{_lambda_.10} parent=11 // pred_check_branch
        %120 = sbr.rel (%p118) target = $region16
      $region15: #{_lambda_.10} parent=11 // pred_region
        _
      $region16: #{_lambda_.10} parent=11 // pred_fallthru
        _
      // Predicated region
      $region17: #{_lambda_.10} parent=11 // pred_check
        %p121 = pneg %p77
      $region18: #{_lambda_.10} parent=11 // pred_check_branch
        %123 = sbr.rel (%p121) target = $region20
      $region19: #{_lambda_.10} parent=11 // pred_region
        _
      $region20: #{_lambda_.10} parent=11 // pred_fallthru
        _
    $region12: #{_lambda_.10} parent=5 // pred_fallthru
      _
    %p124 = scmp.lt.s32.totalorder %s9, 2
    // Predicated region
    $region21: #{_lambda_.10} parent=5 // pred_check
      %p125 = pneg %p124
    $region22: #{_lambda_.10} parent=5 // pred_check_branch
      %127 = sbr.rel (%p125) target = $region24
    $region23: #{_lambda_.10} parent=5 // pred_region
      // Predicated region
      $region25: #{_lambda_.10} parent=23 // pred_check
        %p128 = pneg %p29
      $region26: #{_lambda_.10} parent=23 // pred_check_branch
        %130 = sbr.rel (%p128) target = $region28
      $region27: #{_lambda_.10} parent=23 // pred_region
        %p131 = scmp.lt.s32.totalorder %s9, 1
        %s132 = scalar_select %p131, %s9, 1
        %s133 = smul.addr %s132, 8
        %s134 = smul.addr %s133, 4
        %s135 = scalar_lea.vmem %s0, %s134
      $region28: #{_lambda_.10} parent=23 // pred_fallthru
        _
    $region24: #{_lambda_.10} parent=5 // pred_fallthru
      _
    %p136 = scmp.le.s32.totalorder 1, %s9
    %p137 = scmp.lt.s32.totalorder %s9, 3
    %p138 = pnand %p136, %p137
    %p139 = pneg %p138
    // Predicated region
    $region29: #{_lambda_.10} parent=5 // pred_check
      _
    $region30: #{_lambda_.10} parent=5 // pred_check_branch
      %141 = sbr.rel (%p138) target = $region32
    $region31: #{_lambda_.10} parent=5 // pred_region
      %s142 = ssub.s32 %s9, 1
      %p143 = scmp.lt.s32.totalorder %s14, 1
      %s144 = scalar_select %p143, %s14, 1
      %s145 = smul.addr %s144, 8
      %s146 = smul.addr %s145, 4
      %s147 = scalar_lea.vmem %s0, %s146
      %p148 = pneg %p35
      %p149 = pneg %p32
      %p150 = pneg %p56
      %p151 = pneg %p53
      %p152 = pneg %p77
      %p153 = pneg %p74
      %p154 = pneg %p103
      %p155 = pneg %p100
      %p156 = scmp.lt.s32.totalorder %s14, 1
      %s157 = scalar_select %p156, %s14, 1
      %s158 = smul.addr %s157, 3
      %s159 = smul.addr %s158, 4
      %s160 = scalar_lea.vmem %s3, %s159
      %p161 = scmp.lt.s32.totalorder %s14, 1
      %s162 = scalar_select %p161, %s14, 1
      %s163 = smul.addr %s162, 8
      %s164 = smul.addr %s163, 4
      %s165 = scalar_lea.vmem %s0, %s164
      %p166 = scmp.lt.s32.totalorder %s14, 1
      %s167 = scalar_select %p166, %s14, 1
      %s168 = smul.addr %s167, 3
      %s169 = smul.addr %s168, 4
      %s170 = scalar_lea.vmem %s3, %s169
      %v172 = vld [vmem:[%s165] sm:$0xff]
      %v173 = vld [vmem:[%s165 + $0x8] sm:$0xff]
      %v174 = vld [vmem:[%s165 + $0x10] sm:$0xff]
      %v175 = vld [vmem:[%s165 + $0x18] sm:$0xff]
      %v176 = vunpack.c.l.bf16 %v172
      %v177 = vunpack.c.h.bf16 %v172
      %v178 = vunpack.c.l.bf16 %v173
      %v179 = vunpack.c.h.bf16 %v173
      %v180 = vunpack.c.l.bf16 %v174
      %v181 = vunpack.c.h.bf16 %v174
      %v182 = vunpack.c.l.bf16 %v175
      %v183 = vunpack.c.h.bf16 %v175
      %v184 = vpack.c.bf16 %v177, %v176
      %v185 = vpack.c.bf16 %v178, %v178
      %v186 = vpack.c.bf16 %v181, %v180
      %v187 = vpack.c.bf16 %v182, %v182
      %188 = vst [vmem:[#allocation2] sm:$0xff] %v184
      %189 = vst [vmem:[#allocation2 + $0x8] sm:$0xf] %v185
      %190 = vst [vmem:[#allocation2 + $0xc] sm:$0xff] %v186
      %191 = vst [vmem:[#allocation2 + $0x14] sm:$0xf] %v187
      %v192 = vpack.c.bf16 %v179, %v178
      %v193 = vpack.c.bf16 %v183, %v182
      %198 = vrot.lane.b32.xlu0 %v184, 127
      %v199 = vpop.permute.xlu0 %198
      %200 = vrot.lane.b32.xlu0 %v192, 127
      %v201 = vpop.permute.xlu0 %200
      %202 = vrot.lane.b32.xlu0 %v186, 127
      %v203 = vpop.permute.xlu0 %202
      %204 = vrot.lane.b32.xlu0 %v193, 127
      %v205 = vpop.permute.xlu0 %204
      %v206 = vrot.slane %v199, 4
      %v207 = vrot.slane %v201, 4
      %v208 = vrot.slane %v203, 4
      %v209 = vrot.slane %v205, 4
      %vm210 = vcmask 1043456
      %v211 = vsel %vm210, %v206, %v207
      %vm212 = vcmask 1039360
      %v213 = vsel %vm212, %v199, %v211
      %v214 = vsel %vm212, %v201, %v207
      %v215 = vsel %vm210, %v208, %v209
      %v216 = vsel %vm212, %v203, %v215
      %v217 = vsel %vm212, %v205, %v209
      %222 = vst [vmem:[#allocation2 + $0x18] sm:$0xff] %v213
      %223 = vst [vmem:[#allocation2 + $0x20] sm:$0xf] %v214
      %224 = vst [vmem:[#allocation2 + $0x24] sm:$0xff] %v216
      %225 = vst [vmem:[#allocation2 + $0x2c] sm:$0xf] %v217
      %226 = vrot.lane.b32.xlu0 %v184, 126
      %v227 = vpop.permute.xlu0 %226
      %228 = vrot.lane.b32.xlu0 %v192, 126
      %v229 = vpop.permute.xlu0 %228
      %230 = vrot.lane.b32.xlu0 %v186, 126
      %v231 = vpop.permute.xlu0 %230
      %232 = vrot.lane.b32.xlu0 %v193, 126
      %v233 = vpop.permute.xlu0 %232
      %v234 = vrot.slane %v227, 4
      %v235 = vrot.slane %v229, 4
      %v236 = vrot.slane %v231, 4
      %v237 = vrot.slane %v233, 4
      %v238 = vsel %vm210, %v234, %v235
      %vm239 = vcmask 1031168
      %v240 = vsel %vm239, %v227, %v238
      %v241 = vsel %vm239, %v229, %v235
      %v242 = vsel %vm210, %v236, %v237
      %v243 = vsel %vm239, %v231, %v242
      %v244 = vsel %vm239, %v233, %v237
      %249 = vst [vmem:[#allocation2 + $0x30] sm:$0xff] %v240
      %250 = vst [vmem:[#allocation2 + $0x38] sm:$0xf] %v241
      %251 = vst [vmem:[#allocation2 + $0x3c] sm:$0xff] %v243
      %252 = vst [vmem:[#allocation2 + $0x44] sm:$0xf] %v244
      %253 = vrot.lane.b32.xlu0 %v184, 110
      %v254 = vpop.permute.xlu0 %253
      %255 = vrot.lane.b32.xlu0 %v192, 110
      %v256 = vpop.permute.xlu0 %255
      %257 = vrot.lane.b32.xlu0 %v186, 110
      %v258 = vpop.permute.xlu0 %257
      %259 = vrot.lane.b32.xlu0 %v193, 110
      %v260 = vpop.permute.xlu0 %259
      %v261 = vrot.slane %v254, 4
      %v262 = vrot.slane %v256, 4
      %v263 = vrot.slane %v258, 4
      %v264 = vrot.slane %v260, 4
      %v265 = vsel %vm210, %v261, %v262
      %vm266 = vcmask 900096
      %v267 = vsel %vm266, %v254, %v265
      %v268 = vsel %vm266, %v256, %v262
      %v269 = vsel %vm210, %v263, %v264
      %v270 = vsel %vm266, %v258, %v269
      %v271 = vsel %vm266, %v260, %v264
      %276 = vst [vmem:[#allocation2 + $0x48] sm:$0xff] %v267
      %277 = vst [vmem:[#allocation2 + $0x50] sm:$0xf] %v268
      %278 = vst [vmem:[#allocation2 + $0x54] sm:$0xff] %v270
      %279 = vst [vmem:[#allocation2 + $0x5c] sm:$0xf] %v271
      %280 = vrot.lane.b32.xlu0 %v184, 109
      %v281 = vpop.permute.xlu0 %280
      %282 = vrot.lane.b32.xlu0 %v192, 109
      %v283 = vpop.permute.xlu0 %282
      %284 = vrot.lane.b32.xlu0 %v186, 109
      %v285 = vpop.permute.xlu0 %284
      %286 = vrot.lane.b32.xlu0 %v193, 109
      %v287 = vpop.permute.xlu0 %286
      %v288 = vrot.slane %v281, 4
      %v289 = vrot.slane %v283, 4
      %v290 = vrot.slane %v285, 4
      %v291 = vrot.slane %v287, 4
      %v292 = vsel %vm210, %v288, %v289
      %vm293 = vcmask 891904
      %v294 = vsel %vm293, %v281, %v292
      %v295 = vsel %vm293, %v283, %v289
      %v296 = vsel %vm210, %v290, %v291
      %v297 = vsel %vm293, %v285, %v296
      %v298 = vsel %vm293, %v287, %v291
      %303 = vst [vmem:[#allocation2 + $0x60] sm:$0xff] %v294
      %304 = vst [vmem:[#allocation2 + $0x68] sm:$0xf] %v295
      %305 = vst [vmem:[#allocation2 + $0x6c] sm:$0xff] %v297
      %306 = vst [vmem:[#allocation2 + $0x74] sm:$0xf] %v298
      %307 = vrot.lane.b32.xlu0 %v184, 108
      %v308 = vpop.permute.xlu0 %307
      %309 = vrot.lane.b32.xlu0 %v192, 108
      %v310 = vpop.permute.xlu0 %309
      %311 = vrot.lane.b32.xlu0 %v186, 108
      %v312 = vpop.permute.xlu0 %311
      %313 = vrot.lane.b32.xlu0 %v193, 108
      %v314 = vpop.permute.xlu0 %313
      %v315 = vrot.slane %v308, 4
      %v316 = vrot.slane %v310, 4
      %v317 = vrot.slane %v312, 4
      %v318 = vrot.slane %v314, 4
      %v319 = vsel %vm210, %v315, %v316
      %vm320 = vcmask 883712
      %v321 = vsel %vm320, %v308, %v319
      %v322 = vsel %vm320, %v310, %v316
      %v323 = vsel %vm210, %v317, %v318
      %v324 = vsel %vm320, %v312, %v323
      %v325 = vsel %vm320, %v314, %v318
      %330 = vst [vmem:[#allocation2 + $0x78] sm:$0xff] %v321
      %331 = vst [vmem:[#allocation2 + $0x80] sm:$0xf] %v322
      %332 = vst [vmem:[#allocation2 + $0x84] sm:$0xff] %v324
      %333 = vst [vmem:[#allocation2 + $0x8c] sm:$0xf] %v325
      %334 = vrot.lane.b32.xlu0 %v184, 92
      %v335 = vpop.permute.xlu0 %334
      %336 = vrot.lane.b32.xlu0 %v192, 92
      %v337 = vpop.permute.xlu0 %336
      %338 = vrot.lane.b32.xlu0 %v186, 92
      %v339 = vpop.permute.xlu0 %338
      %340 = vrot.lane.b32.xlu0 %v193, 92
      %v341 = vpop.permute.xlu0 %340
      %v342 = vrot.slane %v335, 4
      %v343 = vrot.slane %v337, 4
      %v344 = vrot.slane %v339, 4
      %v345 = vrot.slane %v341, 4
      %v346 = vsel %vm210, %v342, %v343
      %vm347 = vcmask 752640
      %v348 = vsel %vm347, %v335, %v346
      %v349 = vsel %vm347, %v337, %v343
      %v350 = vsel %vm210, %v344, %v345
      %v351 = vsel %vm347, %v339, %v350
      %v352 = vsel %vm347, %v341, %v345
      %357 = vst [vmem:[#allocation2 + $0x90] sm:$0xff] %v348
      %358 = vst [vmem:[#allocation2 + $0x98] sm:$0xf] %v349
      %359 = vst [vmem:[#allocation2 + $0x9c] sm:$0xff] %v351
      %360 = vst [vmem:[#allocation2 + $0xa4] sm:$0xf] %v352
      %361 = vrot.lane.b32.xlu0 %v184, 91
      %v362 = vpop.permute.xlu0 %361
      %363 = vrot.lane.b32.xlu0 %v192, 91
      %v364 = vpop.permute.xlu0 %363
      %365 = vrot.lane.b32.xlu0 %v186, 91
      %v366 = vpop.permute.xlu0 %365
      %367 = vrot.lane.b32.xlu0 %v193, 91
      %v368 = vpop.permute.xlu0 %367
      %v369 = vrot.slane %v362, 4
      %v370 = vrot.slane %v364, 4
      %v371 = vrot.slane %v366, 4
      %v372 = vrot.slane %v368, 4
      %v373 = vsel %vm210, %v369, %v370
      %vm374 = vcmask 744448
      %v375 = vsel %vm374, %v362, %v373
      %v376 = vsel %vm374, %v364, %v370
      %v377 = vsel %vm210, %v371, %v372
      %v378 = vsel %vm374, %v366, %v377
      %v379 = vsel %vm374, %v368, %v372
      %384 = vst [vmem:[#allocation2 + $0xa8] sm:$0xff] %v375
      %385 = vst [vmem:[#allocation2 + $0xb0] sm:$0xf] %v376
      %386 = vst [vmem:[#allocation2 + $0xb4] sm:$0xff] %v378
      %387 = vst [vmem:[#allocation2 + $0xbc] sm:$0xf] %v379
      %388 = vrot.lane.b32.xlu0 %v184, 90
      %v389 = vpop.permute.xlu0 %388
      %390 = vrot.lane.b32.xlu0 %v192, 90
      %v391 = vpop.permute.xlu0 %390
      %392 = vrot.lane.b32.xlu0 %v186, 90
      %v393 = vpop.permute.xlu0 %392
      %394 = vrot.lane.b32.xlu0 %v193, 90
      %v395 = vpop.permute.xlu0 %394
      %v396 = vrot.slane %v389, 4
      %v397 = vrot.slane %v391, 4
      %v398 = vrot.slane %v393, 4
      %v399 = vrot.slane %v395, 4
      %v400 = vsel %vm210, %v396, %v397
      %vm401 = vcmask 736256
      %v402 = vsel %vm401, %v389, %v400
      %v403 = vsel %vm401, %v391, %v397
      %v404 = vsel %vm210, %v398, %v399
      %v405 = vsel %vm401, %v393, %v404
      %v406 = vsel %vm401, %v395, %v399
      %411 = vst [vmem:[#allocation2 + $0xc0] sm:$0xff] %v402
      %412 = vst [vmem:[#allocation2 + $0xc8] sm:$0xf] %v403
      %413 = vst [vmem:[#allocation2 + $0xcc] sm:$0xff] %v405
      %414 = vst [vmem:[#allocation2 + $0xd4] sm:$0xf] %v406
      %v415 = vld [vmem:[%s1] sm:$0xff]
      %v416 = vld [vmem:[#allocation2] sm:$0xff]
      %v417 = vld [vmem:[#allocation2 + $0x8] sm:$0xf]
      %v418 = vld [vmem:[#allocation2 + $0xc] sm:$0xff]
      %v419 = vld [vmem:[#allocation2 + $0x14] sm:$0xf]
      %v420 = vld [vmem:[#allocation2 + $0x18] sm:$0xff]
      %v421 = vld [vmem:[#allocation2 + $0x20] sm:$0xf]
      %v422 = vld [vmem:[#allocation2 + $0x24] sm:$0xff]
      %v423 = vld [vmem:[#allocation2 + $0x2c] sm:$0xf]
      %v424 = vld [vmem:[#allocation2 + $0x30] sm:$0xff]
      %v425 = vld [vmem:[#allocation2 + $0x38] sm:$0xf]
      %v426 = vld [vmem:[#allocation2 + $0x3c] sm:$0xff]
      %v427 = vld [vmem:[#allocation2 + $0x44] sm:$0xf]
      %v428 = vld [vmem:[#allocation2 + $0x48] sm:$0xff]
      %v429 = vld [vmem:[#allocation2 + $0x50] sm:$0xf]
      %v430 = vld [vmem:[#allocation2 + $0x54] sm:$0xff]
      %v431 = vld [vmem:[#allocation2 + $0x5c] sm:$0xf]
      %v432 = vld [vmem:[#allocation2 + $0x60] sm:$0xff]
      %v433 = vld [vmem:[#allocation2 + $0x68] sm:$0xf]
      %v434 = vld [vmem:[#allocation2 + $0x6c] sm:$0xff]
      %v435 = vld [vmem:[#allocation2 + $0x74] sm:$0xf]
      %v436 = vld [vmem:[#allocation2 + $0x78] sm:$0xff]
      %v437 = vld [vmem:[#allocation2 + $0x80] sm:$0xf]
      %v438 = vld [vmem:[#allocation2 + $0x84] sm:$0xff]
      %v439 = vld [vmem:[#allocation2 + $0x8c] sm:$0xf]
      %v440 = vld [vmem:[#allocation2 + $0x90] sm:$0xff]
      %v441 = vld [vmem:[#allocation2 + $0x98] sm:$0xf]
      %v442 = vld [vmem:[#allocation2 + $0x9c] sm:$0xff]
      %v443 = vld [vmem:[#allocation2 + $0xa4] sm:$0xf]
      %v444 = vld [vmem:[#allocation2 + $0xa8] sm:$0xff]
      %v445 = vld [vmem:[#allocation2 + $0xb0] sm:$0xf]
      %v446 = vld [vmem:[#allocation2 + $0xb4] sm:$0xff]
      %v447 = vld [vmem:[#allocation2 + $0xbc] sm:$0xf]
      %v448 = vld [vmem:[#allocation2 + $0xc0] sm:$0xff]
      %v449 = vld [vmem:[#allocation2 + $0xc8] sm:$0xf]
      %v450 = vld [vmem:[#allocation2 + $0xcc] sm:$0xff]
      %v451 = vld [vmem:[#allocation2 + $0xd4] sm:$0xf]
      %v452 = vld [vmem:[%s2] sm:$0xff]
      %454 = vset.pattern.permute.xlu0 0
      %455 = vperm.xlu0 %454, %v452
      %v456 = vpop.permute.xlu0 %455
      %v459 = vunpack.c.l.b16 %v415
      %v460 = vunpack.c.h.b16 %v415
      %v461 = vpack.c.b16 %v459, %v459
      %v462 = vpack.c.b16 %v460, %v460
      %v500 = vunpack.c.l.b16 %v416
      %v501 = vunpack.c.h.b16 %v416
      %v502 = vunpack.c.l.b16 %v417
      %v503 = vunpack.c.l.b16 %v418
      %v504 = vunpack.c.h.b16 %v418
      %v505 = vunpack.c.l.b16 %v419
      %v506 = vunpack.c.l.b16 %v420
      %v507 = vunpack.c.h.b16 %v420
      %v508 = vunpack.c.l.b16 %v421
      %v509 = vunpack.c.l.b16 %v422
      %v510 = vunpack.c.h.b16 %v422
      %v511 = vunpack.c.l.b16 %v423
      %v512 = vunpack.c.l.b16 %v424
      %v513 = vunpack.c.h.b16 %v424
      %v514 = vunpack.c.l.b16 %v425
      %v515 = vunpack.c.l.b16 %v426
      %v516 = vunpack.c.h.b16 %v426
      %v517 = vunpack.c.l.b16 %v427
      %v518 = vunpack.c.l.b16 %v428
      %v519 = vunpack.c.h.b16 %v428
      %v520 = vunpack.c.l.b16 %v429
      %v521 = vunpack.c.l.b16 %v430
      %v522 = vunpack.c.h.b16 %v430
      %v523 = vunpack.c.l.b16 %v431
      %v524 = vunpack.c.l.b16 %v432
      %v525 = vunpack.c.h.b16 %v432
      %v526 = vunpack.c.l.b16 %v433
      %v527 = vunpack.c.l.b16 %v434
      %v528 = vunpack.c.h.b16 %v434
      %v529 = vunpack.c.l.b16 %v435
      %v530 = vunpack.c.l.b16 %v436
      %v531 = vunpack.c.h.b16 %v436
      %v532 = vunpack.c.l.b16 %v437
      %v533 = vunpack.c.l.b16 %v438
      %v534 = vunpack.c.h.b16 %v438
      %v535 = vunpack.c.l.b16 %v439
      %v536 = vunpack.c.l.b16 %v440
      %v537 = vunpack.c.h.b16 %v440
      %v538 = vunpack.c.l.b16 %v441
      %v539 = vunpack.c.l.b16 %v442
      %v540 = vunpack.c.h.b16 %v442
      %v541 = vunpack.c.l.b16 %v443
      %v542 = vunpack.c.l.b16 %v444
      %v543 = vunpack.c.h.b16 %v444
      %v544 = vunpack.c.l.b16 %v445
      %v545 = vunpack.c.l.b16 %v446
      %v546 = vunpack.c.h.b16 %v446
      %v547 = vunpack.c.l.b16 %v447
      %v548 = vunpack.c.l.b16 %v448
      %v549 = vunpack.c.h.b16 %v448
      %v550 = vunpack.c.l.b16 %v449
      %v551 = vunpack.c.l.b16 %v450
      %v552 = vunpack.c.h.b16 %v450
      %v553 = vunpack.c.l.b16 %v451
      %v554 = vpack.c.b16 %v503, %v500
      %v555 = vpack.c.b16 %v504, %v501
      %v556 = vpack.c.b16 %v505, %v502
      %v557 = vpack.c.b16 %v509, %v506
      %v558 = vpack.c.b16 %v510, %v507
      %v559 = vpack.c.b16 %v511, %v508
      %v560 = vpack.c.b16 %v515, %v512
      %v561 = vpack.c.b16 %v516, %v513
      %v562 = vpack.c.b16 %v517, %v514
      %v563 = vpack.c.b16 %v521, %v518
      %v564 = vpack.c.b16 %v522, %v519
      %v565 = vpack.c.b16 %v523, %v520
      %v566 = vpack.c.b16 %v527, %v524
      %v567 = vpack.c.b16 %v528, %v525
      %v568 = vpack.c.b16 %v529, %v526
      %v569 = vpack.c.b16 %v533, %v530
      %v570 = vpack.c.b16 %v534, %v531
      %v571 = vpack.c.b16 %v535, %v532
      %v572 = vpack.c.b16 %v539, %v536
      %v573 = vpack.c.b16 %v540, %v537
      %v574 = vpack.c.b16 %v541, %v538
      %v575 = vpack.c.b16 %v545, %v542
      %v576 = vpack.c.b16 %v546, %v543
      %v577 = vpack.c.b16 %v547, %v544
      %v578 = vpack.c.b16 %v551, %v548
      %v579 = vpack.c.b16 %v552, %v549
      %v580 = vpack.c.b16 %v553, %v550
      %vm608 = vcmask 130048
      %v610 = vsel %vm608, %v462, 0
      %612 = vmatpush.bf16.msra.mxu0 %v575
      %613 = vmatpush.bf16.msra.mxu0 %v572
      %614 = vmatpush.bf16.msra.mxu0 %v569
      %615 = vmatpush.bf16.msra.mxu0 %v566
      %616 = vmatpush.bf16.msra.mxu0 %v563
      %617 = vmatpush.bf16.msra.mxu0 %v560
      %618 = vmatpush.bf16.msra.mxu0 %v557
      %619 = vmatpush.bf16.msra.mxu0 %v554
      %620 = vmatmul.bf16.gmra.mxu0 %v461
      %v621 = vpop.f32.mrf.mxu0
      %v622 = vadd.f32 %v456, %v621
      %v623 = vpop.f32.mrf.mxu0
      %624 = vdwg.mxu0
      %625 = vmatpush.bf16.msra.mxu0 0
      %626 = vmatpush.bf16.msra.mxu0 0
      %627 = vmatpush.bf16.msra.mxu0 0
      %628 = vmatpush.bf16.msra.mxu0 0
      %629 = vmatpush.bf16.msra.mxu0 0
      %630 = vmatpush.bf16.msra.mxu0 0
      %631 = vmatpush.bf16.msra.mxu0 0
      %632 = vmatpush.bf16.msra.mxu0 %v578
      %633 = vmatmul.bf16.gmra.mxu0 %v610
      %v634 = vpop.f32.mrf.mxu0
      %v635 = vadd.f32 %v622, %v634
      %v636 = vpop.f32.mrf.mxu0
      %637 = vdwg.mxu0
      %638 = vmatpush.bf16.msra.mxu0 %v576
      %639 = vmatpush.bf16.msra.mxu0 %v573
      %640 = vmatpush.bf16.msra.mxu0 %v570
      %641 = vmatpush.bf16.msra.mxu0 %v567
      %642 = vmatpush.bf16.msra.mxu0 %v564
      %643 = vmatpush.bf16.msra.mxu0 %v561
      %644 = vmatpush.bf16.msra.mxu0 %v558
      %645 = vmatpush.bf16.msra.mxu0 %v555
      %646 = vmatmul.bf16.gmra.mxu0 %v461
      %v647 = vpop.f32.mrf.mxu0
      %v648 = vadd.f32 %v456, %v647
      %v649 = vpop.f32.mrf.mxu0
      %650 = vdwg.mxu0
      %651 = vmatpush.bf16.msra.mxu0 0
      %652 = vmatpush.bf16.msra.mxu0 0
      %653 = vmatpush.bf16.msra.mxu0 0
      %654 = vmatpush.bf16.msra.mxu0 0
      %655 = vmatpush.bf16.msra.mxu0 0
      %656 = vmatpush.bf16.msra.mxu0 0
      %657 = vmatpush.bf16.msra.mxu0 0
      %658 = vmatpush.bf16.msra.mxu0 %v579
      %659 = vmatmul.bf16.gmra.mxu0 %v610
      %v660 = vpop.f32.mrf.mxu0
      %v661 = vadd.f32 %v648, %v660
      %v662 = vpop.f32.mrf.mxu0
      %663 = vdwg.mxu0
      %664 = vmatpush.bf16.msra.mxu0 %v577
      %665 = vmatpush.bf16.msra.mxu0 %v574
      %666 = vmatpush.bf16.msra.mxu0 %v571
      %667 = vmatpush.bf16.msra.mxu0 %v568
      %668 = vmatpush.bf16.msra.mxu0 %v565
      %669 = vmatpush.bf16.msra.mxu0 %v562
      %670 = vmatpush.bf16.msra.mxu0 %v559
      %671 = vmatpush.bf16.msra.mxu0 %v556
      %672 = vmatmul.bf16.gmra.mxu0 %v461
      %v673 = vpop.f32.mrf.mxu0
      %v674 = vadd.f32 %v456, %v673
      %v675 = vpop.f32.mrf.mxu0
      %676 = vdwg.mxu0
      %677 = vmatpush.bf16.msra.mxu0 0
      %678 = vmatpush.bf16.msra.mxu0 0
      %679 = vmatpush.bf16.msra.mxu0 0
      %680 = vmatpush.bf16.msra.mxu0 0
      %681 = vmatpush.bf16.msra.mxu0 0
      %682 = vmatpush.bf16.msra.mxu0 0
      %683 = vmatpush.bf16.msra.mxu0 0
      %684 = vmatpush.bf16.msra.mxu0 %v580
      %685 = vmatmul.bf16.gmra.mxu0 %v610
      %v686 = vpop.f32.mrf.mxu0
      %v687 = vadd.f32 %v674, %v686
      %v688 = vpop.f32.mrf.mxu0
      %689 = vdwg.mxu0
      %v690 = vpack.c.bf16 %v661, %v635
      %v691 = vpack.c.bf16 %v687, %v687
      %692 = vst [vmem:[%s170] sm:$0xff] %v690
      %693 = vst [vmem:[%s170 + $0x8] sm:$0xf] %v691
      %p694 = scmp.lt.s32.totalorder %s14, 1
      %s695 = scalar_select %p694, %s14, 1
      %s696 = smul.addr %s695, 3
      %s697 = smul.addr %s696, 4
      %s698 = scalar_lea.vmem %s3, %s697
      // Predicated region
      $region33: #{_lambda_.10} parent=31 // pred_check
        %p699 = pneg %p100
      $region34: #{_lambda_.10} parent=31 // pred_check_branch
        %701 = sbr.rel (%p699) target = $region36
      $region35: #{_lambda_.10} parent=31 // pred_region
        _
      $region36: #{_lambda_.10} parent=31 // pred_fallthru
        _
    $region32: #{_lambda_.10} parent=5 // pred_fallthru
      _
    %p702 = scmp.le.s32.totalorder 2, %s9
    // Predicated region
    $region37: #{_lambda_.10} parent=5 // pred_check
      %p703 = pneg %p702
    $region38: #{_lambda_.10} parent=5 // pred_check_branch
      %705 = sbr.rel (%p703) target = $region40
    $region39: #{_lambda_.10} parent=5 // pred_region
      %s706 = ssub.s32 %s9, 2
      // Predicated region
      $region41: #{_lambda_.10} parent=39 // pred_check
        %p707 = pneg %p106
      $region42: #{_lambda_.10} parent=39 // pred_check_branch
        %709 = sbr.rel (%p707) target = $region44
      $region43: #{_lambda_.10} parent=39 // pred_region
        %p710 = scmp.lt.s32.totalorder %s15, 1
        %s711 = scalar_select %p710, %s15, 1
        %s712 = smul.addr %s711, 3
        %s713 = smul.addr %s712, 4
        %s714 = scalar_lea.vmem %s3, %s713
      $region44: #{_lambda_.10} parent=39 // pred_fallthru
        _
    $region40: #{_lambda_.10} parent=5 // pred_fallthru
      _
  $region6: #{_lambda_.10} parent=0 // loop_footer
    %s13 = sadd.s32 1, %s9
  $region7: #{_lambda_.10} parent=0 // loop_footer_branch
    %8 = sbr.rel target = $region3
  $region8: #{_lambda_.10} parent=0 // loop_exit
    _

// kernel: _lambda_.11
$region0: #{_lambda_.11}
  #allocation0 [shape = 'u32[]', space=smem, size = 0x4, offset = 0x4, fixed_abs, tag = 'smem constant byte address 0x4 - core index']
  #allocation1 [shape = 'u32[72,128]{1,0:T(1,128)}', space=vmem, size = 0x9000, scoped, tag = 'internal scratch']
  #allocation2 [shape = 'bf16[144,384]{1,0:T(8,128)(2,1)}', space=vmem, size = 0x1b000, scoped, tag = 'scratch operand']
  %s0 = inlined_call_operand.vmem [shape: bf16[2,16,512], index: 0, kind: input, shape index: {}]
  %s1 = inlined_call_operand.vmem [shape: bf16[8,144], index: 1, kind: input, shape index: {}]
  %s2 = inlined_call_operand.vmem [shape: f32[8,1], index: 2, kind: input, shape index: {}]
  %s3 = inlined_call_operand.vmem [shape: bf16[2,8,384], index: 3, kind: output, shape index: {}]
  %s4 = sld [smem:[#allocation0]]
  $region45: #{_lambda_.11} parent=0
    _
  %s6 = ssub.s32 1, %s4
  %s7 = scalar_select 0, %s6, %s4
  loop: start=0, step=1, limit=4
  $region2: #{_lambda_.11} parent=0 // loop_pre_header
    _
  $region3: #{_lambda_.11} parent=0 // loop_header
    %s9 = sphi 0, %s13
    %p10 = scmp.ge.s32.totalorder %s9, 4
    %s19 = sphi 0, %s21
    %s22 = sphi 0, %s19
    %s23 = sphi 0, %s22
    %s39 = sphi 0, %s23
    %s43 = sphi 0, %s43
    %s45 = sphi 0, %s43
    %s46 = sphi 0, %s45
    %s60 = sphi 0, %s46
    %s64 = sphi 0, %s64
    %s66 = sphi 0, %s64
    %s67 = sphi 0, %s66
    %s81 = sphi 0, %s67
    %s87 = sphi 0, %s89
    %s90 = sphi 0, %s87
    %s91 = sphi 0, %s90
    %s107 = sphi 0, %s91
  $region4: #{_lambda_.11} parent=0 // loop_header_branch
    %12 = sbr.rel (%p10) target = $region8
  $region5: #{_lambda_.11} parent=0 // loop_body
    %s14 = ssub.s32 %s9, 1
    %s15 = ssub.s32 %s9, 2
    %s16 = sadd.s32 %s9, 1
    %s17 = ssub.s32 %s9, %s16
    %p18 = scmp.eq.s32.totalorder %s17, 0
    %s20 = sadd.s32 %s19, 1
    %s21 = scalar_select %p18, %s19, %s20
    %p24 = pneg %p18
    %p25 = scmp.eq.s32.totalorder %s9, 1
    %p26 = por %p24, %p25
    %p27 = scmp.ne.s32.totalorder %s19, %s22
    %p28 = scmp.eq.s32.totalorder %s9, 0
    %p29 = por %p27, %p28
    %p30 = scmp.ne.s32.totalorder %s19, %s22
    %p31 = scmp.eq.s32.totalorder %s14, 1
    %p32 = por %p30, %p31
    %p33 = scmp.ne.s32.totalorder %s22, %s23
    %p34 = scmp.eq.s32.totalorder %s14, 0
    %p35 = por %p33, %p34
    %p36 = scmp.ne.s32.totalorder %s22, %s23
    %p37 = scmp.eq.s32.totalorder %s15, 1
    %p38 = por %p36, %p37
    %p40 = scmp.ne.s32.totalorder %s23, %s39
    %p41 = scmp.eq.s32.totalorder %s15, 0
    %p42 = por %p40, %p41
    %s44 = sadd.s32 %s43, 1
    %p47 = scmp.eq.s32.totalorder %s9, 1
    %p48 = scmp.ne.s32.totalorder %s43, %s45
    %p49 = scmp.eq.s32.totalorder %s9, 0
    %p50 = por %p48, %p49
    %p51 = scmp.ne.s32.totalorder %s43, %s45
    %p52 = scmp.eq.s32.totalorder %s14, 1
    %p53 = por %p51, %p52
    %p54 = scmp.ne.s32.totalorder %s45, %s46
    %p55 = scmp.eq.s32.totalorder %s14, 0
    %p56 = por %p54, %p55
    %p57 = scmp.ne.s32.totalorder %s45, %s46
    %p58 = scmp.eq.s32.totalorder %s15, 1
    %p59 = por %p57, %p58
    %p61 = scmp.ne.s32.totalorder %s46, %s60
    %p62 = scmp.eq.s32.totalorder %s15, 0
    %p63 = por %p61, %p62
    %s65 = sadd.s32 %s64, 1
    %p68 = scmp.eq.s32.totalorder %s9, 1
    %p69 = scmp.ne.s32.totalorder %s64, %s66
    %p70 = scmp.eq.s32.totalorder %s9, 0
    %p71 = por %p69, %p70
    %p72 = scmp.ne.s32.totalorder %s64, %s66
    %p73 = scmp.eq.s32.totalorder %s14, 1
    %p74 = por %p72, %p73
    %p75 = scmp.ne.s32.totalorder %s66, %s67
    %p76 = scmp.eq.s32.totalorder %s14, 0
    %p77 = por %p75, %p76
    %p78 = scmp.ne.s32.totalorder %s66, %s67
    %p79 = scmp.eq.s32.totalorder %s15, 1
    %p80 = por %p78, %p79
    %p82 = scmp.ne.s32.totalorder %s67, %s81
    %p83 = scmp.eq.s32.totalorder %s15, 0
    %p84 = por %p82, %p83
    %s85 = ssub.s32 %s9, %s16
    %p86 = scmp.eq.s32.totalorder %s85, 0
    %s88 = sadd.s32 %s87, 1
    %s89 = scalar_select %p86, %s87, %s88
    %p92 = pneg %p86
    %p93 = scmp.eq.s32.totalorder %s9, 1
    %p94 = por %p92, %p93
    %p95 = scmp.ne.s32.totalorder %s87, %s90
    %p96 = scmp.eq.s32.totalorder %s9, 0
    %p97 = por %p95, %p96
    %p98 = scmp.ne.s32.totalorder %s87, %s90
    %p99 = scmp.eq.s32.totalorder %s14, 1
    %p100 = por %p98, %p99
    %p101 = scmp.ne.s32.totalorder %s90, %s91
    %p102 = scmp.eq.s32.totalorder %s14, 0
    %p103 = por %p101, %p102
    %p104 = scmp.ne.s32.totalorder %s90, %s91
    %p105 = scmp.eq.s32.totalorder %s15, 1
    %p106 = por %p104, %p105
    %p108 = scmp.ne.s32.totalorder %s91, %s107
    %p109 = scmp.eq.s32.totalorder %s15, 0
    %p110 = por %p108, %p109
    %p111 = scmp.le.s32.totalorder 1, %s9
    %p112 = scmp.lt.s32.totalorder %s9, 3
    %p113 = pnand %p111, %p112
    %p114 = pneg %p113
    // Predicated region
    $region9: #{_lambda_.11} parent=5 // pred_check
      _
    $region10: #{_lambda_.11} parent=5 // pred_check_branch
      %116 = sbr.rel (%p113) target = $region12
    $region11: #{_lambda_.11} parent=5 // pred_region
      %s117 = ssub.s32 %s9, 1
      // Predicated region
      $region13: #{_lambda_.11} parent=11 // pred_check
        %p118 = pneg %p56
      $region14: #{_lambda_.11} parent=11 // pred_check_branch
        %120 = sbr.rel (%p118) target = $region16
      $region15: #{_lambda_.11} parent=11 // pred_region
        _
      $region16: #{_lambda_.11} parent=11 // pred_fallthru
        _
      // Predicated region
      $region17: #{_lambda_.11} parent=11 // pred_check
        %p121 = pneg %p77
      $region18: #{_lambda_.11} parent=11 // pred_check_branch
        %123 = sbr.rel (%p121) target = $region20
      $region19: #{_lambda_.11} parent=11 // pred_region
        _
      $region20: #{_lambda_.11} parent=11 // pred_fallthru
        _
    $region12: #{_lambda_.11} parent=5 // pred_fallthru
      _
    %p124 = scmp.lt.s32.totalorder %s9, 2
    // Predicated region
    $region21: #{_lambda_.11} parent=5 // pred_check
      %p125 = pneg %p124
    $region22: #{_lambda_.11} parent=5 // pred_check_branch
      %127 = sbr.rel (%p125) target = $region24
    $region23: #{_lambda_.11} parent=5 // pred_region
      // Predicated region
      $region25: #{_lambda_.11} parent=23 // pred_check
        %p128 = pneg %p29
      $region26: #{_lambda_.11} parent=23 // pred_check_branch
        %130 = sbr.rel (%p128) target = $region28
      $region27: #{_lambda_.11} parent=23 // pred_region
        %p131 = scmp.lt.s32.totalorder %s9, 1
        %s132 = scalar_select %p131, %s9, 1
        %s133 = smul.addr %s132, 8
        %s134 = smul.addr %s133, 4
        %s135 = scalar_lea.vmem %s0, %s134
      $region28: #{_lambda_.11} parent=23 // pred_fallthru
        _
    $region24: #{_lambda_.11} parent=5 // pred_fallthru
      _
    %p136 = scmp.le.s32.totalorder 1, %s9
    %p137 = scmp.lt.s32.totalorder %s9, 3
    %p138 = pnand %p136, %p137
    %p139 = pneg %p138
    // Predicated region
    $region29: #{_lambda_.11} parent=5 // pred_check
      _
    $region30: #{_lambda_.11} parent=5 // pred_check_branch
      %141 = sbr.rel (%p138) target = $region32
    $region31: #{_lambda_.11} parent=5 // pred_region
      %s142 = ssub.s32 %s9, 1
      %p143 = scmp.lt.s32.totalorder %s14, 1
      %s144 = scalar_select %p143, %s14, 1
      %s145 = smul.addr %s144, 8
      %s146 = smul.addr %s145, 4
      %s147 = scalar_lea.vmem %s0, %s146
      %p148 = pneg %p35
      %p149 = pneg %p32
      %p150 = pneg %p56
      %p151 = pneg %p53
      %p152 = pneg %p77
      %p153 = pneg %p74
      %p154 = pneg %p103
      %p155 = pneg %p100
      %p156 = scmp.lt.s32.totalorder %s14, 1
      %s157 = scalar_select %p156, %s14, 1
      %s158 = smul.addr %s157, 3
      %s159 = smul.addr %s158, 4
      %s160 = scalar_lea.vmem %s3, %s159
      %p161 = scmp.lt.s32.totalorder %s14, 1
      %s162 = scalar_select %p161, %s14, 1
      %s163 = smul.addr %s162, 8
      %s164 = smul.addr %s163, 4
      %s165 = scalar_lea.vmem %s0, %s164
      %p166 = scmp.lt.s32.totalorder %s14, 1
      %s167 = scalar_select %p166, %s14, 1
      %s168 = smul.addr %s167, 3
      %s169 = smul.addr %s168, 4
      %s170 = scalar_lea.vmem %s3, %s169
      %v172 = vld [vmem:[%s165] sm:$0xff]
      %v173 = vld [vmem:[%s165 + $0x8] sm:$0xff]
      %v174 = vld [vmem:[%s165 + $0x10] sm:$0xff]
      %v175 = vld [vmem:[%s165 + $0x18] sm:$0xff]
      %v176 = vunpack.c.l.bf16 %v172
      %v177 = vunpack.c.h.bf16 %v172
      %v178 = vunpack.c.l.bf16 %v173
      %v179 = vunpack.c.h.bf16 %v173
      %v180 = vunpack.c.l.bf16 %v174
      %v181 = vunpack.c.h.bf16 %v174
      %v182 = vunpack.c.l.bf16 %v175
      %v183 = vunpack.c.h.bf16 %v175
      %v184 = vpack.c.bf16 %v177, %v176
      %v185 = vpack.c.bf16 %v178, %v178
      %v186 = vpack.c.bf16 %v181, %v180
      %v187 = vpack.c.bf16 %v182, %v182
      %188 = vst [vmem:[#allocation2] sm:$0xff] %v184
      %189 = vst [vmem:[#allocation2 + $0x8] sm:$0xf] %v185
      %190 = vst [vmem:[#allocation2 + $0xc] sm:$0xff] %v186
      %191 = vst [vmem:[#allocation2 + $0x14] sm:$0xf] %v187
      %v192 = vpack.c.bf16 %v179, %v178
      %v193 = vpack.c.bf16 %v183, %v182
      %198 = vrot.lane.b32.xlu0 %v184, 127
      %v199 = vpop.permute.xlu0 %198
      %200 = vrot.lane.b32.xlu0 %v192, 127
      %v201 = vpop.permute.xlu0 %200
      %202 = vrot.lane.b32.xlu0 %v186, 127
      %v203 = vpop.permute.xlu0 %202
      %204 = vrot.lane.b32.xlu0 %v193, 127
      %v205 = vpop.permute.xlu0 %204
      %v206 = vrot.slane %v199, 4
      %v207 = vrot.slane %v201, 4
      %v208 = vrot.slane %v203, 4
      %v209 = vrot.slane %v205, 4
      %vm210 = vcmask 1043456
      %v211 = vsel %vm210, %v206, %v207
      %vm212 = vcmask 1039360
      %v213 = vsel %vm212, %v199, %v211
      %v214 = vsel %vm212, %v201, %v207
      %v215 = vsel %vm210, %v208, %v209
      %v216 = vsel %vm212, %v203, %v215
      %v217 = vsel %vm212, %v205, %v209
      %222 = vst [vmem:[#allocation2 + $0x18] sm:$0xff] %v213
      %223 = vst [vmem:[#allocation2 + $0x20] sm:$0xf] %v214
      %224 = vst [vmem:[#allocation2 + $0x24] sm:$0xff] %v216
      %225 = vst [vmem:[#allocation2 + $0x2c] sm:$0xf] %v217
      %226 = vrot.lane.b32.xlu0 %v184, 126
      %v227 = vpop.permute.xlu0 %226
      %228 = vrot.lane.b32.xlu0 %v192, 126
      %v229 = vpop.permute.xlu0 %228
      %230 = vrot.lane.b32.xlu0 %v186, 126
      %v231 = vpop.permute.xlu0 %230
      %232 = vrot.lane.b32.xlu0 %v193, 126
      %v233 = vpop.permute.xlu0 %232
      %v234 = vrot.slane %v227, 4
      %v235 = vrot.slane %v229, 4
      %v236 = vrot.slane %v231, 4
      %v237 = vrot.slane %v233, 4
      %v238 = vsel %vm210, %v234, %v235
      %vm239 = vcmask 1031168
      %v240 = vsel %vm239, %v227, %v238
      %v241 = vsel %vm239, %v229, %v235
      %v242 = vsel %vm210, %v236, %v237
      %v243 = vsel %vm239, %v231, %v242
      %v244 = vsel %vm239, %v233, %v237
      %249 = vst [vmem:[#allocation2 + $0x30] sm:$0xff] %v240
      %250 = vst [vmem:[#allocation2 + $0x38] sm:$0xf] %v241
      %251 = vst [vmem:[#allocation2 + $0x3c] sm:$0xff] %v243
      %252 = vst [vmem:[#allocation2 + $0x44] sm:$0xf] %v244
      %253 = vrot.lane.b32.xlu0 %v184, 110
      %v254 = vpop.permute.xlu0 %253
      %255 = vrot.lane.b32.xlu0 %v192, 110
      %v256 = vpop.permute.xlu0 %255
      %257 = vrot.lane.b32.xlu0 %v186, 110
      %v258 = vpop.permute.xlu0 %257
      %259 = vrot.lane.b32.xlu0 %v193, 110
      %v260 = vpop.permute.xlu0 %259
      %v261 = vrot.slane %v254, 4
      %v262 = vrot.slane %v256, 4
      %v263 = vrot.slane %v258, 4
      %v264 = vrot.slane %v260, 4
      %v265 = vsel %vm210, %v261, %v262
      %vm266 = vcmask 900096
      %v267 = vsel %vm266, %v254, %v265
      %v268 = vsel %vm266, %v256, %v262
      %v269 = vsel %vm210, %v263, %v264
      %v270 = vsel %vm266, %v258, %v269
      %v271 = vsel %vm266, %v260, %v264
      %276 = vst [vmem:[#allocation2 + $0x48] sm:$0xff] %v267
      %277 = vst [vmem:[#allocation2 + $0x50] sm:$0xf] %v268
      %278 = vst [vmem:[#allocation2 + $0x54] sm:$0xff] %v270
      %279 = vst [vmem:[#allocation2 + $0x5c] sm:$0xf] %v271
      %280 = vrot.lane.b32.xlu0 %v184, 109
      %v281 = vpop.permute.xlu0 %280
      %282 = vrot.lane.b32.xlu0 %v192, 109
      %v283 = vpop.permute.xlu0 %282
      %284 = vrot.lane.b32.xlu0 %v186, 109
      %v285 = vpop.permute.xlu0 %284
      %286 = vrot.lane.b32.xlu0 %v193, 109
      %v287 = vpop.permute.xlu0 %286
      %v288 = vrot.slane %v281, 4
      %v289 = vrot.slane %v283, 4
      %v290 = vrot.slane %v285, 4
      %v291 = vrot.slane %v287, 4
      %v292 = vsel %vm210, %v288, %v289
      %vm293 = vcmask 891904
      %v294 = vsel %vm293, %v281, %v292
      %v295 = vsel %vm293, %v283, %v289
      %v296 = vsel %vm210, %v290, %v291
      %v297 = vsel %vm293, %v285, %v296
      %v298 = vsel %vm293, %v287, %v291
      %303 = vst [vmem:[#allocation2 + $0x60] sm:$0xff] %v294
      %304 = vst [vmem:[#allocation2 + $0x68] sm:$0xf] %v295
      %305 = vst [vmem:[#allocation2 + $0x6c] sm:$0xff] %v297
      %306 = vst [vmem:[#allocation2 + $0x74] sm:$0xf] %v298
      %307 = vrot.lane.b32.xlu0 %v184, 108
      %v308 = vpop.permute.xlu0 %307
      %309 = vrot.lane.b32.xlu0 %v192, 108
      %v310 = vpop.permute.xlu0 %309
      %311 = vrot.lane.b32.xlu0 %v186, 108
      %v312 = vpop.permute.xlu0 %311
      %313 = vrot.lane.b32.xlu0 %v193, 108
      %v314 = vpop.permute.xlu0 %313
      %v315 = vrot.slane %v308, 4
      %v316 = vrot.slane %v310, 4
      %v317 = vrot.slane %v312, 4
      %v318 = vrot.slane %v314, 4
      %v319 = vsel %vm210, %v315, %v316
      %vm320 = vcmask 883712
      %v321 = vsel %vm320, %v308, %v319
      %v322 = vsel %vm320, %v310, %v316
      %v323 = vsel %vm210, %v317, %v318
      %v324 = vsel %vm320, %v312, %v323
      %v325 = vsel %vm320, %v314, %v318
      %330 = vst [vmem:[#allocation2 + $0x78] sm:$0xff] %v321
      %331 = vst [vmem:[#allocation2 + $0x80] sm:$0xf] %v322
      %332 = vst [vmem:[#allocation2 + $0x84] sm:$0xff] %v324
      %333 = vst [vmem:[#allocation2 + $0x8c] sm:$0xf] %v325
      %334 = vrot.lane.b32.xlu0 %v184, 92
      %v335 = vpop.permute.xlu0 %334
      %336 = vrot.lane.b32.xlu0 %v192, 92
      %v337 = vpop.permute.xlu0 %336
      %338 = vrot.lane.b32.xlu0 %v186, 92
      %v339 = vpop.permute.xlu0 %338
      %340 = vrot.lane.b32.xlu0 %v193, 92
      %v341 = vpop.permute.xlu0 %340
      %v342 = vrot.slane %v335, 4
      %v343 = vrot.slane %v337, 4
      %v344 = vrot.slane %v339, 4
      %v345 = vrot.slane %v341, 4
      %v346 = vsel %vm210, %v342, %v343
      %vm347 = vcmask 752640
      %v348 = vsel %vm347, %v335, %v346
      %v349 = vsel %vm347, %v337, %v343
      %v350 = vsel %vm210, %v344, %v345
      %v351 = vsel %vm347, %v339, %v350
      %v352 = vsel %vm347, %v341, %v345
      %357 = vst [vmem:[#allocation2 + $0x90] sm:$0xff] %v348
      %358 = vst [vmem:[#allocation2 + $0x98] sm:$0xf] %v349
      %359 = vst [vmem:[#allocation2 + $0x9c] sm:$0xff] %v351
      %360 = vst [vmem:[#allocation2 + $0xa4] sm:$0xf] %v352
      %361 = vrot.lane.b32.xlu0 %v184, 91
      %v362 = vpop.permute.xlu0 %361
      %363 = vrot.lane.b32.xlu0 %v192, 91
      %v364 = vpop.permute.xlu0 %363
      %365 = vrot.lane.b32.xlu0 %v186, 91
      %v366 = vpop.permute.xlu0 %365
      %367 = vrot.lane.b32.xlu0 %v193, 91
      %v368 = vpop.permute.xlu0 %367
      %v369 = vrot.slane %v362, 4
      %v370 = vrot.slane %v364, 4
      %v371 = vrot.slane %v366, 4
      %v372 = vrot.slane %v368, 4
      %v373 = vsel %vm210, %v369, %v370
      %vm374 = vcmask 744448
      %v375 = vsel %vm374, %v362, %v373
      %v376 = vsel %vm374, %v364, %v370
      %v377 = vsel %vm210, %v371, %v372
      %v378 = vsel %vm374, %v366, %v377
      %v379 = vsel %vm374, %v368, %v372
      %384 = vst [vmem:[#allocation2 + $0xa8] sm:$0xff] %v375
      %385 = vst [vmem:[#allocation2 + $0xb0] sm:$0xf] %v376
      %386 = vst [vmem:[#allocation2 + $0xb4] sm:$0xff] %v378
      %387 = vst [vmem:[#allocation2 + $0xbc] sm:$0xf] %v379
      %388 = vrot.lane.b32.xlu0 %v184, 90
      %v389 = vpop.permute.xlu0 %388
      %390 = vrot.lane.b32.xlu0 %v192, 90
      %v391 = vpop.permute.xlu0 %390
      %392 = vrot.lane.b32.xlu0 %v186, 90
      %v393 = vpop.permute.xlu0 %392
      %394 = vrot.lane.b32.xlu0 %v193, 90
      %v395 = vpop.permute.xlu0 %394
      %v396 = vrot.slane %v389, 4
      %v397 = vrot.slane %v391, 4
      %v398 = vrot.slane %v393, 4
      %v399 = vrot.slane %v395, 4
      %v400 = vsel %vm210, %v396, %v397
      %vm401 = vcmask 736256
      %v402 = vsel %vm401, %v389, %v400
      %v403 = vsel %vm401, %v391, %v397
      %v404 = vsel %vm210, %v398, %v399
      %v405 = vsel %vm401, %v393, %v404
      %v406 = vsel %vm401, %v395, %v399
      %411 = vst [vmem:[#allocation2 + $0xc0] sm:$0xff] %v402
      %412 = vst [vmem:[#allocation2 + $0xc8] sm:$0xf] %v403
      %413 = vst [vmem:[#allocation2 + $0xcc] sm:$0xff] %v405
      %414 = vst [vmem:[#allocation2 + $0xd4] sm:$0xf] %v406
      %v415 = vld [vmem:[%s1] sm:$0xff]
      %v416 = vld [vmem:[#allocation2] sm:$0xff]
      %v417 = vld [vmem:[#allocation2 + $0x8] sm:$0xf]
      %v418 = vld [vmem:[#allocation2 + $0xc] sm:$0xff]
      %v419 = vld [vmem:[#allocation2 + $0x14] sm:$0xf]
      %v420 = vld [vmem:[#allocation2 + $0x18] sm:$0xff]
      %v421 = vld [vmem:[#allocation2 + $0x20] sm:$0xf]
      %v422 = vld [vmem:[#allocation2 + $0x24] sm:$0xff]
      %v423 = vld [vmem:[#allocation2 + $0x2c] sm:$0xf]
      %v424 = vld [vmem:[#allocation2 + $0x30] sm:$0xff]
      %v425 = vld [vmem:[#allocation2 + $0x38] sm:$0xf]
      %v426 = vld [vmem:[#allocation2 + $0x3c] sm:$0xff]
      %v427 = vld [vmem:[#allocation2 + $0x44] sm:$0xf]
      %v428 = vld [vmem:[#allocation2 + $0x48] sm:$0xff]
      %v429 = vld [vmem:[#allocation2 + $0x50] sm:$0xf]
      %v430 = vld [vmem:[#allocation2 + $0x54] sm:$0xff]
      %v431 = vld [vmem:[#allocation2 + $0x5c] sm:$0xf]
      %v432 = vld [vmem:[#allocation2 + $0x60] sm:$0xff]
      %v433 = vld [vmem:[#allocation2 + $0x68] sm:$0xf]
      %v434 = vld [vmem:[#allocation2 + $0x6c] sm:$0xff]
      %v435 = vld [vmem:[#allocation2 + $0x74] sm:$0xf]
      %v436 = vld [vmem:[#allocation2 + $0x78] sm:$0xff]
      %v437 = vld [vmem:[#allocation2 + $0x80] sm:$0xf]
      %v438 = vld [vmem:[#allocation2 + $0x84] sm:$0xff]
      %v439 = vld [vmem:[#allocation2 + $0x8c] sm:$0xf]
      %v440 = vld [vmem:[#allocation2 + $0x90] sm:$0xff]
      %v441 = vld [vmem:[#allocation2 + $0x98] sm:$0xf]
      %v442 = vld [vmem:[#allocation2 + $0x9c] sm:$0xff]
      %v443 = vld [vmem:[#allocation2 + $0xa4] sm:$0xf]
      %v444 = vld [vmem:[#allocation2 + $0xa8] sm:$0xff]
      %v445 = vld [vmem:[#allocation2 + $0xb0] sm:$0xf]
      %v446 = vld [vmem:[#allocation2 + $0xb4] sm:$0xff]
      %v447 = vld [vmem:[#allocation2 + $0xbc] sm:$0xf]
      %v448 = vld [vmem:[#allocation2 + $0xc0] sm:$0xff]
      %v449 = vld [vmem:[#allocation2 + $0xc8] sm:$0xf]
      %v450 = vld [vmem:[#allocation2 + $0xcc] sm:$0xff]
      %v451 = vld [vmem:[#allocation2 + $0xd4] sm:$0xf]
      %v452 = vld [vmem:[%s2] sm:$0xff]
      %454 = vset.pattern.permute.xlu0 0
      %455 = vperm.xlu0 %454, %v452
      %v456 = vpop.permute.xlu0 %455
      %v459 = vunpack.c.l.b16 %v415
      %v460 = vunpack.c.h.b16 %v415
      %v461 = vpack.c.b16 %v459, %v459
      %v462 = vpack.c.b16 %v460, %v460
      %v500 = vunpack.c.l.b16 %v416
      %v501 = vunpack.c.h.b16 %v416
      %v502 = vunpack.c.l.b16 %v417
      %v503 = vunpack.c.l.b16 %v418
      %v504 = vunpack.c.h.b16 %v418
      %v505 = vunpack.c.l.b16 %v419
      %v506 = vunpack.c.l.b16 %v420
      %v507 = vunpack.c.h.b16 %v420
      %v508 = vunpack.c.l.b16 %v421
      %v509 = vunpack.c.l.b16 %v422
      %v510 = vunpack.c.h.b16 %v422
      %v511 = vunpack.c.l.b16 %v423
      %v512 = vunpack.c.l.b16 %v424
      %v513 = vunpack.c.h.b16 %v424
      %v514 = vunpack.c.l.b16 %v425
      %v515 = vunpack.c.l.b16 %v426
      %v516 = vunpack.c.h.b16 %v426
      %v517 = vunpack.c.l.b16 %v427
      %v518 = vunpack.c.l.b16 %v428
      %v519 = vunpack.c.h.b16 %v428
      %v520 = vunpack.c.l.b16 %v429
      %v521 = vunpack.c.l.b16 %v430
      %v522 = vunpack.c.h.b16 %v430
      %v523 = vunpack.c.l.b16 %v431
      %v524 = vunpack.c.l.b16 %v432
      %v525 = vunpack.c.h.b16 %v432
      %v526 = vunpack.c.l.b16 %v433
      %v527 = vunpack.c.l.b16 %v434
      %v528 = vunpack.c.h.b16 %v434
      %v529 = vunpack.c.l.b16 %v435
      %v530 = vunpack.c.l.b16 %v436
      %v531 = vunpack.c.h.b16 %v436
      %v532 = vunpack.c.l.b16 %v437
      %v533 = vunpack.c.l.b16 %v438
      %v534 = vunpack.c.h.b16 %v438
      %v535 = vunpack.c.l.b16 %v439
      %v536 = vunpack.c.l.b16 %v440
      %v537 = vunpack.c.h.b16 %v440
      %v538 = vunpack.c.l.b16 %v441
      %v539 = vunpack.c.l.b16 %v442
      %v540 = vunpack.c.h.b16 %v442
      %v541 = vunpack.c.l.b16 %v443
      %v542 = vunpack.c.l.b16 %v444
      %v543 = vunpack.c.h.b16 %v444
      %v544 = vunpack.c.l.b16 %v445
      %v545 = vunpack.c.l.b16 %v446
      %v546 = vunpack.c.h.b16 %v446
      %v547 = vunpack.c.l.b16 %v447
      %v548 = vunpack.c.l.b16 %v448
      %v549 = vunpack.c.h.b16 %v448
      %v550 = vunpack.c.l.b16 %v449
      %v551 = vunpack.c.l.b16 %v450
      %v552 = vunpack.c.h.b16 %v450
      %v553 = vunpack.c.l.b16 %v451
      %v554 = vpack.c.b16 %v503, %v500
      %v555 = vpack.c.b16 %v504, %v501
      %v556 = vpack.c.b16 %v505, %v502
      %v557 = vpack.c.b16 %v509, %v506
      %v558 = vpack.c.b16 %v510, %v507
      %v559 = vpack.c.b16 %v511, %v508
      %v560 = vpack.c.b16 %v515, %v512
      %v561 = vpack.c.b16 %v516, %v513
      %v562 = vpack.c.b16 %v517, %v514
      %v563 = vpack.c.b16 %v521, %v518
      %v564 = vpack.c.b16 %v522, %v519
      %v565 = vpack.c.b16 %v523, %v520
      %v566 = vpack.c.b16 %v527, %v524
      %v567 = vpack.c.b16 %v528, %v525
      %v568 = vpack.c.b16 %v529, %v526
      %v569 = vpack.c.b16 %v533, %v530
      %v570 = vpack.c.b16 %v534, %v531
      %v571 = vpack.c.b16 %v535, %v532
      %v572 = vpack.c.b16 %v539, %v536
      %v573 = vpack.c.b16 %v540, %v537
      %v574 = vpack.c.b16 %v541, %v538
      %v575 = vpack.c.b16 %v545, %v542
      %v576 = vpack.c.b16 %v546, %v543
      %v577 = vpack.c.b16 %v547, %v544
      %v578 = vpack.c.b16 %v551, %v548
      %v579 = vpack.c.b16 %v552, %v549
      %v580 = vpack.c.b16 %v553, %v550
      %vm608 = vcmask 130048
      %v610 = vsel %vm608, %v462, 0
      %612 = vmatpush.bf16.msra.mxu0 %v575
      %613 = vmatpush.bf16.msra.mxu0 %v572
      %614 = vmatpush.bf16.msra.mxu0 %v569
      %615 = vmatpush.bf16.msra.mxu0 %v566
      %616 = vmatpush.bf16.msra.mxu0 %v563
      %617 = vmatpush.bf16.msra.mxu0 %v560
      %618 = vmatpush.bf16.msra.mxu0 %v557
      %619 = vmatpush.bf16.msra.mxu0 %v554
      %620 = vmatmul.bf16.gmra.mxu0 %v461
      %v621 = vpop.f32.mrf.mxu0
      %v622 = vadd.f32 %v456, %v621
      %v623 = vpop.f32.mrf.mxu0
      %624 = vdwg.mxu0
      %625 = vmatpush.bf16.msra.mxu0 0
      %626 = vmatpush.bf16.msra.mxu0 0
      %627 = vmatpush.bf16.msra.mxu0 0
      %628 = vmatpush.bf16.msra.mxu0 0
      %629 = vmatpush.bf16.msra.mxu0 0
      %630 = vmatpush.bf16.msra.mxu0 0
      %631 = vmatpush.bf16.msra.mxu0 0
      %632 = vmatpush.bf16.msra.mxu0 %v578
      %633 = vmatmul.bf16.gmra.mxu0 %v610
      %v634 = vpop.f32.mrf.mxu0
      %v635 = vadd.f32 %v622, %v634
      %v636 = vpop.f32.mrf.mxu0
      %637 = vdwg.mxu0
      %638 = vmatpush.bf16.msra.mxu0 %v576
      %639 = vmatpush.bf16.msra.mxu0 %v573
      %640 = vmatpush.bf16.msra.mxu0 %v570
      %641 = vmatpush.bf16.msra.mxu0 %v567
      %642 = vmatpush.bf16.msra.mxu0 %v564
      %643 = vmatpush.bf16.msra.mxu0 %v561
      %644 = vmatpush.bf16.msra.mxu0 %v558
      %645 = vmatpush.bf16.msra.mxu0 %v555
      %646 = vmatmul.bf16.gmra.mxu0 %v461
      %v647 = vpop.f32.mrf.mxu0
      %v648 = vadd.f32 %v456, %v647
      %v649 = vpop.f32.mrf.mxu0
      %650 = vdwg.mxu0
      %651 = vmatpush.bf16.msra.mxu0 0
      %652 = vmatpush.bf16.msra.mxu0 0
      %653 = vmatpush.bf16.msra.mxu0 0
      %654 = vmatpush.bf16.msra.mxu0 0
      %655 = vmatpush.bf16.msra.mxu0 0
      %656 = vmatpush.bf16.msra.mxu0 0
      %657 = vmatpush.bf16.msra.mxu0 0
      %658 = vmatpush.bf16.msra.mxu0 %v579
      %659 = vmatmul.bf16.gmra.mxu0 %v610
      %v660 = vpop.f32.mrf.mxu0
      %v661 = vadd.f32 %v648, %v660
      %v662 = vpop.f32.mrf.mxu0
      %663 = vdwg.mxu0
      %664 = vmatpush.bf16.msra.mxu0 %v577
      %665 = vmatpush.bf16.msra.mxu0 %v574
      %666 = vmatpush.bf16.msra.mxu0 %v571
      %667 = vmatpush.bf16.msra.mxu0 %v568
      %668 = vmatpush.bf16.msra.mxu0 %v565
      %669 = vmatpush.bf16.msra.mxu0 %v562
      %670 = vmatpush.bf16.msra.mxu0 %v559
      %671 = vmatpush.bf16.msra.mxu0 %v556
      %672 = vmatmul.bf16.gmra.mxu0 %v461
      %v673 = vpop.f32.mrf.mxu0
      %v674 = vadd.f32 %v456, %v673
      %v675 = vpop.f32.mrf.mxu0
      %676 = vdwg.mxu0
      %677 = vmatpush.bf16.msra.mxu0 0
      %678 = vmatpush.bf16.msra.mxu0 0
      %679 = vmatpush.bf16.msra.mxu0 0
      %680 = vmatpush.bf16.msra.mxu0 0
      %681 = vmatpush.bf16.msra.mxu0 0
      %682 = vmatpush.bf16.msra.mxu0 0
      %683 = vmatpush.bf16.msra.mxu0 0
      %684 = vmatpush.bf16.msra.mxu0 %v580
      %685 = vmatmul.bf16.gmra.mxu0 %v610
      %v686 = vpop.f32.mrf.mxu0
      %v687 = vadd.f32 %v674, %v686
      %v688 = vpop.f32.mrf.mxu0
      %689 = vdwg.mxu0
      %v690 = vlaneseq
      %v691 = vand.u32 %v690, 127
      %v692 = vadd.s32 %v691, 128
      %v693 = vadd.s32 %v691, 256
      %vm694 = vcmp.lt.s32.totalorder %v691, 0
      %v695 = vsub.s32 0, %v691
      %v696 = vsel %vm694, %v695, %v691
      %v697 = vand.u32 %v696, 65535
      %v698 = vshrl.u32 %v696, 16
      %v700 = vmul.u32 %v697, 14564
      %v701 = vmul.u32 %v697, 58254
      %v702 = vmul.u32 %v698, 14564
      %v703 = vmul.u32 %v698, 58254
      %v704 = vshll.u32 %v701, 16
      %v705 = vshrl.u32 %v701, 16
      %v706 = vshll.u32 %v702, 16
      %v707 = vshrl.u32 %v702, 16
      %vm708 = vc.u32 %v700, %v704
      %v709 = vsel %vm708, 1, 0
      %v710 = vadd.s32 %v700, %v704
      %v711 = vadd.s32 %v703, %v709
      %vm712 = vc.u32 %v710, %v706
      %v713 = vsel %vm712, 1, 0
      %v714 = vadd.s32 %v710, %v706
      %v715 = vadd.s32 %v711, %v713
      %v716 = vadd.s32 %v715, %v705
      %v717 = vadd.s32 %v716, %v707
      %v718 = vshrl.u32 %v717, 4
      %v719 = vmul.u32 %v718, 18
      %v720 = vsub.s32 %v696, %v719
      %v721 = vsub.s32 0, %v720
      %v722 = vsel %vm694, %v721, %v720
      %vm723 = vcmp.lt.s32.totalorder %v692, 0
      %v724 = vsub.s32 0, %v692
      %v725 = vsel %vm723, %v724, %v692
      %v726 = vand.u32 %v725, 65535
      %v727 = vshrl.u32 %v725, 16
      %v729 = vmul.u32 %v726, 14564
      %v730 = vmul.u32 %v726, 58254
      %v731 = vmul.u32 %v727, 14564
      %v732 = vmul.u32 %v727, 58254
      %v733 = vshll.u32 %v730, 16
      %v734 = vshrl.u32 %v730, 16
      %v735 = vshll.u32 %v731, 16
      %v736 = vshrl.u32 %v731, 16
      %vm737 = vc.u32 %v729, %v733
      %v738 = vsel %vm737, 1, 0
      %v739 = vadd.s32 %v729, %v733
      %v740 = vadd.s32 %v732, %v738
      %vm741 = vc.u32 %v739, %v735
      %v742 = vsel %vm741, 1, 0
      %v743 = vadd.s32 %v739, %v735
      %v744 = vadd.s32 %v740, %v742
      %v745 = vadd.s32 %v744, %v734
      %v746 = vadd.s32 %v745, %v736
      %v747 = vshrl.u32 %v746, 4
      %v748 = vmul.u32 %v747, 18
      %v749 = vsub.s32 %v725, %v748
      %v750 = vsub.s32 0, %v749
      %v751 = vsel %vm723, %v750, %v749
      %vm752 = vcmp.lt.s32.totalorder %v693, 0
      %v753 = vsub.s32 0, %v693
      %v754 = vsel %vm752, %v753, %v693
      %v755 = vand.u32 %v754, 65535
      %v756 = vshrl.u32 %v754, 16
      %v758 = vmul.u32 %v755, 14564
      %v759 = vmul.u32 %v755, 58254
      %v760 = vmul.u32 %v756, 14564
      %v761 = vmul.u32 %v756, 58254
      %v762 = vshll.u32 %v759, 16
      %v763 = vshrl.u32 %v759, 16
      %v764 = vshll.u32 %v760, 16
      %v765 = vshrl.u32 %v760, 16
      %vm766 = vc.u32 %v758, %v762
      %v767 = vsel %vm766, 1, 0
      %v768 = vadd.s32 %v758, %v762
      %v769 = vadd.s32 %v761, %v767
      %vm770 = vc.u32 %v768, %v764
      %v771 = vsel %vm770, 1, 0
      %v772 = vadd.s32 %v768, %v764
      %v773 = vadd.s32 %v769, %v771
      %v774 = vadd.s32 %v773, %v763
      %v775 = vadd.s32 %v774, %v765
      %v776 = vshrl.u32 %v775, 4
      %v777 = vmul.u32 %v776, 18
      %v778 = vsub.s32 %v754, %v777
      %v779 = vsub.s32 0, %v778
      %v780 = vsel %vm752, %v779, %v778
      %vm781 = vcmp.ne.s32.totalorder %v722, 0
      %vm782 = vcmp.ne.s32.totalorder %v751, 0
      %vm783 = vcmp.ne.s32.totalorder %v780, 0
      %vm784 = vcmp.lt.s32.totalorder %v722, 0
      %vm785 = vcmp.lt.s32.totalorder %v751, 0
      %vm786 = vcmp.lt.s32.totalorder %v780, 0
      %vm787 = vmand %vm784, %vm781
      %vm788 = vmand %vm785, %vm782
      %vm789 = vmand %vm786, %vm783
      %v790 = vadd.s32 %v722, 18
      %v791 = vadd.s32 %v751, 18
      %v792 = vadd.s32 %v780, 18
      %v793 = vsel %vm787, %v790, %v722
      %v794 = vsel %vm788, %v791, %v751
      %v795 = vsel %vm789, %v792, %v780
      %vm796 = vcmp.lt.s32.totalorder %v793, 16
      %vm797 = vcmp.lt.s32.totalorder %v794, 16
      %vm798 = vcmp.lt.s32.totalorder %v795, 16
      %vm799 = vcmp.lt.s32.totalorder %v691, 288
      %vm800 = vcmp.lt.s32.totalorder %v692, 288
      %vm801 = vcmp.lt.s32.totalorder %v693, 288
      %vm802 = vmand %vm796, %vm799
      %vm803 = vmand %vm797, %vm800
      %vm804 = vmand %vm798, %vm801
      %v805 = vsel %vm802, 1, 0
      %v806 = vsel %vm803, 1, 0
      %v807 = vsel %vm804, 1, 0
      %v808 = vcvt.s32.f32 %v805
      %v809 = vcvt.s32.f32 %v806
      %v810 = vcvt.s32.f32 %v807
      %v811 = vmul.f32 %v635, %v808
      %v812 = vmul.f32 %v661, %v809
      %v813 = vmul.f32 %v687, %v810
      %v814 = vadd.f32 %v811, %v812
      %v815 = vadd.f32 %v814, %v813
      %816 = vadd.xlane.f32.xlu0 %v815
      %v817 = vpop.xlane.xlu0 %816
      %v818 = vmul.f32 %v817, 0.00390625
      %v819 = vmul.f32 %v635, %v635
      %v820 = vmul.f32 %v661, %v661
      %v821 = vmul.f32 %v687, %v687
      %v822 = vmul.f32 %v819, %v808
      %v823 = vmul.f32 %v820, %v809
      %v824 = vmul.f32 %v821, %v810
      %v825 = vadd.f32 %v822, %v823
      %v826 = vadd.f32 %v825, %v824
      %827 = vadd.xlane.f32.xlu0 %v826
      %v828 = vpop.xlane.xlu0 %827
      %v829 = vmul.f32 %v828, 0.00390625
      %v830 = vmul.f32 %v818, %v818
      %v831 = vsub.f32 %v829, %v830
      %v832 = vmax.f32 %v831, 0.0
      %v833 = vsub.f32 %v635, %v818
      %v834 = vsub.f32 %v661, %v818
      %v835 = vsub.f32 %v687, %v818
      %v836 = vadd.f32 %v832, 1e-05
      %v837 = vrsqrt.pop %v836
      %v838 = vmul.f32 %v837, %v836
      %v839 = vmul.f32 %v838, %v837
      %v840 = vmul.f32 0.5, %v839
      %v841 = vsub.f32 1.5, %v840
      %v842 = vmul.f32 %v837, %v841
      %vm843 = vweird.f32 %v836
      %vm844 = vweird.f32 %v837
      %vm845 = vmor %vm843, %vm844
      %v846 = vsel %vm845, %v837, %v842
      %v847 = vmul.f32 %v833, %v846
      %v848 = vmul.f32 %v834, %v846
      %v849 = vmul.f32 %v835, %v846
      %vm850 = vcmp.gt.f32.partialorder %v847, 0.0
      %vm851 = vcmp.gt.f32.partialorder %v848, 0.0
      %vm852 = vcmp.gt.f32.partialorder %v849, 0.0
      %v853 = vmin.f32 %v847, 0.0
      %v854 = vmin.f32 %v848, 0.0
      %v855 = vmin.f32 %v849, 0.0
      %v856 = vmul.f32 %v853, 1.442695
      %v857 = vpow.pop %v856
      %v858 = vmul.f32 %v854, 1.442695
      %v859 = vpow.pop %v858
      %v860 = vmul.f32 %v855, 1.442695
      %v861 = vpow.pop %v860
      %v862 = vsub.f32 %v857, 1.0
      %v863 = vsub.f32 %v859, 1.0
      %v864 = vsub.f32 %v861, 1.0
      %v865 = vsel %vm850, %v847, %v862
      %v866 = vsel %vm851, %v848, %v863
      %v867 = vsel %vm852, %v849, %v864
      %v868 = vpack.c.bf16 %v866, %v865
      %v869 = vpack.c.bf16 %v867, %v867
      %870 = vst [vmem:[%s170] sm:$0xff] %v868
      %871 = vst [vmem:[%s170 + $0x8] sm:$0xf] %v869
      %p872 = scmp.lt.s32.totalorder %s14, 1
      %s873 = scalar_select %p872, %s14, 1
      %s874 = smul.addr %s873, 3
      %s875 = smul.addr %s874, 4
      %s876 = scalar_lea.vmem %s3, %s875
      // Predicated region
      $region33: #{_lambda_.11} parent=31 // pred_check
        %p877 = pneg %p100
      $region34: #{_lambda_.11} parent=31 // pred_check_branch
        %879 = sbr.rel (%p877) target = $region36
      $region35: #{_lambda_.11} parent=31 // pred_region
        _
      $region36: #{_lambda_.11} parent=31 // pred_fallthru
        _
    $region32: #{_lambda_.11} parent=5 // pred_fallthru
      _
    %p880 = scmp.le.s32.totalorder 2, %s9
    // Predicated region
    $region37: #{_lambda_.11} parent=5 // pred_check
      %p881 = pneg %p880
    $region38: #{_lambda_.11} parent=5 // pred_check_branch
      %883 = sbr.rel (%p881) target = $region40
    $region39: #{_lambda_.11} parent=5 // pred_region
      %s884 = ssub.s32 %s9, 2
      // Predicated region
      $region41: #{_lambda_.11} parent=39 // pred_check
        %p885 = pneg %p106
      $region42: #{_lambda_.11} parent=39 // pred_check_branch
        %887 = sbr.rel (%p885) target = $region44
      $region43: #{_lambda_.11} parent=39 // pred_region
        %p888 = scmp.lt.s32.totalorder %s15, 1
        %s889 = scalar_select %p888, %s15, 1
        %s890 = smul.addr %s889, 3
        %s891 = smul.addr %s890, 4
        %s892 = scalar_lea.vmem %s3, %s891
      $region44: #{_lambda_.11} parent=39 // pred_fallthru
        _
    $region40: #{_lambda_.11} parent=5 // pred_fallthru
      _
  $region6: #{_lambda_.11} parent=0 // loop_footer
    %s13 = sadd.s32 1, %s9
  $region7: #{_lambda_.11} parent=0 // loop_footer_branch
    %8 = sbr.rel target = $region3
  $region8: #{_lambda_.11} parent=0 // loop_exit
    _

// kernel: _lambda_.12
$region0: #{_lambda_.12}
  #allocation0 [shape = 'u32[]', space=smem, size = 0x4, offset = 0x4, fixed_abs, tag = 'smem constant byte address 0x4 - core index']
  #allocation1 [shape = 'u32[72,128]{1,0:T(1,128)}', space=vmem, size = 0x9000, scoped, tag = 'internal scratch']
  #allocation2 [shape = 'bf16[144,128]{1,0:T(8,128)(2,1)}', space=vmem, size = 0x9000, scoped, tag = 'scratch operand']
  %s0 = inlined_call_operand.vmem [shape: bf16[2,16,256], index: 0, kind: input, shape index: {}]
  %s1 = inlined_call_operand.vmem [shape: bf16[16,144], index: 1, kind: input, shape index: {}]
  %s2 = inlined_call_operand.vmem [shape: f32[16,1], index: 2, kind: input, shape index: {}]
  %s3 = inlined_call_operand.vmem [shape: bf16[2,16,128], index: 3, kind: output, shape index: {}]
  %s4 = sld [smem:[#allocation0]]
  $region45: #{_lambda_.12} parent=0
    _
  %s6 = ssub.s32 1, %s4
  %s7 = scalar_select 0, %s6, %s4
  loop: start=0, step=1, limit=4
  $region2: #{_lambda_.12} parent=0 // loop_pre_header
    _
  $region3: #{_lambda_.12} parent=0 // loop_header
    %s9 = sphi 0, %s13
    %p10 = scmp.ge.s32.totalorder %s9, 4
    %s19 = sphi 0, %s21
    %s22 = sphi 0, %s19
    %s23 = sphi 0, %s22
    %s39 = sphi 0, %s23
    %s43 = sphi 0, %s43
    %s45 = sphi 0, %s43
    %s46 = sphi 0, %s45
    %s60 = sphi 0, %s46
    %s64 = sphi 0, %s64
    %s66 = sphi 0, %s64
    %s67 = sphi 0, %s66
    %s81 = sphi 0, %s67
    %s87 = sphi 0, %s89
    %s90 = sphi 0, %s87
    %s91 = sphi 0, %s90
    %s107 = sphi 0, %s91
  $region4: #{_lambda_.12} parent=0 // loop_header_branch
    %12 = sbr.rel (%p10) target = $region8
  $region5: #{_lambda_.12} parent=0 // loop_body
    %s14 = ssub.s32 %s9, 1
    %s15 = ssub.s32 %s9, 2
    %s16 = sadd.s32 %s9, 1
    %s17 = ssub.s32 %s9, %s16
    %p18 = scmp.eq.s32.totalorder %s17, 0
    %s20 = sadd.s32 %s19, 1
    %s21 = scalar_select %p18, %s19, %s20
    %p24 = pneg %p18
    %p25 = scmp.eq.s32.totalorder %s9, 1
    %p26 = por %p24, %p25
    %p27 = scmp.ne.s32.totalorder %s19, %s22
    %p28 = scmp.eq.s32.totalorder %s9, 0
    %p29 = por %p27, %p28
    %p30 = scmp.ne.s32.totalorder %s19, %s22
    %p31 = scmp.eq.s32.totalorder %s14, 1
    %p32 = por %p30, %p31
    %p33 = scmp.ne.s32.totalorder %s22, %s23
    %p34 = scmp.eq.s32.totalorder %s14, 0
    %p35 = por %p33, %p34
    %p36 = scmp.ne.s32.totalorder %s22, %s23
    %p37 = scmp.eq.s32.totalorder %s15, 1
    %p38 = por %p36, %p37
    %p40 = scmp.ne.s32.totalorder %s23, %s39
    %p41 = scmp.eq.s32.totalorder %s15, 0
    %p42 = por %p40, %p41
    %s44 = sadd.s32 %s43, 1
    %p47 = scmp.eq.s32.totalorder %s9, 1
    %p48 = scmp.ne.s32.totalorder %s43, %s45
    %p49 = scmp.eq.s32.totalorder %s9, 0
    %p50 = por %p48, %p49
    %p51 = scmp.ne.s32.totalorder %s43, %s45
    %p52 = scmp.eq.s32.totalorder %s14, 1
    %p53 = por %p51, %p52
    %p54 = scmp.ne.s32.totalorder %s45, %s46
    %p55 = scmp.eq.s32.totalorder %s14, 0
    %p56 = por %p54, %p55
    %p57 = scmp.ne.s32.totalorder %s45, %s46
    %p58 = scmp.eq.s32.totalorder %s15, 1
    %p59 = por %p57, %p58
    %p61 = scmp.ne.s32.totalorder %s46, %s60
    %p62 = scmp.eq.s32.totalorder %s15, 0
    %p63 = por %p61, %p62
    %s65 = sadd.s32 %s64, 1
    %p68 = scmp.eq.s32.totalorder %s9, 1
    %p69 = scmp.ne.s32.totalorder %s64, %s66
    %p70 = scmp.eq.s32.totalorder %s9, 0
    %p71 = por %p69, %p70
    %p72 = scmp.ne.s32.totalorder %s64, %s66
    %p73 = scmp.eq.s32.totalorder %s14, 1
    %p74 = por %p72, %p73
    %p75 = scmp.ne.s32.totalorder %s66, %s67
    %p76 = scmp.eq.s32.totalorder %s14, 0
    %p77 = por %p75, %p76
    %p78 = scmp.ne.s32.totalorder %s66, %s67
    %p79 = scmp.eq.s32.totalorder %s15, 1
    %p80 = por %p78, %p79
    %p82 = scmp.ne.s32.totalorder %s67, %s81
    %p83 = scmp.eq.s32.totalorder %s15, 0
    %p84 = por %p82, %p83
    %s85 = ssub.s32 %s9, %s16
    %p86 = scmp.eq.s32.totalorder %s85, 0
    %s88 = sadd.s32 %s87, 1
    %s89 = scalar_select %p86, %s87, %s88
    %p92 = pneg %p86
    %p93 = scmp.eq.s32.totalorder %s9, 1
    %p94 = por %p92, %p93
    %p95 = scmp.ne.s32.totalorder %s87, %s90
    %p96 = scmp.eq.s32.totalorder %s9, 0
    %p97 = por %p95, %p96
    %p98 = scmp.ne.s32.totalorder %s87, %s90
    %p99 = scmp.eq.s32.totalorder %s14, 1
    %p100 = por %p98, %p99
    %p101 = scmp.ne.s32.totalorder %s90, %s91
    %p102 = scmp.eq.s32.totalorder %s14, 0
    %p103 = por %p101, %p102
    %p104 = scmp.ne.s32.totalorder %s90, %s91
    %p105 = scmp.eq.s32.totalorder %s15, 1
    %p106 = por %p104, %p105
    %p108 = scmp.ne.s32.totalorder %s91, %s107
    %p109 = scmp.eq.s32.totalorder %s15, 0
    %p110 = por %p108, %p109
    %p111 = scmp.le.s32.totalorder 1, %s9
    %p112 = scmp.lt.s32.totalorder %s9, 3
    %p113 = pnand %p111, %p112
    %p114 = pneg %p113
    // Predicated region
    $region9: #{_lambda_.12} parent=5 // pred_check
      _
    $region10: #{_lambda_.12} parent=5 // pred_check_branch
      %116 = sbr.rel (%p113) target = $region12
    $region11: #{_lambda_.12} parent=5 // pred_region
      %s117 = ssub.s32 %s9, 1
      // Predicated region
      $region13: #{_lambda_.12} parent=11 // pred_check
        %p118 = pneg %p56
      $region14: #{_lambda_.12} parent=11 // pred_check_branch
        %120 = sbr.rel (%p118) target = $region16
      $region15: #{_lambda_.12} parent=11 // pred_region
        _
      $region16: #{_lambda_.12} parent=11 // pred_fallthru
        _
      // Predicated region
      $region17: #{_lambda_.12} parent=11 // pred_check
        %p121 = pneg %p77
      $region18: #{_lambda_.12} parent=11 // pred_check_branch
        %123 = sbr.rel (%p121) target = $region20
      $region19: #{_lambda_.12} parent=11 // pred_region
        _
      $region20: #{_lambda_.12} parent=11 // pred_fallthru
        _
    $region12: #{_lambda_.12} parent=5 // pred_fallthru
      _
    %p124 = scmp.lt.s32.totalorder %s9, 2
    // Predicated region
    $region21: #{_lambda_.12} parent=5 // pred_check
      %p125 = pneg %p124
    $region22: #{_lambda_.12} parent=5 // pred_check_branch
      %127 = sbr.rel (%p125) target = $region24
    $region23: #{_lambda_.12} parent=5 // pred_region
      // Predicated region
      $region25: #{_lambda_.12} parent=23 // pred_check
        %p128 = pneg %p29
      $region26: #{_lambda_.12} parent=23 // pred_check_branch
        %130 = sbr.rel (%p128) target = $region28
      $region27: #{_lambda_.12} parent=23 // pred_region
        %p131 = scmp.lt.s32.totalorder %s9, 1
        %s132 = scalar_select %p131, %s9, 1
        %s133 = smul.addr %s132, 4
        %s134 = smul.addr %s133, 4
        %s135 = scalar_lea.vmem %s0, %s134
      $region28: #{_lambda_.12} parent=23 // pred_fallthru
        _
    $region24: #{_lambda_.12} parent=5 // pred_fallthru
      _
    %p136 = scmp.le.s32.totalorder 1, %s9
    %p137 = scmp.lt.s32.totalorder %s9, 3
    %p138 = pnand %p136, %p137
    %p139 = pneg %p138
    // Predicated region
    $region29: #{_lambda_.12} parent=5 // pred_check
      _
    $region30: #{_lambda_.12} parent=5 // pred_check_branch
      %141 = sbr.rel (%p138) target = $region32
    $region31: #{_lambda_.12} parent=5 // pred_region
      %s142 = ssub.s32 %s9, 1
      %p143 = scmp.lt.s32.totalorder %s14, 1
      %s144 = scalar_select %p143, %s14, 1
      %s145 = smul.addr %s144, 4
      %s146 = smul.addr %s145, 4
      %s147 = scalar_lea.vmem %s0, %s146
      %p148 = pneg %p35
      %p149 = pneg %p32
      %p150 = pneg %p56
      %p151 = pneg %p53
      %p152 = pneg %p77
      %p153 = pneg %p74
      %p154 = pneg %p103
      %p155 = pneg %p100
      %p156 = scmp.lt.s32.totalorder %s14, 1
      %s157 = scalar_select %p156, %s14, 1
      %s158 = smul.addr %s157, 2
      %s159 = smul.addr %s158, 4
      %s160 = scalar_lea.vmem %s3, %s159
      %p161 = scmp.lt.s32.totalorder %s14, 1
      %s162 = scalar_select %p161, %s14, 1
      %s163 = smul.addr %s162, 4
      %s164 = smul.addr %s163, 4
      %s165 = scalar_lea.vmem %s0, %s164
      %p166 = scmp.lt.s32.totalorder %s14, 1
      %s167 = scalar_select %p166, %s14, 1
      %s168 = smul.addr %s167, 2
      %s169 = smul.addr %s168, 4
      %s170 = scalar_lea.vmem %s3, %s169
      %v172 = vld [vmem:[%s165] sm:$0xff]
      %v173 = vld [vmem:[%s165 + $0x8] sm:$0xff]
      %v174 = vunpack.c.l.bf16 %v172
      %v175 = vunpack.c.h.bf16 %v172
      %v176 = vunpack.c.l.bf16 %v173
      %v177 = vunpack.c.h.bf16 %v173
      %v178 = vpack.c.bf16 %v174, %v174
      %v179 = vpack.c.bf16 %v176, %v176
      %180 = vst [vmem:[#allocation2] sm:$0xf] %v178
      %181 = vst [vmem:[#allocation2 + $0x4] sm:$0xf] %v179
      %v182 = vpack.c.bf16 %v175, %v174
      %v183 = vpack.c.bf16 %v177, %v176
      %186 = vrot.lane.b32.xlu0 %v182, 127
      %v187 = vpop.permute.xlu0 %186
      %188 = vrot.lane.b32.xlu0 %v183, 127
      %v189 = vpop.permute.xlu0 %188
      %v190 = vrot.slane %v187, 4
      %v191 = vrot.slane %v189, 4
      %vm192 = vcmask 1039360
      %v193 = vsel %vm192, %v187, %v190
      %v194 = vsel %vm192, %v189, %v191
      %197 = vst [vmem:[#allocation2 + $0x8] sm:$0xf] %v193
      %198 = vst [vmem:[#allocation2 + $0xc] sm:$0xf] %v194
      %199 = vrot.lane.b32.xlu0 %v182, 126
      %v200 = vpop.permute.xlu0 %199
      %201 = vrot.lane.b32.xlu0 %v183, 126
      %v202 = vpop.permute.xlu0 %201
      %v203 = vrot.slane %v200, 4
      %v204 = vrot.slane %v202, 4
      %vm205 = vcmask 1031168
      %v206 = vsel %vm205, %v200, %v203
      %v207 = vsel %vm205, %v202, %v204
      %210 = vst [vmem:[#allocation2 + $0x10] sm:$0xf] %v206
      %211 = vst [vmem:[#allocation2 + $0x14] sm:$0xf] %v207
      %212 = vrot.lane.b32.xlu0 %v182, 118
      %v213 = vpop.permute.xlu0 %212
      %214 = vrot.lane.b32.xlu0 %v183, 118
      %v215 = vpop.permute.xlu0 %214
      %v216 = vrot.slane %v213, 4
      %v217 = vrot.slane %v215, 4
      %vm218 = vcmask 965632
      %v219 = vsel %vm218, %v213, %v216
      %v220 = vsel %vm218, %v215, %v217
      %223 = vst [vmem:[#allocation2 + $0x18] sm:$0xf] %v219
      %224 = vst [vmem:[#allocation2 + $0x1c] sm:$0xf] %v220
      %225 = vrot.lane.b32.xlu0 %v182, 117
      %v226 = vpop.permute.xlu0 %225
      %227 = vrot.lane.b32.xlu0 %v183, 117
      %v228 = vpop.permute.xlu0 %227
      %v229 = vrot.slane %v226, 4
      %v230 = vrot.slane %v228, 4
      %vm231 = vcmask 957440
      %v232 = vsel %vm231, %v226, %v229
      %v233 = vsel %vm231, %v228, %v230
      %236 = vst [vmem:[#allocation2 + $0x20] sm:$0xf] %v232
      %237 = vst [vmem:[#allocation2 + $0x24] sm:$0xf] %v233
      %238 = vrot.lane.b32.xlu0 %v182, 116
      %v239 = vpop.permute.xlu0 %238
      %240 = vrot.lane.b32.xlu0 %v183, 116
      %v241 = vpop.permute.xlu0 %240
      %v242 = vrot.slane %v239, 4
      %v243 = vrot.slane %v241, 4
      %vm244 = vcmask 949248
      %v245 = vsel %vm244, %v239, %v242
      %v246 = vsel %vm244, %v241, %v243
      %249 = vst [vmem:[#allocation2 + $0x28] sm:$0xf] %v245
      %250 = vst [vmem:[#allocation2 + $0x2c] sm:$0xf] %v246
      %251 = vrot.lane.b32.xlu0 %v182, 108
      %v252 = vpop.permute.xlu0 %251
      %253 = vrot.lane.b32.xlu0 %v183, 108
      %v254 = vpop.permute.xlu0 %253
      %v255 = vrot.slane %v252, 4
      %v256 = vrot.slane %v254, 4
      %vm257 = vcmask 883712
      %v258 = vsel %vm257, %v252, %v255
      %v259 = vsel %vm257, %v254, %v256
      %262 = vst [vmem:[#allocation2 + $0x30] sm:$0xf] %v258
      %263 = vst [vmem:[#allocation2 + $0x34] sm:$0xf] %v259
      %264 = vrot.lane.b32.xlu0 %v182, 107
      %v265 = vpop.permute.xlu0 %264
      %266 = vrot.lane.b32.xlu0 %v183, 107
      %v267 = vpop.permute.xlu0 %266
      %v268 = vrot.slane %v265, 4
      %v269 = vrot.slane %v267, 4
      %vm270 = vcmask 875520
      %v271 = vsel %vm270, %v265, %v268
      %v272 = vsel %vm270, %v267, %v269
      %275 = vst [vmem:[#allocation2 + $0x38] sm:$0xf] %v271
      %276 = vst [vmem:[#allocation2 + $0x3c] sm:$0xf] %v272
      %277 = vrot.lane.b32.xlu0 %v182, 106
      %v278 = vpop.permute.xlu0 %277
      %279 = vrot.lane.b32.xlu0 %v183, 106
      %v280 = vpop.permute.xlu0 %279
      %v281 = vrot.slane %v278, 4
      %v282 = vrot.slane %v280, 4
      %vm283 = vcmask 867328
      %v284 = vsel %vm283, %v278, %v281
      %v285 = vsel %vm283, %v280, %v282
      %288 = vst [vmem:[#allocation2 + $0x40] sm:$0xf] %v284
      %289 = vst [vmem:[#allocation2 + $0x44] sm:$0xf] %v285
      %v290 = vld [vmem:[%s1] sm:$0xff]
      %v291 = vld [vmem:[%s1 + $0x8] sm:$0xff]
      %v292 = vld [vmem:[#allocation2] sm:$0xf]
      %v293 = vld [vmem:[#allocation2 + $0x4] sm:$0xf]
      %v294 = vld [vmem:[#allocation2 + $0x8] sm:$0xf]
      %v295 = vld [vmem:[#allocation2 + $0xc] sm:$0xf]
      %v296 = vld [vmem:[#allocation2 + $0x10] sm:$0xf]
      %v297 = vld [vmem:[#allocation2 + $0x14] sm:$0xf]
      %v298 = vld [vmem:[#allocation2 + $0x18] sm:$0xf]
      %v299 = vld [vmem:[#allocation2 + $0x1c] sm:$0xf]
      %v300 = vld [vmem:[#allocation2 + $0x20] sm:$0xf]
      %v301 = vld [vmem:[#allocation2 + $0x24] sm:$0xf]
      %v302 = vld [vmem:[#allocation2 + $0x28] sm:$0xf]
      %v303 = vld [vmem:[#allocation2 + $0x2c] sm:$0xf]
      %v304 = vld [vmem:[#allocation2 + $0x30] sm:$0xf]
      %v305 = vld [vmem:[#allocation2 + $0x34] sm:$0xf]
      %v306 = vld [vmem:[#allocation2 + $0x38] sm:$0xf]
      %v307 = vld [vmem:[#allocation2 + $0x3c] sm:$0xf]
      %v308 = vld [vmem:[#allocation2 + $0x40] sm:$0xf]
      %v309 = vld [vmem:[#allocation2 + $0x44] sm:$0xf]
      %v310 = vld [vmem:[%s2] sm:$0xff]
      %v311 = vld [vmem:[%s2 + $0x8] sm:$0xff]
      %313 = vset.pattern.permute.xlu0 0
      %314 = vperm.xlu0 %313, %v310
      %v315 = vpop.permute.xlu0 %314
      %318 = vset.pattern.permute.xlu0 0
      %319 = vperm.xlu0 %318, %v311
      %v320 = vpop.permute.xlu0 %319
      %v324 = vunpack.c.l.b16 %v290
      %v325 = vunpack.c.h.b16 %v290
      %v326 = vunpack.c.l.b16 %v291
      %v327 = vunpack.c.h.b16 %v291
      %v328 = vpack.c.b16 %v326, %v324
      %v329 = vpack.c.b16 %v327, %v325
      %v349 = vunpack.c.l.b16 %v292
      %v350 = vunpack.c.l.b16 %v293
      %v351 = vunpack.c.l.b16 %v294
      %v352 = vunpack.c.l.b16 %v295
      %v353 = vunpack.c.l.b16 %v296
      %v354 = vunpack.c.l.b16 %v297
      %v355 = vunpack.c.l.b16 %v298
      %v356 = vunpack.c.l.b16 %v299
      %v357 = vunpack.c.l.b16 %v300
      %v358 = vunpack.c.l.b16 %v301
      %v359 = vunpack.c.l.b16 %v302
      %v360 = vunpack.c.l.b16 %v303
      %v361 = vunpack.c.l.b16 %v304
      %v362 = vunpack.c.l.b16 %v305
      %v363 = vunpack.c.l.b16 %v306
      %v364 = vunpack.c.l.b16 %v307
      %v365 = vunpack.c.l.b16 %v308
      %v366 = vunpack.c.l.b16 %v309
      %v367 = vpack.c.b16 %v350, %v349
      %v368 = vpack.c.b16 %v352, %v351
      %v369 = vpack.c.b16 %v354, %v353
      %v370 = vpack.c.b16 %v356, %v355
      %v371 = vpack.c.b16 %v358, %v357
      %v372 = vpack.c.b16 %v360, %v359
      %v373 = vpack.c.b16 %v362, %v361
      %v374 = vpack.c.b16 %v364, %v363
      %v375 = vpack.c.b16 %v366, %v365
      %vm385 = vcmask 130048
      %v387 = vsel %vm385, %v329, 0
      %389 = vmatpush.bf16.msra.mxu0 %v374
      %390 = vmatpush.bf16.msra.mxu0 %v373
      %391 = vmatpush.bf16.msra.mxu0 %v372
      %392 = vmatpush.bf16.msra.mxu0 %v371
      %393 = vmatpush.bf16.msra.mxu0 %v370
      %394 = vmatpush.bf16.msra.mxu0 %v369
      %395 = vmatpush.bf16.msra.mxu0 %v368
      %396 = vmatpush.bf16.msra.mxu0 %v367
      %397 = vmatmul.bf16.gmra.mxu0 %v328
      %v398 = vpop.f32.mrf.mxu0
      %v399 = vadd.f32 %v315, %v398
      %v400 = vpop.f32.mrf.mxu0
      %v401 = vadd.f32 %v320, %v400
      %402 = vdwg.mxu0
      %403 = vmatpush.bf16.msra.mxu0 0
      %404 = vmatpush.bf16.msra.mxu0 0
      %405 = vmatpush.bf16.msra.mxu0 0
      %406 = vmatpush.bf16.msra.mxu0 0
      %407 = vmatpush.bf16.msra.mxu0 0
      %408 = vmatpush.bf16.msra.mxu0 0
      %409 = vmatpush.bf16.msra.mxu0 0
      %410 = vmatpush.bf16.msra.mxu0 %v375
      %411 = vmatmul.bf16.gmra.mxu0 %v387
      %v412 = vpop.f32.mrf.mxu0
      %v413 = vadd.f32 %v399, %v412
      %v414 = vpop.f32.mrf.mxu0
      %v415 = vadd.f32 %v401, %v414
      %416 = vdwg.mxu0
      %v417 = vlaneseq
      %v418 = vand.u32 %v417, 127
      %vm419 = vcmp.lt.s32.totalorder %v418, 0
      %v420 = vsub.s32 0, %v418
      %v421 = vsel %vm419, %v420, %v418
      %v422 = vand.u32 %v421, 65535
      %v423 = vshrl.u32 %v421, 16
      %v425 = vmul.u32 %v422, 52429
      %v426 = vmul.u32 %v422, 52428
      %v427 = vmul.u32 %v423, 52429
      %v428 = vmul.u32 %v423, 52428
      %v429 = vshll.u32 %v426, 16
      %v430 = vshrl.u32 %v426, 16
      %v431 = vshll.u32 %v427, 16
      %v432 = vshrl.u32 %v427, 16
      %vm433 = vc.u32 %v425, %v429
      %v434 = vsel %vm433, 1, 0
      %v435 = vadd.s32 %v425, %v429
      %v436 = vadd.s32 %v428, %v434
      %vm437 = vc.u32 %v435, %v431
      %v438 = vsel %vm437, 1, 0
      %v439 = vadd.s32 %v435, %v431
      %v440 = vadd.s32 %v436, %v438
      %v441 = vadd.s32 %v440, %v430
      %v442 = vadd.s32 %v441, %v432
      %v443 = vshrl.u32 %v442, 3
      %v444 = vmul.u32 %v443, 10
      %v445 = vsub.s32 %v421, %v444
      %v446 = vsub.s32 0, %v445
      %v447 = vsel %vm419, %v446, %v445
      %vm448 = vcmp.ne.s32.totalorder %v447, 0
      %vm449 = vcmp.lt.s32.totalorder %v447, 0
      %vm450 = vmand %vm449, %vm448
      %v451 = vadd.s32 %v447, 10
      %v452 = vsel %vm450, %v451, %v447
      %vm453 = vcmp.lt.s32.totalorder %v452, 8
      %vm454 = vcmp.lt.s32.totalorder %v418, 80
      %vm455 = vmand %vm453, %vm454
      %v456 = vsel %vm455, 1, 0
      %v457 = vcvt.s32.f32 %v456
      %v458 = vmul.f32 %v413, %v457
      %v459 = vmul.f32 %v415, %v457
      %460 = vadd.xlane.f32.xlu0 %v458
      %v461 = vpop.xlane.xlu0 %460
      %462 = vadd.xlane.f32.xlu0 %v459
      %v463 = vpop.xlane.xlu0 %462
      %v464 = vmul.f32 %v461, 0.015625
      %v465 = vmul.f32 %v463, 0.015625
      %v466 = vmul.f32 %v413, %v413
      %v467 = vmul.f32 %v415, %v415
      %v468 = vmul.f32 %v466, %v457
      %v469 = vmul.f32 %v467, %v457
      %470 = vadd.xlane.f32.xlu0 %v468
      %v471 = vpop.xlane.xlu0 %470
      %472 = vadd.xlane.f32.xlu0 %v469
      %v473 = vpop.xlane.xlu0 %472
      %v474 = vmul.f32 %v471, 0.015625
      %v475 = vmul.f32 %v473, 0.015625
      %v476 = vmul.f32 %v464, %v464
      %v477 = vmul.f32 %v465, %v465
      %v478 = vsub.f32 %v474, %v476
      %v479 = vsub.f32 %v475, %v477
      %v480 = vmax.f32 %v478, 0.0
      %v481 = vmax.f32 %v479, 0.0
      %v482 = vsub.f32 %v413, %v464
      %v483 = vsub.f32 %v415, %v465
      %v484 = vadd.f32 %v480, 1e-05
      %v485 = vadd.f32 %v481, 1e-05
      %v486 = vrsqrt.pop %v484
      %v487 = vmul.f32 %v486, %v484
      %v488 = vmul.f32 %v487, %v486
      %v489 = vmul.f32 0.5, %v488
      %v490 = vsub.f32 1.5, %v489
      %v491 = vmul.f32 %v486, %v490
      %vm492 = vweird.f32 %v484
      %vm493 = vweird.f32 %v486
      %vm494 = vmor %vm492, %vm493
      %v495 = vsel %vm494, %v486, %v491
      %v496 = vrsqrt.pop %v485
      %v497 = vmul.f32 %v496, %v485
      %v498 = vmul.f32 %v497, %v496
      %v499 = vmul.f32 0.5, %v498
      %v500 = vsub.f32 1.5, %v499
      %v501 = vmul.f32 %v496, %v500
      %vm502 = vweird.f32 %v485
      %vm503 = vweird.f32 %v496
      %vm504 = vmor %vm502, %vm503
      %v505 = vsel %vm504, %v496, %v501
      %v506 = vmul.f32 %v482, %v495
      %v507 = vmul.f32 %v483, %v505
      %vm508 = vcmp.gt.f32.partialorder %v506, 0.0
      %vm509 = vcmp.gt.f32.partialorder %v507, 0.0
      %v510 = vmin.f32 %v506, 0.0
      %v511 = vmin.f32 %v507, 0.0
      %v512 = vmul.f32 %v510, 1.442695
      %v513 = vpow.pop %v512
      %v514 = vmul.f32 %v511, 1.442695
      %v515 = vpow.pop %v514
      %v516 = vsub.f32 %v513, 1.0
      %v517 = vsub.f32 %v515, 1.0
      %v518 = vsel %vm508, %v506, %v516
      %v519 = vsel %vm509, %v507, %v517
      %v520 = vpack.c.bf16 %v518, %v518
      %v521 = vpack.c.bf16 %v519, %v519
      %522 = vst [vmem:[%s170] sm:$0xf] %v520
      %523 = vst [vmem:[%s170 + $0x4] sm:$0xf] %v521
      %p524 = scmp.lt.s32.totalorder %s14, 1
      %s525 = scalar_select %p524, %s14, 1
      %s526 = smul.addr %s525, 2
      %s527 = smul.addr %s526, 4
      %s528 = scalar_lea.vmem %s3, %s527
      // Predicated region
      $region33: #{_lambda_.12} parent=31 // pred_check
        %p529 = pneg %p100
      $region34: #{_lambda_.12} parent=31 // pred_check_branch
        %531 = sbr.rel (%p529) target = $region36
      $region35: #{_lambda_.12} parent=31 // pred_region
        _
      $region36: #{_lambda_.12} parent=31 // pred_fallthru
        _
    $region32: #{_lambda_.12} parent=5 // pred_fallthru
      _
    %p532 = scmp.le.s32.totalorder 2, %s9
    // Predicated region
    $region37: #{_lambda_.12} parent=5 // pred_check
      %p533 = pneg %p532
    $region38: #{_lambda_.12} parent=5 // pred_check_branch
      %535 = sbr.rel (%p533) target = $region40
    $region39: #{_lambda_.12} parent=5 // pred_region
      %s536 = ssub.s32 %s9, 2
      // Predicated region
      $region41: #{_lambda_.12} parent=39 // pred_check
        %p537 = pneg %p106
      $region42: #{_lambda_.12} parent=39 // pred_check_branch
        %539 = sbr.rel (%p537) target = $region44
      $region43: #{_lambda_.12} parent=39 // pred_region
        %p540 = scmp.lt.s32.totalorder %s15, 1
        %s541 = scalar_select %p540, %s15, 1
        %s542 = smul.addr %s541, 2
        %s543 = smul.addr %s542, 4
        %s544 = scalar_lea.vmem %s3, %s543
      $region44: #{_lambda_.12} parent=39 // pred_fallthru
        _
    $region40: #{_lambda_.12} parent=5 // pred_fallthru
      _
  $region6: #{_lambda_.12} parent=0 // loop_footer
    %s13 = sadd.s32 1, %s9
  $region7: #{_lambda_.12} parent=0 // loop_footer_branch
    %8 = sbr.rel target = $region3
  $region8: #{_lambda_.12} parent=0 // loop_exit
    _

// kernel: _lambda_.13
$region0: #{_lambda_.13}
  #allocation0 [shape = 'u32[]', space=smem, size = 0x4, offset = 0x4, fixed_abs, tag = 'smem constant byte address 0x4 - core index']
  #allocation1 [shape = 'u32[72,128]{1,0:T(1,128)}', space=vmem, size = 0x9000, scoped, tag = 'internal scratch']
  #allocation2 [shape = 'bf16[144,128]{1,0:T(8,128)(2,1)}', space=vmem, size = 0x9000, scoped, tag = 'scratch operand']
  %s0 = inlined_call_operand.vmem [shape: bf16[2,16,256], index: 0, kind: input, shape index: {}]
  %s1 = inlined_call_operand.vmem [shape: bf16[32,144], index: 1, kind: input, shape index: {}]
  %s2 = inlined_call_operand.vmem [shape: f32[32,1], index: 2, kind: input, shape index: {}]
  %s3 = inlined_call_operand.vmem [shape: bf16[2,32,128], index: 3, kind: output, shape index: {}]
  %s4 = sld [smem:[#allocation0]]
  $region45: #{_lambda_.13} parent=0
    _
  %s6 = ssub.s32 1, %s4
  %s7 = scalar_select 0, %s6, %s4
  loop: start=0, step=1, limit=4
  $region2: #{_lambda_.13} parent=0 // loop_pre_header
    _
  $region3: #{_lambda_.13} parent=0 // loop_header
    %s9 = sphi 0, %s13
    %p10 = scmp.ge.s32.totalorder %s9, 4
    %s19 = sphi 0, %s21
    %s22 = sphi 0, %s19
    %s23 = sphi 0, %s22
    %s39 = sphi 0, %s23
    %s43 = sphi 0, %s43
    %s45 = sphi 0, %s43
    %s46 = sphi 0, %s45
    %s60 = sphi 0, %s46
    %s64 = sphi 0, %s64
    %s66 = sphi 0, %s64
    %s67 = sphi 0, %s66
    %s81 = sphi 0, %s67
    %s87 = sphi 0, %s89
    %s90 = sphi 0, %s87
    %s91 = sphi 0, %s90
    %s107 = sphi 0, %s91
  $region4: #{_lambda_.13} parent=0 // loop_header_branch
    %12 = sbr.rel (%p10) target = $region8
  $region5: #{_lambda_.13} parent=0 // loop_body
    %s14 = ssub.s32 %s9, 1
    %s15 = ssub.s32 %s9, 2
    %s16 = sadd.s32 %s9, 1
    %s17 = ssub.s32 %s9, %s16
    %p18 = scmp.eq.s32.totalorder %s17, 0
    %s20 = sadd.s32 %s19, 1
    %s21 = scalar_select %p18, %s19, %s20
    %p24 = pneg %p18
    %p25 = scmp.eq.s32.totalorder %s9, 1
    %p26 = por %p24, %p25
    %p27 = scmp.ne.s32.totalorder %s19, %s22
    %p28 = scmp.eq.s32.totalorder %s9, 0
    %p29 = por %p27, %p28
    %p30 = scmp.ne.s32.totalorder %s19, %s22
    %p31 = scmp.eq.s32.totalorder %s14, 1
    %p32 = por %p30, %p31
    %p33 = scmp.ne.s32.totalorder %s22, %s23
    %p34 = scmp.eq.s32.totalorder %s14, 0
    %p35 = por %p33, %p34
    %p36 = scmp.ne.s32.totalorder %s22, %s23
    %p37 = scmp.eq.s32.totalorder %s15, 1
    %p38 = por %p36, %p37
    %p40 = scmp.ne.s32.totalorder %s23, %s39
    %p41 = scmp.eq.s32.totalorder %s15, 0
    %p42 = por %p40, %p41
    %s44 = sadd.s32 %s43, 1
    %p47 = scmp.eq.s32.totalorder %s9, 1
    %p48 = scmp.ne.s32.totalorder %s43, %s45
    %p49 = scmp.eq.s32.totalorder %s9, 0
    %p50 = por %p48, %p49
    %p51 = scmp.ne.s32.totalorder %s43, %s45
    %p52 = scmp.eq.s32.totalorder %s14, 1
    %p53 = por %p51, %p52
    %p54 = scmp.ne.s32.totalorder %s45, %s46
    %p55 = scmp.eq.s32.totalorder %s14, 0
    %p56 = por %p54, %p55
    %p57 = scmp.ne.s32.totalorder %s45, %s46
    %p58 = scmp.eq.s32.totalorder %s15, 1
    %p59 = por %p57, %p58
    %p61 = scmp.ne.s32.totalorder %s46, %s60
    %p62 = scmp.eq.s32.totalorder %s15, 0
    %p63 = por %p61, %p62
    %s65 = sadd.s32 %s64, 1
    %p68 = scmp.eq.s32.totalorder %s9, 1
    %p69 = scmp.ne.s32.totalorder %s64, %s66
    %p70 = scmp.eq.s32.totalorder %s9, 0
    %p71 = por %p69, %p70
    %p72 = scmp.ne.s32.totalorder %s64, %s66
    %p73 = scmp.eq.s32.totalorder %s14, 1
    %p74 = por %p72, %p73
    %p75 = scmp.ne.s32.totalorder %s66, %s67
    %p76 = scmp.eq.s32.totalorder %s14, 0
    %p77 = por %p75, %p76
    %p78 = scmp.ne.s32.totalorder %s66, %s67
    %p79 = scmp.eq.s32.totalorder %s15, 1
    %p80 = por %p78, %p79
    %p82 = scmp.ne.s32.totalorder %s67, %s81
    %p83 = scmp.eq.s32.totalorder %s15, 0
    %p84 = por %p82, %p83
    %s85 = ssub.s32 %s9, %s16
    %p86 = scmp.eq.s32.totalorder %s85, 0
    %s88 = sadd.s32 %s87, 1
    %s89 = scalar_select %p86, %s87, %s88
    %p92 = pneg %p86
    %p93 = scmp.eq.s32.totalorder %s9, 1
    %p94 = por %p92, %p93
    %p95 = scmp.ne.s32.totalorder %s87, %s90
    %p96 = scmp.eq.s32.totalorder %s9, 0
    %p97 = por %p95, %p96
    %p98 = scmp.ne.s32.totalorder %s87, %s90
    %p99 = scmp.eq.s32.totalorder %s14, 1
    %p100 = por %p98, %p99
    %p101 = scmp.ne.s32.totalorder %s90, %s91
    %p102 = scmp.eq.s32.totalorder %s14, 0
    %p103 = por %p101, %p102
    %p104 = scmp.ne.s32.totalorder %s90, %s91
    %p105 = scmp.eq.s32.totalorder %s15, 1
    %p106 = por %p104, %p105
    %p108 = scmp.ne.s32.totalorder %s91, %s107
    %p109 = scmp.eq.s32.totalorder %s15, 0
    %p110 = por %p108, %p109
    %p111 = scmp.le.s32.totalorder 1, %s9
    %p112 = scmp.lt.s32.totalorder %s9, 3
    %p113 = pnand %p111, %p112
    %p114 = pneg %p113
    // Predicated region
    $region9: #{_lambda_.13} parent=5 // pred_check
      _
    $region10: #{_lambda_.13} parent=5 // pred_check_branch
      %116 = sbr.rel (%p113) target = $region12
    $region11: #{_lambda_.13} parent=5 // pred_region
      %s117 = ssub.s32 %s9, 1
      // Predicated region
      $region13: #{_lambda_.13} parent=11 // pred_check
        %p118 = pneg %p56
      $region14: #{_lambda_.13} parent=11 // pred_check_branch
        %120 = sbr.rel (%p118) target = $region16
      $region15: #{_lambda_.13} parent=11 // pred_region
        _
      $region16: #{_lambda_.13} parent=11 // pred_fallthru
        _
      // Predicated region
      $region17: #{_lambda_.13} parent=11 // pred_check
        %p121 = pneg %p77
      $region18: #{_lambda_.13} parent=11 // pred_check_branch
        %123 = sbr.rel (%p121) target = $region20
      $region19: #{_lambda_.13} parent=11 // pred_region
        _
      $region20: #{_lambda_.13} parent=11 // pred_fallthru
        _
    $region12: #{_lambda_.13} parent=5 // pred_fallthru
      _
    %p124 = scmp.lt.s32.totalorder %s9, 2
    // Predicated region
    $region21: #{_lambda_.13} parent=5 // pred_check
      %p125 = pneg %p124
    $region22: #{_lambda_.13} parent=5 // pred_check_branch
      %127 = sbr.rel (%p125) target = $region24
    $region23: #{_lambda_.13} parent=5 // pred_region
      // Predicated region
      $region25: #{_lambda_.13} parent=23 // pred_check
        %p128 = pneg %p29
      $region26: #{_lambda_.13} parent=23 // pred_check_branch
        %130 = sbr.rel (%p128) target = $region28
      $region27: #{_lambda_.13} parent=23 // pred_region
        %p131 = scmp.lt.s32.totalorder %s9, 1
        %s132 = scalar_select %p131, %s9, 1
        %s133 = smul.addr %s132, 4
        %s134 = smul.addr %s133, 4
        %s135 = scalar_lea.vmem %s0, %s134
      $region28: #{_lambda_.13} parent=23 // pred_fallthru
        _
    $region24: #{_lambda_.13} parent=5 // pred_fallthru
      _
    %p136 = scmp.le.s32.totalorder 1, %s9
    %p137 = scmp.lt.s32.totalorder %s9, 3
    %p138 = pnand %p136, %p137
    %p139 = pneg %p138
    // Predicated region
    $region29: #{_lambda_.13} parent=5 // pred_check
      _
    $region30: #{_lambda_.13} parent=5 // pred_check_branch
      %141 = sbr.rel (%p138) target = $region32
    $region31: #{_lambda_.13} parent=5 // pred_region
      %s142 = ssub.s32 %s9, 1
      %p143 = scmp.lt.s32.totalorder %s14, 1
      %s144 = scalar_select %p143, %s14, 1
      %s145 = smul.addr %s144, 4
      %s146 = smul.addr %s145, 4
      %s147 = scalar_lea.vmem %s0, %s146
      %p148 = pneg %p35
      %p149 = pneg %p32
      %p150 = pneg %p56
      %p151 = pneg %p53
      %p152 = pneg %p77
      %p153 = pneg %p74
      %p154 = pneg %p103
      %p155 = pneg %p100
      %p156 = scmp.lt.s32.totalorder %s14, 1
      %s157 = scalar_select %p156, %s14, 1
      %s158 = smul.addr %s157, 4
      %s159 = smul.addr %s158, 4
      %s160 = scalar_lea.vmem %s3, %s159
      %p161 = scmp.lt.s32.totalorder %s14, 1
      %s162 = scalar_select %p161, %s14, 1
      %s163 = smul.addr %s162, 4
      %s164 = smul.addr %s163, 4
      %s165 = scalar_lea.vmem %s0, %s164
      %p166 = scmp.lt.s32.totalorder %s14, 1
      %s167 = scalar_select %p166, %s14, 1
      %s168 = smul.addr %s167, 4
      %s169 = smul.addr %s168, 4
      %s170 = scalar_lea.vmem %s3, %s169
      %v172 = vld [vmem:[%s165] sm:$0xff]
      %v173 = vld [vmem:[%s165 + $0x8] sm:$0xff]
      %v174 = vunpack.c.l.bf16 %v172
      %v175 = vunpack.c.h.bf16 %v172
      %v176 = vunpack.c.l.bf16 %v173
      %v177 = vunpack.c.h.bf16 %v173
      %v178 = vpack.c.bf16 %v174, %v174
      %v179 = vpack.c.bf16 %v176, %v176
      %180 = vst [vmem:[#allocation2] sm:$0xf] %v178
      %181 = vst [vmem:[#allocation2 + $0x4] sm:$0xf] %v179
      %v182 = vpack.c.bf16 %v175, %v174
      %v183 = vpack.c.bf16 %v177, %v176
      %186 = vrot.lane.b32.xlu0 %v182, 127
      %v187 = vpop.permute.xlu0 %186
      %188 = vrot.lane.b32.xlu0 %v183, 127
      %v189 = vpop.permute.xlu0 %188
      %v190 = vrot.slane %v187, 4
      %v191 = vrot.slane %v189, 4
      %vm192 = vcmask 1039360
      %v193 = vsel %vm192, %v187, %v190
      %v194 = vsel %vm192, %v189, %v191
      %197 = vst [vmem:[#allocation2 + $0x8] sm:$0xf] %v193
      %198 = vst [vmem:[#allocation2 + $0xc] sm:$0xf] %v194
      %199 = vrot.lane.b32.xlu0 %v182, 126
      %v200 = vpop.permute.xlu0 %199
      %201 = vrot.lane.b32.xlu0 %v183, 126
      %v202 = vpop.permute.xlu0 %201
      %v203 = vrot.slane %v200, 4
      %v204 = vrot.slane %v202, 4
      %vm205 = vcmask 1031168
      %v206 = vsel %vm205, %v200, %v203
      %v207 = vsel %vm205, %v202, %v204
      %210 = vst [vmem:[#allocation2 + $0x10] sm:$0xf] %v206
      %211 = vst [vmem:[#allocation2 + $0x14] sm:$0xf] %v207
      %212 = vrot.lane.b32.xlu0 %v182, 122
      %v213 = vpop.permute.xlu0 %212
      %214 = vrot.lane.b32.xlu0 %v183, 122
      %v215 = vpop.permute.xlu0 %214
      %v216 = vrot.slane %v213, 4
      %v217 = vrot.slane %v215, 4
      %vm218 = vcmask 998400
      %v219 = vsel %vm218, %v213, %v216
      %v220 = vsel %vm218, %v215, %v217
      %223 = vst [vmem:[#allocation2 + $0x18] sm:$0xf] %v219
      %224 = vst [vmem:[#allocation2 + $0x1c] sm:$0xf] %v220
      %225 = vrot.lane.b32.xlu0 %v182, 121
      %v226 = vpop.permute.xlu0 %225
      %227 = vrot.lane.b32.xlu0 %v183, 121
      %v228 = vpop.permute.xlu0 %227
      %v229 = vrot.slane %v226, 4
      %v230 = vrot.slane %v228, 4
      %vm231 = vcmask 990208
      %v232 = vsel %vm231, %v226, %v229
      %v233 = vsel %vm231, %v228, %v230
      %236 = vst [vmem:[#allocation2 + $0x20] sm:$0xf] %v232
      %237 = vst [vmem:[#allocation2 + $0x24] sm:$0xf] %v233
      %238 = vrot.lane.b32.xlu0 %v182, 120
      %v239 = vpop.permute.xlu0 %238
      %240 = vrot.lane.b32.xlu0 %v183, 120
      %v241 = vpop.permute.xlu0 %240
      %v242 = vrot.slane %v239, 4
      %v243 = vrot.slane %v241, 4
      %vm244 = vcmask 982016
      %v245 = vsel %vm244, %v239, %v242
      %v246 = vsel %vm244, %v241, %v243
      %249 = vst [vmem:[#allocation2 + $0x28] sm:$0xf] %v245
      %250 = vst [vmem:[#allocation2 + $0x2c] sm:$0xf] %v246
      %251 = vrot.lane.b32.xlu0 %v182, 116
      %v252 = vpop.permute.xlu0 %251
      %253 = vrot.lane.b32.xlu0 %v183, 116
      %v254 = vpop.permute.xlu0 %253
      %v255 = vrot.slane %v252, 4
      %v256 = vrot.slane %v254, 4
      %vm257 = vcmask 949248
      %v258 = vsel %vm257, %v252, %v255
      %v259 = vsel %vm257, %v254, %v256
      %262 = vst [vmem:[#allocation2 + $0x30] sm:$0xf] %v258
      %263 = vst [vmem:[#allocation2 + $0x34] sm:$0xf] %v259
      %264 = vrot.lane.b32.xlu0 %v182, 115
      %v265 = vpop.permute.xlu0 %264
      %266 = vrot.lane.b32.xlu0 %v183, 115
      %v267 = vpop.permute.xlu0 %266
      %v268 = vrot.slane %v265, 4
      %v269 = vrot.slane %v267, 4
      %vm270 = vcmask 941056
      %v271 = vsel %vm270, %v265, %v268
      %v272 = vsel %vm270, %v267, %v269
      %275 = vst [vmem:[#allocation2 + $0x38] sm:$0xf] %v271
      %276 = vst [vmem:[#allocation2 + $0x3c] sm:$0xf] %v272
      %277 = vrot.lane.b32.xlu0 %v182, 114
      %v278 = vpop.permute.xlu0 %277
      %279 = vrot.lane.b32.xlu0 %v183, 114
      %v280 = vpop.permute.xlu0 %279
      %v281 = vrot.slane %v278, 4
      %v282 = vrot.slane %v280, 4
      %vm283 = vcmask 932864
      %v284 = vsel %vm283, %v278, %v281
      %v285 = vsel %vm283, %v280, %v282
      %288 = vst [vmem:[#allocation2 + $0x40] sm:$0xf] %v284
      %289 = vst [vmem:[#allocation2 + $0x44] sm:$0xf] %v285
      %v290 = vld [vmem:[%s1] sm:$0xff]
      %v291 = vld [vmem:[%s1 + $0x8] sm:$0xff]
      %v292 = vld [vmem:[%s1 + $0x10] sm:$0xff]
      %v293 = vld [vmem:[%s1 + $0x18] sm:$0xff]
      %v294 = vld [vmem:[#allocation2] sm:$0xf]
      %v295 = vld [vmem:[#allocation2 + $0x4] sm:$0xf]
      %v296 = vld [vmem:[#allocation2 + $0x8] sm:$0xf]
      %v297 = vld [vmem:[#allocation2 + $0xc] sm:$0xf]
      %v298 = vld [vmem:[#allocation2 + $0x10] sm:$0xf]
      %v299 = vld [vmem:[#allocation2 + $0x14] sm:$0xf]
      %v300 = vld [vmem:[#allocation2 + $0x18] sm:$0xf]
      %v301 = vld [vmem:[#allocation2 + $0x1c] sm:$0xf]
      %v302 = vld [vmem:[#allocation2 + $0x20] sm:$0xf]
      %v303 = vld [vmem:[#allocation2 + $0x24] sm:$0xf]
      %v304 = vld [vmem:[#allocation2 + $0x28] sm:$0xf]
      %v305 = vld [vmem:[#allocation2 + $0x2c] sm:$0xf]
      %v306 = vld [vmem:[#allocation2 + $0x30] sm:$0xf]
      %v307 = vld [vmem:[#allocation2 + $0x34] sm:$0xf]
      %v308 = vld [vmem:[#allocation2 + $0x38] sm:$0xf]
      %v309 = vld [vmem:[#allocation2 + $0x3c] sm:$0xf]
      %v310 = vld [vmem:[#allocation2 + $0x40] sm:$0xf]
      %v311 = vld [vmem:[#allocation2 + $0x44] sm:$0xf]
      %v312 = vld [vmem:[%s2] sm:$0xff]
      %v313 = vld [vmem:[%s2 + $0x8] sm:$0xff]
      %v314 = vld [vmem:[%s2 + $0x10] sm:$0xff]
      %v315 = vld [vmem:[%s2 + $0x18] sm:$0xff]
      %317 = vset.pattern.permute.xlu0 0
      %318 = vperm.xlu0 %317, %v312
      %v319 = vpop.permute.xlu0 %318
      %322 = vset.pattern.permute.xlu0 0
      %323 = vperm.xlu0 %322, %v313
      %v324 = vpop.permute.xlu0 %323
      %327 = vset.pattern.permute.xlu0 0
      %328 = vperm.xlu0 %327, %v314
      %v329 = vpop.permute.xlu0 %328
      %332 = vset.pattern.permute.xlu0 0
      %333 = vperm.xlu0 %332, %v315
      %v334 = vpop.permute.xlu0 %333
      %v340 = vunpack.c.l.b16 %v290
      %v341 = vunpack.c.h.b16 %v290
      %v342 = vunpack.c.l.b16 %v291
      %v343 = vunpack.c.h.b16 %v291
      %v344 = vunpack.c.l.b16 %v292
      %v345 = vunpack.c.h.b16 %v292
      %v346 = vunpack.c.l.b16 %v293
      %v347 = vunpack.c.h.b16 %v293
      %v348 = vpack.c.b16 %v342, %v340
      %v349 = vpack.c.b16 %v343, %v341
      %v350 = vpack.c.b16 %v346, %v344
      %v351 = vpack.c.b16 %v347, %v345
      %v372 = vunpack.c.l.b16 %v294
      %v373 = vunpack.c.l.b16 %v295
      %v374 = vunpack.c.l.b16 %v296
      %v375 = vunpack.c.l.b16 %v297
      %v376 = vunpack.c.l.b16 %v298
      %v377 = vunpack.c.l.b16 %v299
      %v378 = vunpack.c.l.b16 %v300
      %v379 = vunpack.c.l.b16 %v301
      %v380 = vunpack.c.l.b16 %v302
      %v381 = vunpack.c.l.b16 %v303
      %v382 = vunpack.c.l.b16 %v304
      %v383 = vunpack.c.l.b16 %v305
      %v384 = vunpack.c.l.b16 %v306
      %v385 = vunpack.c.l.b16 %v307
      %v386 = vunpack.c.l.b16 %v308
      %v387 = vunpack.c.l.b16 %v309
      %v388 = vunpack.c.l.b16 %v310
      %v389 = vunpack.c.l.b16 %v311
      %v390 = vpack.c.b16 %v373, %v372
      %v391 = vpack.c.b16 %v375, %v374
      %v392 = vpack.c.b16 %v377, %v376
      %v393 = vpack.c.b16 %v379, %v378
      %v394 = vpack.c.b16 %v381, %v380
      %v395 = vpack.c.b16 %v383, %v382
      %v396 = vpack.c.b16 %v385, %v384
      %v397 = vpack.c.b16 %v387, %v386
      %v398 = vpack.c.b16 %v389, %v388
      %vm408 = vcmask 130048
      %v410 = vsel %vm408, %v349, 0
      %v413 = vsel %vm408, %v351, 0
      %415 = vmatpush.bf16.msra.mxu0 %v397
      %416 = vmatpush.bf16.msra.mxu0 %v396
      %417 = vmatpush.bf16.msra.mxu0 %v395
      %418 = vmatpush.bf16.msra.mxu0 %v394
      %419 = vmatpush.bf16.msra.mxu0 %v393
      %420 = vmatpush.bf16.msra.mxu0 %v392
      %421 = vmatpush.bf16.msra.mxu0 %v391
      %422 = vmatpush.bf16.msra.mxu0 %v390
      %423 = vmatmul.bf16.gmra.mxu0 %v348
      %v424 = vpop.f32.mrf.mxu0
      %v425 = vadd.f32 %v319, %v424
      %v426 = vpop.f32.mrf.mxu0
      %v427 = vadd.f32 %v324, %v426
      %428 = vmatmul.bf16.gmra.mxu0 %v350
      %v429 = vpop.f32.mrf.mxu0
      %v430 = vadd.f32 %v329, %v429
      %v431 = vpop.f32.mrf.mxu0
      %v432 = vadd.f32 %v334, %v431
      %433 = vdwg.mxu0
      %434 = vmatpush.bf16.msra.mxu0 0
      %435 = vmatpush.bf16.msra.mxu0 0
      %436 = vmatpush.bf16.msra.mxu0 0
      %437 = vmatpush.bf16.msra.mxu0 0
      %438 = vmatpush.bf16.msra.mxu0 0
      %439 = vmatpush.bf16.msra.mxu0 0
      %440 = vmatpush.bf16.msra.mxu0 0
      %441 = vmatpush.bf16.msra.mxu0 %v398
      %442 = vmatmul.bf16.gmra.mxu0 %v410
      %v443 = vpop.f32.mrf.mxu0
      %v444 = vadd.f32 %v425, %v443
      %v445 = vpop.f32.mrf.mxu0
      %v446 = vadd.f32 %v427, %v445
      %447 = vmatmul.bf16.gmra.mxu0 %v413
      %v448 = vpop.f32.mrf.mxu0
      %v449 = vadd.f32 %v430, %v448
      %v450 = vpop.f32.mrf.mxu0
      %v451 = vadd.f32 %v432, %v450
      %452 = vdwg.mxu0
      %v453 = vlaneseq
      %v454 = vand.u32 %v453, 127
      %vm455 = vcmp.lt.s32.totalorder %v454, 0
      %v456 = vsub.s32 0, %v454
      %v457 = vsel %vm455, %v456, %v454
      %v458 = vand.u32 %v457, 65535
      %v459 = vshrl.u32 %v457, 16
      %v461 = vmul.u32 %v458, 43691
      %v462 = vmul.u32 %v458, 43690
      %v463 = vmul.u32 %v459, 43691
      %v464 = vmul.u32 %v459, 43690
      %v465 = vshll.u32 %v462, 16
      %v466 = vshrl.u32 %v462, 16
      %v467 = vshll.u32 %v463, 16
      %v468 = vshrl.u32 %v463, 16
      %vm469 = vc.u32 %v461, %v465
      %v470 = vsel %vm469, 1, 0
      %v471 = vadd.s32 %v461, %v465
      %v472 = vadd.s32 %v464, %v470
      %vm473 = vc.u32 %v471, %v467
      %v474 = vsel %vm473, 1, 0
      %v475 = vadd.s32 %v471, %v467
      %v476 = vadd.s32 %v472, %v474
      %v477 = vadd.s32 %v476, %v466
      %v478 = vadd.s32 %v477, %v468
      %v479 = vshrl.u32 %v478, 2
      %v480 = vmul.u32 %v479, 6
      %v481 = vsub.s32 %v457, %v480
      %v482 = vsub.s32 0, %v481
      %v483 = vsel %vm455, %v482, %v481
      %vm484 = vcmp.ne.s32.totalorder %v483, 0
      %vm485 = vcmp.lt.s32.totalorder %v483, 0
      %vm486 = vmand %vm485, %vm484
      %v487 = vadd.s32 %v483, 6
      %v488 = vsel %vm486, %v487, %v483
      %vm489 = vcmp.lt.s32.totalorder %v488, 4
      %vm490 = vcmp.lt.s32.totalorder %v454, 24
      %vm491 = vmand %vm489, %vm490
      %v492 = vsel %vm491, 1, 0
      %v493 = vcvt.s32.f32 %v492
      %v494 = vmul.f32 %v444, %v493
      %v495 = vmul.f32 %v446, %v493
      %v496 = vmul.f32 %v449, %v493
      %v497 = vmul.f32 %v451, %v493
      %498 = vadd.xlane.f32.xlu0 %v494
      %v499 = vpop.xlane.xlu0 %498
      %500 = vadd.xlane.f32.xlu0 %v495
      %v501 = vpop.xlane.xlu0 %500
      %502 = vadd.xlane.f32.xlu0 %v496
      %v503 = vpop.xlane.xlu0 %502
      %504 = vadd.xlane.f32.xlu0 %v497
      %v505 = vpop.xlane.xlu0 %504
      %v506 = vmul.f32 %v499, 0.0625
      %v507 = vmul.f32 %v501, 0.0625
      %v508 = vmul.f32 %v503, 0.0625
      %v509 = vmul.f32 %v505, 0.0625
      %v510 = vmul.f32 %v444, %v444
      %v511 = vmul.f32 %v446, %v446
      %v512 = vmul.f32 %v449, %v449
      %v513 = vmul.f32 %v451, %v451
      %v514 = vmul.f32 %v510, %v493
      %v515 = vmul.f32 %v511, %v493
      %v516 = vmul.f32 %v512, %v493
      %v517 = vmul.f32 %v513, %v493
      %518 = vadd.xlane.f32.xlu0 %v514
      %v519 = vpop.xlane.xlu0 %518
      %520 = vadd.xlane.f32.xlu0 %v515
      %v521 = vpop.xlane.xlu0 %520
      %522 = vadd.xlane.f32.xlu0 %v516
      %v523 = vpop.xlane.xlu0 %522
      %524 = vadd.xlane.f32.xlu0 %v517
      %v525 = vpop.xlane.xlu0 %524
      %v526 = vmul.f32 %v519, 0.0625
      %v527 = vmul.f32 %v521, 0.0625
      %v528 = vmul.f32 %v523, 0.0625
      %v529 = vmul.f32 %v525, 0.0625
      %v530 = vmul.f32 %v506, %v506
      %v531 = vmul.f32 %v507, %v507
      %v532 = vmul.f32 %v508, %v508
      %v533 = vmul.f32 %v509, %v509
      %v534 = vsub.f32 %v526, %v530
      %v535 = vsub.f32 %v527, %v531
      %v536 = vsub.f32 %v528, %v532
      %v537 = vsub.f32 %v529, %v533
      %v538 = vmax.f32 %v534, 0.0
      %v539 = vmax.f32 %v535, 0.0
      %v540 = vmax.f32 %v536, 0.0
      %v541 = vmax.f32 %v537, 0.0
      %v542 = vsub.f32 %v444, %v506
      %v543 = vsub.f32 %v446, %v507
      %v544 = vsub.f32 %v449, %v508
      %v545 = vsub.f32 %v451, %v509
      %v546 = vadd.f32 %v538, 1e-05
      %v547 = vadd.f32 %v539, 1e-05
      %v548 = vadd.f32 %v540, 1e-05
      %v549 = vadd.f32 %v541, 1e-05
      %v550 = vrsqrt.pop %v546
      %v551 = vmul.f32 %v550, %v546
      %v552 = vmul.f32 %v551, %v550
      %v553 = vmul.f32 0.5, %v552
      %v554 = vsub.f32 1.5, %v553
      %v555 = vmul.f32 %v550, %v554
      %vm556 = vweird.f32 %v546
      %vm557 = vweird.f32 %v550
      %vm558 = vmor %vm556, %vm557
      %v559 = vsel %vm558, %v550, %v555
      %v560 = vrsqrt.pop %v547
      %v561 = vmul.f32 %v560, %v547
      %v562 = vmul.f32 %v561, %v560
      %v563 = vmul.f32 0.5, %v562
      %v564 = vsub.f32 1.5, %v563
      %v565 = vmul.f32 %v560, %v564
      %vm566 = vweird.f32 %v547
      %vm567 = vweird.f32 %v560
      %vm568 = vmor %vm566, %vm567
      %v569 = vsel %vm568, %v560, %v565
      %v570 = vrsqrt.pop %v548
      %v571 = vmul.f32 %v570, %v548
      %v572 = vmul.f32 %v571, %v570
      %v573 = vmul.f32 0.5, %v572
      %v574 = vsub.f32 1.5, %v573
      %v575 = vmul.f32 %v570, %v574
      %vm576 = vweird.f32 %v548
      %vm577 = vweird.f32 %v570
      %vm578 = vmor %vm576, %vm577
      %v579 = vsel %vm578, %v570, %v575
      %v580 = vrsqrt.pop %v549
      %v581 = vmul.f32 %v580, %v549
      %v582 = vmul.f32 %v581, %v580
      %v583 = vmul.f32 0.5, %v582
      %v584 = vsub.f32 1.5, %v583
      %v585 = vmul.f32 %v580, %v584
      %vm586 = vweird.f32 %v549
      %vm587 = vweird.f32 %v580
      %vm588 = vmor %vm586, %vm587
      %v589 = vsel %vm588, %v580, %v585
      %v590 = vmul.f32 %v542, %v559
      %v591 = vmul.f32 %v543, %v569
      %v592 = vmul.f32 %v544, %v579
      %v593 = vmul.f32 %v545, %v589
      %vm594 = vcmp.gt.f32.partialorder %v590, 0.0
      %vm595 = vcmp.gt.f32.partialorder %v591, 0.0
      %vm596 = vcmp.gt.f32.partialorder %v592, 0.0
      %vm597 = vcmp.gt.f32.partialorder %v593, 0.0
      %v598 = vmin.f32 %v590, 0.0
      %v599 = vmin.f32 %v591, 0.0
      %v600 = vmin.f32 %v592, 0.0
      %v601 = vmin.f32 %v593, 0.0
      %v602 = vmul.f32 %v598, 1.442695
      %v603 = vpow.pop %v602
      %v604 = vmul.f32 %v599, 1.442695
      %v605 = vpow.pop %v604
      %v606 = vmul.f32 %v600, 1.442695
      %v607 = vpow.pop %v606
      %v608 = vmul.f32 %v601, 1.442695
      %v609 = vpow.pop %v608
      %v610 = vsub.f32 %v603, 1.0
      %v611 = vsub.f32 %v605, 1.0
      %v612 = vsub.f32 %v607, 1.0
      %v613 = vsub.f32 %v609, 1.0
      %v614 = vsel %vm594, %v590, %v610
      %v615 = vsel %vm595, %v591, %v611
      %v616 = vsel %vm596, %v592, %v612
      %v617 = vsel %vm597, %v593, %v613
      %v618 = vpack.c.bf16 %v614, %v614
      %v619 = vpack.c.bf16 %v615, %v615
      %v620 = vpack.c.bf16 %v616, %v616
      %v621 = vpack.c.bf16 %v617, %v617
      %622 = vst [vmem:[%s170] sm:$0xf] %v618
      %623 = vst [vmem:[%s170 + $0x4] sm:$0xf] %v619
      %624 = vst [vmem:[%s170 + $0x8] sm:$0xf] %v620
      %625 = vst [vmem:[%s170 + $0xc] sm:$0xf] %v621
      %p626 = scmp.lt.s32.totalorder %s14, 1
      %s627 = scalar_select %p626, %s14, 1
      %s628 = smul.addr %s627, 4
      %s629 = smul.addr %s628, 4
      %s630 = scalar_lea.vmem %s3, %s629
      // Predicated region
      $region33: #{_lambda_.13} parent=31 // pred_check
        %p631 = pneg %p100
      $region34: #{_lambda_.13} parent=31 // pred_check_branch
        %633 = sbr.rel (%p631) target = $region36
      $region35: #{_lambda_.13} parent=31 // pred_region
        _
      $region36: #{_lambda_.13} parent=31 // pred_fallthru
        _
    $region32: #{_lambda_.13} parent=5 // pred_fallthru
      _
    %p634 = scmp.le.s32.totalorder 2, %s9
    // Predicated region
    $region37: #{_lambda_.13} parent=5 // pred_check
      %p635 = pneg %p634
    $region38: #{_lambda_.13} parent=5 // pred_check_branch
      %637 = sbr.rel (%p635) target = $region40
    $region39: #{_lambda_.13} parent=5 // pred_region
      %s638 = ssub.s32 %s9, 2
      // Predicated region
      $region41: #{_lambda_.13} parent=39 // pred_check
        %p639 = pneg %p106
      $region42: #{_lambda_.13} parent=39 // pred_check_branch
        %641 = sbr.rel (%p639) target = $region44
      $region43: #{_lambda_.13} parent=39 // pred_region
        %p642 = scmp.lt.s32.totalorder %s15, 1
        %s643 = scalar_select %p642, %s15, 1
        %s644 = smul.addr %s643, 4
        %s645 = smul.addr %s644, 4
        %s646 = scalar_lea.vmem %s3, %s645
      $region44: #{_lambda_.13} parent=39 // pred_fallthru
        _
    $region40: #{_lambda_.13} parent=5 // pred_fallthru
      _
  $region6: #{_lambda_.13} parent=0 // loop_footer
    %s13 = sadd.s32 1, %s9
  $region7: #{_lambda_.13} parent=0 // loop_footer_branch
    %8 = sbr.rel target = $region3
  $region8: #{_lambda_.13} parent=0 // loop_exit
    _

// kernel: _lambda_.14
$region0: #{_lambda_.14}
  #allocation0 [shape = 'u32[]', space=smem, size = 0x4, offset = 0x4, fixed_abs, tag = 'smem constant byte address 0x4 - core index']
  #allocation1 [shape = 'u32[72,128]{1,0:T(1,128)}', space=vmem, size = 0x9000, scoped, tag = 'internal scratch']
  #allocation2 [shape = 'bf16[288,128]{1,0:T(8,128)(2,1)}', space=vmem, size = 0x12000, scoped, tag = 'scratch operand']
  %s0 = inlined_call_operand.vmem [shape: bf16[2,32,256], index: 0, kind: input, shape index: {}]
  %s1 = inlined_call_operand.vmem [shape: bf16[64,288], index: 1, kind: input, shape index: {}]
  %s2 = inlined_call_operand.vmem [shape: f32[64,1], index: 2, kind: input, shape index: {}]
  %s3 = inlined_call_operand.vmem [shape: bf16[2,64,128], index: 3, kind: output, shape index: {}]
  %s4 = sld [smem:[#allocation0]]
  $region45: #{_lambda_.14} parent=0
    _
  %s6 = ssub.s32 1, %s4
  %s7 = scalar_select 0, %s6, %s4
  loop: start=0, step=1, limit=4
  $region2: #{_lambda_.14} parent=0 // loop_pre_header
    _
  $region3: #{_lambda_.14} parent=0 // loop_header
    %s9 = sphi 0, %s13
    %p10 = scmp.ge.s32.totalorder %s9, 4
    %s19 = sphi 0, %s21
    %s22 = sphi 0, %s19
    %s23 = sphi 0, %s22
    %s39 = sphi 0, %s23
    %s43 = sphi 0, %s43
    %s45 = sphi 0, %s43
    %s46 = sphi 0, %s45
    %s60 = sphi 0, %s46
    %s64 = sphi 0, %s64
    %s66 = sphi 0, %s64
    %s67 = sphi 0, %s66
    %s81 = sphi 0, %s67
    %s87 = sphi 0, %s89
    %s90 = sphi 0, %s87
    %s91 = sphi 0, %s90
    %s107 = sphi 0, %s91
  $region4: #{_lambda_.14} parent=0 // loop_header_branch
    %12 = sbr.rel (%p10) target = $region8
  $region5: #{_lambda_.14} parent=0 // loop_body
    %s14 = ssub.s32 %s9, 1
    %s15 = ssub.s32 %s9, 2
    %s16 = sadd.s32 %s9, 1
    %s17 = ssub.s32 %s9, %s16
    %p18 = scmp.eq.s32.totalorder %s17, 0
    %s20 = sadd.s32 %s19, 1
    %s21 = scalar_select %p18, %s19, %s20
    %p24 = pneg %p18
    %p25 = scmp.eq.s32.totalorder %s9, 1
    %p26 = por %p24, %p25
    %p27 = scmp.ne.s32.totalorder %s19, %s22
    %p28 = scmp.eq.s32.totalorder %s9, 0
    %p29 = por %p27, %p28
    %p30 = scmp.ne.s32.totalorder %s19, %s22
    %p31 = scmp.eq.s32.totalorder %s14, 1
    %p32 = por %p30, %p31
    %p33 = scmp.ne.s32.totalorder %s22, %s23
    %p34 = scmp.eq.s32.totalorder %s14, 0
    %p35 = por %p33, %p34
    %p36 = scmp.ne.s32.totalorder %s22, %s23
    %p37 = scmp.eq.s32.totalorder %s15, 1
    %p38 = por %p36, %p37
    %p40 = scmp.ne.s32.totalorder %s23, %s39
    %p41 = scmp.eq.s32.totalorder %s15, 0
    %p42 = por %p40, %p41
    %s44 = sadd.s32 %s43, 1
    %p47 = scmp.eq.s32.totalorder %s9, 1
    %p48 = scmp.ne.s32.totalorder %s43, %s45
    %p49 = scmp.eq.s32.totalorder %s9, 0
    %p50 = por %p48, %p49
    %p51 = scmp.ne.s32.totalorder %s43, %s45
    %p52 = scmp.eq.s32.totalorder %s14, 1
    %p53 = por %p51, %p52
    %p54 = scmp.ne.s32.totalorder %s45, %s46
    %p55 = scmp.eq.s32.totalorder %s14, 0
    %p56 = por %p54, %p55
    %p57 = scmp.ne.s32.totalorder %s45, %s46
    %p58 = scmp.eq.s32.totalorder %s15, 1
    %p59 = por %p57, %p58
    %p61 = scmp.ne.s32.totalorder %s46, %s60
    %p62 = scmp.eq.s32.totalorder %s15, 0
    %p63 = por %p61, %p62
    %s65 = sadd.s32 %s64, 1
    %p68 = scmp.eq.s32.totalorder %s9, 1
    %p69 = scmp.ne.s32.totalorder %s64, %s66
    %p70 = scmp.eq.s32.totalorder %s9, 0
    %p71 = por %p69, %p70
    %p72 = scmp.ne.s32.totalorder %s64, %s66
    %p73 = scmp.eq.s32.totalorder %s14, 1
    %p74 = por %p72, %p73
    %p75 = scmp.ne.s32.totalorder %s66, %s67
    %p76 = scmp.eq.s32.totalorder %s14, 0
    %p77 = por %p75, %p76
    %p78 = scmp.ne.s32.totalorder %s66, %s67
    %p79 = scmp.eq.s32.totalorder %s15, 1
    %p80 = por %p78, %p79
    %p82 = scmp.ne.s32.totalorder %s67, %s81
    %p83 = scmp.eq.s32.totalorder %s15, 0
    %p84 = por %p82, %p83
    %s85 = ssub.s32 %s9, %s16
    %p86 = scmp.eq.s32.totalorder %s85, 0
    %s88 = sadd.s32 %s87, 1
    %s89 = scalar_select %p86, %s87, %s88
    %p92 = pneg %p86
    %p93 = scmp.eq.s32.totalorder %s9, 1
    %p94 = por %p92, %p93
    %p95 = scmp.ne.s32.totalorder %s87, %s90
    %p96 = scmp.eq.s32.totalorder %s9, 0
    %p97 = por %p95, %p96
    %p98 = scmp.ne.s32.totalorder %s87, %s90
    %p99 = scmp.eq.s32.totalorder %s14, 1
    %p100 = por %p98, %p99
    %p101 = scmp.ne.s32.totalorder %s90, %s91
    %p102 = scmp.eq.s32.totalorder %s14, 0
    %p103 = por %p101, %p102
    %p104 = scmp.ne.s32.totalorder %s90, %s91
    %p105 = scmp.eq.s32.totalorder %s15, 1
    %p106 = por %p104, %p105
    %p108 = scmp.ne.s32.totalorder %s91, %s107
    %p109 = scmp.eq.s32.totalorder %s15, 0
    %p110 = por %p108, %p109
    %p111 = scmp.le.s32.totalorder 1, %s9
    %p112 = scmp.lt.s32.totalorder %s9, 3
    %p113 = pnand %p111, %p112
    %p114 = pneg %p113
    // Predicated region
    $region9: #{_lambda_.14} parent=5 // pred_check
      _
    $region10: #{_lambda_.14} parent=5 // pred_check_branch
      %116 = sbr.rel (%p113) target = $region12
    $region11: #{_lambda_.14} parent=5 // pred_region
      %s117 = ssub.s32 %s9, 1
      // Predicated region
      $region13: #{_lambda_.14} parent=11 // pred_check
        %p118 = pneg %p56
      $region14: #{_lambda_.14} parent=11 // pred_check_branch
        %120 = sbr.rel (%p118) target = $region16
      $region15: #{_lambda_.14} parent=11 // pred_region
        _
      $region16: #{_lambda_.14} parent=11 // pred_fallthru
        _
      // Predicated region
      $region17: #{_lambda_.14} parent=11 // pred_check
        %p121 = pneg %p77
      $region18: #{_lambda_.14} parent=11 // pred_check_branch
        %123 = sbr.rel (%p121) target = $region20
      $region19: #{_lambda_.14} parent=11 // pred_region
        _
      $region20: #{_lambda_.14} parent=11 // pred_fallthru
        _
    $region12: #{_lambda_.14} parent=5 // pred_fallthru
      _
    %p124 = scmp.lt.s32.totalorder %s9, 2
    // Predicated region
    $region21: #{_lambda_.14} parent=5 // pred_check
      %p125 = pneg %p124
    $region22: #{_lambda_.14} parent=5 // pred_check_branch
      %127 = sbr.rel (%p125) target = $region24
    $region23: #{_lambda_.14} parent=5 // pred_region
      // Predicated region
      $region25: #{_lambda_.14} parent=23 // pred_check
        %p128 = pneg %p29
      $region26: #{_lambda_.14} parent=23 // pred_check_branch
        %130 = sbr.rel (%p128) target = $region28
      $region27: #{_lambda_.14} parent=23 // pred_region
        %p131 = scmp.lt.s32.totalorder %s9, 1
        %s132 = scalar_select %p131, %s9, 1
        %s133 = smul.addr %s132, 8
        %s134 = smul.addr %s133, 4
        %s135 = scalar_lea.vmem %s0, %s134
      $region28: #{_lambda_.14} parent=23 // pred_fallthru
        _
    $region24: #{_lambda_.14} parent=5 // pred_fallthru
      _
    %p136 = scmp.le.s32.totalorder 1, %s9
    %p137 = scmp.lt.s32.totalorder %s9, 3
    %p138 = pnand %p136, %p137
    %p139 = pneg %p138
    // Predicated region
    $region29: #{_lambda_.14} parent=5 // pred_check
      _
    $region30: #{_lambda_.14} parent=5 // pred_check_branch
      %141 = sbr.rel (%p138) target = $region32
    $region31: #{_lambda_.14} parent=5 // pred_region
      %s142 = ssub.s32 %s9, 1
      %p143 = scmp.lt.s32.totalorder %s14, 1
      %s144 = scalar_select %p143, %s14, 1
      %s145 = smul.addr %s144, 8
      %s146 = smul.addr %s145, 4
      %s147 = scalar_lea.vmem %s0, %s146
      %p148 = pneg %p35
      %p149 = pneg %p32
      %p150 = pneg %p56
      %p151 = pneg %p53
      %p152 = pneg %p77
      %p153 = pneg %p74
      %p154 = pneg %p103
      %p155 = pneg %p100
      %p156 = scmp.lt.s32.totalorder %s14, 1
      %s157 = scalar_select %p156, %s14, 1
      %s158 = smul.addr %s157, 8
      %s159 = smul.addr %s158, 4
      %s160 = scalar_lea.vmem %s3, %s159
      %p161 = scmp.lt.s32.totalorder %s14, 1
      %s162 = scalar_select %p161, %s14, 1
      %s163 = smul.addr %s162, 8
      %s164 = smul.addr %s163, 4
      %s165 = scalar_lea.vmem %s0, %s164
      %p166 = scmp.lt.s32.totalorder %s14, 1
      %s167 = scalar_select %p166, %s14, 1
      %s168 = smul.addr %s167, 8
      %s169 = smul.addr %s168, 4
      %s170 = scalar_lea.vmem %s3, %s169
      %v172 = vld [vmem:[%s165] sm:$0xff]
      %v173 = vld [vmem:[%s165 + $0x8] sm:$0xff]
      %v174 = vld [vmem:[%s165 + $0x10] sm:$0xff]
      %v175 = vld [vmem:[%s165 + $0x18] sm:$0xff]
      %v176 = vunpack.c.l.bf16 %v172
      %v177 = vunpack.c.h.bf16 %v172
      %v178 = vunpack.c.l.bf16 %v173
      %v179 = vunpack.c.h.bf16 %v173
      %v180 = vunpack.c.l.bf16 %v174
      %v181 = vunpack.c.h.bf16 %v174
      %v182 = vunpack.c.l.bf16 %v175
      %v183 = vunpack.c.h.bf16 %v175
      %v184 = vpack.c.bf16 %v176, %v176
      %v185 = vpack.c.bf16 %v178, %v178
      %v186 = vpack.c.bf16 %v180, %v180
      %v187 = vpack.c.bf16 %v182, %v182
      %188 = vst [vmem:[#allocation2] sm:$0xf] %v184
      %189 = vst [vmem:[#allocation2 + $0x4] sm:$0xf] %v185
      %190 = vst [vmem:[#allocation2 + $0x8] sm:$0xf] %v186
      %191 = vst [vmem:[#allocation2 + $0xc] sm:$0xf] %v187
      %v192 = vpack.c.bf16 %v177, %v176
      %v193 = vpack.c.bf16 %v179, %v178
      %v194 = vpack.c.bf16 %v181, %v180
      %v195 = vpack.c.bf16 %v183, %v182
      %200 = vrot.lane.b32.xlu0 %v192, 127
      %v201 = vpop.permute.xlu0 %200
      %202 = vrot.lane.b32.xlu0 %v193, 127
      %v203 = vpop.permute.xlu0 %202
      %204 = vrot.lane.b32.xlu0 %v194, 127
      %v205 = vpop.permute.xlu0 %204
      %206 = vrot.lane.b32.xlu0 %v195, 127
      %v207 = vpop.permute.xlu0 %206
      %v208 = vrot.slane %v201, 4
      %v209 = vrot.slane %v203, 4
      %v210 = vrot.slane %v205, 4
      %v211 = vrot.slane %v207, 4
      %vm212 = vcmask 1039360
      %v213 = vsel %vm212, %v201, %v208
      %v214 = vsel %vm212, %v203, %v209
      %v215 = vsel %vm212, %v205, %v210
      %v216 = vsel %vm212, %v207, %v211
      %221 = vst [vmem:[#allocation2 + $0x10] sm:$0xf] %v213
      %222 = vst [vmem:[#allocation2 + $0x14] sm:$0xf] %v214
      %223 = vst [vmem:[#allocation2 + $0x18] sm:$0xf] %v215
      %224 = vst [vmem:[#allocation2 + $0x1c] sm:$0xf] %v216
      %225 = vrot.lane.b32.xlu0 %v192, 126
      %v226 = vpop.permute.xlu0 %225
      %227 = vrot.lane.b32.xlu0 %v193, 126
      %v228 = vpop.permute.xlu0 %227
      %229 = vrot.lane.b32.xlu0 %v194, 126
      %v230 = vpop.permute.xlu0 %229
      %231 = vrot.lane.b32.xlu0 %v195, 126
      %v232 = vpop.permute.xlu0 %231
      %v233 = vrot.slane %v226, 4
      %v234 = vrot.slane %v228, 4
      %v235 = vrot.slane %v230, 4
      %v236 = vrot.slane %v232, 4
      %vm237 = vcmask 1031168
      %v238 = vsel %vm237, %v226, %v233
      %v239 = vsel %vm237, %v228, %v234
      %v240 = vsel %vm237, %v230, %v235
      %v241 = vsel %vm237, %v232, %v236
      %246 = vst [vmem:[#allocation2 + $0x20] sm:$0xf] %v238
      %247 = vst [vmem:[#allocation2 + $0x24] sm:$0xf] %v239
      %248 = vst [vmem:[#allocation2 + $0x28] sm:$0xf] %v240
      %249 = vst [vmem:[#allocation2 + $0x2c] sm:$0xf] %v241
      %250 = vrot.lane.b32.xlu0 %v192, 124
      %v251 = vpop.permute.xlu0 %250
      %252 = vrot.lane.b32.xlu0 %v193, 124
      %v253 = vpop.permute.xlu0 %252
      %254 = vrot.lane.b32.xlu0 %v194, 124
      %v255 = vpop.permute.xlu0 %254
      %256 = vrot.lane.b32.xlu0 %v195, 124
      %v257 = vpop.permute.xlu0 %256
      %v258 = vrot.slane %v251, 4
      %v259 = vrot.slane %v253, 4
      %v260 = vrot.slane %v255, 4
      %v261 = vrot.slane %v257, 4
      %vm262 = vcmask 1014784
      %v263 = vsel %vm262, %v251, %v258
      %v264 = vsel %vm262, %v253, %v259
      %v265 = vsel %vm262, %v255, %v260
      %v266 = vsel %vm262, %v257, %v261
      %271 = vst [vmem:[#allocation2 + $0x30] sm:$0xf] %v263
      %272 = vst [vmem:[#allocation2 + $0x34] sm:$0xf] %v264
      %273 = vst [vmem:[#allocation2 + $0x38] sm:$0xf] %v265
      %274 = vst [vmem:[#allocation2 + $0x3c] sm:$0xf] %v266
      %275 = vrot.lane.b32.xlu0 %v192, 123
      %v276 = vpop.permute.xlu0 %275
      %277 = vrot.lane.b32.xlu0 %v193, 123
      %v278 = vpop.permute.xlu0 %277
      %279 = vrot.lane.b32.xlu0 %v194, 123
      %v280 = vpop.permute.xlu0 %279
      %281 = vrot.lane.b32.xlu0 %v195, 123
      %v282 = vpop.permute.xlu0 %281
      %v283 = vrot.slane %v276, 4
      %v284 = vrot.slane %v278, 4
      %v285 = vrot.slane %v280, 4
      %v286 = vrot.slane %v282, 4
      %vm287 = vcmask 1006592
      %v288 = vsel %vm287, %v276, %v283
      %v289 = vsel %vm287, %v278, %v284
      %v290 = vsel %vm287, %v280, %v285
      %v291 = vsel %vm287, %v282, %v286
      %296 = vst [vmem:[#allocation2 + $0x40] sm:$0xf] %v288
      %297 = vst [vmem:[#allocation2 + $0x44] sm:$0xf] %v289
      %298 = vst [vmem:[#allocation2 + $0x48] sm:$0xf] %v290
      %299 = vst [vmem:[#allocation2 + $0x4c] sm:$0xf] %v291
      %300 = vrot.lane.b32.xlu0 %v192, 122
      %v301 = vpop.permute.xlu0 %300
      %302 = vrot.lane.b32.xlu0 %v193, 122
      %v303 = vpop.permute.xlu0 %302
      %304 = vrot.lane.b32.xlu0 %v194, 122
      %v305 = vpop.permute.xlu0 %304
      %306 = vrot.lane.b32.xlu0 %v195, 122
      %v307 = vpop.permute.xlu0 %306
      %v308 = vrot.slane %v301, 4
      %v309 = vrot.slane %v303, 4
      %v310 = vrot.slane %v305, 4
      %v311 = vrot.slane %v307, 4
      %vm312 = vcmask 998400
      %v313 = vsel %vm312, %v301, %v308
      %v314 = vsel %vm312, %v303, %v309
      %v315 = vsel %vm312, %v305, %v310
      %v316 = vsel %vm312, %v307, %v311
      %321 = vst [vmem:[#allocation2 + $0x50] sm:$0xf] %v313
      %322 = vst [vmem:[#allocation2 + $0x54] sm:$0xf] %v314
      %323 = vst [vmem:[#allocation2 + $0x58] sm:$0xf] %v315
      %324 = vst [vmem:[#allocation2 + $0x5c] sm:$0xf] %v316
      %325 = vrot.lane.b32.xlu0 %v192, 120
      %v326 = vpop.permute.xlu0 %325
      %327 = vrot.lane.b32.xlu0 %v193, 120
      %v328 = vpop.permute.xlu0 %327
      %329 = vrot.lane.b32.xlu0 %v194, 120
      %v330 = vpop.permute.xlu0 %329
      %331 = vrot.lane.b32.xlu0 %v195, 120
      %v332 = vpop.permute.xlu0 %331
      %v333 = vrot.slane %v326, 4
      %v334 = vrot.slane %v328, 4
      %v335 = vrot.slane %v330, 4
      %v336 = vrot.slane %v332, 4
      %vm337 = vcmask 982016
      %v338 = vsel %vm337, %v326, %v333
      %v339 = vsel %vm337, %v328, %v334
      %v340 = vsel %vm337, %v330, %v335
      %v341 = vsel %vm337, %v332, %v336
      %346 = vst [vmem:[#allocation2 + $0x60] sm:$0xf] %v338
      %347 = vst [vmem:[#allocation2 + $0x64] sm:$0xf] %v339
      %348 = vst [vmem:[#allocation2 + $0x68] sm:$0xf] %v340
      %349 = vst [vmem:[#allocation2 + $0x6c] sm:$0xf] %v341
      %350 = vrot.lane.b32.xlu0 %v192, 119
      %v351 = vpop.permute.xlu0 %350
      %352 = vrot.lane.b32.xlu0 %v193, 119
      %v353 = vpop.permute.xlu0 %352
      %354 = vrot.lane.b32.xlu0 %v194, 119
      %v355 = vpop.permute.xlu0 %354
      %356 = vrot.lane.b32.xlu0 %v195, 119
      %v357 = vpop.permute.xlu0 %356
      %v358 = vrot.slane %v351, 4
      %v359 = vrot.slane %v353, 4
      %v360 = vrot.slane %v355, 4
      %v361 = vrot.slane %v357, 4
      %vm362 = vcmask 973824
      %v363 = vsel %vm362, %v351, %v358
      %v364 = vsel %vm362, %v353, %v359
      %v365 = vsel %vm362, %v355, %v360
      %v366 = vsel %vm362, %v357, %v361
      %371 = vst [vmem:[#allocation2 + $0x70] sm:$0xf] %v363
      %372 = vst [vmem:[#allocation2 + $0x74] sm:$0xf] %v364
      %373 = vst [vmem:[#allocation2 + $0x78] sm:$0xf] %v365
      %374 = vst [vmem:[#allocation2 + $0x7c] sm:$0xf] %v366
      %375 = vrot.lane.b32.xlu0 %v192, 118
      %v376 = vpop.permute.xlu0 %375
      %377 = vrot.lane.b32.xlu0 %v193, 118
      %v378 = vpop.permute.xlu0 %377
      %379 = vrot.lane.b32.xlu0 %v194, 118
      %v380 = vpop.permute.xlu0 %379
      %381 = vrot.lane.b32.xlu0 %v195, 118
      %v382 = vpop.permute.xlu0 %381
      %v383 = vrot.slane %v376, 4
      %v384 = vrot.slane %v378, 4
      %v385 = vrot.slane %v380, 4
      %v386 = vrot.slane %v382, 4
      %vm387 = vcmask 965632
      %v388 = vsel %vm387, %v376, %v383
      %v389 = vsel %vm387, %v378, %v384
      %v390 = vsel %vm387, %v380, %v385
      %v391 = vsel %vm387, %v382, %v386
      %396 = vst [vmem:[#allocation2 + $0x80] sm:$0xf] %v388
      %397 = vst [vmem:[#allocation2 + $0x84] sm:$0xf] %v389
      %398 = vst [vmem:[#allocation2 + $0x88] sm:$0xf] %v390
      %399 = vst [vmem:[#allocation2 + $0x8c] sm:$0xf] %v391
      %v400 = vld [vmem:[%s1] sm:$0xff]
      %v401 = vld [vmem:[%s1 + $0x8] sm:$0xf]
      %v402 = vld [vmem:[%s1 + $0xc] sm:$0xff]
      %v403 = vld [vmem:[%s1 + $0x14] sm:$0xf]
      %v404 = vld [vmem:[%s1 + $0x18] sm:$0xff]
      %v405 = vld [vmem:[%s1 + $0x20] sm:$0xf]
      %v406 = vld [vmem:[%s1 + $0x24] sm:$0xff]
      %v407 = vld [vmem:[%s1 + $0x2c] sm:$0xf]
      %v408 = vld [vmem:[%s1 + $0x30] sm:$0xff]
      %v409 = vld [vmem:[%s1 + $0x38] sm:$0xf]
      %v410 = vld [vmem:[%s1 + $0x3c] sm:$0xff]
      %v411 = vld [vmem:[%s1 + $0x44] sm:$0xf]
      %v412 = vld [vmem:[%s1 + $0x48] sm:$0xff]
      %v413 = vld [vmem:[%s1 + $0x50] sm:$0xf]
      %v414 = vld [vmem:[%s1 + $0x54] sm:$0xff]
      %v415 = vld [vmem:[%s1 + $0x5c] sm:$0xf]
      %v416 = vld [vmem:[#allocation2] sm:$0xf]
      %v417 = vld [vmem:[#allocation2 + $0x4] sm:$0xf]
      %v418 = vld [vmem:[#allocation2 + $0x8] sm:$0xf]
      %v419 = vld [vmem:[#allocation2 + $0xc] sm:$0xf]
      %v420 = vld [vmem:[#allocation2 + $0x10] sm:$0xf]
      %v421 = vld [vmem:[#allocation2 + $0x14] sm:$0xf]
      %v422 = vld [vmem:[#allocation2 + $0x18] sm:$0xf]
      %v423 = vld [vmem:[#allocation2 + $0x1c] sm:$0xf]
      %v424 = vld [vmem:[#allocation2 + $0x20] sm:$0xf]
      %v425 = vld [vmem:[#allocation2 + $0x24] sm:$0xf]
      %v426 = vld [vmem:[#allocation2 + $0x28] sm:$0xf]
      %v427 = vld [vmem:[#allocation2 + $0x2c] sm:$0xf]
      %v428 = vld [vmem:[#allocation2 + $0x30] sm:$0xf]
      %v429 = vld [vmem:[#allocation2 + $0x34] sm:$0xf]
      %v430 = vld [vmem:[#allocation2 + $0x38] sm:$0xf]
      %v431 = vld [vmem:[#allocation2 + $0x3c] sm:$0xf]
      %v432 = vld [vmem:[#allocation2 + $0x40] sm:$0xf]
      %v433 = vld [vmem:[#allocation2 + $0x44] sm:$0xf]
      %v434 = vld [vmem:[#allocation2 + $0x48] sm:$0xf]
      %v435 = vld [vmem:[#allocation2 + $0x4c] sm:$0xf]
      %v436 = vld [vmem:[#allocation2 + $0x50] sm:$0xf]
      %v437 = vld [vmem:[#allocation2 + $0x54] sm:$0xf]
      %v438 = vld [vmem:[#allocation2 + $0x58] sm:$0xf]
      %v439 = vld [vmem:[#allocation2 + $0x5c] sm:$0xf]
      %v440 = vld [vmem:[#allocation2 + $0x60] sm:$0xf]
      %v441 = vld [vmem:[#allocation2 + $0x64] sm:$0xf]
      %v442 = vld [vmem:[#allocation2 + $0x68] sm:$0xf]
      %v443 = vld [vmem:[#allocation2 + $0x6c] sm:$0xf]
      %v444 = vld [vmem:[#allocation2 + $0x70] sm:$0xf]
      %v445 = vld [vmem:[#allocation2 + $0x74] sm:$0xf]
      %v446 = vld [vmem:[#allocation2 + $0x78] sm:$0xf]
      %v447 = vld [vmem:[#allocation2 + $0x7c] sm:$0xf]
      %v448 = vld [vmem:[#allocation2 + $0x80] sm:$0xf]
      %v449 = vld [vmem:[#allocation2 + $0x84] sm:$0xf]
      %v450 = vld [vmem:[#allocation2 + $0x88] sm:$0xf]
      %v451 = vld [vmem:[#allocation2 + $0x8c] sm:$0xf]
      %v452 = vld [vmem:[%s2] sm:$0xff]
      %v453 = vld [vmem:[%s2 + $0x8] sm:$0xff]
      %v454 = vld [vmem:[%s2 + $0x10] sm:$0xff]
      %v455 = vld [vmem:[%s2 + $0x18] sm:$0xff]
      %v456 = vld [vmem:[%s2 + $0x20] sm:$0xff]
      %v457 = vld [vmem:[%s2 + $0x28] sm:$0xff]
      %v458 = vld [vmem:[%s2 + $0x30] sm:$0xff]
      %v459 = vld [vmem:[%s2 + $0x38] sm:$0xff]
      %461 = vset.pattern.permute.xlu0 0
      %462 = vperm.xlu0 %461, %v452
      %v463 = vpop.permute.xlu0 %462
      %466 = vset.pattern.permute.xlu0 0
      %467 = vperm.xlu0 %466, %v453
      %v468 = vpop.permute.xlu0 %467
      %471 = vset.pattern.permute.xlu0 0
      %472 = vperm.xlu0 %471, %v454
      %v473 = vpop.permute.xlu0 %472
      %476 = vset.pattern.permute.xlu0 0
      %477 = vperm.xlu0 %476, %v455
      %v478 = vpop.permute.xlu0 %477
      %481 = vset.pattern.permute.xlu0 0
      %482 = vperm.xlu0 %481, %v456
      %v483 = vpop.permute.xlu0 %482
      %486 = vset.pattern.permute.xlu0 0
      %487 = vperm.xlu0 %486, %v457
      %v488 = vpop.permute.xlu0 %487
      %491 = vset.pattern.permute.xlu0 0
      %492 = vperm.xlu0 %491, %v458
      %v493 = vpop.permute.xlu0 %492
      %496 = vset.pattern.permute.xlu0 0
      %497 = vperm.xlu0 %496, %v459
      %v498 = vpop.permute.xlu0 %497
      %v516 = vunpack.c.l.b16 %v400
      %v517 = vunpack.c.h.b16 %v400
      %v518 = vunpack.c.l.b16 %v401
      %v519 = vunpack.c.l.b16 %v402
      %v520 = vunpack.c.h.b16 %v402
      %v521 = vunpack.c.l.b16 %v403
      %v522 = vunpack.c.l.b16 %v404
      %v523 = vunpack.c.h.b16 %v404
      %v524 = vunpack.c.l.b16 %v405
      %v525 = vunpack.c.l.b16 %v406
      %v526 = vunpack.c.h.b16 %v406
      %v527 = vunpack.c.l.b16 %v407
      %v528 = vunpack.c.l.b16 %v408
      %v529 = vunpack.c.h.b16 %v408
      %v530 = vunpack.c.l.b16 %v409
      %v531 = vunpack.c.l.b16 %v410
      %v532 = vunpack.c.h.b16 %v410
      %v533 = vunpack.c.l.b16 %v411
      %v534 = vunpack.c.l.b16 %v412
      %v535 = vunpack.c.h.b16 %v412
      %v536 = vunpack.c.l.b16 %v413
      %v537 = vunpack.c.l.b16 %v414
      %v538 = vunpack.c.h.b16 %v414
      %v539 = vunpack.c.l.b16 %v415
      %v540 = vpack.c.b16 %v519, %v516
      %v541 = vpack.c.b16 %v520, %v517
      %v542 = vpack.c.b16 %v521, %v518
      %v543 = vpack.c.b16 %v525, %v522
      %v544 = vpack.c.b16 %v526, %v523
      %v545 = vpack.c.b16 %v527, %v524
      %v546 = vpack.c.b16 %v531, %v528
      %v547 = vpack.c.b16 %v532, %v529
      %v548 = vpack.c.b16 %v533, %v530
      %v549 = vpack.c.b16 %v537, %v534
      %v550 = vpack.c.b16 %v538, %v535
      %v551 = vpack.c.b16 %v539, %v536
      %v596 = vunpack.c.l.b16 %v416
      %v597 = vunpack.c.l.b16 %v417
      %v598 = vunpack.c.l.b16 %v418
      %v599 = vunpack.c.l.b16 %v419
      %v600 = vunpack.c.l.b16 %v420
      %v601 = vunpack.c.l.b16 %v421
      %v602 = vunpack.c.l.b16 %v422
      %v603 = vunpack.c.l.b16 %v423
      %v604 = vunpack.c.l.b16 %v424
      %v605 = vunpack.c.l.b16 %v425
      %v606 = vunpack.c.l.b16 %v426
      %v607 = vunpack.c.l.b16 %v427
      %v608 = vunpack.c.l.b16 %v428
      %v609 = vunpack.c.l.b16 %v429
      %v610 = vunpack.c.l.b16 %v430
      %v611 = vunpack.c.l.b16 %v431
      %v612 = vunpack.c.l.b16 %v432
      %v613 = vunpack.c.l.b16 %v433
      %v614 = vunpack.c.l.b16 %v434
      %v615 = vunpack.c.l.b16 %v435
      %v616 = vunpack.c.l.b16 %v436
      %v617 = vunpack.c.l.b16 %v437
      %v618 = vunpack.c.l.b16 %v438
      %v619 = vunpack.c.l.b16 %v439
      %v620 = vunpack.c.l.b16 %v440
      %v621 = vunpack.c.l.b16 %v441
      %v622 = vunpack.c.l.b16 %v442
      %v623 = vunpack.c.l.b16 %v443
      %v624 = vunpack.c.l.b16 %v444
      %v625 = vunpack.c.l.b16 %v445
      %v626 = vunpack.c.l.b16 %v446
      %v627 = vunpack.c.l.b16 %v447
      %v628 = vunpack.c.l.b16 %v448
      %v629 = vunpack.c.l.b16 %v449
      %v630 = vunpack.c.l.b16 %v450
      %v631 = vunpack.c.l.b16 %v451
      %v632 = vpack.c.b16 %v597, %v596
      %v633 = vpack.c.b16 %v599, %v598
      %v634 = vpack.c.b16 %v601, %v600
      %v635 = vpack.c.b16 %v603, %v602
      %v636 = vpack.c.b16 %v605, %v604
      %v637 = vpack.c.b16 %v607, %v606
      %v638 = vpack.c.b16 %v609, %v608
      %v639 = vpack.c.b16 %v611, %v610
      %v640 = vpack.c.b16 %v613, %v612
      %v641 = vpack.c.b16 %v615, %v614
      %v642 = vpack.c.b16 %v617, %v616
      %v643 = vpack.c.b16 %v619, %v618
      %v644 = vpack.c.b16 %v621, %v620
      %v645 = vpack.c.b16 %v623, %v622
      %v646 = vpack.c.b16 %v625, %v624
      %v647 = vpack.c.b16 %v627, %v626
      %v648 = vpack.c.b16 %v629, %v628
      %v649 = vpack.c.b16 %v631, %v630
      %vm668 = vcmask 261120
      %v670 = vsel %vm668, %v542, 0
      %v673 = vsel %vm668, %v545, 0
      %v676 = vsel %vm668, %v548, 0
      %v679 = vsel %vm668, %v551, 0
      %681 = vmatpush.bf16.msra.mxu0 %v639
      %682 = vmatpush.bf16.msra.mxu0 %v638
      %683 = vmatpush.bf16.msra.mxu0 %v637
      %684 = vmatpush.bf16.msra.mxu0 %v636
      %685 = vmatpush.bf16.msra.mxu0 %v635
      %686 = vmatpush.bf16.msra.mxu0 %v634
      %687 = vmatpush.bf16.msra.mxu0 %v633
      %688 = vmatpush.bf16.msra.mxu0 %v632
      %689 = vmatmul.bf16.gmra.mxu0 %v540
      %v690 = vpop.f32.mrf.mxu0
      %v691 = vadd.f32 %v463, %v690
      %v692 = vpop.f32.mrf.mxu0
      %v693 = vadd.f32 %v468, %v692
      %694 = vmatmul.bf16.gmra.mxu0 %v543
      %v695 = vpop.f32.mrf.mxu0
      %v696 = vadd.f32 %v473, %v695
      %v697 = vpop.f32.mrf.mxu0
      %v698 = vadd.f32 %v478, %v697
      %699 = vmatmul.bf16.gmra.mxu0 %v546
      %v700 = vpop.f32.mrf.mxu0
      %v701 = vadd.f32 %v483, %v700
      %v702 = vpop.f32.mrf.mxu0
      %v703 = vadd.f32 %v488, %v702
      %704 = vmatmul.bf16.gmra.mxu0 %v549
      %v705 = vpop.f32.mrf.mxu0
      %v706 = vadd.f32 %v493, %v705
      %v707 = vpop.f32.mrf.mxu0
      %v708 = vadd.f32 %v498, %v707
      %709 = vdwg.mxu0
      %710 = vmatpush.bf16.msra.mxu0 %v647
      %711 = vmatpush.bf16.msra.mxu0 %v646
      %712 = vmatpush.bf16.msra.mxu0 %v645
      %713 = vmatpush.bf16.msra.mxu0 %v644
      %714 = vmatpush.bf16.msra.mxu0 %v643
      %715 = vmatpush.bf16.msra.mxu0 %v642
      %716 = vmatpush.bf16.msra.mxu0 %v641
      %717 = vmatpush.bf16.msra.mxu0 %v640
      %718 = vmatmul.bf16.gmra.mxu0 %v541
      %v719 = vpop.f32.mrf.mxu0
      %v720 = vadd.f32 %v691, %v719
      %v721 = vpop.f32.mrf.mxu0
      %v722 = vadd.f32 %v693, %v721
      %723 = vmatmul.bf16.gmra.mxu0 %v544
      %v724 = vpop.f32.mrf.mxu0
      %v725 = vadd.f32 %v696, %v724
      %v726 = vpop.f32.mrf.mxu0
      %v727 = vadd.f32 %v698, %v726
      %728 = vmatmul.bf16.gmra.mxu0 %v547
      %v729 = vpop.f32.mrf.mxu0
      %v730 = vadd.f32 %v701, %v729
      %v731 = vpop.f32.mrf.mxu0
      %v732 = vadd.f32 %v703, %v731
      %733 = vmatmul.bf16.gmra.mxu0 %v550
      %v734 = vpop.f32.mrf.mxu0
      %v735 = vadd.f32 %v706, %v734
      %v736 = vpop.f32.mrf.mxu0
      %v737 = vadd.f32 %v708, %v736
      %738 = vdwg.mxu0
      %739 = vmatpush.bf16.msra.mxu0 0
      %740 = vmatpush.bf16.msra.mxu0 0
      %741 = vmatpush.bf16.msra.mxu0 0
      %742 = vmatpush.bf16.msra.mxu0 0
      %743 = vmatpush.bf16.msra.mxu0 0
      %744 = vmatpush.bf16.msra.mxu0 0
      %745 = vmatpush.bf16.msra.mxu0 %v649
      %746 = vmatpush.bf16.msra.mxu0 %v648
      %747 = vmatmul.bf16.gmra.mxu0 %v670
      %v748 = vpop.f32.mrf.mxu0
      %v749 = vadd.f32 %v720, %v748
      %v750 = vpop.f32.mrf.mxu0
      %v751 = vadd.f32 %v722, %v750
      %752 = vmatmul.bf16.gmra.mxu0 %v673
      %v753 = vpop.f32.mrf.mxu0
      %v754 = vadd.f32 %v725, %v753
      %v755 = vpop.f32.mrf.mxu0
      %v756 = vadd.f32 %v727, %v755
      %757 = vmatmul.bf16.gmra.mxu0 %v676
      %v758 = vpop.f32.mrf.mxu0
      %v759 = vadd.f32 %v730, %v758
      %v760 = vpop.f32.mrf.mxu0
      %v761 = vadd.f32 %v732, %v760
      %762 = vmatmul.bf16.gmra.mxu0 %v679
      %v763 = vpop.f32.mrf.mxu0
      %v764 = vadd.f32 %v735, %v763
      %v765 = vpop.f32.mrf.mxu0
      %v766 = vadd.f32 %v737, %v765
      %767 = vdwg.mxu0
      %v768 = vlaneseq
      %v769 = vand.u32 %v768, 127
      %vm770 = vcmp.lt.s32.totalorder %v769, 0
      %v771 = vsub.s32 0, %v769
      %v772 = vsel %vm770, %v771, %v769
      %v773 = vshrl.u32 %v772, 2
      %v774 = vand.u32 %v772, 3
      %v775 = vsub.s32 0, %v774
      %v776 = vsel %vm770, %v775, %v774
      %vm777 = vcmp.ne.s32.totalorder %v776, 0
      %vm778 = vcmp.lt.s32.totalorder %v776, 0
      %vm779 = vmand %vm778, %vm777
      %v780 = vadd.s32 %v776, 4
      %v781 = vsel %vm779, %v780, %v776
      %vm782 = vcmp.lt.s32.totalorder %v781, 2
      %vm783 = vcmp.lt.s32.totalorder %v769, 8
      %vm784 = vmand %vm782, %vm783
      %v785 = vsel %vm784, 1, 0
      %v786 = vcvt.s32.f32 %v785
      %v787 = vmul.f32 %v749, %v786
      %v788 = vmul.f32 %v751, %v786
      %v789 = vmul.f32 %v754, %v786
      %v790 = vmul.f32 %v756, %v786
      %v791 = vmul.f32 %v759, %v786
      %v792 = vmul.f32 %v761, %v786
      %v793 = vmul.f32 %v764, %v786
      %v794 = vmul.f32 %v766, %v786
      %795 = vadd.xlane.f32.xlu0 %v787
      %v796 = vpop.xlane.xlu0 %795
      %797 = vadd.xlane.f32.xlu0 %v788
      %v798 = vpop.xlane.xlu0 %797
      %799 = vadd.xlane.f32.xlu0 %v789
      %v800 = vpop.xlane.xlu0 %799
      %801 = vadd.xlane.f32.xlu0 %v790
      %v802 = vpop.xlane.xlu0 %801
      %803 = vadd.xlane.f32.xlu0 %v791
      %v804 = vpop.xlane.xlu0 %803
      %805 = vadd.xlane.f32.xlu0 %v792
      %v806 = vpop.xlane.xlu0 %805
      %807 = vadd.xlane.f32.xlu0 %v793
      %v808 = vpop.xlane.xlu0 %807
      %809 = vadd.xlane.f32.xlu0 %v794
      %v810 = vpop.xlane.xlu0 %809
      %v811 = vmul.f32 %v796, 0.25
      %v812 = vmul.f32 %v798, 0.25
      %v813 = vmul.f32 %v800, 0.25
      %v814 = vmul.f32 %v802, 0.25
      %v815 = vmul.f32 %v804, 0.25
      %v816 = vmul.f32 %v806, 0.25
      %v817 = vmul.f32 %v808, 0.25
      %v818 = vmul.f32 %v810, 0.25
      %v819 = vmul.f32 %v749, %v749
      %v820 = vmul.f32 %v751, %v751
      %v821 = vmul.f32 %v754, %v754
      %v822 = vmul.f32 %v756, %v756
      %v823 = vmul.f32 %v759, %v759
      %v824 = vmul.f32 %v761, %v761
      %v825 = vmul.f32 %v764, %v764
      %v826 = vmul.f32 %v766, %v766
      %v827 = vmul.f32 %v819, %v786
      %v828 = vmul.f32 %v820, %v786
      %v829 = vmul.f32 %v821, %v786
      %v830 = vmul.f32 %v822, %v786
      %v831 = vmul.f32 %v823, %v786
      %v832 = vmul.f32 %v824, %v786
      %v833 = vmul.f32 %v825, %v786
      %v834 = vmul.f32 %v826, %v786
      %835 = vadd.xlane.f32.xlu0 %v827
      %v836 = vpop.xlane.xlu0 %835
      %837 = vadd.xlane.f32.xlu0 %v828
      %v838 = vpop.xlane.xlu0 %837
      %839 = vadd.xlane.f32.xlu0 %v829
      %v840 = vpop.xlane.xlu0 %839
      %841 = vadd.xlane.f32.xlu0 %v830
      %v842 = vpop.xlane.xlu0 %841
      %843 = vadd.xlane.f32.xlu0 %v831
      %v844 = vpop.xlane.xlu0 %843
      %845 = vadd.xlane.f32.xlu0 %v832
      %v846 = vpop.xlane.xlu0 %845
      %847 = vadd.xlane.f32.xlu0 %v833
      %v848 = vpop.xlane.xlu0 %847
      %849 = vadd.xlane.f32.xlu0 %v834
      %v850 = vpop.xlane.xlu0 %849
      %v851 = vmul.f32 %v836, 0.25
      %v852 = vmul.f32 %v838, 0.25
      %v853 = vmul.f32 %v840, 0.25
      %v854 = vmul.f32 %v842, 0.25
      %v855 = vmul.f32 %v844, 0.25
      %v856 = vmul.f32 %v846, 0.25
      %v857 = vmul.f32 %v848, 0.25
      %v858 = vmul.f32 %v850, 0.25
      %v859 = vmul.f32 %v811, %v811
      %v860 = vmul.f32 %v812, %v812
      %v861 = vmul.f32 %v813, %v813
      %v862 = vmul.f32 %v814, %v814
      %v863 = vmul.f32 %v815, %v815
      %v864 = vmul.f32 %v816, %v816
      %v865 = vmul.f32 %v817, %v817
      %v866 = vmul.f32 %v818, %v818
      %v867 = vsub.f32 %v851, %v859
      %v868 = vsub.f32 %v852, %v860
      %v869 = vsub.f32 %v853, %v861
      %v870 = vsub.f32 %v854, %v862
      %v871 = vsub.f32 %v855, %v863
      %v872 = vsub.f32 %v856, %v864
      %v873 = vsub.f32 %v857, %v865
      %v874 = vsub.f32 %v858, %v866
      %v875 = vmax.f32 %v867, 0.0
      %v876 = vmax.f32 %v868, 0.0
      %v877 = vmax.f32 %v869, 0.0
      %v878 = vmax.f32 %v870, 0.0
      %v879 = vmax.f32 %v871, 0.0
      %v880 = vmax.f32 %v872, 0.0
      %v881 = vmax.f32 %v873, 0.0
      %v882 = vmax.f32 %v874, 0.0
      %v883 = vsub.f32 %v749, %v811
      %v884 = vsub.f32 %v751, %v812
      %v885 = vsub.f32 %v754, %v813
      %v886 = vsub.f32 %v756, %v814
      %v887 = vsub.f32 %v759, %v815
      %v888 = vsub.f32 %v761, %v816
      %v889 = vsub.f32 %v764, %v817
      %v890 = vsub.f32 %v766, %v818
      %v891 = vadd.f32 %v875, 1e-05
      %v892 = vadd.f32 %v876, 1e-05
      %v893 = vadd.f32 %v877, 1e-05
      %v894 = vadd.f32 %v878, 1e-05
      %v895 = vadd.f32 %v879, 1e-05
      %v896 = vadd.f32 %v880, 1e-05
      %v897 = vadd.f32 %v881, 1e-05
      %v898 = vadd.f32 %v882, 1e-05
      %v899 = vrsqrt.pop %v891
      %v900 = vmul.f32 %v899, %v891
      %v901 = vmul.f32 %v900, %v899
      %v902 = vmul.f32 0.5, %v901
      %v903 = vsub.f32 1.5, %v902
      %v904 = vmul.f32 %v899, %v903
      %vm905 = vweird.f32 %v891
      %vm906 = vweird.f32 %v899
      %vm907 = vmor %vm905, %vm906
      %v908 = vsel %vm907, %v899, %v904
      %v909 = vrsqrt.pop %v892
      %v910 = vmul.f32 %v909, %v892
      %v911 = vmul.f32 %v910, %v909
      %v912 = vmul.f32 0.5, %v911
      %v913 = vsub.f32 1.5, %v912
      %v914 = vmul.f32 %v909, %v913
      %vm915 = vweird.f32 %v892
      %vm916 = vweird.f32 %v909
      %vm917 = vmor %vm915, %vm916
      %v918 = vsel %vm917, %v909, %v914
      %v919 = vrsqrt.pop %v893
      %v920 = vmul.f32 %v919, %v893
      %v921 = vmul.f32 %v920, %v919
      %v922 = vmul.f32 0.5, %v921
      %v923 = vsub.f32 1.5, %v922
      %v924 = vmul.f32 %v919, %v923
      %vm925 = vweird.f32 %v893
      %vm926 = vweird.f32 %v919
      %vm927 = vmor %vm925, %vm926
      %v928 = vsel %vm927, %v919, %v924
      %v929 = vrsqrt.pop %v894
      %v930 = vmul.f32 %v929, %v894
      %v931 = vmul.f32 %v930, %v929
      %v932 = vmul.f32 0.5, %v931
      %v933 = vsub.f32 1.5, %v932
      %v934 = vmul.f32 %v929, %v933
      %vm935 = vweird.f32 %v894
      %vm936 = vweird.f32 %v929
      %vm937 = vmor %vm935, %vm936
      %v938 = vsel %vm937, %v929, %v934
      %v939 = vrsqrt.pop %v895
      %v940 = vmul.f32 %v939, %v895
      %v941 = vmul.f32 %v940, %v939
      %v942 = vmul.f32 0.5, %v941
      %v943 = vsub.f32 1.5, %v942
      %v944 = vmul.f32 %v939, %v943
      %vm945 = vweird.f32 %v895
      %vm946 = vweird.f32 %v939
      %vm947 = vmor %vm945, %vm946
      %v948 = vsel %vm947, %v939, %v944
      %v949 = vrsqrt.pop %v896
      %v950 = vmul.f32 %v949, %v896
      %v951 = vmul.f32 %v950, %v949
      %v952 = vmul.f32 0.5, %v951
      %v953 = vsub.f32 1.5, %v952
      %v954 = vmul.f32 %v949, %v953
      %vm955 = vweird.f32 %v896
      %vm956 = vweird.f32 %v949
      %vm957 = vmor %vm955, %vm956
      %v958 = vsel %vm957, %v949, %v954
      %v959 = vrsqrt.pop %v897
      %v960 = vmul.f32 %v959, %v897
      %v961 = vmul.f32 %v960, %v959
      %v962 = vmul.f32 0.5, %v961
      %v963 = vsub.f32 1.5, %v962
      %v964 = vmul.f32 %v959, %v963
      %vm965 = vweird.f32 %v897
      %vm966 = vweird.f32 %v959
      %vm967 = vmor %vm965, %vm966
      %v968 = vsel %vm967, %v959, %v964
      %v969 = vrsqrt.pop %v898
      %v970 = vmul.f32 %v969, %v898
      %v971 = vmul.f32 %v970, %v969
      %v972 = vmul.f32 0.5, %v971
      %v973 = vsub.f32 1.5, %v972
      %v974 = vmul.f32 %v969, %v973
      %vm975 = vweird.f32 %v898
      %vm976 = vweird.f32 %v969
      %vm977 = vmor %vm975, %vm976
      %v978 = vsel %vm977, %v969, %v974
      %v979 = vmul.f32 %v883, %v908
      %v980 = vmul.f32 %v884, %v918
      %v981 = vmul.f32 %v885, %v928
      %v982 = vmul.f32 %v886, %v938
      %v983 = vmul.f32 %v887, %v948
      %v984 = vmul.f32 %v888, %v958
      %v985 = vmul.f32 %v889, %v968
      %v986 = vmul.f32 %v890, %v978
      %vm987 = vcmp.gt.f32.partialorder %v979, 0.0
      %vm988 = vcmp.gt.f32.partialorder %v980, 0.0
      %vm989 = vcmp.gt.f32.partialorder %v981, 0.0
      %vm990 = vcmp.gt.f32.partialorder %v982, 0.0
      %vm991 = vcmp.gt.f32.partialorder %v983, 0.0
      %vm992 = vcmp.gt.f32.partialorder %v984, 0.0
      %vm993 = vcmp.gt.f32.partialorder %v985, 0.0
      %vm994 = vcmp.gt.f32.partialorder %v986, 0.0
      %v995 = vmin.f32 %v979, 0.0
      %v996 = vmin.f32 %v980, 0.0
      %v997 = vmin.f32 %v981, 0.0
      %v998 = vmin.f32 %v982, 0.0
      %v999 = vmin.f32 %v983, 0.0
      %v1000 = vmin.f32 %v984, 0.0
      %v1001 = vmin.f32 %v985, 0.0
      %v1002 = vmin.f32 %v986, 0.0
      %v1003 = vmul.f32 %v995, 1.442695
      %v1004 = vpow.pop %v1003
      %v1005 = vmul.f32 %v996, 1.442695
      %v1006 = vpow.pop %v1005
      %v1007 = vmul.f32 %v997, 1.442695
      %v1008 = vpow.pop %v1007
      %v1009 = vmul.f32 %v998, 1.442695
      %v1010 = vpow.pop %v1009
      %v1011 = vmul.f32 %v999, 1.442695
      %v1012 = vpow.pop %v1011
      %v1013 = vmul.f32 %v1000, 1.442695
      %v1014 = vpow.pop %v1013
      %v1015 = vmul.f32 %v1001, 1.442695
      %v1016 = vpow.pop %v1015
      %v1017 = vmul.f32 %v1002, 1.442695
      %v1018 = vpow.pop %v1017
      %v1019 = vsub.f32 %v1004, 1.0
      %v1020 = vsub.f32 %v1006, 1.0
      %v1021 = vsub.f32 %v1008, 1.0
      %v1022 = vsub.f32 %v1010, 1.0
      %v1023 = vsub.f32 %v1012, 1.0
      %v1024 = vsub.f32 %v1014, 1.0
      %v1025 = vsub.f32 %v1016, 1.0
      %v1026 = vsub.f32 %v1018, 1.0
      %v1027 = vsel %vm987, %v979, %v1019
      %v1028 = vsel %vm988, %v980, %v1020
      %v1029 = vsel %vm989, %v981, %v1021
      %v1030 = vsel %vm990, %v982, %v1022
      %v1031 = vsel %vm991, %v983, %v1023
      %v1032 = vsel %vm992, %v984, %v1024
      %v1033 = vsel %vm993, %v985, %v1025
      %v1034 = vsel %vm994, %v986, %v1026
      %v1035 = vpack.c.bf16 %v1027, %v1027
      %v1036 = vpack.c.bf16 %v1028, %v1028
      %v1037 = vpack.c.bf16 %v1029, %v1029
      %v1038 = vpack.c.bf16 %v1030, %v1030
      %v1039 = vpack.c.bf16 %v1031, %v1031
      %v1040 = vpack.c.bf16 %v1032, %v1032
      %v1041 = vpack.c.bf16 %v1033, %v1033
      %v1042 = vpack.c.bf16 %v1034, %v1034
      %1043 = vst [vmem:[%s170] sm:$0xf] %v1035
      %1044 = vst [vmem:[%s170 + $0x4] sm:$0xf] %v1036
      %1045 = vst [vmem:[%s170 + $0x8] sm:$0xf] %v1037
      %1046 = vst [vmem:[%s170 + $0xc] sm:$0xf] %v1038
      %1047 = vst [vmem:[%s170 + $0x10] sm:$0xf] %v1039
      %1048 = vst [vmem:[%s170 + $0x14] sm:$0xf] %v1040
      %1049 = vst [vmem:[%s170 + $0x18] sm:$0xf] %v1041
      %1050 = vst [vmem:[%s170 + $0x1c] sm:$0xf] %v1042
      %p1051 = scmp.lt.s32.totalorder %s14, 1
      %s1052 = scalar_select %p1051, %s14, 1
      %s1053 = smul.addr %s1052, 8
      %s1054 = smul.addr %s1053, 4
      %s1055 = scalar_lea.vmem %s3, %s1054
      // Predicated region
      $region33: #{_lambda_.14} parent=31 // pred_check
        %p1056 = pneg %p100
      $region34: #{_lambda_.14} parent=31 // pred_check_branch
        %1058 = sbr.rel (%p1056) target = $region36
      $region35: #{_lambda_.14} parent=31 // pred_region
        _
      $region36: #{_lambda_.14} parent=31 // pred_fallthru
        _
    $region32: #{_lambda_.14} parent=5 // pred_fallthru
      _
    %p1059 = scmp.le.s32.totalorder 2, %s9
    // Predicated region
    $region37: #{_lambda_.14} parent=5 // pred_check
      %p1060 = pneg %p1059
    $region38: #{_lambda_.14} parent=5 // pred_check_branch
      %1062 = sbr.rel (%p1060) target = $region40
    $region39: #{_lambda_.14} parent=5 // pred_region
      %s1063 = ssub.s32 %s9, 2
      // Predicated region
      $region41: #{_lambda_.14} parent=39 // pred_check
        %p1064 = pneg %p106
      $region42: #{_lambda_.14} parent=39 // pred_check_branch
        %1066 = sbr.rel (%p1064) target = $region44
      $region43: #{_lambda_.14} parent=39 // pred_region
        %p1067 = scmp.lt.s32.totalorder %s15, 1
        %s1068 = scalar_select %p1067, %s15, 1
        %s1069 = smul.addr %s1068, 8
        %s1070 = smul.addr %s1069, 4
        %s1071 = scalar_lea.vmem %s3, %s1070
      $region44: #{_lambda_.14} parent=39 // pred_fallthru
        _
    $region40: #{_lambda_.14} parent=5 // pred_fallthru
      _
  $region6: #{_lambda_.14} parent=0 // loop_footer
    %s13 = sadd.s32 1, %s9
  $region7: #{_lambda_.14} parent=0 // loop_footer_branch
    %8 = sbr.rel target = $region3
  $region8: #{_lambda_.14} parent=0 // loop_exit
    _

// kernel: _lambda_.15
$region0: #{_lambda_.15}
  #allocation0 [shape = 'u32[]', space=smem, size = 0x4, offset = 0x4, fixed_abs, tag = 'smem constant byte address 0x4 - core index']
  #allocation1 [shape = 'u32[72,128]{1,0:T(1,128)}', space=vmem, size = 0x9000, scoped, tag = 'internal scratch']
  #allocation2 [shape = 'bf16[576,128]{1,0:T(8,128)(2,1)}', space=vmem, size = 0x24000, scoped, tag = 'scratch operand']
  %s0 = inlined_call_operand.vmem [shape: bf16[2,64,256], index: 0, kind: input, shape index: {}]
  %s1 = inlined_call_operand.vmem [shape: bf16[32,576], index: 1, kind: input, shape index: {}]
  %s2 = inlined_call_operand.vmem [shape: f32[32,1], index: 2, kind: input, shape index: {}]
  %s3 = inlined_call_operand.vmem [shape: bf16[2,32,128], index: 3, kind: output, shape index: {}]
  %s4 = sld [smem:[#allocation0]]
  $region45: #{_lambda_.15} parent=0
    _
  %s6 = ssub.s32 1, %s4
  %s7 = scalar_select 0, %s6, %s4
  loop: start=0, step=1, limit=4
  $region2: #{_lambda_.15} parent=0 // loop_pre_header
    _
  $region3: #{_lambda_.15} parent=0 // loop_header
    %s9 = sphi 0, %s13
    %p10 = scmp.ge.s32.totalorder %s9, 4
    %s19 = sphi 0, %s21
    %s22 = sphi 0, %s19
    %s23 = sphi 0, %s22
    %s39 = sphi 0, %s23
    %s43 = sphi 0, %s43
    %s45 = sphi 0, %s43
    %s46 = sphi 0, %s45
    %s60 = sphi 0, %s46
    %s64 = sphi 0, %s64
    %s66 = sphi 0, %s64
    %s67 = sphi 0, %s66
    %s81 = sphi 0, %s67
    %s87 = sphi 0, %s89
    %s90 = sphi 0, %s87
    %s91 = sphi 0, %s90
    %s107 = sphi 0, %s91
  $region4: #{_lambda_.15} parent=0 // loop_header_branch
    %12 = sbr.rel (%p10) target = $region8
  $region5: #{_lambda_.15} parent=0 // loop_body
    %s14 = ssub.s32 %s9, 1
    %s15 = ssub.s32 %s9, 2
    %s16 = sadd.s32 %s9, 1
    %s17 = ssub.s32 %s9, %s16
    %p18 = scmp.eq.s32.totalorder %s17, 0
    %s20 = sadd.s32 %s19, 1
    %s21 = scalar_select %p18, %s19, %s20
    %p24 = pneg %p18
    %p25 = scmp.eq.s32.totalorder %s9, 1
    %p26 = por %p24, %p25
    %p27 = scmp.ne.s32.totalorder %s19, %s22
    %p28 = scmp.eq.s32.totalorder %s9, 0
    %p29 = por %p27, %p28
    %p30 = scmp.ne.s32.totalorder %s19, %s22
    %p31 = scmp.eq.s32.totalorder %s14, 1
    %p32 = por %p30, %p31
    %p33 = scmp.ne.s32.totalorder %s22, %s23
    %p34 = scmp.eq.s32.totalorder %s14, 0
    %p35 = por %p33, %p34
    %p36 = scmp.ne.s32.totalorder %s22, %s23
    %p37 = scmp.eq.s32.totalorder %s15, 1
    %p38 = por %p36, %p37
    %p40 = scmp.ne.s32.totalorder %s23, %s39
    %p41 = scmp.eq.s32.totalorder %s15, 0
    %p42 = por %p40, %p41
    %s44 = sadd.s32 %s43, 1
    %p47 = scmp.eq.s32.totalorder %s9, 1
    %p48 = scmp.ne.s32.totalorder %s43, %s45
    %p49 = scmp.eq.s32.totalorder %s9, 0
    %p50 = por %p48, %p49
    %p51 = scmp.ne.s32.totalorder %s43, %s45
    %p52 = scmp.eq.s32.totalorder %s14, 1
    %p53 = por %p51, %p52
    %p54 = scmp.ne.s32.totalorder %s45, %s46
    %p55 = scmp.eq.s32.totalorder %s14, 0
    %p56 = por %p54, %p55
    %p57 = scmp.ne.s32.totalorder %s45, %s46
    %p58 = scmp.eq.s32.totalorder %s15, 1
    %p59 = por %p57, %p58
    %p61 = scmp.ne.s32.totalorder %s46, %s60
    %p62 = scmp.eq.s32.totalorder %s15, 0
    %p63 = por %p61, %p62
    %s65 = sadd.s32 %s64, 1
    %p68 = scmp.eq.s32.totalorder %s9, 1
    %p69 = scmp.ne.s32.totalorder %s64, %s66
    %p70 = scmp.eq.s32.totalorder %s9, 0
    %p71 = por %p69, %p70
    %p72 = scmp.ne.s32.totalorder %s64, %s66
    %p73 = scmp.eq.s32.totalorder %s14, 1
    %p74 = por %p72, %p73
    %p75 = scmp.ne.s32.totalorder %s66, %s67
    %p76 = scmp.eq.s32.totalorder %s14, 0
    %p77 = por %p75, %p76
    %p78 = scmp.ne.s32.totalorder %s66, %s67
    %p79 = scmp.eq.s32.totalorder %s15, 1
    %p80 = por %p78, %p79
    %p82 = scmp.ne.s32.totalorder %s67, %s81
    %p83 = scmp.eq.s32.totalorder %s15, 0
    %p84 = por %p82, %p83
    %s85 = ssub.s32 %s9, %s16
    %p86 = scmp.eq.s32.totalorder %s85, 0
    %s88 = sadd.s32 %s87, 1
    %s89 = scalar_select %p86, %s87, %s88
    %p92 = pneg %p86
    %p93 = scmp.eq.s32.totalorder %s9, 1
    %p94 = por %p92, %p93
    %p95 = scmp.ne.s32.totalorder %s87, %s90
    %p96 = scmp.eq.s32.totalorder %s9, 0
    %p97 = por %p95, %p96
    %p98 = scmp.ne.s32.totalorder %s87, %s90
    %p99 = scmp.eq.s32.totalorder %s14, 1
    %p100 = por %p98, %p99
    %p101 = scmp.ne.s32.totalorder %s90, %s91
    %p102 = scmp.eq.s32.totalorder %s14, 0
    %p103 = por %p101, %p102
    %p104 = scmp.ne.s32.totalorder %s90, %s91
    %p105 = scmp.eq.s32.totalorder %s15, 1
    %p106 = por %p104, %p105
    %p108 = scmp.ne.s32.totalorder %s91, %s107
    %p109 = scmp.eq.s32.totalorder %s15, 0
    %p110 = por %p108, %p109
    %p111 = scmp.le.s32.totalorder 1, %s9
    %p112 = scmp.lt.s32.totalorder %s9, 3
    %p113 = pnand %p111, %p112
    %p114 = pneg %p113
    // Predicated region
    $region9: #{_lambda_.15} parent=5 // pred_check
      _
    $region10: #{_lambda_.15} parent=5 // pred_check_branch
      %116 = sbr.rel (%p113) target = $region12
    $region11: #{_lambda_.15} parent=5 // pred_region
      %s117 = ssub.s32 %s9, 1
      // Predicated region
      $region13: #{_lambda_.15} parent=11 // pred_check
        %p118 = pneg %p56
      $region14: #{_lambda_.15} parent=11 // pred_check_branch
        %120 = sbr.rel (%p118) target = $region16
      $region15: #{_lambda_.15} parent=11 // pred_region
        _
      $region16: #{_lambda_.15} parent=11 // pred_fallthru
        _
      // Predicated region
      $region17: #{_lambda_.15} parent=11 // pred_check
        %p121 = pneg %p77
      $region18: #{_lambda_.15} parent=11 // pred_check_branch
        %123 = sbr.rel (%p121) target = $region20
      $region19: #{_lambda_.15} parent=11 // pred_region
        _
      $region20: #{_lambda_.15} parent=11 // pred_fallthru
        _
    $region12: #{_lambda_.15} parent=5 // pred_fallthru
      _
    %p124 = scmp.lt.s32.totalorder %s9, 2
    // Predicated region
    $region21: #{_lambda_.15} parent=5 // pred_check
      %p125 = pneg %p124
    $region22: #{_lambda_.15} parent=5 // pred_check_branch
      %127 = sbr.rel (%p125) target = $region24
    $region23: #{_lambda_.15} parent=5 // pred_region
      // Predicated region
      $region25: #{_lambda_.15} parent=23 // pred_check
        %p128 = pneg %p29
      $region26: #{_lambda_.15} parent=23 // pred_check_branch
        %130 = sbr.rel (%p128) target = $region28
      $region27: #{_lambda_.15} parent=23 // pred_region
        %p131 = scmp.lt.s32.totalorder %s9, 1
        %s132 = scalar_select %p131, %s9, 1
        %s133 = smul.addr %s132, 16
        %s134 = smul.addr %s133, 4
        %s135 = scalar_lea.vmem %s0, %s134
      $region28: #{_lambda_.15} parent=23 // pred_fallthru
        _
    $region24: #{_lambda_.15} parent=5 // pred_fallthru
      _
    %p136 = scmp.le.s32.totalorder 1, %s9
    %p137 = scmp.lt.s32.totalorder %s9, 3
    %p138 = pnand %p136, %p137
    %p139 = pneg %p138
    // Predicated region
    $region29: #{_lambda_.15} parent=5 // pred_check
      _
    $region30: #{_lambda_.15} parent=5 // pred_check_branch
      %141 = sbr.rel (%p138) target = $region32
    $region31: #{_lambda_.15} parent=5 // pred_region
      %s142 = ssub.s32 %s9, 1
      %p143 = scmp.lt.s32.totalorder %s14, 1
      %s144 = scalar_select %p143, %s14, 1
      %s145 = smul.addr %s144, 16
      %s146 = smul.addr %s145, 4
      %s147 = scalar_lea.vmem %s0, %s146
      %p148 = pneg %p35
      %p149 = pneg %p32
      %p150 = pneg %p56
      %p151 = pneg %p53
      %p152 = pneg %p77
      %p153 = pneg %p74
      %p154 = pneg %p103
      %p155 = pneg %p100
      %p156 = scmp.lt.s32.totalorder %s14, 1
      %s157 = scalar_select %p156, %s14, 1
      %s158 = smul.addr %s157, 4
      %s159 = smul.addr %s158, 4
      %s160 = scalar_lea.vmem %s3, %s159
      %p161 = scmp.lt.s32.totalorder %s14, 1
      %s162 = scalar_select %p161, %s14, 1
      %s163 = smul.addr %s162, 16
      %s164 = smul.addr %s163, 4
      %s165 = scalar_lea.vmem %s0, %s164
      %p166 = scmp.lt.s32.totalorder %s14, 1
      %s167 = scalar_select %p166, %s14, 1
      %s168 = smul.addr %s167, 4
      %s169 = smul.addr %s168, 4
      %s170 = scalar_lea.vmem %s3, %s169
      %v172 = vld [vmem:[%s165] sm:$0xff]
      %v173 = vld [vmem:[%s165 + $0x8] sm:$0xff]
      %v174 = vld [vmem:[%s165 + $0x10] sm:$0xff]
      %v175 = vld [vmem:[%s165 + $0x18] sm:$0xff]
      %v176 = vld [vmem:[%s165 + $0x20] sm:$0xff]
      %v177 = vld [vmem:[%s165 + $0x28] sm:$0xff]
      %v178 = vld [vmem:[%s165 + $0x30] sm:$0xff]
      %v179 = vld [vmem:[%s165 + $0x38] sm:$0xff]
      %v180 = vunpack.c.l.bf16 %v172
      %v181 = vunpack.c.h.bf16 %v172
      %v182 = vunpack.c.l.bf16 %v173
      %v183 = vunpack.c.h.bf16 %v173
      %v184 = vunpack.c.l.bf16 %v174
      %v185 = vunpack.c.h.bf16 %v174
      %v186 = vunpack.c.l.bf16 %v175
      %v187 = vunpack.c.h.bf16 %v175
      %v188 = vunpack.c.l.bf16 %v176
      %v189 = vunpack.c.h.bf16 %v176
      %v190 = vunpack.c.l.bf16 %v177
      %v191 = vunpack.c.h.bf16 %v177
      %v192 = vunpack.c.l.bf16 %v178
      %v193 = vunpack.c.h.bf16 %v178
      %v194 = vunpack.c.l.bf16 %v179
      %v195 = vunpack.c.h.bf16 %v179
      %v196 = vpack.c.bf16 %v180, %v180
      %v197 = vpack.c.bf16 %v182, %v182
      %v198 = vpack.c.bf16 %v184, %v184
      %v199 = vpack.c.bf16 %v186, %v186
      %v200 = vpack.c.bf16 %v188, %v188
      %v201 = vpack.c.bf16 %v190, %v190
      %v202 = vpack.c.bf16 %v192, %v192
      %v203 = vpack.c.bf16 %v194, %v194
      %204 = vst [vmem:[#allocation2] sm:$0xf] %v196
      %205 = vst [vmem:[#allocation2 + $0x4] sm:$0xf] %v197
      %206 = vst [vmem:[#allocation2 + $0x8] sm:$0xf] %v198
      %207 = vst [vmem:[#allocation2 + $0xc] sm:$0xf] %v199
      %208 = vst [vmem:[#allocation2 + $0x10] sm:$0xf] %v200
      %209 = vst [vmem:[#allocation2 + $0x14] sm:$0xf] %v201
      %210 = vst [vmem:[#allocation2 + $0x18] sm:$0xf] %v202
      %211 = vst [vmem:[#allocation2 + $0x1c] sm:$0xf] %v203
      %v212 = vpack.c.bf16 %v181, %v180
      %v213 = vpack.c.bf16 %v183, %v182
      %v214 = vpack.c.bf16 %v185, %v184
      %v215 = vpack.c.bf16 %v187, %v186
      %v216 = vpack.c.bf16 %v189, %v188
      %v217 = vpack.c.bf16 %v191, %v190
      %v218 = vpack.c.bf16 %v193, %v192
      %v219 = vpack.c.bf16 %v195, %v194
      %228 = vrot.lane.b32.xlu0 %v212, 127
      %v229 = vpop.permute.xlu0 %228
      %230 = vrot.lane.b32.xlu0 %v213, 127
      %v231 = vpop.permute.xlu0 %230
      %232 = vrot.lane.b32.xlu0 %v214, 127
      %v233 = vpop.permute.xlu0 %232
      %234 = vrot.lane.b32.xlu0 %v215, 127
      %v235 = vpop.permute.xlu0 %234
      %236 = vrot.lane.b32.xlu0 %v216, 127
      %v237 = vpop.permute.xlu0 %236
      %238 = vrot.lane.b32.xlu0 %v217, 127
      %v239 = vpop.permute.xlu0 %238
      %240 = vrot.lane.b32.xlu0 %v218, 127
      %v241 = vpop.permute.xlu0 %240
      %242 = vrot.lane.b32.xlu0 %v219, 127
      %v243 = vpop.permute.xlu0 %242
      %v244 = vrot.slane %v229, 4
      %v245 = vrot.slane %v231, 4
      %v246 = vrot.slane %v233, 4
      %v247 = vrot.slane %v235, 4
      %v248 = vrot.slane %v237, 4
      %v249 = vrot.slane %v239, 4
      %v250 = vrot.slane %v241, 4
      %v251 = vrot.slane %v243, 4
      %vm252 = vcmask 1039360
      %v253 = vsel %vm252, %v229, %v244
      %v254 = vsel %vm252, %v231, %v245
      %v255 = vsel %vm252, %v233, %v246
      %v256 = vsel %vm252, %v235, %v247
      %v257 = vsel %vm252, %v237, %v248
      %v258 = vsel %vm252, %v239, %v249
      %v259 = vsel %vm252, %v241, %v250
      %v260 = vsel %vm252, %v243, %v251
      %269 = vst [vmem:[#allocation2 + $0x20] sm:$0xf] %v253
      %270 = vst [vmem:[#allocation2 + $0x24] sm:$0xf] %v254
      %271 = vst [vmem:[#allocation2 + $0x28] sm:$0xf] %v255
      %272 = vst [vmem:[#allocation2 + $0x2c] sm:$0xf] %v256
      %273 = vst [vmem:[#allocation2 + $0x30] sm:$0xf] %v257
      %274 = vst [vmem:[#allocation2 + $0x34] sm:$0xf] %v258
      %275 = vst [vmem:[#allocation2 + $0x38] sm:$0xf] %v259
      %276 = vst [vmem:[#allocation2 + $0x3c] sm:$0xf] %v260
      %277 = vrot.lane.b32.xlu0 %v212, 126
      %v278 = vpop.permute.xlu0 %277
      %279 = vrot.lane.b32.xlu0 %v213, 126
      %v280 = vpop.permute.xlu0 %279
      %281 = vrot.lane.b32.xlu0 %v214, 126
      %v282 = vpop.permute.xlu0 %281
      %283 = vrot.lane.b32.xlu0 %v215, 126
      %v284 = vpop.permute.xlu0 %283
      %285 = vrot.lane.b32.xlu0 %v216, 126
      %v286 = vpop.permute.xlu0 %285
      %287 = vrot.lane.b32.xlu0 %v217, 126
      %v288 = vpop.permute.xlu0 %287
      %289 = vrot.lane.b32.xlu0 %v218, 126
      %v290 = vpop.permute.xlu0 %289
      %291 = vrot.lane.b32.xlu0 %v219, 126
      %v292 = vpop.permute.xlu0 %291
      %v293 = vrot.slane %v278, 4
      %v294 = vrot.slane %v280, 4
      %v295 = vrot.slane %v282, 4
      %v296 = vrot.slane %v284, 4
      %v297 = vrot.slane %v286, 4
      %v298 = vrot.slane %v288, 4
      %v299 = vrot.slane %v290, 4
      %v300 = vrot.slane %v292, 4
      %vm301 = vcmask 1031168
      %v302 = vsel %vm301, %v278, %v293
      %v303 = vsel %vm301, %v280, %v294
      %v304 = vsel %vm301, %v282, %v295
      %v305 = vsel %vm301, %v284, %v296
      %v306 = vsel %vm301, %v286, %v297
      %v307 = vsel %vm301, %v288, %v298
      %v308 = vsel %vm301, %v290, %v299
      %v309 = vsel %vm301, %v292, %v300
      %318 = vst [vmem:[#allocation2 + $0x40] sm:$0xf] %v302
      %319 = vst [vmem:[#allocation2 + $0x44] sm:$0xf] %v303
      %320 = vst [vmem:[#allocation2 + $0x48] sm:$0xf] %v304
      %321 = vst [vmem:[#allocation2 + $0x4c] sm:$0xf] %v305
      %322 = vst [vmem:[#allocation2 + $0x50] sm:$0xf] %v306
      %323 = vst [vmem:[#allocation2 + $0x54] sm:$0xf] %v307
      %324 = vst [vmem:[#allocation2 + $0x58] sm:$0xf] %v308
      %325 = vst [vmem:[#allocation2 + $0x5c] sm:$0xf] %v309
      %326 = vrot.lane.b32.xlu0 %v212, 124
      %v327 = vpop.permute.xlu0 %326
      %328 = vrot.lane.b32.xlu0 %v213, 124
      %v329 = vpop.permute.xlu0 %328
      %330 = vrot.lane.b32.xlu0 %v214, 124
      %v331 = vpop.permute.xlu0 %330
      %332 = vrot.lane.b32.xlu0 %v215, 124
      %v333 = vpop.permute.xlu0 %332
      %334 = vrot.lane.b32.xlu0 %v216, 124
      %v335 = vpop.permute.xlu0 %334
      %336 = vrot.lane.b32.xlu0 %v217, 124
      %v337 = vpop.permute.xlu0 %336
      %338 = vrot.lane.b32.xlu0 %v218, 124
      %v339 = vpop.permute.xlu0 %338
      %340 = vrot.lane.b32.xlu0 %v219, 124
      %v341 = vpop.permute.xlu0 %340
      %v342 = vrot.slane %v327, 4
      %v343 = vrot.slane %v329, 4
      %v344 = vrot.slane %v331, 4
      %v345 = vrot.slane %v333, 4
      %v346 = vrot.slane %v335, 4
      %v347 = vrot.slane %v337, 4
      %v348 = vrot.slane %v339, 4
      %v349 = vrot.slane %v341, 4
      %vm350 = vcmask 1014784
      %v351 = vsel %vm350, %v327, %v342
      %v352 = vsel %vm350, %v329, %v343
      %v353 = vsel %vm350, %v331, %v344
      %v354 = vsel %vm350, %v333, %v345
      %v355 = vsel %vm350, %v335, %v346
      %v356 = vsel %vm350, %v337, %v347
      %v357 = vsel %vm350, %v339, %v348
      %v358 = vsel %vm350, %v341, %v349
      %367 = vst [vmem:[#allocation2 + $0x60] sm:$0xf] %v351
      %368 = vst [vmem:[#allocation2 + $0x64] sm:$0xf] %v352
      %369 = vst [vmem:[#allocation2 + $0x68] sm:$0xf] %v353
      %370 = vst [vmem:[#allocation2 + $0x6c] sm:$0xf] %v354
      %371 = vst [vmem:[#allocation2 + $0x70] sm:$0xf] %v355
      %372 = vst [vmem:[#allocation2 + $0x74] sm:$0xf] %v356
      %373 = vst [vmem:[#allocation2 + $0x78] sm:$0xf] %v357
      %374 = vst [vmem:[#allocation2 + $0x7c] sm:$0xf] %v358
      %375 = vrot.lane.b32.xlu0 %v212, 123
      %v376 = vpop.permute.xlu0 %375
      %377 = vrot.lane.b32.xlu0 %v213, 123
      %v378 = vpop.permute.xlu0 %377
      %379 = vrot.lane.b32.xlu0 %v214, 123
      %v380 = vpop.permute.xlu0 %379
      %381 = vrot.lane.b32.xlu0 %v215, 123
      %v382 = vpop.permute.xlu0 %381
      %383 = vrot.lane.b32.xlu0 %v216, 123
      %v384 = vpop.permute.xlu0 %383
      %385 = vrot.lane.b32.xlu0 %v217, 123
      %v386 = vpop.permute.xlu0 %385
      %387 = vrot.lane.b32.xlu0 %v218, 123
      %v388 = vpop.permute.xlu0 %387
      %389 = vrot.lane.b32.xlu0 %v219, 123
      %v390 = vpop.permute.xlu0 %389
      %v391 = vrot.slane %v376, 4
      %v392 = vrot.slane %v378, 4
      %v393 = vrot.slane %v380, 4
      %v394 = vrot.slane %v382, 4
      %v395 = vrot.slane %v384, 4
      %v396 = vrot.slane %v386, 4
      %v397 = vrot.slane %v388, 4
      %v398 = vrot.slane %v390, 4
      %vm399 = vcmask 1006592
      %v400 = vsel %vm399, %v376, %v391
      %v401 = vsel %vm399, %v378, %v392
      %v402 = vsel %vm399, %v380, %v393
      %v403 = vsel %vm399, %v382, %v394
      %v404 = vsel %vm399, %v384, %v395
      %v405 = vsel %vm399, %v386, %v396
      %v406 = vsel %vm399, %v388, %v397
      %v407 = vsel %vm399, %v390, %v398
      %416 = vst [vmem:[#allocation2 + $0x80] sm:$0xf] %v400
      %417 = vst [vmem:[#allocation2 + $0x84] sm:$0xf] %v401
      %418 = vst [vmem:[#allocation2 + $0x88] sm:$0xf] %v402
      %419 = vst [vmem:[#allocation2 + $0x8c] sm:$0xf] %v403
      %420 = vst [vmem:[#allocation2 + $0x90] sm:$0xf] %v404
      %421 = vst [vmem:[#allocation2 + $0x94] sm:$0xf] %v405
      %422 = vst [vmem:[#allocation2 + $0x98] sm:$0xf] %v406
      %423 = vst [vmem:[#allocation2 + $0x9c] sm:$0xf] %v407
      %424 = vrot.lane.b32.xlu0 %v212, 122
      %v425 = vpop.permute.xlu0 %424
      %426 = vrot.lane.b32.xlu0 %v213, 122
      %v427 = vpop.permute.xlu0 %426
      %428 = vrot.lane.b32.xlu0 %v214, 122
      %v429 = vpop.permute.xlu0 %428
      %430 = vrot.lane.b32.xlu0 %v215, 122
      %v431 = vpop.permute.xlu0 %430
      %432 = vrot.lane.b32.xlu0 %v216, 122
      %v433 = vpop.permute.xlu0 %432
      %434 = vrot.lane.b32.xlu0 %v217, 122
      %v435 = vpop.permute.xlu0 %434
      %436 = vrot.lane.b32.xlu0 %v218, 122
      %v437 = vpop.permute.xlu0 %436
      %438 = vrot.lane.b32.xlu0 %v219, 122
      %v439 = vpop.permute.xlu0 %438
      %v440 = vrot.slane %v425, 4
      %v441 = vrot.slane %v427, 4
      %v442 = vrot.slane %v429, 4
      %v443 = vrot.slane %v431, 4
      %v444 = vrot.slane %v433, 4
      %v445 = vrot.slane %v435, 4
      %v446 = vrot.slane %v437, 4
      %v447 = vrot.slane %v439, 4
      %vm448 = vcmask 998400
      %v449 = vsel %vm448, %v425, %v440
      %v450 = vsel %vm448, %v427, %v441
      %v451 = vsel %vm448, %v429, %v442
      %v452 = vsel %vm448, %v431, %v443
      %v453 = vsel %vm448, %v433, %v444
      %v454 = vsel %vm448, %v435, %v445
      %v455 = vsel %vm448, %v437, %v446
      %v456 = vsel %vm448, %v439, %v447
      %465 = vst [vmem:[#allocation2 + $0xa0] sm:$0xf] %v449
      %466 = vst [vmem:[#allocation2 + $0xa4] sm:$0xf] %v450
      %467 = vst [vmem:[#allocation2 + $0xa8] sm:$0xf] %v451
      %468 = vst [vmem:[#allocation2 + $0xac] sm:$0xf] %v452
      %469 = vst [vmem:[#allocation2 + $0xb0] sm:$0xf] %v453
      %470 = vst [vmem:[#allocation2 + $0xb4] sm:$0xf] %v454
      %471 = vst [vmem:[#allocation2 + $0xb8] sm:$0xf] %v455
      %472 = vst [vmem:[#allocation2 + $0xbc] sm:$0xf] %v456
      %473 = vrot.lane.b32.xlu0 %v212, 120
      %v474 = vpop.permute.xlu0 %473
      %475 = vrot.lane.b32.xlu0 %v213, 120
      %v476 = vpop.permute.xlu0 %475
      %477 = vrot.lane.b32.xlu0 %v214, 120
      %v478 = vpop.permute.xlu0 %477
      %479 = vrot.lane.b32.xlu0 %v215, 120
      %v480 = vpop.permute.xlu0 %479
      %481 = vrot.lane.b32.xlu0 %v216, 120
      %v482 = vpop.permute.xlu0 %481
      %483 = vrot.lane.b32.xlu0 %v217, 120
      %v484 = vpop.permute.xlu0 %483
      %485 = vrot.lane.b32.xlu0 %v218, 120
      %v486 = vpop.permute.xlu0 %485
      %487 = vrot.lane.b32.xlu0 %v219, 120
      %v488 = vpop.permute.xlu0 %487
      %v489 = vrot.slane %v474, 4
      %v490 = vrot.slane %v476, 4
      %v491 = vrot.slane %v478, 4
      %v492 = vrot.slane %v480, 4
      %v493 = vrot.slane %v482, 4
      %v494 = vrot.slane %v484, 4
      %v495 = vrot.slane %v486, 4
      %v496 = vrot.slane %v488, 4
      %vm497 = vcmask 982016
      %v498 = vsel %vm497, %v474, %v489
      %v499 = vsel %vm497, %v476, %v490
      %v500 = vsel %vm497, %v478, %v491
      %v501 = vsel %vm497, %v480, %v492
      %v502 = vsel %vm497, %v482, %v493
      %v503 = vsel %vm497, %v484, %v494
      %v504 = vsel %vm497, %v486, %v495
      %v505 = vsel %vm497, %v488, %v496
      %514 = vst [vmem:[#allocation2 + $0xc0] sm:$0xf] %v498
      %515 = vst [vmem:[#allocation2 + $0xc4] sm:$0xf] %v499
      %516 = vst [vmem:[#allocation2 + $0xc8] sm:$0xf] %v500
      %517 = vst [vmem:[#allocation2 + $0xcc] sm:$0xf] %v501
      %518 = vst [vmem:[#allocation2 + $0xd0] sm:$0xf] %v502
      %519 = vst [vmem:[#allocation2 + $0xd4] sm:$0xf] %v503
      %520 = vst [vmem:[#allocation2 + $0xd8] sm:$0xf] %v504
      %521 = vst [vmem:[#allocation2 + $0xdc] sm:$0xf] %v505
      %522 = vrot.lane.b32.xlu0 %v212, 119
      %v523 = vpop.permute.xlu0 %522
      %524 = vrot.lane.b32.xlu0 %v213, 119
      %v525 = vpop.permute.xlu0 %524
      %526 = vrot.lane.b32.xlu0 %v214, 119
      %v527 = vpop.permute.xlu0 %526
      %528 = vrot.lane.b32.xlu0 %v215, 119
      %v529 = vpop.permute.xlu0 %528
      %530 = vrot.lane.b32.xlu0 %v216, 119
      %v531 = vpop.permute.xlu0 %530
      %532 = vrot.lane.b32.xlu0 %v217, 119
      %v533 = vpop.permute.xlu0 %532
      %534 = vrot.lane.b32.xlu0 %v218, 119
      %v535 = vpop.permute.xlu0 %534
      %536 = vrot.lane.b32.xlu0 %v219, 119
      %v537 = vpop.permute.xlu0 %536
      %v538 = vrot.slane %v523, 4
      %v539 = vrot.slane %v525, 4
      %v540 = vrot.slane %v527, 4
      %v541 = vrot.slane %v529, 4
      %v542 = vrot.slane %v531, 4
      %v543 = vrot.slane %v533, 4
      %v544 = vrot.slane %v535, 4
      %v545 = vrot.slane %v537, 4
      %vm546 = vcmask 973824
      %v547 = vsel %vm546, %v523, %v538
      %v548 = vsel %vm546, %v525, %v539
      %v549 = vsel %vm546, %v527, %v540
      %v550 = vsel %vm546, %v529, %v541
      %v551 = vsel %vm546, %v531, %v542
      %v552 = vsel %vm546, %v533, %v543
      %v553 = vsel %vm546, %v535, %v544
      %v554 = vsel %vm546, %v537, %v545
      %563 = vst [vmem:[#allocation2 + $0xe0] sm:$0xf] %v547
      %564 = vst [vmem:[#allocation2 + $0xe4] sm:$0xf] %v548
      %565 = vst [vmem:[#allocation2 + $0xe8] sm:$0xf] %v549
      %566 = vst [vmem:[#allocation2 + $0xec] sm:$0xf] %v550
      %567 = vst [vmem:[#allocation2 + $0xf0] sm:$0xf] %v551
      %568 = vst [vmem:[#allocation2 + $0xf4] sm:$0xf] %v552
      %569 = vst [vmem:[#allocation2 + $0xf8] sm:$0xf] %v553
      %570 = vst [vmem:[#allocation2 + $0xfc] sm:$0xf] %v554
      %571 = vrot.lane.b32.xlu0 %v212, 118
      %v572 = vpop.permute.xlu0 %571
      %573 = vrot.lane.b32.xlu0 %v213, 118
      %v574 = vpop.permute.xlu0 %573
      %575 = vrot.lane.b32.xlu0 %v214, 118
      %v576 = vpop.permute.xlu0 %575
      %577 = vrot.lane.b32.xlu0 %v215, 118
      %v578 = vpop.permute.xlu0 %577
      %579 = vrot.lane.b32.xlu0 %v216, 118
      %v580 = vpop.permute.xlu0 %579
      %581 = vrot.lane.b32.xlu0 %v217, 118
      %v582 = vpop.permute.xlu0 %581
      %583 = vrot.lane.b32.xlu0 %v218, 118
      %v584 = vpop.permute.xlu0 %583
      %585 = vrot.lane.b32.xlu0 %v219, 118
      %v586 = vpop.permute.xlu0 %585
      %v587 = vrot.slane %v572, 4
      %v588 = vrot.slane %v574, 4
      %v589 = vrot.slane %v576, 4
      %v590 = vrot.slane %v578, 4
      %v591 = vrot.slane %v580, 4
      %v592 = vrot.slane %v582, 4
      %v593 = vrot.slane %v584, 4
      %v594 = vrot.slane %v586, 4
      %vm595 = vcmask 965632
      %v596 = vsel %vm595, %v572, %v587
      %v597 = vsel %vm595, %v574, %v588
      %v598 = vsel %vm595, %v576, %v589
      %v599 = vsel %vm595, %v578, %v590
      %v600 = vsel %vm595, %v580, %v591
      %v601 = vsel %vm595, %v582, %v592
      %v602 = vsel %vm595, %v584, %v593
      %v603 = vsel %vm595, %v586, %v594
      %612 = vst [vmem:[#allocation2 + $0x100] sm:$0xf] %v596
      %613 = vst [vmem:[#allocation2 + $0x104] sm:$0xf] %v597
      %614 = vst [vmem:[#allocation2 + $0x108] sm:$0xf] %v598
      %615 = vst [vmem:[#allocation2 + $0x10c] sm:$0xf] %v599
      %616 = vst [vmem:[#allocation2 + $0x110] sm:$0xf] %v600
      %617 = vst [vmem:[#allocation2 + $0x114] sm:$0xf] %v601
      %618 = vst [vmem:[#allocation2 + $0x118] sm:$0xf] %v602
      %619 = vst [vmem:[#allocation2 + $0x11c] sm:$0xf] %v603
      %v620 = vld [vmem:[%s1] sm:$0xff]
      %v621 = vld [vmem:[%s1 + $0x8] sm:$0xff]
      %v622 = vld [vmem:[%s1 + $0x10] sm:$0xf]
      %v623 = vld [vmem:[%s1 + $0x14] sm:$0xff]
      %v624 = vld [vmem:[%s1 + $0x1c] sm:$0xff]
      %v625 = vld [vmem:[%s1 + $0x24] sm:$0xf]
      %v626 = vld [vmem:[%s1 + $0x28] sm:$0xff]
      %v627 = vld [vmem:[%s1 + $0x30] sm:$0xff]
      %v628 = vld [vmem:[%s1 + $0x38] sm:$0xf]
      %v629 = vld [vmem:[%s1 + $0x3c] sm:$0xff]
      %v630 = vld [vmem:[%s1 + $0x44] sm:$0xff]
      %v631 = vld [vmem:[%s1 + $0x4c] sm:$0xf]
      %v632 = vld [vmem:[#allocation2] sm:$0xf]
      %v633 = vld [vmem:[#allocation2 + $0x4] sm:$0xf]
      %v634 = vld [vmem:[#allocation2 + $0x8] sm:$0xf]
      %v635 = vld [vmem:[#allocation2 + $0xc] sm:$0xf]
      %v636 = vld [vmem:[#allocation2 + $0x10] sm:$0xf]
      %v637 = vld [vmem:[#allocation2 + $0x14] sm:$0xf]
      %v638 = vld [vmem:[#allocation2 + $0x18] sm:$0xf]
      %v639 = vld [vmem:[#allocation2 + $0x1c] sm:$0xf]
      %v640 = vld [vmem:[#allocation2 + $0x20] sm:$0xf]
      %v641 = vld [vmem:[#allocation2 + $0x24] sm:$0xf]
      %v642 = vld [vmem:[#allocation2 + $0x28] sm:$0xf]
      %v643 = vld [vmem:[#allocation2 + $0x2c] sm:$0xf]
      %v644 = vld [vmem:[#allocation2 + $0x30] sm:$0xf]
      %v645 = vld [vmem:[#allocation2 + $0x34] sm:$0xf]
      %v646 = vld [vmem:[#allocation2 + $0x38] sm:$0xf]
      %v647 = vld [vmem:[#allocation2 + $0x3c] sm:$0xf]
      %v648 = vld [vmem:[#allocation2 + $0x40] sm:$0xf]
      %v649 = vld [vmem:[#allocation2 + $0x44] sm:$0xf]
      %v650 = vld [vmem:[#allocation2 + $0x48] sm:$0xf]
      %v651 = vld [vmem:[#allocation2 + $0x4c] sm:$0xf]
      %v652 = vld [vmem:[#allocation2 + $0x50] sm:$0xf]
      %v653 = vld [vmem:[#allocation2 + $0x54] sm:$0xf]
      %v654 = vld [vmem:[#allocation2 + $0x58] sm:$0xf]
      %v655 = vld [vmem:[#allocation2 + $0x5c] sm:$0xf]
      %v656 = vld [vmem:[#allocation2 + $0x60] sm:$0xf]
      %v657 = vld [vmem:[#allocation2 + $0x64] sm:$0xf]
      %v658 = vld [vmem:[#allocation2 + $0x68] sm:$0xf]
      %v659 = vld [vmem:[#allocation2 + $0x6c] sm:$0xf]
      %v660 = vld [vmem:[#allocation2 + $0x70] sm:$0xf]
      %v661 = vld [vmem:[#allocation2 + $0x74] sm:$0xf]
      %v662 = vld [vmem:[#allocation2 + $0x78] sm:$0xf]
      %v663 = vld [vmem:[#allocation2 + $0x7c] sm:$0xf]
      %v664 = vld [vmem:[#allocation2 + $0x80] sm:$0xf]
      %v665 = vld [vmem:[#allocation2 + $0x84] sm:$0xf]
      %v666 = vld [vmem:[#allocation2 + $0x88] sm:$0xf]
      %v667 = vld [vmem:[#allocation2 + $0x8c] sm:$0xf]
      %v668 = vld [vmem:[#allocation2 + $0x90] sm:$0xf]
      %v669 = vld [vmem:[#allocation2 + $0x94] sm:$0xf]
      %v670 = vld [vmem:[#allocation2 + $0x98] sm:$0xf]
      %v671 = vld [vmem:[#allocation2 + $0x9c] sm:$0xf]
      %v672 = vld [vmem:[#allocation2 + $0xa0] sm:$0xf]
      %v673 = vld [vmem:[#allocation2 + $0xa4] sm:$0xf]
      %v674 = vld [vmem:[#allocation2 + $0xa8] sm:$0xf]
      %v675 = vld [vmem:[#allocation2 + $0xac] sm:$0xf]
      %v676 = vld [vmem:[#allocation2 + $0xb0] sm:$0xf]
      %v677 = vld [vmem:[#allocation2 + $0xb4] sm:$0xf]
      %v678 = vld [vmem:[#allocation2 + $0xb8] sm:$0xf]
      %v679 = vld [vmem:[#allocation2 + $0xbc] sm:$0xf]
      %v680 = vld [vmem:[#allocation2 + $0xc0] sm:$0xf]
      %v681 = vld [vmem:[#allocation2 + $0xc4] sm:$0xf]
      %v682 = vld [vmem:[#allocation2 + $0xc8] sm:$0xf]
      %v683 = vld [vmem:[#allocation2 + $0xcc] sm:$0xf]
      %v684 = vld [vmem:[#allocation2 + $0xd0] sm:$0xf]
      %v685 = vld [vmem:[#allocation2 + $0xd4] sm:$0xf]
      %v686 = vld [vmem:[#allocation2 + $0xd8] sm:$0xf]
      %v687 = vld [vmem:[#allocation2 + $0xdc] sm:$0xf]
      %v688 = vld [vmem:[#allocation2 + $0xe0] sm:$0xf]
      %v689 = vld [vmem:[#allocation2 + $0xe4] sm:$0xf]
      %v690 = vld [vmem:[#allocation2 + $0xe8] sm:$0xf]
      %v691 = vld [vmem:[#allocation2 + $0xec] sm:$0xf]
      %v692 = vld [vmem:[#allocation2 + $0xf0] sm:$0xf]
      %v693 = vld [vmem:[#allocation2 + $0xf4] sm:$0xf]
      %v694 = vld [vmem:[#allocation2 + $0xf8] sm:$0xf]
      %v695 = vld [vmem:[#allocation2 + $0xfc] sm:$0xf]
      %v696 = vld [vmem:[#allocation2 + $0x100] sm:$0xf]
      %v697 = vld [vmem:[#allocation2 + $0x104] sm:$0xf]
      %v698 = vld [vmem:[#allocation2 + $0x108] sm:$0xf]
      %v699 = vld [vmem:[#allocation2 + $0x10c] sm:$0xf]
      %v700 = vld [vmem:[#allocation2 + $0x110] sm:$0xf]
      %v701 = vld [vmem:[#allocation2 + $0x114] sm:$0xf]
      %v702 = vld [vmem:[#allocation2 + $0x118] sm:$0xf]
      %v703 = vld [vmem:[#allocation2 + $0x11c] sm:$0xf]
      %v704 = vld [vmem:[%s2] sm:$0xff]
      %v705 = vld [vmem:[%s2 + $0x8] sm:$0xff]
      %v706 = vld [vmem:[%s2 + $0x10] sm:$0xff]
      %v707 = vld [vmem:[%s2 + $0x18] sm:$0xff]
      %709 = vset.pattern.permute.xlu0 0
      %710 = vperm.xlu0 %709, %v704
      %v711 = vpop.permute.xlu0 %710
      %714 = vset.pattern.permute.xlu0 0
      %715 = vperm.xlu0 %714, %v705
      %v716 = vpop.permute.xlu0 %715
      %719 = vset.pattern.permute.xlu0 0
      %720 = vperm.xlu0 %719, %v706
      %v721 = vpop.permute.xlu0 %720
      %724 = vset.pattern.permute.xlu0 0
      %725 = vperm.xlu0 %724, %v707
      %v726 = vpop.permute.xlu0 %725
      %v740 = vunpack.c.l.b16 %v620
      %v741 = vunpack.c.h.b16 %v620
      %v742 = vunpack.c.l.b16 %v621
      %v743 = vunpack.c.h.b16 %v621
      %v744 = vunpack.c.l.b16 %v622
      %v745 = vunpack.c.l.b16 %v623
      %v746 = vunpack.c.h.b16 %v623
      %v747 = vunpack.c.l.b16 %v624
      %v748 = vunpack.c.h.b16 %v624
      %v749 = vunpack.c.l.b16 %v625
      %v750 = vunpack.c.l.b16 %v626
      %v751 = vunpack.c.h.b16 %v626
      %v752 = vunpack.c.l.b16 %v627
      %v753 = vunpack.c.h.b16 %v627
      %v754 = vunpack.c.l.b16 %v628
      %v755 = vunpack.c.l.b16 %v629
      %v756 = vunpack.c.h.b16 %v629
      %v757 = vunpack.c.l.b16 %v630
      %v758 = vunpack.c.h.b16 %v630
      %v759 = vunpack.c.l.b16 %v631
      %v760 = vpack.c.b16 %v745, %v740
      %v761 = vpack.c.b16 %v746, %v741
      %v762 = vpack.c.b16 %v747, %v742
      %v763 = vpack.c.b16 %v748, %v743
      %v764 = vpack.c.b16 %v749, %v744
      %v765 = vpack.c.b16 %v755, %v750
      %v766 = vpack.c.b16 %v756, %v751
      %v767 = vpack.c.b16 %v757, %v752
      %v768 = vpack.c.b16 %v758, %v753
      %v769 = vpack.c.b16 %v759, %v754
      %v850 = vunpack.c.l.b16 %v632
      %v851 = vunpack.c.l.b16 %v633
      %v852 = vunpack.c.l.b16 %v634
      %v853 = vunpack.c.l.b16 %v635
      %v854 = vunpack.c.l.b16 %v636
      %v855 = vunpack.c.l.b16 %v637
      %v856 = vunpack.c.l.b16 %v638
      %v857 = vunpack.c.l.b16 %v639
      %v858 = vunpack.c.l.b16 %v640
      %v859 = vunpack.c.l.b16 %v641
      %v860 = vunpack.c.l.b16 %v642
      %v861 = vunpack.c.l.b16 %v643
      %v862 = vunpack.c.l.b16 %v644
      %v863 = vunpack.c.l.b16 %v645
      %v864 = vunpack.c.l.b16 %v646
      %v865 = vunpack.c.l.b16 %v647
      %v866 = vunpack.c.l.b16 %v648
      %v867 = vunpack.c.l.b16 %v649
      %v868 = vunpack.c.l.b16 %v650
      %v869 = vunpack.c.l.b16 %v651
      %v870 = vunpack.c.l.b16 %v652
      %v871 = vunpack.c.l.b16 %v653
      %v872 = vunpack.c.l.b16 %v654
      %v873 = vunpack.c.l.b16 %v655
      %v874 = vunpack.c.l.b16 %v656
      %v875 = vunpack.c.l.b16 %v657
      %v876 = vunpack.c.l.b16 %v658
      %v877 = vunpack.c.l.b16 %v659
      %v878 = vunpack.c.l.b16 %v660
      %v879 = vunpack.c.l.b16 %v661
      %v880 = vunpack.c.l.b16 %v662
      %v881 = vunpack.c.l.b16 %v663
      %v882 = vunpack.c.l.b16 %v664
      %v883 = vunpack.c.l.b16 %v665
      %v884 = vunpack.c.l.b16 %v666
      %v885 = vunpack.c.l.b16 %v667
      %v886 = vunpack.c.l.b16 %v668
      %v887 = vunpack.c.l.b16 %v669
      %v888 = vunpack.c.l.b16 %v670
      %v889 = vunpack.c.l.b16 %v671
      %v890 = vunpack.c.l.b16 %v672
      %v891 = vunpack.c.l.b16 %v673
      %v892 = vunpack.c.l.b16 %v674
      %v893 = vunpack.c.l.b16 %v675
      %v894 = vunpack.c.l.b16 %v676
      %v895 = vunpack.c.l.b16 %v677
      %v896 = vunpack.c.l.b16 %v678
      %v897 = vunpack.c.l.b16 %v679
      %v898 = vunpack.c.l.b16 %v680
      %v899 = vunpack.c.l.b16 %v681
      %v900 = vunpack.c.l.b16 %v682
      %v901 = vunpack.c.l.b16 %v683
      %v902 = vunpack.c.l.b16 %v684
      %v903 = vunpack.c.l.b16 %v685
      %v904 = vunpack.c.l.b16 %v686
      %v905 = vunpack.c.l.b16 %v687
      %v906 = vunpack.c.l.b16 %v688
      %v907 = vunpack.c.l.b16 %v689
      %v908 = vunpack.c.l.b16 %v690
      %v909 = vunpack.c.l.b16 %v691
      %v910 = vunpack.c.l.b16 %v692
      %v911 = vunpack.c.l.b16 %v693
      %v912 = vunpack.c.l.b16 %v694
      %v913 = vunpack.c.l.b16 %v695
      %v914 = vunpack.c.l.b16 %v696
      %v915 = vunpack.c.l.b16 %v697
      %v916 = vunpack.c.l.b16 %v698
      %v917 = vunpack.c.l.b16 %v699
      %v918 = vunpack.c.l.b16 %v700
      %v919 = vunpack.c.l.b16 %v701
      %v920 = vunpack.c.l.b16 %v702
      %v921 = vunpack.c.l.b16 %v703
      %v922 = vpack.c.b16 %v851, %v850
      %v923 = vpack.c.b16 %v853, %v852
      %v924 = vpack.c.b16 %v855, %v854
      %v925 = vpack.c.b16 %v857, %v856
      %v926 = vpack.c.b16 %v859, %v858
      %v927 = vpack.c.b16 %v861, %v860
      %v928 = vpack.c.b16 %v863, %v862
      %v929 = vpack.c.b16 %v865, %v864
      %v930 = vpack.c.b16 %v867, %v866
      %v931 = vpack.c.b16 %v869, %v868
      %v932 = vpack.c.b16 %v871, %v870
      %v933 = vpack.c.b16 %v873, %v872
      %v934 = vpack.c.b16 %v875, %v874
      %v935 = vpack.c.b16 %v877, %v876
      %v936 = vpack.c.b16 %v879, %v878
      %v937 = vpack.c.b16 %v881, %v880
      %v938 = vpack.c.b16 %v883, %v882
      %v939 = vpack.c.b16 %v885, %v884
      %v940 = vpack.c.b16 %v887, %v886
      %v941 = vpack.c.b16 %v889, %v888
      %v942 = vpack.c.b16 %v891, %v890
      %v943 = vpack.c.b16 %v893, %v892
      %v944 = vpack.c.b16 %v895, %v894
      %v945 = vpack.c.b16 %v897, %v896
      %v946 = vpack.c.b16 %v899, %v898
      %v947 = vpack.c.b16 %v901, %v900
      %v948 = vpack.c.b16 %v903, %v902
      %v949 = vpack.c.b16 %v905, %v904
      %v950 = vpack.c.b16 %v907, %v906
      %v951 = vpack.c.b16 %v909, %v908
      %v952 = vpack.c.b16 %v911, %v910
      %v953 = vpack.c.b16 %v913, %v912
      %v954 = vpack.c.b16 %v915, %v914
      %v955 = vpack.c.b16 %v917, %v916
      %v956 = vpack.c.b16 %v919, %v918
      %v957 = vpack.c.b16 %v921, %v920
      %vm994 = vcmask 523264
      %v996 = vsel %vm994, %v764, 0
      %v999 = vsel %vm994, %v769, 0
      %1001 = vmatpush.bf16.msra.mxu0 %v929
      %1002 = vmatpush.bf16.msra.mxu0 %v928
      %1003 = vmatpush.bf16.msra.mxu0 %v927
      %1004 = vmatpush.bf16.msra.mxu0 %v926
      %1005 = vmatpush.bf16.msra.mxu0 %v925
      %1006 = vmatpush.bf16.msra.mxu0 %v924
      %1007 = vmatpush.bf16.msra.mxu0 %v923
      %1008 = vmatpush.bf16.msra.mxu0 %v922
      %1009 = vmatmul.bf16.gmra.mxu0 %v760
      %v1010 = vpop.f32.mrf.mxu0
      %v1011 = vadd.f32 %v711, %v1010
      %v1012 = vpop.f32.mrf.mxu0
      %v1013 = vadd.f32 %v716, %v1012
      %1014 = vmatmul.bf16.gmra.mxu0 %v765
      %v1015 = vpop.f32.mrf.mxu0
      %v1016 = vadd.f32 %v721, %v1015
      %v1017 = vpop.f32.mrf.mxu0
      %v1018 = vadd.f32 %v726, %v1017
      %1019 = vdwg.mxu0
      %1020 = vmatpush.bf16.msra.mxu0 %v937
      %1021 = vmatpush.bf16.msra.mxu0 %v936
      %1022 = vmatpush.bf16.msra.mxu0 %v935
      %1023 = vmatpush.bf16.msra.mxu0 %v934
      %1024 = vmatpush.bf16.msra.mxu0 %v933
      %1025 = vmatpush.bf16.msra.mxu0 %v932
      %1026 = vmatpush.bf16.msra.mxu0 %v931
      %1027 = vmatpush.bf16.msra.mxu0 %v930
      %1028 = vmatmul.bf16.gmra.mxu0 %v761
      %v1029 = vpop.f32.mrf.mxu0
      %v1030 = vadd.f32 %v1011, %v1029
      %v1031 = vpop.f32.mrf.mxu0
      %v1032 = vadd.f32 %v1013, %v1031
      %1033 = vmatmul.bf16.gmra.mxu0 %v766
      %v1034 = vpop.f32.mrf.mxu0
      %v1035 = vadd.f32 %v1016, %v1034
      %v1036 = vpop.f32.mrf.mxu0
      %v1037 = vadd.f32 %v1018, %v1036
      %1038 = vdwg.mxu0
      %1039 = vmatpush.bf16.msra.mxu0 %v945
      %1040 = vmatpush.bf16.msra.mxu0 %v944
      %1041 = vmatpush.bf16.msra.mxu0 %v943
      %1042 = vmatpush.bf16.msra.mxu0 %v942
      %1043 = vmatpush.bf16.msra.mxu0 %v941
      %1044 = vmatpush.bf16.msra.mxu0 %v940
      %1045 = vmatpush.bf16.msra.mxu0 %v939
      %1046 = vmatpush.bf16.msra.mxu0 %v938
      %1047 = vmatmul.bf16.gmra.mxu0 %v762
      %v1048 = vpop.f32.mrf.mxu0
      %v1049 = vadd.f32 %v1030, %v1048
      %v1050 = vpop.f32.mrf.mxu0
      %v1051 = vadd.f32 %v1032, %v1050
      %1052 = vmatmul.bf16.gmra.mxu0 %v767
      %v1053 = vpop.f32.mrf.mxu0
      %v1054 = vadd.f32 %v1035, %v1053
      %v1055 = vpop.f32.mrf.mxu0
      %v1056 = vadd.f32 %v1037, %v1055
      %1057 = vdwg.mxu0
      %1058 = vmatpush.bf16.msra.mxu0 %v953
      %1059 = vmatpush.bf16.msra.mxu0 %v952
      %1060 = vmatpush.bf16.msra.mxu0 %v951
      %1061 = vmatpush.bf16.msra.mxu0 %v950
      %1062 = vmatpush.bf16.msra.mxu0 %v949
      %1063 = vmatpush.bf16.msra.mxu0 %v948
      %1064 = vmatpush.bf16.msra.mxu0 %v947
      %1065 = vmatpush.bf16.msra.mxu0 %v946
      %1066 = vmatmul.bf16.gmra.mxu0 %v763
      %v1067 = vpop.f32.mrf.mxu0
      %v1068 = vadd.f32 %v1049, %v1067
      %v1069 = vpop.f32.mrf.mxu0
      %v1070 = vadd.f32 %v1051, %v1069
      %1071 = vmatmul.bf16.gmra.mxu0 %v768
      %v1072 = vpop.f32.mrf.mxu0
      %v1073 = vadd.f32 %v1054, %v1072
      %v1074 = vpop.f32.mrf.mxu0
      %v1075 = vadd.f32 %v1056, %v1074
      %1076 = vdwg.mxu0
      %1077 = vmatpush.bf16.msra.mxu0 0
      %1078 = vmatpush.bf16.msra.mxu0 0
      %1079 = vmatpush.bf16.msra.mxu0 0
      %1080 = vmatpush.bf16.msra.mxu0 0
      %1081 = vmatpush.bf16.msra.mxu0 %v957
      %1082 = vmatpush.bf16.msra.mxu0 %v956
      %1083 = vmatpush.bf16.msra.mxu0 %v955
      %1084 = vmatpush.bf16.msra.mxu0 %v954
      %1085 = vmatmul.bf16.gmra.mxu0 %v996
      %v1086 = vpop.f32.mrf.mxu0
      %v1087 = vadd.f32 %v1068, %v1086
      %v1088 = vpop.f32.mrf.mxu0
      %v1089 = vadd.f32 %v1070, %v1088
      %1090 = vmatmul.bf16.gmra.mxu0 %v999
      %v1091 = vpop.f32.mrf.mxu0
      %v1092 = vadd.f32 %v1073, %v1091
      %v1093 = vpop.f32.mrf.mxu0
      %v1094 = vadd.f32 %v1075, %v1093
      %1095 = vdwg.mxu0
      %v1096 = vlaneseq
      %v1097 = vand.u32 %v1096, 127
      %vm1098 = vcmp.lt.s32.totalorder %v1097, 0
      %v1099 = vsub.s32 0, %v1097
      %v1100 = vsel %vm1098, %v1099, %v1097
      %v1101 = vshrl.u32 %v1100, 2
      %v1102 = vand.u32 %v1100, 3
      %v1103 = vsub.s32 0, %v1102
      %v1104 = vsel %vm1098, %v1103, %v1102
      %vm1105 = vcmp.ne.s32.totalorder %v1104, 0
      %vm1106 = vcmp.lt.s32.totalorder %v1104, 0
      %vm1107 = vmand %vm1106, %vm1105
      %v1108 = vadd.s32 %v1104, 4
      %v1109 = vsel %vm1107, %v1108, %v1104
      %vm1110 = vcmp.lt.s32.totalorder %v1109, 2
      %vm1111 = vcmp.lt.s32.totalorder %v1097, 8
      %vm1112 = vmand %vm1110, %vm1111
      %v1113 = vsel %vm1112, 1, 0
      %v1114 = vcvt.s32.f32 %v1113
      %v1115 = vmul.f32 %v1087, %v1114
      %v1116 = vmul.f32 %v1089, %v1114
      %v1117 = vmul.f32 %v1092, %v1114
      %v1118 = vmul.f32 %v1094, %v1114
      %1119 = vadd.xlane.f32.xlu0 %v1115
      %v1120 = vpop.xlane.xlu0 %1119
      %1121 = vadd.xlane.f32.xlu0 %v1116
      %v1122 = vpop.xlane.xlu0 %1121
      %1123 = vadd.xlane.f32.xlu0 %v1117
      %v1124 = vpop.xlane.xlu0 %1123
      %1125 = vadd.xlane.f32.xlu0 %v1118
      %v1126 = vpop.xlane.xlu0 %1125
      %v1127 = vmul.f32 %v1120, 0.25
      %v1128 = vmul.f32 %v1122, 0.25
      %v1129 = vmul.f32 %v1124, 0.25
      %v1130 = vmul.f32 %v1126, 0.25
      %v1131 = vmul.f32 %v1087, %v1087
      %v1132 = vmul.f32 %v1089, %v1089
      %v1133 = vmul.f32 %v1092, %v1092
      %v1134 = vmul.f32 %v1094, %v1094
      %v1135 = vmul.f32 %v1131, %v1114
      %v1136 = vmul.f32 %v1132, %v1114
      %v1137 = vmul.f32 %v1133, %v1114
      %v1138 = vmul.f32 %v1134, %v1114
      %1139 = vadd.xlane.f32.xlu0 %v1135
      %v1140 = vpop.xlane.xlu0 %1139
      %1141 = vadd.xlane.f32.xlu0 %v1136
      %v1142 = vpop.xlane.xlu0 %1141
      %1143 = vadd.xlane.f32.xlu0 %v1137
      %v1144 = vpop.xlane.xlu0 %1143
      %1145 = vadd.xlane.f32.xlu0 %v1138
      %v1146 = vpop.xlane.xlu0 %1145
      %v1147 = vmul.f32 %v1140, 0.25
      %v1148 = vmul.f32 %v1142, 0.25
      %v1149 = vmul.f32 %v1144, 0.25
      %v1150 = vmul.f32 %v1146, 0.25
      %v1151 = vmul.f32 %v1127, %v1127
      %v1152 = vmul.f32 %v1128, %v1128
      %v1153 = vmul.f32 %v1129, %v1129
      %v1154 = vmul.f32 %v1130, %v1130
      %v1155 = vsub.f32 %v1147, %v1151
      %v1156 = vsub.f32 %v1148, %v1152
      %v1157 = vsub.f32 %v1149, %v1153
      %v1158 = vsub.f32 %v1150, %v1154
      %v1159 = vmax.f32 %v1155, 0.0
      %v1160 = vmax.f32 %v1156, 0.0
      %v1161 = vmax.f32 %v1157, 0.0
      %v1162 = vmax.f32 %v1158, 0.0
      %v1163 = vsub.f32 %v1087, %v1127
      %v1164 = vsub.f32 %v1089, %v1128
      %v1165 = vsub.f32 %v1092, %v1129
      %v1166 = vsub.f32 %v1094, %v1130
      %v1167 = vadd.f32 %v1159, 1e-05
      %v1168 = vadd.f32 %v1160, 1e-05
      %v1169 = vadd.f32 %v1161, 1e-05
      %v1170 = vadd.f32 %v1162, 1e-05
      %v1171 = vrsqrt.pop %v1167
      %v1172 = vmul.f32 %v1171, %v1167
      %v1173 = vmul.f32 %v1172, %v1171
      %v1174 = vmul.f32 0.5, %v1173
      %v1175 = vsub.f32 1.5, %v1174
      %v1176 = vmul.f32 %v1171, %v1175
      %vm1177 = vweird.f32 %v1167
      %vm1178 = vweird.f32 %v1171
      %vm1179 = vmor %vm1177, %vm1178
      %v1180 = vsel %vm1179, %v1171, %v1176
      %v1181 = vrsqrt.pop %v1168
      %v1182 = vmul.f32 %v1181, %v1168
      %v1183 = vmul.f32 %v1182, %v1181
      %v1184 = vmul.f32 0.5, %v1183
      %v1185 = vsub.f32 1.5, %v1184
      %v1186 = vmul.f32 %v1181, %v1185
      %vm1187 = vweird.f32 %v1168
      %vm1188 = vweird.f32 %v1181
      %vm1189 = vmor %vm1187, %vm1188
      %v1190 = vsel %vm1189, %v1181, %v1186
      %v1191 = vrsqrt.pop %v1169
      %v1192 = vmul.f32 %v1191, %v1169
      %v1193 = vmul.f32 %v1192, %v1191
      %v1194 = vmul.f32 0.5, %v1193
      %v1195 = vsub.f32 1.5, %v1194
      %v1196 = vmul.f32 %v1191, %v1195
      %vm1197 = vweird.f32 %v1169
      %vm1198 = vweird.f32 %v1191
      %vm1199 = vmor %vm1197, %vm1198
      %v1200 = vsel %vm1199, %v1191, %v1196
      %v1201 = vrsqrt.pop %v1170
      %v1202 = vmul.f32 %v1201, %v1170
      %v1203 = vmul.f32 %v1202, %v1201
      %v1204 = vmul.f32 0.5, %v1203
      %v1205 = vsub.f32 1.5, %v1204
      %v1206 = vmul.f32 %v1201, %v1205
      %vm1207 = vweird.f32 %v1170
      %vm1208 = vweird.f32 %v1201
      %vm1209 = vmor %vm1207, %vm1208
      %v1210 = vsel %vm1209, %v1201, %v1206
      %v1211 = vmul.f32 %v1163, %v1180
      %v1212 = vmul.f32 %v1164, %v1190
      %v1213 = vmul.f32 %v1165, %v1200
      %v1214 = vmul.f32 %v1166, %v1210
      %vm1215 = vcmp.gt.f32.partialorder %v1211, 0.0
      %vm1216 = vcmp.gt.f32.partialorder %v1212, 0.0
      %vm1217 = vcmp.gt.f32.partialorder %v1213, 0.0
      %vm1218 = vcmp.gt.f32.partialorder %v1214, 0.0
      %v1219 = vmin.f32 %v1211, 0.0
      %v1220 = vmin.f32 %v1212, 0.0
      %v1221 = vmin.f32 %v1213, 0.0
      %v1222 = vmin.f32 %v1214, 0.0
      %v1223 = vmul.f32 %v1219, 1.442695
      %v1224 = vpow.pop %v1223
      %v1225 = vmul.f32 %v1220, 1.442695
      %v1226 = vpow.pop %v1225
      %v1227 = vmul.f32 %v1221, 1.442695
      %v1228 = vpow.pop %v1227
      %v1229 = vmul.f32 %v1222, 1.442695
      %v1230 = vpow.pop %v1229
      %v1231 = vsub.f32 %v1224, 1.0
      %v1232 = vsub.f32 %v1226, 1.0
      %v1233 = vsub.f32 %v1228, 1.0
      %v1234 = vsub.f32 %v1230, 1.0
      %v1235 = vsel %vm1215, %v1211, %v1231
      %v1236 = vsel %vm1216, %v1212, %v1232
      %v1237 = vsel %vm1217, %v1213, %v1233
      %v1238 = vsel %vm1218, %v1214, %v1234
      %v1239 = vpack.c.bf16 %v1235, %v1235
      %v1240 = vpack.c.bf16 %v1236, %v1236
      %v1241 = vpack.c.bf16 %v1237, %v1237
      %v1242 = vpack.c.bf16 %v1238, %v1238
      %1243 = vst [vmem:[%s170] sm:$0xf] %v1239
      %1244 = vst [vmem:[%s170 + $0x4] sm:$0xf] %v1240
      %1245 = vst [vmem:[%s170 + $0x8] sm:$0xf] %v1241
      %1246 = vst [vmem:[%s170 + $0xc] sm:$0xf] %v1242
      %p1247 = scmp.lt.s32.totalorder %s14, 1
      %s1248 = scalar_select %p1247, %s14, 1
      %s1249 = smul.addr %s1248, 4
      %s1250 = smul.addr %s1249, 4
      %s1251 = scalar_lea.vmem %s3, %s1250
      // Predicated region
      $region33: #{_lambda_.15} parent=31 // pred_check
        %p1252 = pneg %p100
      $region34: #{_lambda_.15} parent=31 // pred_check_branch
        %1254 = sbr.rel (%p1252) target = $region36
      $region35: #{_lambda_.15} parent=31 // pred_region
        _
      $region36: #{_lambda_.15} parent=31 // pred_fallthru
        _
    $region32: #{_lambda_.15} parent=5 // pred_fallthru
      _
    %p1255 = scmp.le.s32.totalorder 2, %s9
    // Predicated region
    $region37: #{_lambda_.15} parent=5 // pred_check
      %p1256 = pneg %p1255
    $region38: #{_lambda_.15} parent=5 // pred_check_branch
      %1258 = sbr.rel (%p1256) target = $region40
    $region39: #{_lambda_.15} parent=5 // pred_region
      %s1259 = ssub.s32 %s9, 2
      // Predicated region
      $region41: #{_lambda_.15} parent=39 // pred_check
        %p1260 = pneg %p106
      $region42: #{_lambda_.15} parent=39 // pred_check_branch
        %1262 = sbr.rel (%p1260) target = $region44
      $region43: #{_lambda_.15} parent=39 // pred_region
        %p1263 = scmp.lt.s32.totalorder %s15, 1
        %s1264 = scalar_select %p1263, %s15, 1
        %s1265 = smul.addr %s1264, 4
        %s1266 = smul.addr %s1265, 4
        %s1267 = scalar_lea.vmem %s3, %s1266
      $region44: #{_lambda_.15} parent=39 // pred_fallthru
        _
    $region40: #{_lambda_.15} parent=5 // pred_fallthru
      _
  $region6: #{_lambda_.15} parent=0 // loop_footer
    %s13 = sadd.s32 1, %s9
  $region7: #{_lambda_.15} parent=0 // loop_footer_branch
    %8 = sbr.rel target = $region3
  $region8: #{_lambda_.15} parent=0 // loop_exit
    _

// kernel: _lambda_.16
$region0: #{_lambda_.16}
  #allocation0 [shape = 'u32[]', space=smem, size = 0x4, offset = 0x4, fixed_abs, tag = 'smem constant byte address 0x4 - core index']
  #allocation1 [shape = 'u32[72,128]{1,0:T(1,128)}', space=vmem, size = 0x9000, scoped, tag = 'internal scratch']
  #allocation2 [shape = 'bf16[288,128]{1,0:T(8,128)(2,1)}', space=vmem, size = 0x12000, scoped, tag = 'scratch operand']
  %s0 = inlined_call_operand.vmem [shape: bf16[2,32,256], index: 0, kind: input, shape index: {}]
  %s1 = inlined_call_operand.vmem [shape: bf16[2,32,256], index: 1, kind: input, shape index: {}]
  %s2 = inlined_call_operand.vmem [shape: bf16[16,288], index: 2, kind: input, shape index: {}]
  %s3 = inlined_call_operand.vmem [shape: f32[16,1], index: 3, kind: input, shape index: {}]
  %s4 = inlined_call_operand.vmem [shape: bf16[2,16,128], index: 4, kind: output, shape index: {}]
  %s5 = sld [smem:[#allocation0]]
  $region49: #{_lambda_.16} parent=0
    _
  %s7 = ssub.s32 1, %s5
  %s8 = scalar_select 0, %s7, %s5
  loop: start=0, step=1, limit=4
  $region2: #{_lambda_.16} parent=0 // loop_pre_header
    _
  $region3: #{_lambda_.16} parent=0 // loop_header
    %s10 = sphi 0, %s14
    %p11 = scmp.ge.s32.totalorder %s10, 4
    %s20 = sphi 0, %s22
    %s23 = sphi 0, %s20
    %s24 = sphi 0, %s23
    %s40 = sphi 0, %s24
    %s46 = sphi 0, %s48
    %s49 = sphi 0, %s46
    %s50 = sphi 0, %s49
    %s66 = sphi 0, %s50
    %s70 = sphi 0, %s70
    %s72 = sphi 0, %s70
    %s73 = sphi 0, %s72
    %s87 = sphi 0, %s73
    %s91 = sphi 0, %s91
    %s93 = sphi 0, %s91
    %s94 = sphi 0, %s93
    %s108 = sphi 0, %s94
    %s114 = sphi 0, %s116
    %s117 = sphi 0, %s114
    %s118 = sphi 0, %s117
    %s134 = sphi 0, %s118
  $region4: #{_lambda_.16} parent=0 // loop_header_branch
    %13 = sbr.rel (%p11) target = $region8
  $region5: #{_lambda_.16} parent=0 // loop_body
    %s15 = ssub.s32 %s10, 1
    %s16 = ssub.s32 %s10, 2
    %s17 = sadd.s32 %s10, 1
    %s18 = ssub.s32 %s10, %s17
    %p19 = scmp.eq.s32.totalorder %s18, 0
    %s21 = sadd.s32 %s20, 1
    %s22 = scalar_select %p19, %s20, %s21
    %p25 = pneg %p19
    %p26 = scmp.eq.s32.totalorder %s10, 1
    %p27 = por %p25, %p26
    %p28 = scmp.ne.s32.totalorder %s20, %s23
    %p29 = scmp.eq.s32.totalorder %s10, 0
    %p30 = por %p28, %p29
    %p31 = scmp.ne.s32.totalorder %s20, %s23
    %p32 = scmp.eq.s32.totalorder %s15, 1
    %p33 = por %p31, %p32
    %p34 = scmp.ne.s32.totalorder %s23, %s24
    %p35 = scmp.eq.s32.totalorder %s15, 0
    %p36 = por %p34, %p35
    %p37 = scmp.ne.s32.totalorder %s23, %s24
    %p38 = scmp.eq.s32.totalorder %s16, 1
    %p39 = por %p37, %p38
    %p41 = scmp.ne.s32.totalorder %s24, %s40
    %p42 = scmp.eq.s32.totalorder %s16, 0
    %p43 = por %p41, %p42
    %s44 = ssub.s32 %s10, %s17
    %p45 = scmp.eq.s32.totalorder %s44, 0
    %s47 = sadd.s32 %s46, 1
    %s48 = scalar_select %p45, %s46, %s47
    %p51 = pneg %p45
    %p52 = scmp.eq.s32.totalorder %s10, 1
    %p53 = por %p51, %p52
    %p54 = scmp.ne.s32.totalorder %s46, %s49
    %p55 = scmp.eq.s32.totalorder %s10, 0
    %p56 = por %p54, %p55
    %p57 = scmp.ne.s32.totalorder %s46, %s49
    %p58 = scmp.eq.s32.totalorder %s15, 1
    %p59 = por %p57, %p58
    %p60 = scmp.ne.s32.totalorder %s49, %s50
    %p61 = scmp.eq.s32.totalorder %s15, 0
    %p62 = por %p60, %p61
    %p63 = scmp.ne.s32.totalorder %s49, %s50
    %p64 = scmp.eq.s32.totalorder %s16, 1
    %p65 = por %p63, %p64
    %p67 = scmp.ne.s32.totalorder %s50, %s66
    %p68 = scmp.eq.s32.totalorder %s16, 0
    %p69 = por %p67, %p68
    %s71 = sadd.s32 %s70, 1
    %p74 = scmp.eq.s32.totalorder %s10, 1
    %p75 = scmp.ne.s32.totalorder %s70, %s72
    %p76 = scmp.eq.s32.totalorder %s10, 0
    %p77 = por %p75, %p76
    %p78 = scmp.ne.s32.totalorder %s70, %s72
    %p79 = scmp.eq.s32.totalorder %s15, 1
    %p80 = por %p78, %p79
    %p81 = scmp.ne.s32.totalorder %s72, %s73
    %p82 = scmp.eq.s32.totalorder %s15, 0
    %p83 = por %p81, %p82
    %p84 = scmp.ne.s32.totalorder %s72, %s73
    %p85 = scmp.eq.s32.totalorder %s16, 1
    %p86 = por %p84, %p85
    %p88 = scmp.ne.s32.totalorder %s73, %s87
    %p89 = scmp.eq.s32.totalorder %s16, 0
    %p90 = por %p88, %p89
    %s92 = sadd.s32 %s91, 1
    %p95 = scmp.eq.s32.totalorder %s10, 1
    %p96 = scmp.ne.s32.totalorder %s91, %s93
    %p97 = scmp.eq.s32.totalorder %s10, 0
    %p98 = por %p96, %p97
    %p99 = scmp.ne.s32.totalorder %s91, %s93
    %p100 = scmp.eq.s32.totalorder %s15, 1
    %p101 = por %p99, %p100
    %p102 = scmp.ne.s32.totalorder %s93, %s94
    %p103 = scmp.eq.s32.totalorder %s15, 0
    %p104 = por %p102, %p103
    %p105 = scmp.ne.s32.totalorder %s93, %s94
    %p106 = scmp.eq.s32.totalorder %s16, 1
    %p107 = por %p105, %p106
    %p109 = scmp.ne.s32.totalorder %s94, %s108
    %p110 = scmp.eq.s32.totalorder %s16, 0
    %p111 = por %p109, %p110
    %s112 = ssub.s32 %s10, %s17
    %p113 = scmp.eq.s32.totalorder %s112, 0
    %s115 = sadd.s32 %s114, 1
    %s116 = scalar_select %p113, %s114, %s115
    %p119 = pneg %p113
    %p120 = scmp.eq.s32.totalorder %s10, 1
    %p121 = por %p119, %p120
    %p122 = scmp.ne.s32.totalorder %s114, %s117
    %p123 = scmp.eq.s32.totalorder %s10, 0
    %p124 = por %p122, %p123
    %p125 = scmp.ne.s32.totalorder %s114, %s117
    %p126 = scmp.eq.s32.totalorder %s15, 1
    %p127 = por %p125, %p126
    %p128 = scmp.ne.s32.totalorder %s117, %s118
    %p129 = scmp.eq.s32.totalorder %s15, 0
    %p130 = por %p128, %p129
    %p131 = scmp.ne.s32.totalorder %s117, %s118
    %p132 = scmp.eq.s32.totalorder %s16, 1
    %p133 = por %p131, %p132
    %p135 = scmp.ne.s32.totalorder %s118, %s134
    %p136 = scmp.eq.s32.totalorder %s16, 0
    %p137 = por %p135, %p136
    %p138 = scmp.le.s32.totalorder 1, %s10
    %p139 = scmp.lt.s32.totalorder %s10, 3
    %p140 = pnand %p138, %p139
    %p141 = pneg %p140
    // Predicated region
    $region9: #{_lambda_.16} parent=5 // pred_check
      _
    $region10: #{_lambda_.16} parent=5 // pred_check_branch
      %143 = sbr.rel (%p140) target = $region12
    $region11: #{_lambda_.16} parent=5 // pred_region
      %s144 = ssub.s32 %s10, 1
      // Predicated region
      $region13: #{_lambda_.16} parent=11 // pred_check
        %p145 = pneg %p83
      $region14: #{_lambda_.16} parent=11 // pred_check_branch
        %147 = sbr.rel (%p145) target = $region16
      $region15: #{_lambda_.16} parent=11 // pred_region
        _
      $region16: #{_lambda_.16} parent=11 // pred_fallthru
        _
      // Predicated region
      $region17: #{_lambda_.16} parent=11 // pred_check
        %p148 = pneg %p104
      $region18: #{_lambda_.16} parent=11 // pred_check_branch
        %150 = sbr.rel (%p148) target = $region20
      $region19: #{_lambda_.16} parent=11 // pred_region
        _
      $region20: #{_lambda_.16} parent=11 // pred_fallthru
        _
    $region12: #{_lambda_.16} parent=5 // pred_fallthru
      _
    %p151 = scmp.lt.s32.totalorder %s10, 2
    // Predicated region
    $region21: #{_lambda_.16} parent=5 // pred_check
      %p152 = pneg %p151
    $region22: #{_lambda_.16} parent=5 // pred_check_branch
      %154 = sbr.rel (%p152) target = $region24
    $region23: #{_lambda_.16} parent=5 // pred_region
      // Predicated region
      $region25: #{_lambda_.16} parent=23 // pred_check
        %p155 = pneg %p30
      $region26: #{_lambda_.16} parent=23 // pred_check_branch
        %157 = sbr.rel (%p155) target = $region28
      $region27: #{_lambda_.16} parent=23 // pred_region
        %p158 = scmp.lt.s32.totalorder %s10, 1
        %s159 = scalar_select %p158, %s10, 1
        %s160 = smul.addr %s159, 8
        %s161 = smul.addr %s160, 4
        %s162 = scalar_lea.vmem %s0, %s161
      $region28: #{_lambda_.16} parent=23 // pred_fallthru
        _
      // Predicated region
      $region29: #{_lambda_.16} parent=23 // pred_check
        %p163 = pneg %p56
      $region30: #{_lambda_.16} parent=23 // pred_check_branch
        %165 = sbr.rel (%p163) target = $region32
      $region31: #{_lambda_.16} parent=23 // pred_region
        %p166 = scmp.lt.s32.totalorder %s10, 1
        %s167 = scalar_select %p166, %s10, 1
        %s168 = smul.addr %s167, 8
        %s169 = smul.addr %s168, 4
        %s170 = scalar_lea.vmem %s1, %s169
      $region32: #{_lambda_.16} parent=23 // pred_fallthru
        _
    $region24: #{_lambda_.16} parent=5 // pred_fallthru
      _
    %p171 = scmp.le.s32.totalorder 1, %s10
    %p172 = scmp.lt.s32.totalorder %s10, 3
    %p173 = pnand %p171, %p172
    %p174 = pneg %p173
    // Predicated region
    $region33: #{_lambda_.16} parent=5 // pred_check
      _
    $region34: #{_lambda_.16} parent=5 // pred_check_branch
      %176 = sbr.rel (%p173) target = $region36
    $region35: #{_lambda_.16} parent=5 // pred_region
      %s177 = ssub.s32 %s10, 1
      %p178 = scmp.lt.s32.totalorder %s15, 1
      %s179 = scalar_select %p178, %s15, 1
      %s180 = smul.addr %s179, 8
      %s181 = smul.addr %s180, 4
      %s182 = scalar_lea.vmem %s0, %s181
      %p183 = pneg %p36
      %p184 = pneg %p33
      %p185 = scmp.lt.s32.totalorder %s15, 1
      %s186 = scalar_select %p185, %s15, 1
      %s187 = smul.addr %s186, 8
      %s188 = smul.addr %s187, 4
      %s189 = scalar_lea.vmem %s1, %s188
      %p190 = pneg %p62
      %p191 = pneg %p59
      %p192 = pneg %p83
      %p193 = pneg %p80
      %p194 = pneg %p104
      %p195 = pneg %p101
      %p196 = pneg %p130
      %p197 = pneg %p127
      %p198 = scmp.lt.s32.totalorder %s15, 1
      %s199 = scalar_select %p198, %s15, 1
      %s200 = smul.addr %s199, 2
      %s201 = smul.addr %s200, 4
      %s202 = scalar_lea.vmem %s4, %s201
      %p203 = scmp.lt.s32.totalorder %s15, 1
      %s204 = scalar_select %p203, %s15, 1
      %s205 = smul.addr %s204, 8
      %s206 = smul.addr %s205, 4
      %s207 = scalar_lea.vmem %s0, %s206
      %p208 = scmp.lt.s32.totalorder %s15, 1
      %s209 = scalar_select %p208, %s15, 1
      %s210 = smul.addr %s209, 8
      %s211 = smul.addr %s210, 4
      %s212 = scalar_lea.vmem %s1, %s211
      %p213 = scmp.lt.s32.totalorder %s15, 1
      %s214 = scalar_select %p213, %s15, 1
      %s215 = smul.addr %s214, 2
      %s216 = smul.addr %s215, 4
      %s217 = scalar_lea.vmem %s4, %s216
      %v219 = vld [vmem:[%s207] sm:$0xff]
      %v220 = vld [vmem:[%s207 + $0x8] sm:$0xff]
      %v221 = vld [vmem:[%s207 + $0x10] sm:$0xff]
      %v222 = vld [vmem:[%s207 + $0x18] sm:$0xff]
      %v223 = vunpack.c.l.bf16 %v219
      %v224 = vunpack.c.h.bf16 %v219
      %v225 = vunpack.c.l.bf16 %v220
      %v226 = vunpack.c.h.bf16 %v220
      %v227 = vunpack.c.l.bf16 %v221
      %v228 = vunpack.c.h.bf16 %v221
      %v229 = vunpack.c.l.bf16 %v222
      %v230 = vunpack.c.h.bf16 %v222
      %v231 = vld [vmem:[%s212] sm:$0xff]
      %v232 = vld [vmem:[%s212 + $0x8] sm:$0xff]
      %v233 = vld [vmem:[%s212 + $0x10] sm:$0xff]
      %v234 = vld [vmem:[%s212 + $0x18] sm:$0xff]
      %v235 = vunpack.c.l.bf16 %v231
      %v236 = vunpack.c.h.bf16 %v231
      %v237 = vunpack.c.l.bf16 %v232
      %v238 = vunpack.c.h.bf16 %v232
      %v239 = vunpack.c.l.bf16 %v233
      %v240 = vunpack.c.h.bf16 %v233
      %v241 = vunpack.c.l.bf16 %v234
      %v242 = vunpack.c.h.bf16 %v234
      %v243 = vadd.f32 %v223, %v235
      %v244 = vadd.f32 %v224, %v236
      %v245 = vadd.f32 %v225, %v237
      %v246 = vadd.f32 %v226, %v238
      %v247 = vadd.f32 %v227, %v239
      %v248 = vadd.f32 %v228, %v240
      %v249 = vadd.f32 %v229, %v241
      %v250 = vadd.f32 %v230, %v242
      %v251 = vpack.c.bf16 %v243, %v243
      %v252 = vpack.c.bf16 %v245, %v245
      %v253 = vpack.c.bf16 %v247, %v247
      %v254 = vpack.c.bf16 %v249, %v249
      %255 = vst [vmem:[#allocation2] sm:$0xf] %v251
      %256 = vst [vmem:[#allocation2 + $0x4] sm:$0xf] %v252
      %257 = vst [vmem:[#allocation2 + $0x8] sm:$0xf] %v253
      %258 = vst [vmem:[#allocation2 + $0xc] sm:$0xf] %v254
      %v259 = vpack.c.bf16 %v244, %v243
      %v260 = vpack.c.bf16 %v246, %v245
      %v261 = vpack.c.bf16 %v248, %v247
      %v262 = vpack.c.bf16 %v250, %v249
      %267 = vrot.lane.b32.xlu0 %v259, 127
      %v268 = vpop.permute.xlu0 %267
      %269 = vrot.lane.b32.xlu0 %v260, 127
      %v270 = vpop.permute.xlu0 %269
      %271 = vrot.lane.b32.xlu0 %v261, 127
      %v272 = vpop.permute.xlu0 %271
      %273 = vrot.lane.b32.xlu0 %v262, 127
      %v274 = vpop.permute.xlu0 %273
      %v275 = vrot.slane %v268, 4
      %v276 = vrot.slane %v270, 4
      %v277 = vrot.slane %v272, 4
      %v278 = vrot.slane %v274, 4
      %vm279 = vcmask 1039360
      %v280 = vsel %vm279, %v268, %v275
      %v281 = vsel %vm279, %v270, %v276
      %v282 = vsel %vm279, %v272, %v277
      %v283 = vsel %vm279, %v274, %v278
      %288 = vst [vmem:[#allocation2 + $0x10] sm:$0xf] %v280
      %289 = vst [vmem:[#allocation2 + $0x14] sm:$0xf] %v281
      %290 = vst [vmem:[#allocation2 + $0x18] sm:$0xf] %v282
      %291 = vst [vmem:[#allocation2 + $0x1c] sm:$0xf] %v283
      %292 = vrot.lane.b32.xlu0 %v259, 126
      %v293 = vpop.permute.xlu0 %292
      %294 = vrot.lane.b32.xlu0 %v260, 126
      %v295 = vpop.permute.xlu0 %294
      %296 = vrot.lane.b32.xlu0 %v261, 126
      %v297 = vpop.permute.xlu0 %296
      %298 = vrot.lane.b32.xlu0 %v262, 126
      %v299 = vpop.permute.xlu0 %298
      %v300 = vrot.slane %v293, 4
      %v301 = vrot.slane %v295, 4
      %v302 = vrot.slane %v297, 4
      %v303 = vrot.slane %v299, 4
      %vm304 = vcmask 1031168
      %v305 = vsel %vm304, %v293, %v300
      %v306 = vsel %vm304, %v295, %v301
      %v307 = vsel %vm304, %v297, %v302
      %v308 = vsel %vm304, %v299, %v303
      %313 = vst [vmem:[#allocation2 + $0x20] sm:$0xf] %v305
      %314 = vst [vmem:[#allocation2 + $0x24] sm:$0xf] %v306
      %315 = vst [vmem:[#allocation2 + $0x28] sm:$0xf] %v307
      %316 = vst [vmem:[#allocation2 + $0x2c] sm:$0xf] %v308
      %317 = vrot.lane.b32.xlu0 %v259, 122
      %v318 = vpop.permute.xlu0 %317
      %319 = vrot.lane.b32.xlu0 %v260, 122
      %v320 = vpop.permute.xlu0 %319
      %321 = vrot.lane.b32.xlu0 %v261, 122
      %v322 = vpop.permute.xlu0 %321
      %323 = vrot.lane.b32.xlu0 %v262, 122
      %v324 = vpop.permute.xlu0 %323
      %v325 = vrot.slane %v318, 4
      %v326 = vrot.slane %v320, 4
      %v327 = vrot.slane %v322, 4
      %v328 = vrot.slane %v324, 4
      %vm329 = vcmask 998400
      %v330 = vsel %vm329, %v318, %v325
      %v331 = vsel %vm329, %v320, %v326
      %v332 = vsel %vm329, %v322, %v327
      %v333 = vsel %vm329, %v324, %v328
      %338 = vst [vmem:[#allocation2 + $0x30] sm:$0xf] %v330
      %339 = vst [vmem:[#allocation2 + $0x34] sm:$0xf] %v331
      %340 = vst [vmem:[#allocation2 + $0x38] sm:$0xf] %v332
      %341 = vst [vmem:[#allocation2 + $0x3c] sm:$0xf] %v333
      %342 = vrot.lane.b32.xlu0 %v259, 121
      %v343 = vpop.permute.xlu0 %342
      %344 = vrot.lane.b32.xlu0 %v260, 121
      %v345 = vpop.permute.xlu0 %344
      %346 = vrot.lane.b32.xlu0 %v261, 121
      %v347 = vpop.permute.xlu0 %346
      %348 = vrot.lane.b32.xlu0 %v262, 121
      %v349 = vpop.permute.xlu0 %348
      %v350 = vrot.slane %v343, 4
      %v351 = vrot.slane %v345, 4
      %v352 = vrot.slane %v347, 4
      %v353 = vrot.slane %v349, 4
      %vm354 = vcmask 990208
      %v355 = vsel %vm354, %v343, %v350
      %v356 = vsel %vm354, %v345, %v351
      %v357 = vsel %vm354, %v347, %v352
      %v358 = vsel %vm354, %v349, %v353
      %363 = vst [vmem:[#allocation2 + $0x40] sm:$0xf] %v355
      %364 = vst [vmem:[#allocation2 + $0x44] sm:$0xf] %v356
      %365 = vst [vmem:[#allocation2 + $0x48] sm:$0xf] %v357
      %366 = vst [vmem:[#allocation2 + $0x4c] sm:$0xf] %v358
      %367 = vrot.lane.b32.xlu0 %v259, 120
      %v368 = vpop.permute.xlu0 %367
      %369 = vrot.lane.b32.xlu0 %v260, 120
      %v370 = vpop.permute.xlu0 %369
      %371 = vrot.lane.b32.xlu0 %v261, 120
      %v372 = vpop.permute.xlu0 %371
      %373 = vrot.lane.b32.xlu0 %v262, 120
      %v374 = vpop.permute.xlu0 %373
      %v375 = vrot.slane %v368, 4
      %v376 = vrot.slane %v370, 4
      %v377 = vrot.slane %v372, 4
      %v378 = vrot.slane %v374, 4
      %vm379 = vcmask 982016
      %v380 = vsel %vm379, %v368, %v375
      %v381 = vsel %vm379, %v370, %v376
      %v382 = vsel %vm379, %v372, %v377
      %v383 = vsel %vm379, %v374, %v378
      %388 = vst [vmem:[#allocation2 + $0x50] sm:$0xf] %v380
      %389 = vst [vmem:[#allocation2 + $0x54] sm:$0xf] %v381
      %390 = vst [vmem:[#allocation2 + $0x58] sm:$0xf] %v382
      %391 = vst [vmem:[#allocation2 + $0x5c] sm:$0xf] %v383
      %392 = vrot.lane.b32.xlu0 %v259, 116
      %v393 = vpop.permute.xlu0 %392
      %394 = vrot.lane.b32.xlu0 %v260, 116
      %v395 = vpop.permute.xlu0 %394
      %396 = vrot.lane.b32.xlu0 %v261, 116
      %v397 = vpop.permute.xlu0 %396
      %398 = vrot.lane.b32.xlu0 %v262, 116
      %v399 = vpop.permute.xlu0 %398
      %v400 = vrot.slane %v393, 4
      %v401 = vrot.slane %v395, 4
      %v402 = vrot.slane %v397, 4
      %v403 = vrot.slane %v399, 4
      %vm404 = vcmask 949248
      %v405 = vsel %vm404, %v393, %v400
      %v406 = vsel %vm404, %v395, %v401
      %v407 = vsel %vm404, %v397, %v402
      %v408 = vsel %vm404, %v399, %v403
      %413 = vst [vmem:[#allocation2 + $0x60] sm:$0xf] %v405
      %414 = vst [vmem:[#allocation2 + $0x64] sm:$0xf] %v406
      %415 = vst [vmem:[#allocation2 + $0x68] sm:$0xf] %v407
      %416 = vst [vmem:[#allocation2 + $0x6c] sm:$0xf] %v408
      %417 = vrot.lane.b32.xlu0 %v259, 115
      %v418 = vpop.permute.xlu0 %417
      %419 = vrot.lane.b32.xlu0 %v260, 115
      %v420 = vpop.permute.xlu0 %419
      %421 = vrot.lane.b32.xlu0 %v261, 115
      %v422 = vpop.permute.xlu0 %421
      %423 = vrot.lane.b32.xlu0 %v262, 115
      %v424 = vpop.permute.xlu0 %423
      %v425 = vrot.slane %v418, 4
      %v426 = vrot.slane %v420, 4
      %v427 = vrot.slane %v422, 4
      %v428 = vrot.slane %v424, 4
      %vm429 = vcmask 941056
      %v430 = vsel %vm429, %v418, %v425
      %v431 = vsel %vm429, %v420, %v426
      %v432 = vsel %vm429, %v422, %v427
      %v433 = vsel %vm429, %v424, %v428
      %438 = vst [vmem:[#allocation2 + $0x70] sm:$0xf] %v430
      %439 = vst [vmem:[#allocation2 + $0x74] sm:$0xf] %v431
      %440 = vst [vmem:[#allocation2 + $0x78] sm:$0xf] %v432
      %441 = vst [vmem:[#allocation2 + $0x7c] sm:$0xf] %v433
      %442 = vrot.lane.b32.xlu0 %v259, 114
      %v443 = vpop.permute.xlu0 %442
      %444 = vrot.lane.b32.xlu0 %v260, 114
      %v445 = vpop.permute.xlu0 %444
      %446 = vrot.lane.b32.xlu0 %v261, 114
      %v447 = vpop.permute.xlu0 %446
      %448 = vrot.lane.b32.xlu0 %v262, 114
      %v449 = vpop.permute.xlu0 %448
      %v450 = vrot.slane %v443, 4
      %v451 = vrot.slane %v445, 4
      %v452 = vrot.slane %v447, 4
      %v453 = vrot.slane %v449, 4
      %vm454 = vcmask 932864
      %v455 = vsel %vm454, %v443, %v450
      %v456 = vsel %vm454, %v445, %v451
      %v457 = vsel %vm454, %v447, %v452
      %v458 = vsel %vm454, %v449, %v453
      %463 = vst [vmem:[#allocation2 + $0x80] sm:$0xf] %v455
      %464 = vst [vmem:[#allocation2 + $0x84] sm:$0xf] %v456
      %465 = vst [vmem:[#allocation2 + $0x88] sm:$0xf] %v457
      %466 = vst [vmem:[#allocation2 + $0x8c] sm:$0xf] %v458
      %v467 = vld [vmem:[%s2] sm:$0xff]
      %v468 = vld [vmem:[%s2 + $0x8] sm:$0xf]
      %v469 = vld [vmem:[%s2 + $0xc] sm:$0xff]
      %v470 = vld [vmem:[%s2 + $0x14] sm:$0xf]
      %v471 = vld [vmem:[#allocation2] sm:$0xf]
      %v472 = vld [vmem:[#allocation2 + $0x4] sm:$0xf]
      %v473 = vld [vmem:[#allocation2 + $0x8] sm:$0xf]
      %v474 = vld [vmem:[#allocation2 + $0xc] sm:$0xf]
      %v475 = vld [vmem:[#allocation2 + $0x10] sm:$0xf]
      %v476 = vld [vmem:[#allocation2 + $0x14] sm:$0xf]
      %v477 = vld [vmem:[#allocation2 + $0x18] sm:$0xf]
      %v478 = vld [vmem:[#allocation2 + $0x1c] sm:$0xf]
      %v479 = vld [vmem:[#allocation2 + $0x20] sm:$0xf]
      %v480 = vld [vmem:[#allocation2 + $0x24] sm:$0xf]
      %v481 = vld [vmem:[#allocation2 + $0x28] sm:$0xf]
      %v482 = vld [vmem:[#allocation2 + $0x2c] sm:$0xf]
      %v483 = vld [vmem:[#allocation2 + $0x30] sm:$0xf]
      %v484 = vld [vmem:[#allocation2 + $0x34] sm:$0xf]
      %v485 = vld [vmem:[#allocation2 + $0x38] sm:$0xf]
      %v486 = vld [vmem:[#allocation2 + $0x3c] sm:$0xf]
      %v487 = vld [vmem:[#allocation2 + $0x40] sm:$0xf]
      %v488 = vld [vmem:[#allocation2 + $0x44] sm:$0xf]
      %v489 = vld [vmem:[#allocation2 + $0x48] sm:$0xf]
      %v490 = vld [vmem:[#allocation2 + $0x4c] sm:$0xf]
      %v491 = vld [vmem:[#allocation2 + $0x50] sm:$0xf]
      %v492 = vld [vmem:[#allocation2 + $0x54] sm:$0xf]
      %v493 = vld [vmem:[#allocation2 + $0x58] sm:$0xf]
      %v494 = vld [vmem:[#allocation2 + $0x5c] sm:$0xf]
      %v495 = vld [vmem:[#allocation2 + $0x60] sm:$0xf]
      %v496 = vld [vmem:[#allocation2 + $0x64] sm:$0xf]
      %v497 = vld [vmem:[#allocation2 + $0x68] sm:$0xf]
      %v498 = vld [vmem:[#allocation2 + $0x6c] sm:$0xf]
      %v499 = vld [vmem:[#allocation2 + $0x70] sm:$0xf]
      %v500 = vld [vmem:[#allocation2 + $0x74] sm:$0xf]
      %v501 = vld [vmem:[#allocation2 + $0x78] sm:$0xf]
      %v502 = vld [vmem:[#allocation2 + $0x7c] sm:$0xf]
      %v503 = vld [vmem:[#allocation2 + $0x80] sm:$0xf]
      %v504 = vld [vmem:[#allocation2 + $0x84] sm:$0xf]
      %v505 = vld [vmem:[#allocation2 + $0x88] sm:$0xf]
      %v506 = vld [vmem:[#allocation2 + $0x8c] sm:$0xf]
      %v507 = vld [vmem:[%s3] sm:$0xff]
      %v508 = vld [vmem:[%s3 + $0x8] sm:$0xff]
      %510 = vset.pattern.permute.xlu0 0
      %511 = vperm.xlu0 %510, %v507
      %v512 = vpop.permute.xlu0 %511
      %515 = vset.pattern.permute.xlu0 0
      %516 = vperm.xlu0 %515, %v508
      %v517 = vpop.permute.xlu0 %516
      %v523 = vunpack.c.l.b16 %v467
      %v524 = vunpack.c.h.b16 %v467
      %v525 = vunpack.c.l.b16 %v468
      %v526 = vunpack.c.l.b16 %v469
      %v527 = vunpack.c.h.b16 %v469
      %v528 = vunpack.c.l.b16 %v470
      %v529 = vpack.c.b16 %v526, %v523
      %v530 = vpack.c.b16 %v527, %v524
      %v531 = vpack.c.b16 %v528, %v525
      %v570 = vunpack.c.l.b16 %v471
      %v571 = vunpack.c.l.b16 %v472
      %v572 = vunpack.c.l.b16 %v473
      %v573 = vunpack.c.l.b16 %v474
      %v574 = vunpack.c.l.b16 %v475
      %v575 = vunpack.c.l.b16 %v476
      %v576 = vunpack.c.l.b16 %v477
      %v577 = vunpack.c.l.b16 %v478
      %v578 = vunpack.c.l.b16 %v479
      %v579 = vunpack.c.l.b16 %v480
      %v580 = vunpack.c.l.b16 %v481
      %v581 = vunpack.c.l.b16 %v482
      %v582 = vunpack.c.l.b16 %v483
      %v583 = vunpack.c.l.b16 %v484
      %v584 = vunpack.c.l.b16 %v485
      %v585 = vunpack.c.l.b16 %v486
      %v586 = vunpack.c.l.b16 %v487
      %v587 = vunpack.c.l.b16 %v488
      %v588 = vunpack.c.l.b16 %v489
      %v589 = vunpack.c.l.b16 %v490
      %v590 = vunpack.c.l.b16 %v491
      %v591 = vunpack.c.l.b16 %v492
      %v592 = vunpack.c.l.b16 %v493
      %v593 = vunpack.c.l.b16 %v494
      %v594 = vunpack.c.l.b16 %v495
      %v595 = vunpack.c.l.b16 %v496
      %v596 = vunpack.c.l.b16 %v497
      %v597 = vunpack.c.l.b16 %v498
      %v598 = vunpack.c.l.b16 %v499
      %v599 = vunpack.c.l.b16 %v500
      %v600 = vunpack.c.l.b16 %v501
      %v601 = vunpack.c.l.b16 %v502
      %v602 = vunpack.c.l.b16 %v503
      %v603 = vunpack.c.l.b16 %v504
      %v604 = vunpack.c.l.b16 %v505
      %v605 = vunpack.c.l.b16 %v506
      %v606 = vpack.c.b16 %v571, %v570
      %v607 = vpack.c.b16 %v573, %v572
      %v608 = vpack.c.b16 %v575, %v574
      %v609 = vpack.c.b16 %v577, %v576
      %v610 = vpack.c.b16 %v579, %v578
      %v611 = vpack.c.b16 %v581, %v580
      %v612 = vpack.c.b16 %v583, %v582
      %v613 = vpack.c.b16 %v585, %v584
      %v614 = vpack.c.b16 %v587, %v586
      %v615 = vpack.c.b16 %v589, %v588
      %v616 = vpack.c.b16 %v591, %v590
      %v617 = vpack.c.b16 %v593, %v592
      %v618 = vpack.c.b16 %v595, %v594
      %v619 = vpack.c.b16 %v597, %v596
      %v620 = vpack.c.b16 %v599, %v598
      %v621 = vpack.c.b16 %v601, %v600
      %v622 = vpack.c.b16 %v603, %v602
      %v623 = vpack.c.b16 %v605, %v604
      %vm642 = vcmask 261120
      %v644 = vsel %vm642, %v531, 0
      %646 = vmatpush.bf16.msra.mxu0 %v613
      %647 = vmatpush.bf16.msra.mxu0 %v612
      %648 = vmatpush.bf16.msra.mxu0 %v611
      %649 = vmatpush.bf16.msra.mxu0 %v610
      %650 = vmatpush.bf16.msra.mxu0 %v609
      %651 = vmatpush.bf16.msra.mxu0 %v608
      %652 = vmatpush.bf16.msra.mxu0 %v607
      %653 = vmatpush.bf16.msra.mxu0 %v606
      %654 = vmatmul.bf16.gmra.mxu0 %v529
      %v655 = vpop.f32.mrf.mxu0
      %v656 = vadd.f32 %v512, %v655
      %v657 = vpop.f32.mrf.mxu0
      %v658 = vadd.f32 %v517, %v657
      %659 = vdwg.mxu0
      %660 = vmatpush.bf16.msra.mxu0 %v621
      %661 = vmatpush.bf16.msra.mxu0 %v620
      %662 = vmatpush.bf16.msra.mxu0 %v619
      %663 = vmatpush.bf16.msra.mxu0 %v618
      %664 = vmatpush.bf16.msra.mxu0 %v617
      %665 = vmatpush.bf16.msra.mxu0 %v616
      %666 = vmatpush.bf16.msra.mxu0 %v615
      %667 = vmatpush.bf16.msra.mxu0 %v614
      %668 = vmatmul.bf16.gmra.mxu0 %v530
      %v669 = vpop.f32.mrf.mxu0
      %v670 = vadd.f32 %v656, %v669
      %v671 = vpop.f32.mrf.mxu0
      %v672 = vadd.f32 %v658, %v671
      %673 = vdwg.mxu0
      %674 = vmatpush.bf16.msra.mxu0 0
      %675 = vmatpush.bf16.msra.mxu0 0
      %676 = vmatpush.bf16.msra.mxu0 0
      %677 = vmatpush.bf16.msra.mxu0 0
      %678 = vmatpush.bf16.msra.mxu0 0
      %679 = vmatpush.bf16.msra.mxu0 0
      %680 = vmatpush.bf16.msra.mxu0 %v623
      %681 = vmatpush.bf16.msra.mxu0 %v622
      %682 = vmatmul.bf16.gmra.mxu0 %v644
      %v683 = vpop.f32.mrf.mxu0
      %v684 = vadd.f32 %v670, %v683
      %v685 = vpop.f32.mrf.mxu0
      %v686 = vadd.f32 %v672, %v685
      %687 = vdwg.mxu0
      %v688 = vlaneseq
      %v689 = vand.u32 %v688, 127
      %vm690 = vcmp.lt.s32.totalorder %v689, 0
      %v691 = vsub.s32 0, %v689
      %v692 = vsel %vm690, %v691, %v689
      %v693 = vand.u32 %v692, 65535
      %v694 = vshrl.u32 %v692, 16
      %v696 = vmul.u32 %v693, 43691
      %v697 = vmul.u32 %v693, 43690
      %v698 = vmul.u32 %v694, 43691
      %v699 = vmul.u32 %v694, 43690
      %v700 = vshll.u32 %v697, 16
      %v701 = vshrl.u32 %v697, 16
      %v702 = vshll.u32 %v698, 16
      %v703 = vshrl.u32 %v698, 16
      %vm704 = vc.u32 %v696, %v700
      %v705 = vsel %vm704, 1, 0
      %v706 = vadd.s32 %v696, %v700
      %v707 = vadd.s32 %v699, %v705
      %vm708 = vc.u32 %v706, %v702
      %v709 = vsel %vm708, 1, 0
      %v710 = vadd.s32 %v706, %v702
      %v711 = vadd.s32 %v707, %v709
      %v712 = vadd.s32 %v711, %v701
      %v713 = vadd.s32 %v712, %v703
      %v714 = vshrl.u32 %v713, 2
      %v715 = vmul.u32 %v714, 6
      %v716 = vsub.s32 %v692, %v715
      %v717 = vsub.s32 0, %v716
      %v718 = vsel %vm690, %v717, %v716
      %vm719 = vcmp.ne.s32.totalorder %v718, 0
      %vm720 = vcmp.lt.s32.totalorder %v718, 0
      %vm721 = vmand %vm720, %vm719
      %v722 = vadd.s32 %v718, 6
      %v723 = vsel %vm721, %v722, %v718
      %vm724 = vcmp.lt.s32.totalorder %v723, 4
      %vm725 = vcmp.lt.s32.totalorder %v689, 24
      %vm726 = vmand %vm724, %vm725
      %v727 = vsel %vm726, 1, 0
      %v728 = vcvt.s32.f32 %v727
      %v729 = vmul.f32 %v684, %v728
      %v730 = vmul.f32 %v686, %v728
      %731 = vadd.xlane.f32.xlu0 %v729
      %v732 = vpop.xlane.xlu0 %731
      %733 = vadd.xlane.f32.xlu0 %v730
      %v734 = vpop.xlane.xlu0 %733
      %v735 = vmul.f32 %v732, 0.0625
      %v736 = vmul.f32 %v734, 0.0625
      %v737 = vmul.f32 %v684, %v684
      %v738 = vmul.f32 %v686, %v686
      %v739 = vmul.f32 %v737, %v728
      %v740 = vmul.f32 %v738, %v728
      %741 = vadd.xlane.f32.xlu0 %v739
      %v742 = vpop.xlane.xlu0 %741
      %743 = vadd.xlane.f32.xlu0 %v740
      %v744 = vpop.xlane.xlu0 %743
      %v745 = vmul.f32 %v742, 0.0625
      %v746 = vmul.f32 %v744, 0.0625
      %v747 = vmul.f32 %v735, %v735
      %v748 = vmul.f32 %v736, %v736
      %v749 = vsub.f32 %v745, %v747
      %v750 = vsub.f32 %v746, %v748
      %v751 = vmax.f32 %v749, 0.0
      %v752 = vmax.f32 %v750, 0.0
      %v753 = vsub.f32 %v684, %v735
      %v754 = vsub.f32 %v686, %v736
      %v755 = vadd.f32 %v751, 1e-05
      %v756 = vadd.f32 %v752, 1e-05
      %v757 = vrsqrt.pop %v755
      %v758 = vmul.f32 %v757, %v755
      %v759 = vmul.f32 %v758, %v757
      %v760 = vmul.f32 0.5, %v759
      %v761 = vsub.f32 1.5, %v760
      %v762 = vmul.f32 %v757, %v761
      %vm763 = vweird.f32 %v755
      %vm764 = vweird.f32 %v757
      %vm765 = vmor %vm763, %vm764
      %v766 = vsel %vm765, %v757, %v762
      %v767 = vrsqrt.pop %v756
      %v768 = vmul.f32 %v767, %v756
      %v769 = vmul.f32 %v768, %v767
      %v770 = vmul.f32 0.5, %v769
      %v771 = vsub.f32 1.5, %v770
      %v772 = vmul.f32 %v767, %v771
      %vm773 = vweird.f32 %v756
      %vm774 = vweird.f32 %v767
      %vm775 = vmor %vm773, %vm774
      %v776 = vsel %vm775, %v767, %v772
      %v777 = vmul.f32 %v753, %v766
      %v778 = vmul.f32 %v754, %v776
      %vm779 = vcmp.gt.f32.partialorder %v777, 0.0
      %vm780 = vcmp.gt.f32.partialorder %v778, 0.0
      %v781 = vmin.f32 %v777, 0.0
      %v782 = vmin.f32 %v778, 0.0
      %v783 = vmul.f32 %v781, 1.442695
      %v784 = vpow.pop %v783
      %v785 = vmul.f32 %v782, 1.442695
      %v786 = vpow.pop %v785
      %v787 = vsub.f32 %v784, 1.0
      %v788 = vsub.f32 %v786, 1.0
      %v789 = vsel %vm779, %v777, %v787
      %v790 = vsel %vm780, %v778, %v788
      %v791 = vpack.c.bf16 %v789, %v789
      %v792 = vpack.c.bf16 %v790, %v790
      %793 = vst [vmem:[%s217] sm:$0xf] %v791
      %794 = vst [vmem:[%s217 + $0x4] sm:$0xf] %v792
      %p795 = scmp.lt.s32.totalorder %s15, 1
      %s796 = scalar_select %p795, %s15, 1
      %s797 = smul.addr %s796, 2
      %s798 = smul.addr %s797, 4
      %s799 = scalar_lea.vmem %s4, %s798
      // Predicated region
      $region37: #{_lambda_.16} parent=35 // pred_check
        %p800 = pneg %p127
      $region38: #{_lambda_.16} parent=35 // pred_check_branch
        %802 = sbr.rel (%p800) target = $region40
      $region39: #{_lambda_.16} parent=35 // pred_region
        _
      $region40: #{_lambda_.16} parent=35 // pred_fallthru
        _
    $region36: #{_lambda_.16} parent=5 // pred_fallthru
      _
    %p803 = scmp.le.s32.totalorder 2, %s10
    // Predicated region
    $region41: #{_lambda_.16} parent=5 // pred_check
      %p804 = pneg %p803
    $region42: #{_lambda_.16} parent=5 // pred_check_branch
      %806 = sbr.rel (%p804) target = $region44
    $region43: #{_lambda_.16} parent=5 // pred_region
      %s807 = ssub.s32 %s10, 2
      // Predicated region
      $region45: #{_lambda_.16} parent=43 // pred_check
        %p808 = pneg %p133
      $region46: #{_lambda_.16} parent=43 // pred_check_branch
        %810 = sbr.rel (%p808) target = $region48
      $region47: #{_lambda_.16} parent=43 // pred_region
        %p811 = scmp.lt.s32.totalorder %s16, 1
        %s812 = scalar_select %p811, %s16, 1
        %s813 = smul.addr %s812, 2
        %s814 = smul.addr %s813, 4
        %s815 = scalar_lea.vmem %s4, %s814
      $region48: #{_lambda_.16} parent=43 // pred_fallthru
        _
    $region44: #{_lambda_.16} parent=5 // pred_fallthru
      _
  $region6: #{_lambda_.16} parent=0 // loop_footer
    %s14 = sadd.s32 1, %s10
  $region7: #{_lambda_.16} parent=0 // loop_footer_branch
    %9 = sbr.rel target = $region3
  $region8: #{_lambda_.16} parent=0 // loop_exit
    _

// kernel: _lambda_.17
$region0: #{_lambda_.17}
  #allocation0 [shape = 'u32[]', space=smem, size = 0x4, offset = 0x4, fixed_abs, tag = 'smem constant byte address 0x4 - core index']
  #allocation1 [shape = 'u32[72,128]{1,0:T(1,128)}', space=vmem, size = 0x9000, scoped, tag = 'internal scratch']
  #allocation2 [shape = 'bf16[144,128]{1,0:T(8,128)(2,1)}', space=vmem, size = 0x9000, scoped, tag = 'scratch operand']
  %s0 = inlined_call_operand.vmem [shape: bf16[2,16,256], index: 0, kind: input, shape index: {}]
  %s1 = inlined_call_operand.vmem [shape: bf16[2,16,256], index: 1, kind: input, shape index: {}]
  %s2 = inlined_call_operand.vmem [shape: bf16[8,144], index: 2, kind: input, shape index: {}]
  %s3 = inlined_call_operand.vmem [shape: f32[8,1], index: 3, kind: input, shape index: {}]
  %s4 = inlined_call_operand.vmem [shape: bf16[2,8,128], index: 4, kind: output, shape index: {}]
  %s5 = sld [smem:[#allocation0]]
  $region49: #{_lambda_.17} parent=0
    _
  %s7 = ssub.s32 1, %s5
  %s8 = scalar_select 0, %s7, %s5
  loop: start=0, step=1, limit=4
  $region2: #{_lambda_.17} parent=0 // loop_pre_header
    _
  $region3: #{_lambda_.17} parent=0 // loop_header
    %s10 = sphi 0, %s14
    %p11 = scmp.ge.s32.totalorder %s10, 4
    %s20 = sphi 0, %s22
    %s23 = sphi 0, %s20
    %s24 = sphi 0, %s23
    %s40 = sphi 0, %s24
    %s46 = sphi 0, %s48
    %s49 = sphi 0, %s46
    %s50 = sphi 0, %s49
    %s66 = sphi 0, %s50
    %s70 = sphi 0, %s70
    %s72 = sphi 0, %s70
    %s73 = sphi 0, %s72
    %s87 = sphi 0, %s73
    %s91 = sphi 0, %s91
    %s93 = sphi 0, %s91
    %s94 = sphi 0, %s93
    %s108 = sphi 0, %s94
    %s114 = sphi 0, %s116
    %s117 = sphi 0, %s114
    %s118 = sphi 0, %s117
    %s134 = sphi 0, %s118
  $region4: #{_lambda_.17} parent=0 // loop_header_branch
    %13 = sbr.rel (%p11) target = $region8
  $region5: #{_lambda_.17} parent=0 // loop_body
    %s15 = ssub.s32 %s10, 1
    %s16 = ssub.s32 %s10, 2
    %s17 = sadd.s32 %s10, 1
    %s18 = ssub.s32 %s10, %s17
    %p19 = scmp.eq.s32.totalorder %s18, 0
    %s21 = sadd.s32 %s20, 1
    %s22 = scalar_select %p19, %s20, %s21
    %p25 = pneg %p19
    %p26 = scmp.eq.s32.totalorder %s10, 1
    %p27 = por %p25, %p26
    %p28 = scmp.ne.s32.totalorder %s20, %s23
    %p29 = scmp.eq.s32.totalorder %s10, 0
    %p30 = por %p28, %p29
    %p31 = scmp.ne.s32.totalorder %s20, %s23
    %p32 = scmp.eq.s32.totalorder %s15, 1
    %p33 = por %p31, %p32
    %p34 = scmp.ne.s32.totalorder %s23, %s24
    %p35 = scmp.eq.s32.totalorder %s15, 0
    %p36 = por %p34, %p35
    %p37 = scmp.ne.s32.totalorder %s23, %s24
    %p38 = scmp.eq.s32.totalorder %s16, 1
    %p39 = por %p37, %p38
    %p41 = scmp.ne.s32.totalorder %s24, %s40
    %p42 = scmp.eq.s32.totalorder %s16, 0
    %p43 = por %p41, %p42
    %s44 = ssub.s32 %s10, %s17
    %p45 = scmp.eq.s32.totalorder %s44, 0
    %s47 = sadd.s32 %s46, 1
    %s48 = scalar_select %p45, %s46, %s47
    %p51 = pneg %p45
    %p52 = scmp.eq.s32.totalorder %s10, 1
    %p53 = por %p51, %p52
    %p54 = scmp.ne.s32.totalorder %s46, %s49
    %p55 = scmp.eq.s32.totalorder %s10, 0
    %p56 = por %p54, %p55
    %p57 = scmp.ne.s32.totalorder %s46, %s49
    %p58 = scmp.eq.s32.totalorder %s15, 1
    %p59 = por %p57, %p58
    %p60 = scmp.ne.s32.totalorder %s49, %s50
    %p61 = scmp.eq.s32.totalorder %s15, 0
    %p62 = por %p60, %p61
    %p63 = scmp.ne.s32.totalorder %s49, %s50
    %p64 = scmp.eq.s32.totalorder %s16, 1
    %p65 = por %p63, %p64
    %p67 = scmp.ne.s32.totalorder %s50, %s66
    %p68 = scmp.eq.s32.totalorder %s16, 0
    %p69 = por %p67, %p68
    %s71 = sadd.s32 %s70, 1
    %p74 = scmp.eq.s32.totalorder %s10, 1
    %p75 = scmp.ne.s32.totalorder %s70, %s72
    %p76 = scmp.eq.s32.totalorder %s10, 0
    %p77 = por %p75, %p76
    %p78 = scmp.ne.s32.totalorder %s70, %s72
    %p79 = scmp.eq.s32.totalorder %s15, 1
    %p80 = por %p78, %p79
    %p81 = scmp.ne.s32.totalorder %s72, %s73
    %p82 = scmp.eq.s32.totalorder %s15, 0
    %p83 = por %p81, %p82
    %p84 = scmp.ne.s32.totalorder %s72, %s73
    %p85 = scmp.eq.s32.totalorder %s16, 1
    %p86 = por %p84, %p85
    %p88 = scmp.ne.s32.totalorder %s73, %s87
    %p89 = scmp.eq.s32.totalorder %s16, 0
    %p90 = por %p88, %p89
    %s92 = sadd.s32 %s91, 1
    %p95 = scmp.eq.s32.totalorder %s10, 1
    %p96 = scmp.ne.s32.totalorder %s91, %s93
    %p97 = scmp.eq.s32.totalorder %s10, 0
    %p98 = por %p96, %p97
    %p99 = scmp.ne.s32.totalorder %s91, %s93
    %p100 = scmp.eq.s32.totalorder %s15, 1
    %p101 = por %p99, %p100
    %p102 = scmp.ne.s32.totalorder %s93, %s94
    %p103 = scmp.eq.s32.totalorder %s15, 0
    %p104 = por %p102, %p103
    %p105 = scmp.ne.s32.totalorder %s93, %s94
    %p106 = scmp.eq.s32.totalorder %s16, 1
    %p107 = por %p105, %p106
    %p109 = scmp.ne.s32.totalorder %s94, %s108
    %p110 = scmp.eq.s32.totalorder %s16, 0
    %p111 = por %p109, %p110
    %s112 = ssub.s32 %s10, %s17
    %p113 = scmp.eq.s32.totalorder %s112, 0
    %s115 = sadd.s32 %s114, 1
    %s116 = scalar_select %p113, %s114, %s115
    %p119 = pneg %p113
    %p120 = scmp.eq.s32.totalorder %s10, 1
    %p121 = por %p119, %p120
    %p122 = scmp.ne.s32.totalorder %s114, %s117
    %p123 = scmp.eq.s32.totalorder %s10, 0
    %p124 = por %p122, %p123
    %p125 = scmp.ne.s32.totalorder %s114, %s117
    %p126 = scmp.eq.s32.totalorder %s15, 1
    %p127 = por %p125, %p126
    %p128 = scmp.ne.s32.totalorder %s117, %s118
    %p129 = scmp.eq.s32.totalorder %s15, 0
    %p130 = por %p128, %p129
    %p131 = scmp.ne.s32.totalorder %s117, %s118
    %p132 = scmp.eq.s32.totalorder %s16, 1
    %p133 = por %p131, %p132
    %p135 = scmp.ne.s32.totalorder %s118, %s134
    %p136 = scmp.eq.s32.totalorder %s16, 0
    %p137 = por %p135, %p136
    %p138 = scmp.le.s32.totalorder 1, %s10
    %p139 = scmp.lt.s32.totalorder %s10, 3
    %p140 = pnand %p138, %p139
    %p141 = pneg %p140
    // Predicated region
    $region9: #{_lambda_.17} parent=5 // pred_check
      _
    $region10: #{_lambda_.17} parent=5 // pred_check_branch
      %143 = sbr.rel (%p140) target = $region12
    $region11: #{_lambda_.17} parent=5 // pred_region
      %s144 = ssub.s32 %s10, 1
      // Predicated region
      $region13: #{_lambda_.17} parent=11 // pred_check
        %p145 = pneg %p83
      $region14: #{_lambda_.17} parent=11 // pred_check_branch
        %147 = sbr.rel (%p145) target = $region16
      $region15: #{_lambda_.17} parent=11 // pred_region
        _
      $region16: #{_lambda_.17} parent=11 // pred_fallthru
        _
      // Predicated region
      $region17: #{_lambda_.17} parent=11 // pred_check
        %p148 = pneg %p104
      $region18: #{_lambda_.17} parent=11 // pred_check_branch
        %150 = sbr.rel (%p148) target = $region20
      $region19: #{_lambda_.17} parent=11 // pred_region
        _
      $region20: #{_lambda_.17} parent=11 // pred_fallthru
        _
    $region12: #{_lambda_.17} parent=5 // pred_fallthru
      _
    %p151 = scmp.lt.s32.totalorder %s10, 2
    // Predicated region
    $region21: #{_lambda_.17} parent=5 // pred_check
      %p152 = pneg %p151
    $region22: #{_lambda_.17} parent=5 // pred_check_branch
      %154 = sbr.rel (%p152) target = $region24
    $region23: #{_lambda_.17} parent=5 // pred_region
      // Predicated region
      $region25: #{_lambda_.17} parent=23 // pred_check
        %p155 = pneg %p30
      $region26: #{_lambda_.17} parent=23 // pred_check_branch
        %157 = sbr.rel (%p155) target = $region28
      $region27: #{_lambda_.17} parent=23 // pred_region
        %p158 = scmp.lt.s32.totalorder %s10, 1
        %s159 = scalar_select %p158, %s10, 1
        %s160 = smul.addr %s159, 4
        %s161 = smul.addr %s160, 4
        %s162 = scalar_lea.vmem %s0, %s161
      $region28: #{_lambda_.17} parent=23 // pred_fallthru
        _
      // Predicated region
      $region29: #{_lambda_.17} parent=23 // pred_check
        %p163 = pneg %p56
      $region30: #{_lambda_.17} parent=23 // pred_check_branch
        %165 = sbr.rel (%p163) target = $region32
      $region31: #{_lambda_.17} parent=23 // pred_region
        %p166 = scmp.lt.s32.totalorder %s10, 1
        %s167 = scalar_select %p166, %s10, 1
        %s168 = smul.addr %s167, 4
        %s169 = smul.addr %s168, 4
        %s170 = scalar_lea.vmem %s1, %s169
      $region32: #{_lambda_.17} parent=23 // pred_fallthru
        _
    $region24: #{_lambda_.17} parent=5 // pred_fallthru
      _
    %p171 = scmp.le.s32.totalorder 1, %s10
    %p172 = scmp.lt.s32.totalorder %s10, 3
    %p173 = pnand %p171, %p172
    %p174 = pneg %p173
    // Predicated region
    $region33: #{_lambda_.17} parent=5 // pred_check
      _
    $region34: #{_lambda_.17} parent=5 // pred_check_branch
      %176 = sbr.rel (%p173) target = $region36
    $region35: #{_lambda_.17} parent=5 // pred_region
      %s177 = ssub.s32 %s10, 1
      %p178 = scmp.lt.s32.totalorder %s15, 1
      %s179 = scalar_select %p178, %s15, 1
      %s180 = smul.addr %s179, 4
      %s181 = smul.addr %s180, 4
      %s182 = scalar_lea.vmem %s0, %s181
      %p183 = pneg %p36
      %p184 = pneg %p33
      %p185 = scmp.lt.s32.totalorder %s15, 1
      %s186 = scalar_select %p185, %s15, 1
      %s187 = smul.addr %s186, 4
      %s188 = smul.addr %s187, 4
      %s189 = scalar_lea.vmem %s1, %s188
      %p190 = pneg %p62
      %p191 = pneg %p59
      %p192 = pneg %p83
      %p193 = pneg %p80
      %p194 = pneg %p104
      %p195 = pneg %p101
      %p196 = pneg %p130
      %p197 = pneg %p127
      %p198 = scmp.lt.s32.totalorder %s15, 1
      %s199 = scalar_select %p198, %s15, 1
      %s200 = smul.addr %s199, 4
      %s201 = scalar_lea.vmem %s4, %s200
      %p202 = scmp.lt.s32.totalorder %s15, 1
      %s203 = scalar_select %p202, %s15, 1
      %s204 = smul.addr %s203, 4
      %s205 = smul.addr %s204, 4
      %s206 = scalar_lea.vmem %s0, %s205
      %p207 = scmp.lt.s32.totalorder %s15, 1
      %s208 = scalar_select %p207, %s15, 1
      %s209 = smul.addr %s208, 4
      %s210 = smul.addr %s209, 4
      %s211 = scalar_lea.vmem %s1, %s210
      %p212 = scmp.lt.s32.totalorder %s15, 1
      %s213 = scalar_select %p212, %s15, 1
      %s214 = smul.addr %s213, 4
      %s215 = scalar_lea.vmem %s4, %s214
      %v217 = vld [vmem:[%s206] sm:$0xff]
      %v218 = vld [vmem:[%s206 + $0x8] sm:$0xff]
      %v219 = vunpack.c.l.bf16 %v217
      %v220 = vunpack.c.h.bf16 %v217
      %v221 = vunpack.c.l.bf16 %v218
      %v222 = vunpack.c.h.bf16 %v218
      %v223 = vld [vmem:[%s211] sm:$0xff]
      %v224 = vld [vmem:[%s211 + $0x8] sm:$0xff]
      %v225 = vunpack.c.l.bf16 %v223
      %v226 = vunpack.c.h.bf16 %v223
      %v227 = vunpack.c.l.bf16 %v224
      %v228 = vunpack.c.h.bf16 %v224
      %v229 = vadd.f32 %v219, %v225
      %v230 = vadd.f32 %v220, %v226
      %v231 = vadd.f32 %v221, %v227
      %v232 = vadd.f32 %v222, %v228
      %v233 = vpack.c.bf16 %v229, %v229
      %v234 = vpack.c.bf16 %v231, %v231
      %235 = vst [vmem:[#allocation2] sm:$0xf] %v233
      %236 = vst [vmem:[#allocation2 + $0x4] sm:$0xf] %v234
      %v237 = vpack.c.bf16 %v230, %v229
      %v238 = vpack.c.bf16 %v232, %v231
      %241 = vrot.lane.b32.xlu0 %v237, 127
      %v242 = vpop.permute.xlu0 %241
      %243 = vrot.lane.b32.xlu0 %v238, 127
      %v244 = vpop.permute.xlu0 %243
      %v245 = vrot.slane %v242, 4
      %v246 = vrot.slane %v244, 4
      %vm247 = vcmask 1039360
      %v248 = vsel %vm247, %v242, %v245
      %v249 = vsel %vm247, %v244, %v246
      %252 = vst [vmem:[#allocation2 + $0x8] sm:$0xf] %v248
      %253 = vst [vmem:[#allocation2 + $0xc] sm:$0xf] %v249
      %254 = vrot.lane.b32.xlu0 %v237, 126
      %v255 = vpop.permute.xlu0 %254
      %256 = vrot.lane.b32.xlu0 %v238, 126
      %v257 = vpop.permute.xlu0 %256
      %v258 = vrot.slane %v255, 4
      %v259 = vrot.slane %v257, 4
      %vm260 = vcmask 1031168
      %v261 = vsel %vm260, %v255, %v258
      %v262 = vsel %vm260, %v257, %v259
      %265 = vst [vmem:[#allocation2 + $0x10] sm:$0xf] %v261
      %266 = vst [vmem:[#allocation2 + $0x14] sm:$0xf] %v262
      %267 = vrot.lane.b32.xlu0 %v237, 118
      %v268 = vpop.permute.xlu0 %267
      %269 = vrot.lane.b32.xlu0 %v238, 118
      %v270 = vpop.permute.xlu0 %269
      %v271 = vrot.slane %v268, 4
      %v272 = vrot.slane %v270, 4
      %vm273 = vcmask 965632
      %v274 = vsel %vm273, %v268, %v271
      %v275 = vsel %vm273, %v270, %v272
      %278 = vst [vmem:[#allocation2 + $0x18] sm:$0xf] %v274
      %279 = vst [vmem:[#allocation2 + $0x1c] sm:$0xf] %v275
      %280 = vrot.lane.b32.xlu0 %v237, 117
      %v281 = vpop.permute.xlu0 %280
      %282 = vrot.lane.b32.xlu0 %v238, 117
      %v283 = vpop.permute.xlu0 %282
      %v284 = vrot.slane %v281, 4
      %v285 = vrot.slane %v283, 4
      %vm286 = vcmask 957440
      %v287 = vsel %vm286, %v281, %v284
      %v288 = vsel %vm286, %v283, %v285
      %291 = vst [vmem:[#allocation2 + $0x20] sm:$0xf] %v287
      %292 = vst [vmem:[#allocation2 + $0x24] sm:$0xf] %v288
      %293 = vrot.lane.b32.xlu0 %v237, 116
      %v294 = vpop.permute.xlu0 %293
      %295 = vrot.lane.b32.xlu0 %v238, 116
      %v296 = vpop.permute.xlu0 %295
      %v297 = vrot.slane %v294, 4
      %v298 = vrot.slane %v296, 4
      %vm299 = vcmask 949248
      %v300 = vsel %vm299, %v294, %v297
      %v301 = vsel %vm299, %v296, %v298
      %304 = vst [vmem:[#allocation2 + $0x28] sm:$0xf] %v300
      %305 = vst [vmem:[#allocation2 + $0x2c] sm:$0xf] %v301
      %306 = vrot.lane.b32.xlu0 %v237, 108
      %v307 = vpop.permute.xlu0 %306
      %308 = vrot.lane.b32.xlu0 %v238, 108
      %v309 = vpop.permute.xlu0 %308
      %v310 = vrot.slane %v307, 4
      %v311 = vrot.slane %v309, 4
      %vm312 = vcmask 883712
      %v313 = vsel %vm312, %v307, %v310
      %v314 = vsel %vm312, %v309, %v311
      %317 = vst [vmem:[#allocation2 + $0x30] sm:$0xf] %v313
      %318 = vst [vmem:[#allocation2 + $0x34] sm:$0xf] %v314
      %319 = vrot.lane.b32.xlu0 %v237, 107
      %v320 = vpop.permute.xlu0 %319
      %321 = vrot.lane.b32.xlu0 %v238, 107
      %v322 = vpop.permute.xlu0 %321
      %v323 = vrot.slane %v320, 4
      %v324 = vrot.slane %v322, 4
      %vm325 = vcmask 875520
      %v326 = vsel %vm325, %v320, %v323
      %v327 = vsel %vm325, %v322, %v324
      %330 = vst [vmem:[#allocation2 + $0x38] sm:$0xf] %v326
      %331 = vst [vmem:[#allocation2 + $0x3c] sm:$0xf] %v327
      %332 = vrot.lane.b32.xlu0 %v237, 106
      %v333 = vpop.permute.xlu0 %332
      %334 = vrot.lane.b32.xlu0 %v238, 106
      %v335 = vpop.permute.xlu0 %334
      %v336 = vrot.slane %v333, 4
      %v337 = vrot.slane %v335, 4
      %vm338 = vcmask 867328
      %v339 = vsel %vm338, %v333, %v336
      %v340 = vsel %vm338, %v335, %v337
      %343 = vst [vmem:[#allocation2 + $0x40] sm:$0xf] %v339
      %344 = vst [vmem:[#allocation2 + $0x44] sm:$0xf] %v340
      %v345 = vld [vmem:[%s2] sm:$0xff]
      %v346 = vld [vmem:[#allocation2] sm:$0xf]
      %v347 = vld [vmem:[#allocation2 + $0x4] sm:$0xf]
      %v348 = vld [vmem:[#allocation2 + $0x8] sm:$0xf]
      %v349 = vld [vmem:[#allocation2 + $0xc] sm:$0xf]
      %v350 = vld [vmem:[#allocation2 + $0x10] sm:$0xf]
      %v351 = vld [vmem:[#allocation2 + $0x14] sm:$0xf]
      %v352 = vld [vmem:[#allocation2 + $0x18] sm:$0xf]
      %v353 = vld [vmem:[#allocation2 + $0x1c] sm:$0xf]
      %v354 = vld [vmem:[#allocation2 + $0x20] sm:$0xf]
      %v355 = vld [vmem:[#allocation2 + $0x24] sm:$0xf]
      %v356 = vld [vmem:[#allocation2 + $0x28] sm:$0xf]
      %v357 = vld [vmem:[#allocation2 + $0x2c] sm:$0xf]
      %v358 = vld [vmem:[#allocation2 + $0x30] sm:$0xf]
      %v359 = vld [vmem:[#allocation2 + $0x34] sm:$0xf]
      %v360 = vld [vmem:[#allocation2 + $0x38] sm:$0xf]
      %v361 = vld [vmem:[#allocation2 + $0x3c] sm:$0xf]
      %v362 = vld [vmem:[#allocation2 + $0x40] sm:$0xf]
      %v363 = vld [vmem:[#allocation2 + $0x44] sm:$0xf]
      %v364 = vld [vmem:[%s3] sm:$0xff]
      %366 = vset.pattern.permute.xlu0 0
      %367 = vperm.xlu0 %366, %v364
      %v368 = vpop.permute.xlu0 %367
      %v371 = vunpack.c.l.b16 %v345
      %v372 = vunpack.c.h.b16 %v345
      %v373 = vpack.c.b16 %v371, %v371
      %v374 = vpack.c.b16 %v372, %v372
      %v394 = vunpack.c.l.b16 %v346
      %v395 = vunpack.c.l.b16 %v347
      %v396 = vunpack.c.l.b16 %v348
      %v397 = vunpack.c.l.b16 %v349
      %v398 = vunpack.c.l.b16 %v350
      %v399 = vunpack.c.l.b16 %v351
      %v400 = vunpack.c.l.b16 %v352
      %v401 = vunpack.c.l.b16 %v353
      %v402 = vunpack.c.l.b16 %v354
      %v403 = vunpack.c.l.b16 %v355
      %v404 = vunpack.c.l.b16 %v356
      %v405 = vunpack.c.l.b16 %v357
      %v406 = vunpack.c.l.b16 %v358
      %v407 = vunpack.c.l.b16 %v359
      %v408 = vunpack.c.l.b16 %v360
      %v409 = vunpack.c.l.b16 %v361
      %v410 = vunpack.c.l.b16 %v362
      %v411 = vunpack.c.l.b16 %v363
      %v412 = vpack.c.b16 %v395, %v394
      %v413 = vpack.c.b16 %v397, %v396
      %v414 = vpack.c.b16 %v399, %v398
      %v415 = vpack.c.b16 %v401, %v400
      %v416 = vpack.c.b16 %v403, %v402
      %v417 = vpack.c.b16 %v405, %v404
      %v418 = vpack.c.b16 %v407, %v406
      %v419 = vpack.c.b16 %v409, %v408
      %v420 = vpack.c.b16 %v411, %v410
      %vm430 = vcmask 130048
      %v432 = vsel %vm430, %v374, 0
      %434 = vmatpush.bf16.msra.mxu0 %v419
      %435 = vmatpush.bf16.msra.mxu0 %v418
      %436 = vmatpush.bf16.msra.mxu0 %v417
      %437 = vmatpush.bf16.msra.mxu0 %v416
      %438 = vmatpush.bf16.msra.mxu0 %v415
      %439 = vmatpush.bf16.msra.mxu0 %v414
      %440 = vmatpush.bf16.msra.mxu0 %v413
      %441 = vmatpush.bf16.msra.mxu0 %v412
      %442 = vmatmul.bf16.gmra.mxu0 %v373
      %v443 = vpop.f32.mrf.mxu0
      %v444 = vadd.f32 %v368, %v443
      %v445 = vpop.f32.mrf.mxu0
      %446 = vdwg.mxu0
      %447 = vmatpush.bf16.msra.mxu0 0
      %448 = vmatpush.bf16.msra.mxu0 0
      %449 = vmatpush.bf16.msra.mxu0 0
      %450 = vmatpush.bf16.msra.mxu0 0
      %451 = vmatpush.bf16.msra.mxu0 0
      %452 = vmatpush.bf16.msra.mxu0 0
      %453 = vmatpush.bf16.msra.mxu0 0
      %454 = vmatpush.bf16.msra.mxu0 %v420
      %455 = vmatmul.bf16.gmra.mxu0 %v432
      %v456 = vpop.f32.mrf.mxu0
      %v457 = vadd.f32 %v444, %v456
      %v458 = vpop.f32.mrf.mxu0
      %459 = vdwg.mxu0
      %v460 = vlaneseq
      %v461 = vand.u32 %v460, 127
      %vm462 = vcmp.lt.s32.totalorder %v461, 0
      %v463 = vsub.s32 0, %v461
      %v464 = vsel %vm462, %v463, %v461
      %v465 = vand.u32 %v464, 65535
      %v466 = vshrl.u32 %v464, 16
      %v468 = vmul.u32 %v465, 52429
      %v469 = vmul.u32 %v465, 52428
      %v470 = vmul.u32 %v466, 52429
      %v471 = vmul.u32 %v466, 52428
      %v472 = vshll.u32 %v469, 16
      %v473 = vshrl.u32 %v469, 16
      %v474 = vshll.u32 %v470, 16
      %v475 = vshrl.u32 %v470, 16
      %vm476 = vc.u32 %v468, %v472
      %v477 = vsel %vm476, 1, 0
      %v478 = vadd.s32 %v468, %v472
      %v479 = vadd.s32 %v471, %v477
      %vm480 = vc.u32 %v478, %v474
      %v481 = vsel %vm480, 1, 0
      %v482 = vadd.s32 %v478, %v474
      %v483 = vadd.s32 %v479, %v481
      %v484 = vadd.s32 %v483, %v473
      %v485 = vadd.s32 %v484, %v475
      %v486 = vshrl.u32 %v485, 3
      %v487 = vmul.u32 %v486, 10
      %v488 = vsub.s32 %v464, %v487
      %v489 = vsub.s32 0, %v488
      %v490 = vsel %vm462, %v489, %v488
      %vm491 = vcmp.ne.s32.totalorder %v490, 0
      %vm492 = vcmp.lt.s32.totalorder %v490, 0
      %vm493 = vmand %vm492, %vm491
      %v494 = vadd.s32 %v490, 10
      %v495 = vsel %vm493, %v494, %v490
      %vm496 = vcmp.lt.s32.totalorder %v495, 8
      %vm497 = vcmp.lt.s32.totalorder %v461, 80
      %vm498 = vmand %vm496, %vm497
      %v499 = vsel %vm498, 1, 0
      %v500 = vcvt.s32.f32 %v499
      %v501 = vmul.f32 %v457, %v500
      %502 = vadd.xlane.f32.xlu0 %v501
      %v503 = vpop.xlane.xlu0 %502
      %v504 = vmul.f32 %v503, 0.015625
      %v505 = vmul.f32 %v457, %v457
      %v506 = vmul.f32 %v505, %v500
      %507 = vadd.xlane.f32.xlu0 %v506
      %v508 = vpop.xlane.xlu0 %507
      %v509 = vmul.f32 %v508, 0.015625
      %v510 = vmul.f32 %v504, %v504
      %v511 = vsub.f32 %v509, %v510
      %v512 = vmax.f32 %v511, 0.0
      %v513 = vsub.f32 %v457, %v504
      %v514 = vadd.f32 %v512, 1e-05
      %v515 = vrsqrt.pop %v514
      %v516 = vmul.f32 %v515, %v514
      %v517 = vmul.f32 %v516, %v515
      %v518 = vmul.f32 0.5, %v517
      %v519 = vsub.f32 1.5, %v518
      %v520 = vmul.f32 %v515, %v519
      %vm521 = vweird.f32 %v514
      %vm522 = vweird.f32 %v515
      %vm523 = vmor %vm521, %vm522
      %v524 = vsel %vm523, %v515, %v520
      %v525 = vmul.f32 %v513, %v524
      %vm526 = vcmp.gt.f32.partialorder %v525, 0.0
      %v527 = vmin.f32 %v525, 0.0
      %v528 = vmul.f32 %v527, 1.442695
      %v529 = vpow.pop %v528
      %v530 = vsub.f32 %v529, 1.0
      %v531 = vsel %vm526, %v525, %v530
      %v532 = vpack.c.bf16 %v531, %v531
      %533 = vst [vmem:[%s215] sm:$0xf] %v532
      %p534 = scmp.lt.s32.totalorder %s15, 1
      %s535 = scalar_select %p534, %s15, 1
      %s536 = smul.addr %s535, 4
      %s537 = scalar_lea.vmem %s4, %s536
      // Predicated region
      $region37: #{_lambda_.17} parent=35 // pred_check
        %p538 = pneg %p127
      $region38: #{_lambda_.17} parent=35 // pred_check_branch
        %540 = sbr.rel (%p538) target = $region40
      $region39: #{_lambda_.17} parent=35 // pred_region
        _
      $region40: #{_lambda_.17} parent=35 // pred_fallthru
        _
    $region36: #{_lambda_.17} parent=5 // pred_fallthru
      _
    %p541 = scmp.le.s32.totalorder 2, %s10
    // Predicated region
    $region41: #{_lambda_.17} parent=5 // pred_check
      %p542 = pneg %p541
    $region42: #{_lambda_.17} parent=5 // pred_check_branch
      %544 = sbr.rel (%p542) target = $region44
    $region43: #{_lambda_.17} parent=5 // pred_region
      %s545 = ssub.s32 %s10, 2
      // Predicated region
      $region45: #{_lambda_.17} parent=43 // pred_check
        %p546 = pneg %p133
      $region46: #{_lambda_.17} parent=43 // pred_check_branch
        %548 = sbr.rel (%p546) target = $region48
      $region47: #{_lambda_.17} parent=43 // pred_region
        %p549 = scmp.lt.s32.totalorder %s16, 1
        %s550 = scalar_select %p549, %s16, 1
        %s551 = smul.addr %s550, 4
        %s552 = scalar_lea.vmem %s4, %s551
      $region48: #{_lambda_.17} parent=43 // pred_fallthru
        _
    $region44: #{_lambda_.17} parent=5 // pred_fallthru
      _
  $region6: #{_lambda_.17} parent=0 // loop_footer
    %s14 = sadd.s32 1, %s10
  $region7: #{_lambda_.17} parent=0 // loop_footer_branch
    %9 = sbr.rel target = $region3
  $region8: #{_lambda_.17} parent=0 // loop_exit
    _

// kernel: _lambda_.18
$region0: #{_lambda_.18}
  #allocation0 [shape = 'u32[]', space=smem, size = 0x4, offset = 0x4, fixed_abs, tag = 'smem constant byte address 0x4 - core index']
  #allocation1 [shape = 'u32[72,128]{1,0:T(1,128)}', space=vmem, size = 0x9000, scoped, tag = 'internal scratch']
  #allocation2 [shape = 'bf16[144,384]{1,0:T(8,128)(2,1)}', space=vmem, size = 0x1b000, scoped, tag = 'scratch operand']
  %s0 = inlined_call_operand.vmem [shape: bf16[2,16,512], index: 0, kind: input, shape index: {}]
  %s1 = inlined_call_operand.vmem [shape: bf16[2,16,512], index: 1, kind: input, shape index: {}]
  %s2 = inlined_call_operand.vmem [shape: bf16[2,144], index: 2, kind: input, shape index: {}]
  %s3 = inlined_call_operand.vmem [shape: f32[2,1], index: 3, kind: input, shape index: {}]
  %s4 = inlined_call_operand.vmem [shape: bf16[2,2,384], index: 4, kind: output, shape index: {}]
  %s5 = sld [smem:[#allocation0]]
  $region49: #{_lambda_.18} parent=0
    _
  %s7 = ssub.s32 1, %s5
  %s8 = scalar_select 0, %s7, %s5
  loop: start=0, step=1, limit=4
  $region2: #{_lambda_.18} parent=0 // loop_pre_header
    _
  $region3: #{_lambda_.18} parent=0 // loop_header
    %s10 = sphi 0, %s14
    %p11 = scmp.ge.s32.totalorder %s10, 4
    %s20 = sphi 0, %s22
    %s23 = sphi 0, %s20
    %s24 = sphi 0, %s23
    %s40 = sphi 0, %s24
    %s46 = sphi 0, %s48
    %s49 = sphi 0, %s46
    %s50 = sphi 0, %s49
    %s66 = sphi 0, %s50
    %s70 = sphi 0, %s70
    %s72 = sphi 0, %s70
    %s73 = sphi 0, %s72
    %s87 = sphi 0, %s73
    %s91 = sphi 0, %s91
    %s93 = sphi 0, %s91
    %s94 = sphi 0, %s93
    %s108 = sphi 0, %s94
    %s114 = sphi 0, %s116
    %s117 = sphi 0, %s114
    %s118 = sphi 0, %s117
    %s134 = sphi 0, %s118
  $region4: #{_lambda_.18} parent=0 // loop_header_branch
    %13 = sbr.rel (%p11) target = $region8
  $region5: #{_lambda_.18} parent=0 // loop_body
    %s15 = ssub.s32 %s10, 1
    %s16 = ssub.s32 %s10, 2
    %s17 = sadd.s32 %s10, 1
    %s18 = ssub.s32 %s10, %s17
    %p19 = scmp.eq.s32.totalorder %s18, 0
    %s21 = sadd.s32 %s20, 1
    %s22 = scalar_select %p19, %s20, %s21
    %p25 = pneg %p19
    %p26 = scmp.eq.s32.totalorder %s10, 1
    %p27 = por %p25, %p26
    %p28 = scmp.ne.s32.totalorder %s20, %s23
    %p29 = scmp.eq.s32.totalorder %s10, 0
    %p30 = por %p28, %p29
    %p31 = scmp.ne.s32.totalorder %s20, %s23
    %p32 = scmp.eq.s32.totalorder %s15, 1
    %p33 = por %p31, %p32
    %p34 = scmp.ne.s32.totalorder %s23, %s24
    %p35 = scmp.eq.s32.totalorder %s15, 0
    %p36 = por %p34, %p35
    %p37 = scmp.ne.s32.totalorder %s23, %s24
    %p38 = scmp.eq.s32.totalorder %s16, 1
    %p39 = por %p37, %p38
    %p41 = scmp.ne.s32.totalorder %s24, %s40
    %p42 = scmp.eq.s32.totalorder %s16, 0
    %p43 = por %p41, %p42
    %s44 = ssub.s32 %s10, %s17
    %p45 = scmp.eq.s32.totalorder %s44, 0
    %s47 = sadd.s32 %s46, 1
    %s48 = scalar_select %p45, %s46, %s47
    %p51 = pneg %p45
    %p52 = scmp.eq.s32.totalorder %s10, 1
    %p53 = por %p51, %p52
    %p54 = scmp.ne.s32.totalorder %s46, %s49
    %p55 = scmp.eq.s32.totalorder %s10, 0
    %p56 = por %p54, %p55
    %p57 = scmp.ne.s32.totalorder %s46, %s49
    %p58 = scmp.eq.s32.totalorder %s15, 1
    %p59 = por %p57, %p58
    %p60 = scmp.ne.s32.totalorder %s49, %s50
    %p61 = scmp.eq.s32.totalorder %s15, 0
    %p62 = por %p60, %p61
    %p63 = scmp.ne.s32.totalorder %s49, %s50
    %p64 = scmp.eq.s32.totalorder %s16, 1
    %p65 = por %p63, %p64
    %p67 = scmp.ne.s32.totalorder %s50, %s66
    %p68 = scmp.eq.s32.totalorder %s16, 0
    %p69 = por %p67, %p68
    %s71 = sadd.s32 %s70, 1
    %p74 = scmp.eq.s32.totalorder %s10, 1
    %p75 = scmp.ne.s32.totalorder %s70, %s72
    %p76 = scmp.eq.s32.totalorder %s10, 0
    %p77 = por %p75, %p76
    %p78 = scmp.ne.s32.totalorder %s70, %s72
    %p79 = scmp.eq.s32.totalorder %s15, 1
    %p80 = por %p78, %p79
    %p81 = scmp.ne.s32.totalorder %s72, %s73
    %p82 = scmp.eq.s32.totalorder %s15, 0
    %p83 = por %p81, %p82
    %p84 = scmp.ne.s32.totalorder %s72, %s73
    %p85 = scmp.eq.s32.totalorder %s16, 1
    %p86 = por %p84, %p85
    %p88 = scmp.ne.s32.totalorder %s73, %s87
    %p89 = scmp.eq.s32.totalorder %s16, 0
    %p90 = por %p88, %p89
    %s92 = sadd.s32 %s91, 1
    %p95 = scmp.eq.s32.totalorder %s10, 1
    %p96 = scmp.ne.s32.totalorder %s91, %s93
    %p97 = scmp.eq.s32.totalorder %s10, 0
    %p98 = por %p96, %p97
    %p99 = scmp.ne.s32.totalorder %s91, %s93
    %p100 = scmp.eq.s32.totalorder %s15, 1
    %p101 = por %p99, %p100
    %p102 = scmp.ne.s32.totalorder %s93, %s94
    %p103 = scmp.eq.s32.totalorder %s15, 0
    %p104 = por %p102, %p103
    %p105 = scmp.ne.s32.totalorder %s93, %s94
    %p106 = scmp.eq.s32.totalorder %s16, 1
    %p107 = por %p105, %p106
    %p109 = scmp.ne.s32.totalorder %s94, %s108
    %p110 = scmp.eq.s32.totalorder %s16, 0
    %p111 = por %p109, %p110
    %s112 = ssub.s32 %s10, %s17
    %p113 = scmp.eq.s32.totalorder %s112, 0
    %s115 = sadd.s32 %s114, 1
    %s116 = scalar_select %p113, %s114, %s115
    %p119 = pneg %p113
    %p120 = scmp.eq.s32.totalorder %s10, 1
    %p121 = por %p119, %p120
    %p122 = scmp.ne.s32.totalorder %s114, %s117
    %p123 = scmp.eq.s32.totalorder %s10, 0
    %p124 = por %p122, %p123
    %p125 = scmp.ne.s32.totalorder %s114, %s117
    %p126 = scmp.eq.s32.totalorder %s15, 1
    %p127 = por %p125, %p126
    %p128 = scmp.ne.s32.totalorder %s117, %s118
    %p129 = scmp.eq.s32.totalorder %s15, 0
    %p130 = por %p128, %p129
    %p131 = scmp.ne.s32.totalorder %s117, %s118
    %p132 = scmp.eq.s32.totalorder %s16, 1
    %p133 = por %p131, %p132
    %p135 = scmp.ne.s32.totalorder %s118, %s134
    %p136 = scmp.eq.s32.totalorder %s16, 0
    %p137 = por %p135, %p136
    %p138 = scmp.le.s32.totalorder 1, %s10
    %p139 = scmp.lt.s32.totalorder %s10, 3
    %p140 = pnand %p138, %p139
    %p141 = pneg %p140
    // Predicated region
    $region9: #{_lambda_.18} parent=5 // pred_check
      _
    $region10: #{_lambda_.18} parent=5 // pred_check_branch
      %143 = sbr.rel (%p140) target = $region12
    $region11: #{_lambda_.18} parent=5 // pred_region
      %s144 = ssub.s32 %s10, 1
      // Predicated region
      $region13: #{_lambda_.18} parent=11 // pred_check
        %p145 = pneg %p83
      $region14: #{_lambda_.18} parent=11 // pred_check_branch
        %147 = sbr.rel (%p145) target = $region16
      $region15: #{_lambda_.18} parent=11 // pred_region
        _
      $region16: #{_lambda_.18} parent=11 // pred_fallthru
        _
      // Predicated region
      $region17: #{_lambda_.18} parent=11 // pred_check
        %p148 = pneg %p104
      $region18: #{_lambda_.18} parent=11 // pred_check_branch
        %150 = sbr.rel (%p148) target = $region20
      $region19: #{_lambda_.18} parent=11 // pred_region
        _
      $region20: #{_lambda_.18} parent=11 // pred_fallthru
        _
    $region12: #{_lambda_.18} parent=5 // pred_fallthru
      _
    %p151 = scmp.lt.s32.totalorder %s10, 2
    // Predicated region
    $region21: #{_lambda_.18} parent=5 // pred_check
      %p152 = pneg %p151
    $region22: #{_lambda_.18} parent=5 // pred_check_branch
      %154 = sbr.rel (%p152) target = $region24
    $region23: #{_lambda_.18} parent=5 // pred_region
      // Predicated region
      $region25: #{_lambda_.18} parent=23 // pred_check
        %p155 = pneg %p30
      $region26: #{_lambda_.18} parent=23 // pred_check_branch
        %157 = sbr.rel (%p155) target = $region28
      $region27: #{_lambda_.18} parent=23 // pred_region
        %p158 = scmp.lt.s32.totalorder %s10, 1
        %s159 = scalar_select %p158, %s10, 1
        %s160 = smul.addr %s159, 8
        %s161 = smul.addr %s160, 4
        %s162 = scalar_lea.vmem %s0, %s161
      $region28: #{_lambda_.18} parent=23 // pred_fallthru
        _
      // Predicated region
      $region29: #{_lambda_.18} parent=23 // pred_check
        %p163 = pneg %p56
      $region30: #{_lambda_.18} parent=23 // pred_check_branch
        %165 = sbr.rel (%p163) target = $region32
      $region31: #{_lambda_.18} parent=23 // pred_region
        %p166 = scmp.lt.s32.totalorder %s10, 1
        %s167 = scalar_select %p166, %s10, 1
        %s168 = smul.addr %s167, 8
        %s169 = smul.addr %s168, 4
        %s170 = scalar_lea.vmem %s1, %s169
      $region32: #{_lambda_.18} parent=23 // pred_fallthru
        _
    $region24: #{_lambda_.18} parent=5 // pred_fallthru
      _
    %p171 = scmp.le.s32.totalorder 1, %s10
    %p172 = scmp.lt.s32.totalorder %s10, 3
    %p173 = pnand %p171, %p172
    %p174 = pneg %p173
    // Predicated region
    $region33: #{_lambda_.18} parent=5 // pred_check
      _
    $region34: #{_lambda_.18} parent=5 // pred_check_branch
      %176 = sbr.rel (%p173) target = $region36
    $region35: #{_lambda_.18} parent=5 // pred_region
      %s177 = ssub.s32 %s10, 1
      %p178 = scmp.lt.s32.totalorder %s15, 1
      %s179 = scalar_select %p178, %s15, 1
      %s180 = smul.addr %s179, 8
      %s181 = smul.addr %s180, 4
      %s182 = scalar_lea.vmem %s0, %s181
      %p183 = pneg %p36
      %p184 = pneg %p33
      %p185 = scmp.lt.s32.totalorder %s15, 1
      %s186 = scalar_select %p185, %s15, 1
      %s187 = smul.addr %s186, 8
      %s188 = smul.addr %s187, 4
      %s189 = scalar_lea.vmem %s1, %s188
      %p190 = pneg %p62
      %p191 = pneg %p59
      %p192 = pneg %p83
      %p193 = pneg %p80
      %p194 = pneg %p104
      %p195 = pneg %p101
      %p196 = pneg %p130
      %p197 = pneg %p127
      %p198 = scmp.lt.s32.totalorder %s15, 1
      %s199 = scalar_select %p198, %s15, 1
      %s200 = smul.addr %s199, 3
      %s201 = scalar_lea.vmem %s4, %s200
      %p202 = scmp.lt.s32.totalorder %s15, 1
      %s203 = scalar_select %p202, %s15, 1
      %s204 = smul.addr %s203, 8
      %s205 = smul.addr %s204, 4
      %s206 = scalar_lea.vmem %s0, %s205
      %p207 = scmp.lt.s32.totalorder %s15, 1
      %s208 = scalar_select %p207, %s15, 1
      %s209 = smul.addr %s208, 8
      %s210 = smul.addr %s209, 4
      %s211 = scalar_lea.vmem %s1, %s210
      %p212 = scmp.lt.s32.totalorder %s15, 1
      %s213 = scalar_select %p212, %s15, 1
      %s214 = smul.addr %s213, 3
      %s215 = scalar_lea.vmem %s4, %s214
      %v217 = vld [vmem:[%s206] sm:$0xff]
      %v218 = vld [vmem:[%s206 + $0x8] sm:$0xff]
      %v219 = vld [vmem:[%s206 + $0x10] sm:$0xff]
      %v220 = vld [vmem:[%s206 + $0x18] sm:$0xff]
      %v221 = vunpack.c.l.bf16 %v217
      %v222 = vunpack.c.h.bf16 %v217
      %v223 = vunpack.c.l.bf16 %v218
      %v224 = vunpack.c.h.bf16 %v218
      %v225 = vunpack.c.l.bf16 %v219
      %v226 = vunpack.c.h.bf16 %v219
      %v227 = vunpack.c.l.bf16 %v220
      %v228 = vunpack.c.h.bf16 %v220
      %v229 = vld [vmem:[%s211] sm:$0xff]
      %v230 = vld [vmem:[%s211 + $0x8] sm:$0xff]
      %v231 = vld [vmem:[%s211 + $0x10] sm:$0xff]
      %v232 = vld [vmem:[%s211 + $0x18] sm:$0xff]
      %v233 = vunpack.c.l.bf16 %v229
      %v234 = vunpack.c.h.bf16 %v229
      %v235 = vunpack.c.l.bf16 %v230
      %v236 = vunpack.c.h.bf16 %v230
      %v237 = vunpack.c.l.bf16 %v231
      %v238 = vunpack.c.h.bf16 %v231
      %v239 = vunpack.c.l.bf16 %v232
      %v240 = vunpack.c.h.bf16 %v232
      %v241 = vadd.f32 %v221, %v233
      %v242 = vadd.f32 %v222, %v234
      %v243 = vadd.f32 %v223, %v235
      %v244 = vadd.f32 %v224, %v236
      %v245 = vadd.f32 %v225, %v237
      %v246 = vadd.f32 %v226, %v238
      %v247 = vadd.f32 %v227, %v239
      %v248 = vadd.f32 %v228, %v240
      %v249 = vpack.c.bf16 %v242, %v241
      %v250 = vpack.c.bf16 %v243, %v243
      %v251 = vpack.c.bf16 %v246, %v245
      %v252 = vpack.c.bf16 %v247, %v247
      %253 = vst [vmem:[#allocation2] sm:$0xff] %v249
      %254 = vst [vmem:[#allocation2 + $0x8] sm:$0xf] %v250
      %255 = vst [vmem:[#allocation2 + $0xc] sm:$0xff] %v251
      %256 = vst [vmem:[#allocation2 + $0x14] sm:$0xf] %v252
      %v257 = vpack.c.bf16 %v244, %v243
      %v258 = vpack.c.bf16 %v248, %v247
      %263 = vrot.lane.b32.xlu0 %v249, 127
      %v264 = vpop.permute.xlu0 %263
      %265 = vrot.lane.b32.xlu0 %v257, 127
      %v266 = vpop.permute.xlu0 %265
      %267 = vrot.lane.b32.xlu0 %v251, 127
      %v268 = vpop.permute.xlu0 %267
      %269 = vrot.lane.b32.xlu0 %v258, 127
      %v270 = vpop.permute.xlu0 %269
      %v271 = vrot.slane %v264, 4
      %v272 = vrot.slane %v266, 4
      %v273 = vrot.slane %v268, 4
      %v274 = vrot.slane %v270, 4
      %vm275 = vcmask 1043456
      %v276 = vsel %vm275, %v271, %v272
      %vm277 = vcmask 1039360
      %v278 = vsel %vm277, %v264, %v276
      %v279 = vsel %vm277, %v266, %v272
      %v280 = vsel %vm275, %v273, %v274
      %v281 = vsel %vm277, %v268, %v280
      %v282 = vsel %vm277, %v270, %v274
      %287 = vst [vmem:[#allocation2 + $0x18] sm:$0xff] %v278
      %288 = vst [vmem:[#allocation2 + $0x20] sm:$0xf] %v279
      %289 = vst [vmem:[#allocation2 + $0x24] sm:$0xff] %v281
      %290 = vst [vmem:[#allocation2 + $0x2c] sm:$0xf] %v282
      %291 = vrot.lane.b32.xlu0 %v249, 126
      %v292 = vpop.permute.xlu0 %291
      %293 = vrot.lane.b32.xlu0 %v257, 126
      %v294 = vpop.permute.xlu0 %293
      %295 = vrot.lane.b32.xlu0 %v251, 126
      %v296 = vpop.permute.xlu0 %295
      %297 = vrot.lane.b32.xlu0 %v258, 126
      %v298 = vpop.permute.xlu0 %297
      %v299 = vrot.slane %v292, 4
      %v300 = vrot.slane %v294, 4
      %v301 = vrot.slane %v296, 4
      %v302 = vrot.slane %v298, 4
      %v303 = vsel %vm275, %v299, %v300
      %vm304 = vcmask 1031168
      %v305 = vsel %vm304, %v292, %v303
      %v306 = vsel %vm304, %v294, %v300
      %v307 = vsel %vm275, %v301, %v302
      %v308 = vsel %vm304, %v296, %v307
      %v309 = vsel %vm304, %v298, %v302
      %314 = vst [vmem:[#allocation2 + $0x30] sm:$0xff] %v305
      %315 = vst [vmem:[#allocation2 + $0x38] sm:$0xf] %v306
      %316 = vst [vmem:[#allocation2 + $0x3c] sm:$0xff] %v308
      %317 = vst [vmem:[#allocation2 + $0x44] sm:$0xf] %v309
      %318 = vrot.lane.b32.xlu0 %v249, 110
      %v319 = vpop.permute.xlu0 %318
      %320 = vrot.lane.b32.xlu0 %v257, 110
      %v321 = vpop.permute.xlu0 %320
      %322 = vrot.lane.b32.xlu0 %v251, 110
      %v323 = vpop.permute.xlu0 %322
      %324 = vrot.lane.b32.xlu0 %v258, 110
      %v325 = vpop.permute.xlu0 %324
      %v326 = vrot.slane %v319, 4
      %v327 = vrot.slane %v321, 4
      %v328 = vrot.slane %v323, 4
      %v329 = vrot.slane %v325, 4
      %v330 = vsel %vm275, %v326, %v327
      %vm331 = vcmask 900096
      %v332 = vsel %vm331, %v319, %v330
      %v333 = vsel %vm331, %v321, %v327
      %v334 = vsel %vm275, %v328, %v329
      %v335 = vsel %vm331, %v323, %v334
      %v336 = vsel %vm331, %v325, %v329
      %341 = vst [vmem:[#allocation2 + $0x48] sm:$0xff] %v332
      %342 = vst [vmem:[#allocation2 + $0x50] sm:$0xf] %v333
      %343 = vst [vmem:[#allocation2 + $0x54] sm:$0xff] %v335
      %344 = vst [vmem:[#allocation2 + $0x5c] sm:$0xf] %v336
      %345 = vrot.lane.b32.xlu0 %v249, 109
      %v346 = vpop.permute.xlu0 %345
      %347 = vrot.lane.b32.xlu0 %v257, 109
      %v348 = vpop.permute.xlu0 %347
      %349 = vrot.lane.b32.xlu0 %v251, 109
      %v350 = vpop.permute.xlu0 %349
      %351 = vrot.lane.b32.xlu0 %v258, 109
      %v352 = vpop.permute.xlu0 %351
      %v353 = vrot.slane %v346, 4
      %v354 = vrot.slane %v348, 4
      %v355 = vrot.slane %v350, 4
      %v356 = vrot.slane %v352, 4
      %v357 = vsel %vm275, %v353, %v354
      %vm358 = vcmask 891904
      %v359 = vsel %vm358, %v346, %v357
      %v360 = vsel %vm358, %v348, %v354
      %v361 = vsel %vm275, %v355, %v356
      %v362 = vsel %vm358, %v350, %v361
      %v363 = vsel %vm358, %v352, %v356
      %368 = vst [vmem:[#allocation2 + $0x60] sm:$0xff] %v359
      %369 = vst [vmem:[#allocation2 + $0x68] sm:$0xf] %v360
      %370 = vst [vmem:[#allocation2 + $0x6c] sm:$0xff] %v362
      %371 = vst [vmem:[#allocation2 + $0x74] sm:$0xf] %v363
      %372 = vrot.lane.b32.xlu0 %v249, 108
      %v373 = vpop.permute.xlu0 %372
      %374 = vrot.lane.b32.xlu0 %v257, 108
      %v375 = vpop.permute.xlu0 %374
      %376 = vrot.lane.b32.xlu0 %v251, 108
      %v377 = vpop.permute.xlu0 %376
      %378 = vrot.lane.b32.xlu0 %v258, 108
      %v379 = vpop.permute.xlu0 %378
      %v380 = vrot.slane %v373, 4
      %v381 = vrot.slane %v375, 4
      %v382 = vrot.slane %v377, 4
      %v383 = vrot.slane %v379, 4
      %v384 = vsel %vm275, %v380, %v381
      %vm385 = vcmask 883712
      %v386 = vsel %vm385, %v373, %v384
      %v387 = vsel %vm385, %v375, %v381
      %v388 = vsel %vm275, %v382, %v383
      %v389 = vsel %vm385, %v377, %v388
      %v390 = vsel %vm385, %v379, %v383
      %395 = vst [vmem:[#allocation2 + $0x78] sm:$0xff] %v386
      %396 = vst [vmem:[#allocation2 + $0x80] sm:$0xf] %v387
      %397 = vst [vmem:[#allocation2 + $0x84] sm:$0xff] %v389
      %398 = vst [vmem:[#allocation2 + $0x8c] sm:$0xf] %v390
      %399 = vrot.lane.b32.xlu0 %v249, 92
      %v400 = vpop.permute.xlu0 %399
      %401 = vrot.lane.b32.xlu0 %v257, 92
      %v402 = vpop.permute.xlu0 %401
      %403 = vrot.lane.b32.xlu0 %v251, 92
      %v404 = vpop.permute.xlu0 %403
      %405 = vrot.lane.b32.xlu0 %v258, 92
      %v406 = vpop.permute.xlu0 %405
      %v407 = vrot.slane %v400, 4
      %v408 = vrot.slane %v402, 4
      %v409 = vrot.slane %v404, 4
      %v410 = vrot.slane %v406, 4
      %v411 = vsel %vm275, %v407, %v408
      %vm412 = vcmask 752640
      %v413 = vsel %vm412, %v400, %v411
      %v414 = vsel %vm412, %v402, %v408
      %v415 = vsel %vm275, %v409, %v410
      %v416 = vsel %vm412, %v404, %v415
      %v417 = vsel %vm412, %v406, %v410
      %422 = vst [vmem:[#allocation2 + $0x90] sm:$0xff] %v413
      %423 = vst [vmem:[#allocation2 + $0x98] sm:$0xf] %v414
      %424 = vst [vmem:[#allocation2 + $0x9c] sm:$0xff] %v416
      %425 = vst [vmem:[#allocation2 + $0xa4] sm:$0xf] %v417
      %426 = vrot.lane.b32.xlu0 %v249, 91
      %v427 = vpop.permute.xlu0 %426
      %428 = vrot.lane.b32.xlu0 %v257, 91
      %v429 = vpop.permute.xlu0 %428
      %430 = vrot.lane.b32.xlu0 %v251, 91
      %v431 = vpop.permute.xlu0 %430
      %432 = vrot.lane.b32.xlu0 %v258, 91
      %v433 = vpop.permute.xlu0 %432
      %v434 = vrot.slane %v427, 4
      %v435 = vrot.slane %v429, 4
      %v436 = vrot.slane %v431, 4
      %v437 = vrot.slane %v433, 4
      %v438 = vsel %vm275, %v434, %v435
      %vm439 = vcmask 744448
      %v440 = vsel %vm439, %v427, %v438
      %v441 = vsel %vm439, %v429, %v435
      %v442 = vsel %vm275, %v436, %v437
      %v443 = vsel %vm439, %v431, %v442
      %v444 = vsel %vm439, %v433, %v437
      %449 = vst [vmem:[#allocation2 + $0xa8] sm:$0xff] %v440
      %450 = vst [vmem:[#allocation2 + $0xb0] sm:$0xf] %v441
      %451 = vst [vmem:[#allocation2 + $0xb4] sm:$0xff] %v443
      %452 = vst [vmem:[#allocation2 + $0xbc] sm:$0xf] %v444
      %453 = vrot.lane.b32.xlu0 %v249, 90
      %v454 = vpop.permute.xlu0 %453
      %455 = vrot.lane.b32.xlu0 %v257, 90
      %v456 = vpop.permute.xlu0 %455
      %457 = vrot.lane.b32.xlu0 %v251, 90
      %v458 = vpop.permute.xlu0 %457
      %459 = vrot.lane.b32.xlu0 %v258, 90
      %v460 = vpop.permute.xlu0 %459
      %v461 = vrot.slane %v454, 4
      %v462 = vrot.slane %v456, 4
      %v463 = vrot.slane %v458, 4
      %v464 = vrot.slane %v460, 4
      %v465 = vsel %vm275, %v461, %v462
      %vm466 = vcmask 736256
      %v467 = vsel %vm466, %v454, %v465
      %v468 = vsel %vm466, %v456, %v462
      %v469 = vsel %vm275, %v463, %v464
      %v470 = vsel %vm466, %v458, %v469
      %v471 = vsel %vm466, %v460, %v464
      %476 = vst [vmem:[#allocation2 + $0xc0] sm:$0xff] %v467
      %477 = vst [vmem:[#allocation2 + $0xc8] sm:$0xf] %v468
      %478 = vst [vmem:[#allocation2 + $0xcc] sm:$0xff] %v470
      %479 = vst [vmem:[#allocation2 + $0xd4] sm:$0xf] %v471
      %v480 = vld [vmem:[%s2] sm:$0x3]
      %v481 = vld [vmem:[#allocation2] sm:$0xff]
      %v482 = vld [vmem:[#allocation2 + $0x8] sm:$0xf]
      %v483 = vld [vmem:[#allocation2 + $0xc] sm:$0xff]
      %v484 = vld [vmem:[#allocation2 + $0x14] sm:$0xf]
      %v485 = vld [vmem:[#allocation2 + $0x18] sm:$0xff]
      %v486 = vld [vmem:[#allocation2 + $0x20] sm:$0xf]
      %v487 = vld [vmem:[#allocation2 + $0x24] sm:$0xff]
      %v488 = vld [vmem:[#allocation2 + $0x2c] sm:$0xf]
      %v489 = vld [vmem:[#allocation2 + $0x30] sm:$0xff]
      %v490 = vld [vmem:[#allocation2 + $0x38] sm:$0xf]
      %v491 = vld [vmem:[#allocation2 + $0x3c] sm:$0xff]
      %v492 = vld [vmem:[#allocation2 + $0x44] sm:$0xf]
      %v493 = vld [vmem:[#allocation2 + $0x48] sm:$0xff]
      %v494 = vld [vmem:[#allocation2 + $0x50] sm:$0xf]
      %v495 = vld [vmem:[#allocation2 + $0x54] sm:$0xff]
      %v496 = vld [vmem:[#allocation2 + $0x5c] sm:$0xf]
      %v497 = vld [vmem:[#allocation2 + $0x60] sm:$0xff]
      %v498 = vld [vmem:[#allocation2 + $0x68] sm:$0xf]
      %v499 = vld [vmem:[#allocation2 + $0x6c] sm:$0xff]
      %v500 = vld [vmem:[#allocation2 + $0x74] sm:$0xf]
      %v501 = vld [vmem:[#allocation2 + $0x78] sm:$0xff]
      %v502 = vld [vmem:[#allocation2 + $0x80] sm:$0xf]
      %v503 = vld [vmem:[#allocation2 + $0x84] sm:$0xff]
      %v504 = vld [vmem:[#allocation2 + $0x8c] sm:$0xf]
      %v505 = vld [vmem:[#allocation2 + $0x90] sm:$0xff]
      %v506 = vld [vmem:[#allocation2 + $0x98] sm:$0xf]
      %v507 = vld [vmem:[#allocation2 + $0x9c] sm:$0xff]
      %v508 = vld [vmem:[#allocation2 + $0xa4] sm:$0xf]
      %v509 = vld [vmem:[#allocation2 + $0xa8] sm:$0xff]
      %v510 = vld [vmem:[#allocation2 + $0xb0] sm:$0xf]
      %v511 = vld [vmem:[#allocation2 + $0xb4] sm:$0xff]
      %v512 = vld [vmem:[#allocation2 + $0xbc] sm:$0xf]
      %v513 = vld [vmem:[#allocation2 + $0xc0] sm:$0xff]
      %v514 = vld [vmem:[#allocation2 + $0xc8] sm:$0xf]
      %v515 = vld [vmem:[#allocation2 + $0xcc] sm:$0xff]
      %v516 = vld [vmem:[#allocation2 + $0xd4] sm:$0xf]
      %v517 = vld [vmem:[%s3] sm:$0x3]
      %519 = vset.pattern.permute.xlu0 0
      %520 = vperm.xlu0 %519, %v517
      %v521 = vpop.permute.xlu0 %520
      %524 = vst [vmem:[#allocation1] ss:$9 sm:$0xff] %v480
      %v525 = vld [vmem:[#allocation1] sm:$0xff]
      %v526 = vld [vmem:[#allocation1 + $0x9] sm:$0xff]
      %v564 = vunpack.c.l.b16 %v481
      %v565 = vunpack.c.h.b16 %v481
      %v566 = vunpack.c.l.b16 %v482
      %v567 = vunpack.c.l.b16 %v483
      %v568 = vunpack.c.h.b16 %v483
      %v569 = vunpack.c.l.b16 %v484
      %v570 = vunpack.c.l.b16 %v485
      %v571 = vunpack.c.h.b16 %v485
      %v572 = vunpack.c.l.b16 %v486
      %v573 = vunpack.c.l.b16 %v487
      %v574 = vunpack.c.h.b16 %v487
      %v575 = vunpack.c.l.b16 %v488
      %v576 = vunpack.c.l.b16 %v489
      %v577 = vunpack.c.h.b16 %v489
      %v578 = vunpack.c.l.b16 %v490
      %v579 = vunpack.c.l.b16 %v491
      %v580 = vunpack.c.h.b16 %v491
      %v581 = vunpack.c.l.b16 %v492
      %v582 = vunpack.c.l.b16 %v493
      %v583 = vunpack.c.h.b16 %v493
      %v584 = vunpack.c.l.b16 %v494
      %v585 = vunpack.c.l.b16 %v495
      %v586 = vunpack.c.h.b16 %v495
      %v587 = vunpack.c.l.b16 %v496
      %v588 = vunpack.c.l.b16 %v497
      %v589 = vunpack.c.h.b16 %v497
      %v590 = vunpack.c.l.b16 %v498
      %v591 = vunpack.c.l.b16 %v499
      %v592 = vunpack.c.h.b16 %v499
      %v593 = vunpack.c.l.b16 %v500
      %v594 = vunpack.c.l.b16 %v501
      %v595 = vunpack.c.h.b16 %v501
      %v596 = vunpack.c.l.b16 %v502
      %v597 = vunpack.c.l.b16 %v503
      %v598 = vunpack.c.h.b16 %v503
      %v599 = vunpack.c.l.b16 %v504
      %v600 = vunpack.c.l.b16 %v505
      %v601 = vunpack.c.h.b16 %v505
      %v602 = vunpack.c.l.b16 %v506
      %v603 = vunpack.c.l.b16 %v507
      %v604 = vunpack.c.h.b16 %v507
      %v605 = vunpack.c.l.b16 %v508
      %v606 = vunpack.c.l.b16 %v509
      %v607 = vunpack.c.h.b16 %v509
      %v608 = vunpack.c.l.b16 %v510
      %v609 = vunpack.c.l.b16 %v511
      %v610 = vunpack.c.h.b16 %v511
      %v611 = vunpack.c.l.b16 %v512
      %v612 = vunpack.c.l.b16 %v513
      %v613 = vunpack.c.h.b16 %v513
      %v614 = vunpack.c.l.b16 %v514
      %v615 = vunpack.c.l.b16 %v515
      %v616 = vunpack.c.h.b16 %v515
      %v617 = vunpack.c.l.b16 %v516
      %v618 = vpack.c.b16 %v567, %v564
      %v619 = vpack.c.b16 %v568, %v565
      %v620 = vpack.c.b16 %v569, %v566
      %v621 = vpack.c.b16 %v573, %v570
      %v622 = vpack.c.b16 %v574, %v571
      %v623 = vpack.c.b16 %v575, %v572
      %v624 = vpack.c.b16 %v579, %v576
      %v625 = vpack.c.b16 %v580, %v577
      %v626 = vpack.c.b16 %v581, %v578
      %v627 = vpack.c.b16 %v585, %v582
      %v628 = vpack.c.b16 %v586, %v583
      %v629 = vpack.c.b16 %v587, %v584
      %v630 = vpack.c.b16 %v591, %v588
      %v631 = vpack.c.b16 %v592, %v589
      %v632 = vpack.c.b16 %v593, %v590
      %v633 = vpack.c.b16 %v597, %v594
      %v634 = vpack.c.b16 %v598, %v595
      %v635 = vpack.c.b16 %v599, %v596
      %v636 = vpack.c.b16 %v603, %v600
      %v637 = vpack.c.b16 %v604, %v601
      %v638 = vpack.c.b16 %v605, %v602
      %v639 = vpack.c.b16 %v609, %v606
      %v640 = vpack.c.b16 %v610, %v607
      %v641 = vpack.c.b16 %v611, %v608
      %v642 = vpack.c.b16 %v615, %v612
      %v643 = vpack.c.b16 %v616, %v613
      %v644 = vpack.c.b16 %v617, %v614
      %vm672 = vcmask 130048
      %v673 = vsel %vm672, %v526, 0
      %675 = vmatpush.bf16.msra.mxu0 %v639
      %676 = vmatpush.bf16.msra.mxu0 %v636
      %677 = vmatpush.bf16.msra.mxu0 %v633
      %678 = vmatpush.bf16.msra.mxu0 %v630
      %679 = vmatpush.bf16.msra.mxu0 %v627
      %680 = vmatpush.bf16.msra.mxu0 %v624
      %681 = vmatpush.bf16.msra.mxu0 %v621
      %682 = vmatpush.bf16.msra.mxu0 %v618
      %683 = vmatmul.bf16.gmra.mxu0 %v525
      %v684 = vpop.f32.mrf.mxu0
      %v685 = vadd.f32 %v521, %v684
      %v686 = vpop.f32.mrf.mxu0
      %687 = vdwg.mxu0
      %688 = vmatpush.bf16.msra.mxu0 0
      %689 = vmatpush.bf16.msra.mxu0 0
      %690 = vmatpush.bf16.msra.mxu0 0
      %691 = vmatpush.bf16.msra.mxu0 0
      %692 = vmatpush.bf16.msra.mxu0 0
      %693 = vmatpush.bf16.msra.mxu0 0
      %694 = vmatpush.bf16.msra.mxu0 0
      %695 = vmatpush.bf16.msra.mxu0 %v642
      %696 = vmatmul.bf16.gmra.mxu0 %v673
      %v697 = vpop.f32.mrf.mxu0
      %v698 = vadd.f32 %v685, %v697
      %v699 = vpop.f32.mrf.mxu0
      %700 = vdwg.mxu0
      %701 = vmatpush.bf16.msra.mxu0 %v640
      %702 = vmatpush.bf16.msra.mxu0 %v637
      %703 = vmatpush.bf16.msra.mxu0 %v634
      %704 = vmatpush.bf16.msra.mxu0 %v631
      %705 = vmatpush.bf16.msra.mxu0 %v628
      %706 = vmatpush.bf16.msra.mxu0 %v625
      %707 = vmatpush.bf16.msra.mxu0 %v622
      %708 = vmatpush.bf16.msra.mxu0 %v619
      %709 = vmatmul.bf16.gmra.mxu0 %v525
      %v710 = vpop.f32.mrf.mxu0
      %v711 = vadd.f32 %v521, %v710
      %v712 = vpop.f32.mrf.mxu0
      %713 = vdwg.mxu0
      %714 = vmatpush.bf16.msra.mxu0 0
      %715 = vmatpush.bf16.msra.mxu0 0
      %716 = vmatpush.bf16.msra.mxu0 0
      %717 = vmatpush.bf16.msra.mxu0 0
      %718 = vmatpush.bf16.msra.mxu0 0
      %719 = vmatpush.bf16.msra.mxu0 0
      %720 = vmatpush.bf16.msra.mxu0 0
      %721 = vmatpush.bf16.msra.mxu0 %v643
      %722 = vmatmul.bf16.gmra.mxu0 %v673
      %v723 = vpop.f32.mrf.mxu0
      %v724 = vadd.f32 %v711, %v723
      %v725 = vpop.f32.mrf.mxu0
      %726 = vdwg.mxu0
      %727 = vmatpush.bf16.msra.mxu0 %v641
      %728 = vmatpush.bf16.msra.mxu0 %v638
      %729 = vmatpush.bf16.msra.mxu0 %v635
      %730 = vmatpush.bf16.msra.mxu0 %v632
      %731 = vmatpush.bf16.msra.mxu0 %v629
      %732 = vmatpush.bf16.msra.mxu0 %v626
      %733 = vmatpush.bf16.msra.mxu0 %v623
      %734 = vmatpush.bf16.msra.mxu0 %v620
      %735 = vmatmul.bf16.gmra.mxu0 %v525
      %v736 = vpop.f32.mrf.mxu0
      %v737 = vadd.f32 %v521, %v736
      %v738 = vpop.f32.mrf.mxu0
      %739 = vdwg.mxu0
      %740 = vmatpush.bf16.msra.mxu0 0
      %741 = vmatpush.bf16.msra.mxu0 0
      %742 = vmatpush.bf16.msra.mxu0 0
      %743 = vmatpush.bf16.msra.mxu0 0
      %744 = vmatpush.bf16.msra.mxu0 0
      %745 = vmatpush.bf16.msra.mxu0 0
      %746 = vmatpush.bf16.msra.mxu0 0
      %747 = vmatpush.bf16.msra.mxu0 %v644
      %748 = vmatmul.bf16.gmra.mxu0 %v673
      %v749 = vpop.f32.mrf.mxu0
      %v750 = vadd.f32 %v737, %v749
      %v751 = vpop.f32.mrf.mxu0
      %752 = vdwg.mxu0
      %v753 = vlaneseq
      %v754 = vand.u32 %v753, 127
      %v755 = vadd.s32 %v754, 128
      %v756 = vadd.s32 %v754, 256
      %vm757 = vcmp.lt.s32.totalorder %v754, 0
      %v758 = vsub.s32 0, %v754
      %v759 = vsel %vm757, %v758, %v754
      %v760 = vand.u32 %v759, 65535
      %v761 = vshrl.u32 %v759, 16
      %v763 = vmul.u32 %v760, 14564
      %v764 = vmul.u32 %v760, 58254
      %v765 = vmul.u32 %v761, 14564
      %v766 = vmul.u32 %v761, 58254
      %v767 = vshll.u32 %v764, 16
      %v768 = vshrl.u32 %v764, 16
      %v769 = vshll.u32 %v765, 16
      %v770 = vshrl.u32 %v765, 16
      %vm771 = vc.u32 %v763, %v767
      %v772 = vsel %vm771, 1, 0
      %v773 = vadd.s32 %v763, %v767
      %v774 = vadd.s32 %v766, %v772
      %vm775 = vc.u32 %v773, %v769
      %v776 = vsel %vm775, 1, 0
      %v777 = vadd.s32 %v773, %v769
      %v778 = vadd.s32 %v774, %v776
      %v779 = vadd.s32 %v778, %v768
      %v780 = vadd.s32 %v779, %v770
      %v781 = vshrl.u32 %v780, 4
      %v782 = vmul.u32 %v781, 18
      %v783 = vsub.s32 %v759, %v782
      %v784 = vsub.s32 0, %v783
      %v785 = vsel %vm757, %v784, %v783
      %vm786 = vcmp.lt.s32.totalorder %v755, 0
      %v787 = vsub.s32 0, %v755
      %v788 = vsel %vm786, %v787, %v755
      %v789 = vand.u32 %v788, 65535
      %v790 = vshrl.u32 %v788, 16
      %v792 = vmul.u32 %v789, 14564
      %v793 = vmul.u32 %v789, 58254
      %v794 = vmul.u32 %v790, 14564
      %v795 = vmul.u32 %v790, 58254
      %v796 = vshll.u32 %v793, 16
      %v797 = vshrl.u32 %v793, 16
      %v798 = vshll.u32 %v794, 16
      %v799 = vshrl.u32 %v794, 16
      %vm800 = vc.u32 %v792, %v796
      %v801 = vsel %vm800, 1, 0
      %v802 = vadd.s32 %v792, %v796
      %v803 = vadd.s32 %v795, %v801
      %vm804 = vc.u32 %v802, %v798
      %v805 = vsel %vm804, 1, 0
      %v806 = vadd.s32 %v802, %v798
      %v807 = vadd.s32 %v803, %v805
      %v808 = vadd.s32 %v807, %v797
      %v809 = vadd.s32 %v808, %v799
      %v810 = vshrl.u32 %v809, 4
      %v811 = vmul.u32 %v810, 18
      %v812 = vsub.s32 %v788, %v811
      %v813 = vsub.s32 0, %v812
      %v814 = vsel %vm786, %v813, %v812
      %vm815 = vcmp.lt.s32.totalorder %v756, 0
      %v816 = vsub.s32 0, %v756
      %v817 = vsel %vm815, %v816, %v756
      %v818 = vand.u32 %v817, 65535
      %v819 = vshrl.u32 %v817, 16
      %v821 = vmul.u32 %v818, 14564
      %v822 = vmul.u32 %v818, 58254
      %v823 = vmul.u32 %v819, 14564
      %v824 = vmul.u32 %v819, 58254
      %v825 = vshll.u32 %v822, 16
      %v826 = vshrl.u32 %v822, 16
      %v827 = vshll.u32 %v823, 16
      %v828 = vshrl.u32 %v823, 16
      %vm829 = vc.u32 %v821, %v825
      %v830 = vsel %vm829, 1, 0
      %v831 = vadd.s32 %v821, %v825
      %v832 = vadd.s32 %v824, %v830
      %vm833 = vc.u32 %v831, %v827
      %v834 = vsel %vm833, 1, 0
      %v835 = vadd.s32 %v831, %v827
      %v836 = vadd.s32 %v832, %v834
      %v837 = vadd.s32 %v836, %v826
      %v838 = vadd.s32 %v837, %v828
      %v839 = vshrl.u32 %v838, 4
      %v840 = vmul.u32 %v839, 18
      %v841 = vsub.s32 %v817, %v840
      %v842 = vsub.s32 0, %v841
      %v843 = vsel %vm815, %v842, %v841
      %vm844 = vcmp.ne.s32.totalorder %v785, 0
      %vm845 = vcmp.ne.s32.totalorder %v814, 0
      %vm846 = vcmp.ne.s32.totalorder %v843, 0
      %vm847 = vcmp.lt.s32.totalorder %v785, 0
      %vm848 = vcmp.lt.s32.totalorder %v814, 0
      %vm849 = vcmp.lt.s32.totalorder %v843, 0
      %vm850 = vmand %vm847, %vm844
      %vm851 = vmand %vm848, %vm845
      %vm852 = vmand %vm849, %vm846
      %v853 = vadd.s32 %v785, 18
      %v854 = vadd.s32 %v814, 18
      %v855 = vadd.s32 %v843, 18
      %v856 = vsel %vm850, %v853, %v785
      %v857 = vsel %vm851, %v854, %v814
      %v858 = vsel %vm852, %v855, %v843
      %vm859 = vcmp.lt.s32.totalorder %v856, 16
      %vm860 = vcmp.lt.s32.totalorder %v857, 16
      %vm861 = vcmp.lt.s32.totalorder %v858, 16
      %vm862 = vcmp.lt.s32.totalorder %v754, 288
      %vm863 = vcmp.lt.s32.totalorder %v755, 288
      %vm864 = vcmp.lt.s32.totalorder %v756, 288
      %vm865 = vmand %vm859, %vm862
      %vm866 = vmand %vm860, %vm863
      %vm867 = vmand %vm861, %vm864
      %v868 = vsel %vm865, 1, 0
      %v869 = vsel %vm866, 1, 0
      %v870 = vsel %vm867, 1, 0
      %v871 = vcvt.s32.f32 %v868
      %v872 = vcvt.s32.f32 %v869
      %v873 = vcvt.s32.f32 %v870
      %v874 = vmul.f32 %v698, %v871
      %v875 = vmul.f32 %v724, %v872
      %v876 = vmul.f32 %v750, %v873
      %vm877 = vcmask 1041408
      %v878 = vsel %vm877, %v874, 0.0
      %v879 = vsel %vm877, %v875, 0.0
      %v880 = vadd.f32 %v878, %v879
      %v881 = vsel %vm877, %v876, 0.0
      %v882 = vadd.f32 %v880, %v881
      %883 = vadd.xlane.f32.xlu0 %v882
      %v884 = vpop.xlane.xlu0 %883
      %v885 = vmul.f32 %v884, 0.00390625
      %v886 = vmul.f32 %v698, %v698
      %v887 = vmul.f32 %v724, %v724
      %v888 = vmul.f32 %v750, %v750
      %v889 = vmul.f32 %v886, %v871
      %v890 = vmul.f32 %v887, %v872
      %v891 = vmul.f32 %v888, %v873
      %v892 = vsel %vm877, %v889, 0.0
      %v893 = vsel %vm877, %v890, 0.0
      %v894 = vadd.f32 %v892, %v893
      %v895 = vsel %vm877, %v891, 0.0
      %v896 = vadd.f32 %v894, %v895
      %897 = vadd.xlane.f32.xlu0 %v896
      %v898 = vpop.xlane.xlu0 %897
      %v899 = vmul.f32 %v898, 0.00390625
      %v900 = vmul.f32 %v885, %v885
      %v901 = vsub.f32 %v899, %v900
      %v902 = vmax.f32 %v901, 0.0
      %v903 = vsub.f32 %v698, %v885
      %v904 = vsub.f32 %v724, %v885
      %v905 = vsub.f32 %v750, %v885
      %v906 = vadd.f32 %v902, 1e-05
      %v907 = vrsqrt.pop %v906
      %v908 = vmul.f32 %v907, %v906
      %v909 = vmul.f32 %v908, %v907
      %v910 = vmul.f32 0.5, %v909
      %v911 = vsub.f32 1.5, %v910
      %v912 = vmul.f32 %v907, %v911
      %vm913 = vweird.f32 %v906
      %vm914 = vweird.f32 %v907
      %vm915 = vmor %vm913, %vm914
      %v916 = vsel %vm915, %v907, %v912
      %v917 = vmul.f32 %v903, %v916
      %v918 = vmul.f32 %v904, %v916
      %v919 = vmul.f32 %v905, %v916
      %vm920 = vcmp.gt.f32.partialorder %v917, 0.0
      %vm921 = vcmp.gt.f32.partialorder %v918, 0.0
      %vm922 = vcmp.gt.f32.partialorder %v919, 0.0
      %v923 = vmin.f32 %v917, 0.0
      %v924 = vmin.f32 %v918, 0.0
      %v925 = vmin.f32 %v919, 0.0
      %v926 = vmul.f32 %v923, 1.442695
      %v927 = vpow.pop %v926
      %v928 = vmul.f32 %v924, 1.442695
      %v929 = vpow.pop %v928
      %v930 = vmul.f32 %v925, 1.442695
      %v931 = vpow.pop %v930
      %v932 = vsub.f32 %v927, 1.0
      %v933 = vsub.f32 %v929, 1.0
      %v934 = vsub.f32 %v931, 1.0
      %v935 = vsel %vm920, %v917, %v932
      %v936 = vsel %vm921, %v918, %v933
      %v937 = vsel %vm922, %v919, %v934
      %v938 = vpack.c.bf16 %v936, %v935
      %v939 = vpack.c.bf16 %v937, %v937
      %v942 = vrot.slane %v938, 3
      %v943 = vrot.slane %v939, 6
      %v944 = vrot.slane %v939, 1
      %vm945 = vcmask 1040384
      %v948 = vsel %vm945, %v938, %v942
      %vm949 = vcmask 1042434
      %v952 = vsel %vm949, %v943, %v944
      %v953 = vsel %vm877, %v948, %v952
      %955 = vst [vmem:[%s215] sm:$0x7] %v953
      %p956 = scmp.lt.s32.totalorder %s15, 1
      %s957 = scalar_select %p956, %s15, 1
      %s958 = smul.addr %s957, 3
      %s959 = scalar_lea.vmem %s4, %s958
      // Predicated region
      $region37: #{_lambda_.18} parent=35 // pred_check
        %p960 = pneg %p127
      $region38: #{_lambda_.18} parent=35 // pred_check_branch
        %962 = sbr.rel (%p960) target = $region40
      $region39: #{_lambda_.18} parent=35 // pred_region
        _
      $region40: #{_lambda_.18} parent=35 // pred_fallthru
        _
    $region36: #{_lambda_.18} parent=5 // pred_fallthru
      _
    %p963 = scmp.le.s32.totalorder 2, %s10
    // Predicated region
    $region41: #{_lambda_.18} parent=5 // pred_check
      %p964 = pneg %p963
    $region42: #{_lambda_.18} parent=5 // pred_check_branch
      %966 = sbr.rel (%p964) target = $region44
    $region43: #{_lambda_.18} parent=5 // pred_region
      %s967 = ssub.s32 %s10, 2
      // Predicated region
      $region45: #{_lambda_.18} parent=43 // pred_check
        %p968 = pneg %p133
      $region46: #{_lambda_.18} parent=43 // pred_check_branch
        %970 = sbr.rel (%p968) target = $region48
      $region47: #{_lambda_.18} parent=43 // pred_region
        %p971 = scmp.lt.s32.totalorder %s16, 1
        %s972 = scalar_select %p971, %s16, 1
        %s973 = smul.addr %s972, 3
        %s974 = scalar_lea.vmem %s4, %s973
      $region48: #{_lambda_.18} parent=43 // pred_fallthru
        _
    $region44: #{_lambda_.18} parent=5 // pred_fallthru
      _
  $region6: #{_lambda_.18} parent=0 // loop_footer
    %s14 = sadd.s32 1, %s10
  $region7: #{_lambda_.18} parent=0 // loop_footer_branch
    %9 = sbr.rel target = $region3
  $region8: #{_lambda_.18} parent=0 // loop_exit
    _

// kernel: _lambda_.19
$region0: #{_lambda_.19}
  #allocation0 [shape = 'u32[]', space=smem, size = 0x4, offset = 0x4, fixed_abs, tag = 'smem constant byte address 0x4 - core index']
  #allocation1 [shape = 'u32[72,128]{1,0:T(1,128)}', space=vmem, size = 0x9000, scoped, tag = 'internal scratch']
  %s0 = inlined_call_operand.vmem [shape: bf16[2,2,256], index: 0, kind: input, shape index: {}]
  %s1 = inlined_call_operand.vmem [shape: f32[2,3,256], index: 1, kind: input, shape index: {}]
  %s2 = inlined_call_operand.vmem [shape: f32[3,2], index: 2, kind: input, shape index: {}]
  %s3 = inlined_call_operand.vmem [shape: f32[3], index: 3, kind: input, shape index: {}]
  %s4 = inlined_call_operand.vmem [shape: f32[2,3,256], index: 4, kind: output, shape index: {}]
  %s5 = sld [smem:[#allocation0]]
  $region34: #{_lambda_.19} parent=0
    _
  %s7 = ssub.s32 1, %s5
  %s8 = scalar_select 0, %s7, %s5
  $region1: #{_lambda_.19} parent=0
    #allocation2 [shape = 'u8[2048]{0}', space=smem, size = 0x800, scoped, tag = 'input window, operand 2, single buffered']
    #allocation3 [shape = 's32[1]{0}', space=sflag, size = 0x4, scoped, tag = 'scoped memory for _lambda_.19']
    #allocation4 [shape = 'u8[512]{0}', space=smem, size = 0x200, scoped, tag = 'input window, operand 3, single buffered']
    #allocation5 [shape = 's32[1]{0}', space=sflag, size = 0x4, scoped, tag = 'scoped memory for _lambda_.19']
    %9 = vsyncpa [#allocation3], 0
    %10 = vsyncpa [#allocation5], 0
    // Predicated region
    $region2: #{_lambda_.19} parent=1 // pred_check
      _
    $region3: #{_lambda_.19} parent=1 // pred_check_branch
      %12 = sbr.rel (0) target = $region5
    $region4: #{_lambda_.19} parent=1 // pred_region
      _
    $region5: #{_lambda_.19} parent=1 // pred_fallthru
      _
    // Predicated region
    $region6: #{_lambda_.19} parent=1 // pred_check
      _
    $region7: #{_lambda_.19} parent=1 // pred_check_branch
      %14 = sbr.rel (0) target = $region9
    $region8: #{_lambda_.19} parent=1 // pred_region
      _
    $region9: #{_lambda_.19} parent=1 // pred_fallthru
      _
    // Predicated region
    $region10: #{_lambda_.19} parent=1 // pred_check
      _
    $region11: #{_lambda_.19} parent=1 // pred_check_branch
      %16 = sbr.rel (0) target = $region13
    $region12: #{_lambda_.19} parent=1 // pred_region
      %18 = vsyncadd [#allocation3], 0
      %s20 = sshll.u32 %s2, 4
      %s21 = int_to_ptr.vmem [resolvable:$true] %s20
      %23 = dma.vmem_to_smem %s21, 64, [#allocation2], [#allocation3]
    $region13: #{_lambda_.19} parent=1 // pred_fallthru
      _
    // Predicated region
    $region14: #{_lambda_.19} parent=1 // pred_check
      _
    $region15: #{_lambda_.19} parent=1 // pred_check_branch
      %25 = sbr.rel (0) target = $region17
    $region16: #{_lambda_.19} parent=1 // pred_region
      %27 = vsyncadd [#allocation5], 0
      %s29 = sshll.u32 %s3, 4
      %s30 = int_to_ptr.vmem [resolvable:$true] %s29
      %32 = dma.vmem_to_smem %s30, 16, [#allocation4], [#allocation5]
    $region17: #{_lambda_.19} parent=1 // pred_fallthru
      _
    // Predicated region
    $region18: #{_lambda_.19} parent=1 // pred_check
      _
    $region19: #{_lambda_.19} parent=1 // pred_check_branch
      %34 = sbr.rel (0) target = $region21
    $region20: #{_lambda_.19} parent=1 // pred_region
      %36 = dma.done [#allocation3], 64
    $region21: #{_lambda_.19} parent=1 // pred_fallthru
      _
    // Predicated region
    $region22: #{_lambda_.19} parent=1 // pred_check
      _
    $region23: #{_lambda_.19} parent=1 // pred_check_branch
      %38 = sbr.rel (0) target = $region25
    $region24: #{_lambda_.19} parent=1 // pred_region
      %40 = dma.done [#allocation5], 16
    $region25: #{_lambda_.19} parent=1 // pred_fallthru
      _
    %41 = sfence
    %v42 = vld [vmem:[%s0] sm:$0x3]
    %v43 = vunpack.c.l.bf16 %v42
    %s44 = sld [smem:[#allocation2]]
    %v45 = vstv %s44
    %v46 = vmul.f32 %v43, %v45
    %s47 = sld [smem:[#allocation2 + $0x1]]
    %v48 = vstv %s47
    %v49 = vmul.f32 %v43, %v48
    %v51 = vrot.slane %v49, 7
    %v52 = vrot.slane %v51, 2
    %v54 = vadd.f32 %v46, %v52
    %s55 = sld [smem:[#allocation4]]
    %v56 = vstv %s55
    %v57 = vadd.f32 %v54, %v56
    %s58 = sld [smem:[#allocation2 + $0x80]]
    %v59 = vstv %s58
    %v60 = vmul.f32 %v43, %v59
    %s61 = sld [smem:[#allocation2 + $0x81]]
    %v62 = vstv %s61
    %v63 = vmul.f32 %v43, %v62
    %v65 = vrot.slane %v63, 7
    %v66 = vrot.slane %v65, 2
    %v68 = vadd.f32 %v60, %v66
    %s69 = sld [smem:[#allocation4 + $0x1]]
    %v70 = vstv %s69
    %v71 = vadd.f32 %v68, %v70
    %s72 = sld [smem:[#allocation2 + $0x100]]
    %v73 = vstv %s72
    %v74 = vmul.f32 %v43, %v73
    %s75 = sld [smem:[#allocation2 + $0x101]]
    %v76 = vstv %s75
    %v77 = vmul.f32 %v43, %v76
    %v79 = vrot.slane %v77, 7
    %v80 = vrot.slane %v79, 2
    %v82 = vadd.f32 %v74, %v80
    %s83 = sld [smem:[#allocation4 + $0x2]]
    %v84 = vstv %s83
    %v85 = vadd.f32 %v82, %v84
    %v87 = vperm.slane %v57, 0
    %v88 = vperm.slane %v57, 2
    %v92 = vperm.slane %v71, 0
    %v93 = vperm.slane %v71, 2
    %v97 = vperm.slane %v85, 0
    %v98 = vperm.slane %v85, 2
    %vm101 = vcmask 1040384
    %v102 = vsel %vm101, %v87, %v92
    %v103 = vsel %vm101, %v88, %v93
    %vm104 = vcmask 1041408
    %v105 = vsel %vm104, %v102, %v97
    %v106 = vsel %vm104, %v103, %v98
    %v107 = vtanh.pop %v105
    %v108 = vtanh.pop %v106
    %v109 = vld [vmem:[%s1] sm:$0x77]
    %111 = vst [vmem:[#allocation1] ss:$2 sm:$0xff] %v109
    %v112 = vld.sshfl [vmem:[#allocation1] sm:$0xff pattern:$0x75316420]
    %v113 = vld.sshfl [vmem:[#allocation1 + $0x8] sm:$0xff pattern:$0x75316420]
    %v116 = vadd.f32 %v107, %v112
    %v117 = vadd.f32 %v108, %v113
    %v120 = vrot.slane %v117, 4
    %vm121 = vcmask 1043456
    %v122 = vsel %vm121, %v116, %v120
    %124 = vst [vmem:[%s4] sm:$0x77] %v122
    %vm125 = vcmask 1042432
    %v126 = vsel %vm125, %v116, -inf
    %v127 = vsel %vm125, %v117, -inf
    %v128 = vmax.f32 %v126, %v127
    %129 = vmax.xlane.f32.xlu0 %v128
    %v130 = vpop.xlane.xlu0 %129
    %v131 = vrot.slane %v130, 4
    %v132 = vmax.f32 %v130, %v131
    %v133 = vrot.slane %v132, 2
    %v134 = vmax.f32 %v132, %v133
    %v135 = vrot.slane %v134, 1
    %v136 = vmax.f32 %v134, %v135
    %s137 = vtos %v136
    %v138 = vsel %vm125, %v116, inf
    %v139 = vsel %vm125, %v117, inf
    %v140 = vmin.f32 %v138, %v139
    %141 = vmin.xlane.f32.xlu0 %v140
    %v142 = vpop.xlane.xlu0 %141
    %v143 = vrot.slane %v142, 4
    %v144 = vmin.f32 %v142, %v143
    %v145 = vrot.slane %v144, 2
    %v146 = vmin.f32 %v144, %v145
    %v147 = vrot.slane %v146, 1
    %v148 = vmin.f32 %v146, %v147
    %s149 = vtos %v148
    %s150 = scalar_lea.vmem %s0, 2
    %v151 = vld [vmem:[%s150] sm:$0x3]
    %v152 = vunpack.c.l.bf16 %v151
    %s153 = sld [smem:[#allocation2]]
    %v154 = vstv %s153
    %v155 = vmul.f32 %v152, %v154
    %s156 = sld [smem:[#allocation2 + $0x1]]
    %v157 = vstv %s156
    %v158 = vmul.f32 %v152, %v157
    %v160 = vrot.slane %v158, 7
    %v161 = vrot.slane %v160, 2
    %v163 = vadd.f32 %v155, %v161
    %s164 = sld [smem:[#allocation4]]
    %v165 = vstv %s164
    %v166 = vadd.f32 %v163, %v165
    %s167 = sld [smem:[#allocation2 + $0x80]]
    %v168 = vstv %s167
    %v169 = vmul.f32 %v152, %v168
    %s170 = sld [smem:[#allocation2 + $0x81]]
    %v171 = vstv %s170
    %v172 = vmul.f32 %v152, %v171
    %v174 = vrot.slane %v172, 7
    %v175 = vrot.slane %v174, 2
    %v177 = vadd.f32 %v169, %v175
    %s178 = sld [smem:[#allocation4 + $0x1]]
    %v179 = vstv %s178
    %v180 = vadd.f32 %v177, %v179
    %s181 = sld [smem:[#allocation2 + $0x100]]
    %v182 = vstv %s181
    %v183 = vmul.f32 %v152, %v182
    %s184 = sld [smem:[#allocation2 + $0x101]]
    %v185 = vstv %s184
    %v186 = vmul.f32 %v152, %v185
    %v188 = vrot.slane %v186, 7
    %v189 = vrot.slane %v188, 2
    %v191 = vadd.f32 %v183, %v189
    %s192 = sld [smem:[#allocation4 + $0x2]]
    %v193 = vstv %s192
    %v194 = vadd.f32 %v191, %v193
    %v196 = vperm.slane %v166, 0
    %v197 = vperm.slane %v166, 2
    %v201 = vperm.slane %v180, 0
    %v202 = vperm.slane %v180, 2
    %v206 = vperm.slane %v194, 0
    %v207 = vperm.slane %v194, 2
    %v210 = vsel %vm101, %v196, %v201
    %v211 = vsel %vm101, %v197, %v202
    %v212 = vsel %vm104, %v210, %v206
    %v213 = vsel %vm104, %v211, %v207
    %v214 = vtanh.pop %v212
    %v215 = vtanh.pop %v213
    %s216 = scalar_lea.vmem %s1, 8
    %v217 = vld [vmem:[%s216] sm:$0x77]
    %219 = vst [vmem:[#allocation1] ss:$2 sm:$0xff] %v217
    %v220 = vld.sshfl [vmem:[#allocation1] sm:$0xff pattern:$0x75316420]
    %v221 = vld.sshfl [vmem:[#allocation1 + $0x8] sm:$0xff pattern:$0x75316420]
    %v224 = vadd.f32 %v214, %v220
    %v225 = vadd.f32 %v215, %v221
    %v228 = vrot.slane %v225, 4
    %v229 = vsel %vm121, %v224, %v228
    %s231 = scalar_lea.vmem %s4, 8
    %232 = vst [vmem:[%s231] sm:$0x77] %v229
    %v233 = vsel %vm125, %v224, -inf
    %v234 = vsel %vm125, %v225, -inf
    %v235 = vmax.f32 %v233, %v234
    %236 = vmax.xlane.f32.xlu0 %v235
    %v237 = vpop.xlane.xlu0 %236
    %v238 = vrot.slane %v237, 4
    %v239 = vmax.f32 %v237, %v238
    %v240 = vrot.slane %v239, 2
    %v241 = vmax.f32 %v239, %v240
    %v242 = vrot.slane %v241, 1
    %v243 = vmax.f32 %v241, %v242
    %s244 = vtos %v243
    %v245 = vsel %vm125, %v224, inf
    %v246 = vsel %vm125, %v225, inf
    %v247 = vmin.f32 %v245, %v246
    %248 = vmin.xlane.f32.xlu0 %v247
    %v249 = vpop.xlane.xlu0 %248
    %v250 = vrot.slane %v249, 4
    %v251 = vmin.f32 %v249, %v250
    %v252 = vrot.slane %v251, 2
    %v253 = vmin.f32 %v251, %v252
    %v254 = vrot.slane %v253, 1
    %v255 = vmin.f32 %v253, %v254
    %s256 = vtos %v255
    %s257 = smax.f32 %s137, %s244
    %s258 = smin.f32 %s149, %s256
    %p259 = scmp.gt.f32.partialorder %s257, 1.0
    %p260 = scmp.lt.f32.partialorder %s258, 0.0
    %p261 = por %p259, %p260
    %v262 = vld [vmem:[%s4] sm:$0x77]
    %264 = vst [vmem:[#allocation1] ss:$2 sm:$0xff] %v262
    %v265 = vld.sshfl [vmem:[#allocation1] sm:$0xff pattern:$0x75316420]
    %v266 = vld.sshfl [vmem:[#allocation1 + $0x8] sm:$0xff pattern:$0x75316420]
    %v269 = vsel %vm125, %v265, -inf
    %v270 = vsel %vm125, %v266, -inf
    %v271 = vmax.f32 %v269, %v270
    %272 = vmax.xlane.f32.xlu0 %v271
    %v273 = vpop.xlane.xlu0 %272
    %274 = vst [vmem:[#allocation1] ss:$2 sm:$0xff] %v262
    %v275 = vld.sshfl [vmem:[#allocation1] sm:$0xff pattern:$0x75316420]
    %v276 = vld.sshfl [vmem:[#allocation1 + $0x8] sm:$0xff pattern:$0x75316420]
    %v279 = vsel %vm125, %v275, inf
    %v280 = vsel %vm125, %v276, inf
    %v281 = vmin.f32 %v279, %v280
    %282 = vmin.xlane.f32.xlu0 %v281
    %v283 = vpop.xlane.xlu0 %282
    %v286 = vunpack.c.l.s4 839922192
    %v287 = vunpack.c.0.s8 %v286
    %v288 = vperm.slane %v283, %v287
    %v290 = vsub.f32 %v262, %v288
    %v291 = vsub.f32 %v273, %v283
    %v292 = vadd.f32 %v291, 1e-07
    %v295 = vunpack.c.l.s4 839922192
    %v296 = vunpack.c.0.s8 %v295
    %v297 = vperm.slane %v292, %v296
    %v299 = vrcp.pop %v297
    %v300 = vmul.f32 %v297, %v299
    %v301 = vsub.f32 1.0, %v300
    %v302 = vmul.f32 %v299, %v301
    %v303 = vadd.f32 %v299, %v302
    %vm304 = vweird.f32 %v297
    %vm305 = vweird.f32 %v299
    %vm306 = vmor %vm304, %vm305
    %v307 = vsel %vm306, %v299, %v303
    %v308 = vand.u32 2147483647, %v297
    %vm309 = vcmp.eq.f32.partialorder %v308, 8.507059e+37
    %v310 = vand.u32 %v297, 2147483648
    %v311 = vor.u32 1.1754944e-38, %v310
    %v312 = vsel %vm309, %v311, %v307
    %v313 = vmul.f32 %v290, %v312
    %s314 = scalar_select %p261, 1, 0
    %v315 = vstv %s314
    %vm316 = vcmp.eq.s32.totalorder %v315, 1
    %v317 = vsel %vm316, %v313, %v262
    %318 = vst [vmem:[%s4] sm:$0x77] %v317
    %v319 = vld [vmem:[%s231] sm:$0x77]
    %321 = vst [vmem:[#allocation1] ss:$2 sm:$0xff] %v319
    %v322 = vld.sshfl [vmem:[#allocation1] sm:$0xff pattern:$0x75316420]
    %v323 = vld.sshfl [vmem:[#allocation1 + $0x8] sm:$0xff pattern:$0x75316420]
    %v326 = vsel %vm125, %v322, -inf
    %v327 = vsel %vm125, %v323, -inf
    %v328 = vmax.f32 %v326, %v327
    %329 = vmax.xlane.f32.xlu0 %v328
    %v330 = vpop.xlane.xlu0 %329
    %331 = vst [vmem:[#allocation1] ss:$2 sm:$0xff] %v319
    %v332 = vld.sshfl [vmem:[#allocation1] sm:$0xff pattern:$0x75316420]
    %v333 = vld.sshfl [vmem:[#allocation1 + $0x8] sm:$0xff pattern:$0x75316420]
    %v336 = vsel %vm125, %v332, inf
    %v337 = vsel %vm125, %v333, inf
    %v338 = vmin.f32 %v336, %v337
    %339 = vmin.xlane.f32.xlu0 %v338
    %v340 = vpop.xlane.xlu0 %339
    %v343 = vunpack.c.l.s4 839922192
    %v344 = vunpack.c.0.s8 %v343
    %v345 = vperm.slane %v340, %v344
    %v347 = vsub.f32 %v319, %v345
    %v348 = vsub.f32 %v330, %v340
    %v349 = vadd.f32 %v348, 1e-07
    %v352 = vunpack.c.l.s4 839922192
    %v353 = vunpack.c.0.s8 %v352
    %v354 = vperm.slane %v349, %v353
    %v356 = vrcp.pop %v354
    %v357 = vmul.f32 %v354, %v356
    %v358 = vsub.f32 1.0, %v357
    %v359 = vmul.f32 %v356, %v358
    %v360 = vadd.f32 %v356, %v359
    %vm361 = vweird.f32 %v354
    %vm362 = vweird.f32 %v356
    %vm363 = vmor %vm361, %vm362
    %v364 = vsel %vm363, %v356, %v360
    %v365 = vand.u32 2147483647, %v354
    %vm366 = vcmp.eq.f32.partialorder %v365, 8.507059e+37
    %v367 = vand.u32 %v354, 2147483648
    %v368 = vor.u32 1.1754944e-38, %v367
    %v369 = vsel %vm366, %v368, %v364
    %v370 = vmul.f32 %v347, %v369
    %v371 = vsel %vm316, %v370, %v319
    %372 = vst [vmem:[%s231] sm:$0x77] %v371
    // Predicated region
    $region26: #{_lambda_.19} parent=1 // pred_check
      _
    $region27: #{_lambda_.19} parent=1 // pred_check_branch
      %374 = sbr.rel (0) target = $region29
    $region28: #{_lambda_.19} parent=1 // pred_region
      _
    $region29: #{_lambda_.19} parent=1 // pred_fallthru
      _
    // Predicated region
    $region30: #{_lambda_.19} parent=1 // pred_check
      _
    $region31: #{_lambda_.19} parent=1 // pred_check_branch
      %376 = sbr.rel (0) target = $region33
    $region32: #{_lambda_.19} parent=1 // pred_region
      _
    $region33: #{_lambda_.19} parent=1 // pred_fallthru
      _
    %377 = vsyncpa [#allocation3], 1
    %378 = vsyncpa [#allocation5], 1

</llo_original>
